<compile_context>
chip_gen: v6e
topology: v6e:2x2x1
jax: 0.10.0
libtpu: 0.0.40
codegen_flags: <defaults>
</compile_context>

<pallas_src>
import functools
import math

import jax
import jax.numpy as jnp
from jax import lax
from jax.experimental import pallas as pl
from jax.experimental.pallas import tpu as pltpu

OA_DIM = 64             # self.OA_dim
Q_DIM = OA_DIM // 4     # q/k channels in OA
OUT_DIM = 256           # output_dim of final linear
CAT_DIM = OA_DIM * 5    # concat of [x, x1, x2, x3, x4]
N_OA = 4                # four offset-attention blocks
QV_DIM = 128            # fused (v | q | pad) projection width (one full vreg)
BN_EPS = 1e-5


# --------------------------------------------------------------------------- #
# Kernel
# --------------------------------------------------------------------------- #
def _pct_nr_kernel(x_ref,
                   w1_ref, b1_ref, w2_ref, b2_ref,
                   wvq_ref, bvq_ref, wt_ref, bt_ref, wl5_ref, bl_ref,
                   out_ref, max_ref, mean_ref,
                   *, bt_pack, n_pts, use_bf16):
    cdt = jnp.bfloat16 if use_bf16 else jnp.float32

    def mm(a, b):
        return jnp.dot(a.astype(cdt), b.astype(cdt),
                       preferred_element_type=jnp.float32)

    Bt, N = bt_pack, n_pts
    x = x_ref[0]                                              # [Bt*N, 3]

    # ---- NR_process (BN already folded into weights/biases) ----
    f = jnp.maximum(mm(x, w1_ref[...]) + b1_ref[...], 0.0)
    f = jnp.maximum(mm(f, w2_ref[...]) + b2_ref[...], 0.0)    # [Bt*N, 64]

    cur = f
    # Final linear is accumulated on the fly: sum_j feats[j] @ wl5[j]
    o_acc = mm(cur, wl5_ref[0])                               # [Bt*N, 256]

    # ---- 4 stacked Offset-Attention blocks (statically unrolled) ----
    for i in range(N_OA):
        # Fused v|q projection: columns [0:64) = v_conv, [64:80) = q_conv, rest 0.
        vq = mm(cur, wvq_ref[i]) + bvq_ref[i]                 # [Bt*N, 128]
        v_all = vq[:, :OA_DIM]                                # [Bt*N, 64]
        q_all = vq[:, OA_DIM:]                                # [Bt*N, 64] (48 zero cols)

        diffs = []
        for bi in range(Bt):                                  # per-point-cloud attention
            r0 = bi * N
            q_b = q_all[r0:r0 + N, :]
            v_b = v_all[r0:r0 + N, :]
            c_b = cur[r0:r0 + N, :]

            # energy is symmetric: q_conv.weight is literally shared with
            # k_conv.weight in the PCT SA/OA layer (padded zero cols are inert).
            e = lax.dot_general(q_b.astype(cdt), q_b.astype(cdt),
                                (((1,), (1,)), ((), ())),
                                preferred_element_type=jnp.float32)    # [N, N]

            # Global max keeps P = exp(E - gmax) exactly symmetric (softmax is
            # shift invariant, so the result is unchanged).
            gmax = jnp.max(jnp.max(e, axis=-1, keepdims=True),
                           axis=0, keepdims=True)             # [1, 1]
            p = jnp.exp(e - gmax)                             # [N, N], symmetric

            # a[m] = 1 / softmax-denominator of row m.  By symmetry
            # rowsum(P) == colsum(P), so compute it directly in lane layout.
            a_row = pl.reciprocal(jnp.sum(p, axis=0, keepdims=True))   # [1, N]
            pa = p * a_row                                    # pa[n, m] == attn[m, n]
            # second normalization: 1 / (1e-9 + attn.sum over query dim)
            b_col = pl.reciprocal(1e-9 + jnp.sum(pa, axis=-1, keepdims=True))  # [N, 1]
            # x_r (point-major) == attn2^T @ v, as a standard last-dim contraction.
            x_r = mm(pa * b_col, v_b)                         # [N, 64]

            diffs.append(c_b - x_r)

        diff = diffs[0] if Bt == 1 else jnp.concatenate(diffs, axis=0)  # [Bt*N, 64]

        # trans_conv + BN (folded) + ReLU, residual add.
        t = jnp.maximum(mm(diff, wt_ref[i]) + bt_ref[i], 0.0)
        cur = cur + t
        o_acc = o_acc + mm(cur, wl5_ref[i + 1])

    # ---- final bias + LeakyReLU(0.2) ----
    o = o_acc + bl_ref[...]
    o = jnp.where(o >= 0.0, o, 0.2 * o)                       # [Bt*N, 256]

    # ---- per-batch outputs: fused transpose + max/mean over points ----
    for bi in range(Bt):
        o_b = o[bi * N:(bi + 1) * N, :]                       # [N, 256]
        out_ref[bi] = jnp.transpose(o_b)                      # [256, N]
        max_ref[bi] = jnp.max(o_b, axis=0, keepdims=True)     # [1, 256]
        mean_ref[bi] = jnp.mean(o_b, axis=0, keepdims=True)   # [1, 256]


# --------------------------------------------------------------------------- #
# Wrapper
# --------------------------------------------------------------------------- #
def _pick_bt(B, N):
    """Pack several point clouds per grid step when N is small (fills MXU M-dim,
    amortizes per-step pipeline overhead)."""
    best = 1
    for bt in range(1, min(B, 8) + 1):
        if B % bt == 0 and bt * N <= 1024:
            best = bt
    return best


def _vmem_limit_bytes(bt_pack, n_pts, params):
    f32 = 4
    rows = bt_pack * n_pts
    param_bytes = sum(int(p.size) for p in params) * f32
    act = (rows * 3 + 8 * rows * OA_DIM + rows * QV_DIM
           + 4 * n_pts * n_pts + 3 * rows * OUT_DIM + 2 * bt_pack * OUT_DIM)
    io = 2 * (rows * 3 + bt_pack * OUT_DIM * n_pts + 2 * bt_pack * OUT_DIM)
    est = param_bytes + (act + io) * f32
    # TODO(synk): for large N (>~1024) tile the [N, N] attention flash-style
    # (apply the second normalization only after all key tiles) instead of
    # relying on a bigger VMEM budget; re-derive per TPU generation (v7x: 64 MiB).
    return int(min(max(2 * est, 32 * 2 ** 20), 48 * 2 ** 20))


def pct_nr_forward(x_bcn, params, *, use_bf16=False):
    """x_bcn: [B, 3, N] (PyTorch layout).
    Returns (x [B, 256, N], x_max [B, 256], x_mean [B, 256])."""
    B, C, N = x_bcn.shape
    Bt = _pick_bt(B, N)
    G = B // Bt

    x = jnp.transpose(x_bcn, (0, 2, 1)).astype(jnp.float32).reshape(G, Bt * N, C)

    kernel = functools.partial(_pct_nr_kernel, bt_pack=Bt, n_pts=N,
                               use_bf16=use_bf16)

    def full_spec(p):
        nd = p.ndim
        return pl.BlockSpec(p.shape, lambda g, _n=nd: (0,) * _n)

    in_specs = [pl.BlockSpec((1, Bt * N, C), lambda g: (g, 0, 0))]
    in_specs += [full_spec(p) for p in params]

    out_specs = (pl.BlockSpec((Bt, OUT_DIM, N), lambda g: (g, 0, 0)),
                 pl.BlockSpec((Bt, 1, OUT_DIM), lambda g: (g, 0, 0)),
                 pl.BlockSpec((Bt, 1, OUT_DIM), lambda g: (g, 0, 0)))
    out_shape = (jax.ShapeDtypeStruct((B, OUT_DIM, N), jnp.float32),
                 jax.ShapeDtypeStruct((B, 1, OUT_DIM), jnp.float32),
                 jax.ShapeDtypeStruct((B, 1, OUT_DIM), jnp.float32))

    out, xmax, xmean = pl.pallas_call(
        kernel,
        out_shape=out_shape,
        grid=(G,),
        in_specs=in_specs,
        out_specs=out_specs,
        compiler_params=pltpu.CompilerParams(
            # batch blocks are fully independent -> megacore sharding on v7x
            dimension_semantics=("parallel",),
            vmem_limit_bytes=_vmem_limit_bytes(Bt, N, params)),
    )(x, *params)

    return out, xmax[:, 0, :], xmean[:, 0, :]


# --------------------------------------------------------------------------- #
# Parameters: raw (PyTorch-style, eval-mode BN with real running stats) and
# folded (what the kernel consumes).
# --------------------------------------------------------------------------- #
def init_raw_params(key):
    ks = iter(jax.random.split(key, 64))

    def w(shape, scale=0.1):
        return scale * jax.random.normal(next(ks), shape, dtype=jnp.float32)

    def bn(c):
        return dict(
            gamma=1.0 + 0.1 * jax.random.normal(next(ks), (c,), dtype=jnp.float32),
            beta=0.1 * jax.random.normal(next(ks), (c,), dtype=jnp.float32),
            mean=0.1 * jax.random.normal(next(ks), (c,), dtype=jnp.float32),
            var=0.5 + jax.random.uniform(next(ks), (c,), dtype=jnp.float32),
        )

    raw = dict(
        c1_w=w((OA_DIM, 3)), bn1=bn(OA_DIM),
        c2_w=w((OA_DIM, OA_DIM)), bn2=bn(OA_DIM),
        oa=[dict(q_w=w((Q_DIM, OA_DIM)),            # shared with k_conv (PCT OA layer)
                 v_w=w((OA_DIM, OA_DIM)), v_b=w((OA_DIM,), 0.05),
                 t_w=w((OA_DIM, OA_DIM)), t_b=w((OA_DIM,), 0.05),
                 bn=bn(OA_DIM)) for _ in range(N_OA)],
        l_w=w((OUT_DIM, CAT_DIM)), bnl=bn(OUT_DIM),
    )
    return raw


def fold_params(raw):
    """Fold eval-mode BN (using the actual running stats) into weights/biases and
    build the fused/reshaped weights the kernel expects."""
    def bn_sb(p):
        s = p['gamma'] / jnp.sqrt(p['var'] + BN_EPS)
        return s, p['beta'] - p['mean'] * s

    s1, b1 = bn_sb(raw['bn1'])
    s2, b2 = bn_sb(raw['bn2'])
    w1 = raw['c1_w'].T * s1[None, :]                          # [3, 64]
    w2 = raw['c2_w'].T * s2[None, :]                          # [64, 64]

    wvq, bvq, wt, bt = [], [], [], []
    for oa in raw['oa']:
        wvq_i = jnp.zeros((OA_DIM, QV_DIM), jnp.float32)
        wvq_i = wvq_i.at[:, :OA_DIM].set(oa['v_w'].T)
        wvq_i = wvq_i.at[:, OA_DIM:OA_DIM + Q_DIM].set(oa['q_w'].T)
        bvq_i = jnp.zeros((QV_DIM,), jnp.float32).at[:OA_DIM].set(oa['v_b'])
        so, bo = bn_sb(oa['bn'])
        wt_i = oa['t_w'].T * so[None, :]
        bt_i = oa['t_b'] * so + bo
        wvq.append(wvq_i); bvq.append(bvq_i); wt.append(wt_i); bt.append(bt_i)

    sl, bl = bn_sb(raw['bnl'])
    wl5 = (raw['l_w'].T * sl[None, :]).reshape(N_OA + 1, OA_DIM, OUT_DIM)

    return (w1, b1[None, :], w2, b2[None, :],
            jnp.stack(wvq), jnp.stack(bvq)[:, None, :],
            jnp.stack(wt), jnp.stack(bt)[:, None, :],
            wl5, bl[None, :])


# --------------------------------------------------------------------------- #
# Pure-JAX reference (torch math, raw params, eval-mode BN)
# --------------------------------------------------------------------------- #
def reference(x_bcn, raw):
    x = x_bcn.astype(jnp.float32)                             # [B, 3, N]

    def bn(y, p):
        s = p['gamma'] / jnp.sqrt(p['var'] + BN_EPS)
        return y * s[None, :, None] + (p['beta'] - p['mean'] * s)[None, :, None]

    def conv(y, w, b=None):
        o = jnp.einsum('oi,bin->bon', w, y)
        return o if b is None else o + b[None, :, None]

    f = jax.nn.relu(bn(conv(x, raw['c1_w']), raw['bn1']))
    f = jax.nn.relu(bn(conv(f, raw['c2_w']), raw['bn2']))
    feats = [f]
    cur = f
    for i in range(N_OA):
        oa = raw['oa'][i]
        xq = conv(cur, oa['q_w'])                             # q_conv == k_conv (shared)
        xv = conv(cur, oa['v_w'], oa['v_b'])
        energy = jnp.einsum('bqn,bqm->bnm', xq, xq)
        attn = jax.nn.softmax(energy, axis=-1)
        attn = attn / (1e-9 + jnp.sum(attn, axis=1, keepdims=True))
        x_r = jnp.einsum('bcn,bnm->bcm', xv, attn)
        t = jax.nn.relu(bn(conv(cur - x_r, oa['t_w'], oa['t_b']), oa['bn']))
        cur = cur + t
        feats.append(cur)
    cat = jnp.concatenate(feats, axis=1)                      # [B, 320, N]
    o = bn(conv(cat, raw['l_w']), raw['bnl'])
    o = jnp.where(o >= 0.0, o, 0.2 * o)
    return o, jnp.max(o, axis=-1), jnp.mean(o, axis=-1)


# --------------------------------------------------------------------------- #
if __name__ == "__main__":
    key = jax.random.PRNGKey(0)
    kx, kp = jax.random.split(key)
    B, N = 2, 64
    x = jax.random.normal(kx, (B, 3, N), dtype=jnp.float32)   # PyTorch layout [B, 3, N]

    raw = init_raw_params(kp)
    params = fold_params(raw)

    out, xmax, xmean = pct_nr_forward(x, params)
    jax.block_until_ready((out, xmax, xmean))

    ro, rmax, rmean = reference(x, raw)
    assert jnp.allclose(out, ro, atol=2e-4, rtol=2e-4), float(jnp.max(jnp.abs(out - ro)))
    assert jnp.allclose(xmax, rmax, atol=2e-4, rtol=2e-4)
    assert jnp.allclose(xmean, rmean, atol=2e-4, rtol=2e-4)

    print("KERNEL_OK")
</pallas_src>

<mosaic_0001>
module attributes {stable_mosaic.version = 11 : i64} {
  func.func @_pct_nr_kernel(%arg0: i32, %arg1: memref<1x128x3xf32, #tpu.memory_space<vmem>>, %arg2: memref<3x64xf32, #tpu.memory_space<vmem>>, %arg3: memref<1x64xf32, #tpu.memory_space<vmem>>, %arg4: memref<64x64xf32, #tpu.memory_space<vmem>>, %arg5: memref<1x64xf32, #tpu.memory_space<vmem>>, %arg6: memref<4x64x128xf32, #tpu.memory_space<vmem>>, %arg7: memref<4x1x128xf32, #tpu.memory_space<vmem>>, %arg8: memref<4x64x64xf32, #tpu.memory_space<vmem>>, %arg9: memref<4x1x64xf32, #tpu.memory_space<vmem>>, %arg10: memref<5x64x256xf32, #tpu.memory_space<vmem>>, %arg11: memref<1x256xf32, #tpu.memory_space<vmem>>, %arg12: memref<2x256x64xf32, #tpu.memory_space<vmem>>, %arg13: memref<2x1x256xf32, #tpu.memory_space<vmem>>, %arg14: memref<2x1x256xf32, #tpu.memory_space<vmem>>) attributes {dimension_semantics = [#tpu.dimension_semantics<parallel>], iteration_bounds = array<i64: 1>, scalar_prefetch = 0 : i64, scratch_operands = 0 : i64, tpu.core_type = #tpu.core_type<tc>, window_params = [{transform_indices = @transform_0, window_bounds = array<i64: 1, 128, 3>}, {pipeline_mode = #tpu.pipeline_mode<synchronous>, transform_indices = @transform_1, window_bounds = array<i64: 3, 64>}, {pipeline_mode = #tpu.pipeline_mode<synchronous>, transform_indices = @transform_2, window_bounds = array<i64: 1, 64>}, {pipeline_mode = #tpu.pipeline_mode<synchronous>, transform_indices = @transform_3, window_bounds = array<i64: 64, 64>}, {pipeline_mode = #tpu.pipeline_mode<synchronous>, transform_indices = @transform_4, window_bounds = array<i64: 1, 64>}, {pipeline_mode = #tpu.pipeline_mode<synchronous>, transform_indices = @transform_5, window_bounds = array<i64: 4, 64, 128>}, {pipeline_mode = #tpu.pipeline_mode<synchronous>, transform_indices = @transform_6, window_bounds = array<i64: 4, 1, 128>}, {pipeline_mode = #tpu.pipeline_mode<synchronous>, transform_indices = @transform_7, window_bounds = array<i64: 4, 64, 64>}, {pipeline_mode = #tpu.pipeline_mode<synchronous>, transform_indices = @transform_8, window_bounds = array<i64: 4, 1, 64>}, {pipeline_mode = #tpu.pipeline_mode<synchronous>, transform_indices = @transform_9, window_bounds = array<i64: 5, 64, 256>}, {pipeline_mode = #tpu.pipeline_mode<synchronous>, transform_indices = @transform_10, window_bounds = array<i64: 1, 256>}, {transform_indices = @transform_11, window_bounds = array<i64: 2, 256, 64>}, {transform_indices = @transform_12, window_bounds = array<i64: 2, 1, 256>}, {transform_indices = @transform_13, window_bounds = array<i64: 2, 1, 256>}]} {
    %c0 = arith.constant 0 : index
    %c0_0 = arith.constant 0 : index
    %c0_1 = arith.constant 0 : index
    %0 = vector.load %arg1[%c0, %c0_0, %c0_1] : memref<1x128x3xf32, #tpu.memory_space<vmem>>, vector<1x128x3xf32>
    %1 = vector.shape_cast %0 : vector<1x128x3xf32> to vector<128x3xf32>
    %c0_2 = arith.constant 0 : index
    %c0_3 = arith.constant 0 : index
    %2 = vector.load %arg2[%c0_2, %c0_3] : memref<3x64xf32, #tpu.memory_space<vmem>>, vector<3x64xf32>
    %cst = arith.constant dense<0.000000e+00> : vector<128x64xf32>
    %3 = tpu.matmul %1, %2, %cst {dimension_numbers = #tpu.dot_dimension_numbers<[1], [0], [0], [1], [0, 0, 1, 1], [], []>} : vector<128x3xf32>, vector<3x64xf32>, vector<128x64xf32> -> vector<128x64xf32>
    %c0_4 = arith.constant 0 : index
    %c0_5 = arith.constant 0 : index
    %4 = vector.load %arg3[%c0_4, %c0_5] : memref<1x64xf32, #tpu.memory_space<vmem>>, vector<1x64xf32>
    %5 = vector.broadcast %4 : vector<1x64xf32> to vector<128x64xf32>
    %6 = arith.addf %3, %5 : vector<128x64xf32>
    %cst_6 = arith.constant 0.000000e+00 : f32
    %7 = vector.broadcast %cst_6 : f32 to vector<128x64xf32>
    %8 = arith.maximumf %6, %7 : vector<128x64xf32>
    %c0_7 = arith.constant 0 : index
    %c0_8 = arith.constant 0 : index
    %9 = vector.load %arg4[%c0_7, %c0_8] : memref<64x64xf32, #tpu.memory_space<vmem>>, vector<64x64xf32>
    %cst_9 = arith.constant dense<0.000000e+00> : vector<128x64xf32>
    %10 = tpu.matmul %8, %9, %cst_9 {dimension_numbers = #tpu.dot_dimension_numbers<[1], [0], [0], [1], [0, 0, 1, 1], [], []>} : vector<128x64xf32>, vector<64x64xf32>, vector<128x64xf32> -> vector<128x64xf32>
    %c0_10 = arith.constant 0 : index
    %c0_11 = arith.constant 0 : index
    %11 = vector.load %arg5[%c0_10, %c0_11] : memref<1x64xf32, #tpu.memory_space<vmem>>, vector<1x64xf32>
    %12 = vector.broadcast %11 : vector<1x64xf32> to vector<128x64xf32>
    %13 = arith.addf %10, %12 : vector<128x64xf32>
    %cst_12 = arith.constant 0.000000e+00 : f32
    %14 = vector.broadcast %cst_12 : f32 to vector<128x64xf32>
    %15 = arith.maximumf %13, %14 : vector<128x64xf32>
    %c0_13 = arith.constant 0 : index
    %c0_14 = arith.constant 0 : index
    %c0_15 = arith.constant 0 : index
    %16 = vector.load %arg10[%c0_13, %c0_14, %c0_15] : memref<5x64x256xf32, #tpu.memory_space<vmem>>, vector<1x64x256xf32>
    %17 = vector.shape_cast %16 : vector<1x64x256xf32> to vector<64x256xf32>
    %cst_16 = arith.constant dense<0.000000e+00> : vector<128x256xf32>
    %18 = tpu.matmul %15, %17, %cst_16 {dimension_numbers = #tpu.dot_dimension_numbers<[1], [0], [0], [1], [0, 0, 1, 1], [], []>} : vector<128x64xf32>, vector<64x256xf32>, vector<128x256xf32> -> vector<128x256xf32>
    %c0_17 = arith.constant 0 : index
    %c0_18 = arith.constant 0 : index
    %c0_19 = arith.constant 0 : index
    %19 = vector.load %arg6[%c0_17, %c0_18, %c0_19] : memref<4x64x128xf32, #tpu.memory_space<vmem>>, vector<1x64x128xf32>
    %20 = vector.shape_cast %19 : vector<1x64x128xf32> to vector<64x128xf32>
    %cst_20 = arith.constant dense<0.000000e+00> : vector<128x128xf32>
    %21 = tpu.matmul %15, %20, %cst_20 {dimension_numbers = #tpu.dot_dimension_numbers<[1], [0], [0], [1], [0, 0, 1, 1], [], []>} : vector<128x64xf32>, vector<64x128xf32>, vector<128x128xf32> -> vector<128x128xf32>
    %c0_21 = arith.constant 0 : index
    %c0_22 = arith.constant 0 : index
    %c0_23 = arith.constant 0 : index
    %22 = vector.load %arg7[%c0_21, %c0_22, %c0_23] : memref<4x1x128xf32, #tpu.memory_space<vmem>>, vector<1x1x128xf32>
    %23 = vector.shape_cast %22 : vector<1x1x128xf32> to vector<1x128xf32>
    %24 = vector.broadcast %23 : vector<1x128xf32> to vector<128x128xf32>
    %25 = arith.addf %21, %24 : vector<128x128xf32>
    %26 = vector.extract_strided_slice %25 {offsets = [0, 0], sizes = [128, 64], strides = [1, 1]} : vector<128x128xf32> to vector<128x64xf32>
    %27 = vector.extract_strided_slice %25 {offsets = [0, 64], sizes = [128, 64], strides = [1, 1]} : vector<128x128xf32> to vector<128x64xf32>
    %28 = vector.extract_strided_slice %27 {offsets = [0, 0], sizes = [64, 64], strides = [1, 1]} : vector<128x64xf32> to vector<64x64xf32>
    %29 = vector.extract_strided_slice %26 {offsets = [0, 0], sizes = [64, 64], strides = [1, 1]} : vector<128x64xf32> to vector<64x64xf32>
    %30 = vector.extract_strided_slice %15 {offsets = [0, 0], sizes = [64, 64], strides = [1, 1]} : vector<128x64xf32> to vector<64x64xf32>
    %cst_24 = arith.constant dense<0.000000e+00> : vector<64x64xf32>
    %31 = tpu.matmul %28, %28, %cst_24 {dimension_numbers = #tpu.dot_dimension_numbers<[1], [1], [0], [0], [0, 0, 1, 0], [], []>} : vector<64x64xf32>, vector<64x64xf32>, vector<64x64xf32> -> vector<64x64xf32>
    %cst_25 = arith.constant dense<0xFF800000> : vector<64xf32>
    %32 = vector.multi_reduction <maximumf>, %31, %cst_25 [1] : vector<64x64xf32> to vector<64xf32>
    %33 = vector.shape_cast %32 : vector<64xf32> to vector<64x1xf32>
    %cst_26 = arith.constant dense<0xFF800000> : vector<1xf32>
    %34 = vector.multi_reduction <maximumf>, %33, %cst_26 [0] : vector<64x1xf32> to vector<1xf32>
    %35 = vector.shape_cast %34 : vector<1xf32> to vector<1x1xf32>
    %36 = vector.broadcast %35 : vector<1x1xf32> to vector<64x64xf32>
    %37 = arith.subf %31, %36 : vector<64x64xf32>
    %38 = math.exp %37 : vector<64x64xf32>
    %cst_27 = arith.constant dense<0.000000e+00> : vector<64xf32>
    %39 = vector.multi_reduction <add>, %38, %cst_27 [0] : vector<64x64xf32> to vector<64xf32>
    %40 = vector.shape_cast %39 : vector<64xf32> to vector<1x64xf32>
    %41 = tpu.reciprocal %40 : vector<1x64xf32> -> vector<1x64xf32>
    %42 = vector.broadcast %41 : vector<1x64xf32> to vector<64x64xf32>
    %43 = arith.mulf %38, %42 : vector<64x64xf32>
    %cst_28 = arith.constant dense<0.000000e+00> : vector<64xf32>
    %44 = vector.multi_reduction <add>, %43, %cst_28 [1] : vector<64x64xf32> to vector<64xf32>
    %45 = vector.shape_cast %44 : vector<64xf32> to vector<64x1xf32>
    %cst_29 = arith.constant 9.99999971E-10 : f32
    %46 = vector.broadcast %cst_29 : f32 to vector<64x1xf32>
    %47 = arith.addf %46, %45 : vector<64x1xf32>
    %48 = tpu.reciprocal %47 : vector<64x1xf32> -> vector<64x1xf32>
    %49 = vector.broadcast %48 : vector<64x1xf32> to vector<64x64xf32>
    %50 = arith.mulf %43, %49 : vector<64x64xf32>
    %cst_30 = arith.constant dense<0.000000e+00> : vector<64x64xf32>
    %51 = tpu.matmul %50, %29, %cst_30 {dimension_numbers = #tpu.dot_dimension_numbers<[1], [0], [0], [1], [0, 0, 1, 1], [], []>} : vector<64x64xf32>, vector<64x64xf32>, vector<64x64xf32> -> vector<64x64xf32>
    %52 = arith.subf %30, %51 : vector<64x64xf32>
    %53 = vector.extract_strided_slice %27 {offsets = [64, 0], sizes = [64, 64], strides = [1, 1]} : vector<128x64xf32> to vector<64x64xf32>
    %54 = vector.extract_strided_slice %26 {offsets = [64, 0], sizes = [64, 64], strides = [1, 1]} : vector<128x64xf32> to vector<64x64xf32>
    %55 = vector.extract_strided_slice %15 {offsets = [64, 0], sizes = [64, 64], strides = [1, 1]} : vector<128x64xf32> to vector<64x64xf32>
    %cst_31 = arith.constant dense<0.000000e+00> : vector<64x64xf32>
    %56 = tpu.matmul %53, %53, %cst_31 {dimension_numbers = #tpu.dot_dimension_numbers<[1], [1], [0], [0], [0, 0, 1, 0], [], []>} : vector<64x64xf32>, vector<64x64xf32>, vector<64x64xf32> -> vector<64x64xf32>
    %cst_32 = arith.constant dense<0xFF800000> : vector<64xf32>
    %57 = vector.multi_reduction <maximumf>, %56, %cst_32 [1] : vector<64x64xf32> to vector<64xf32>
    %58 = vector.shape_cast %57 : vector<64xf32> to vector<64x1xf32>
    %cst_33 = arith.constant dense<0xFF800000> : vector<1xf32>
    %59 = vector.multi_reduction <maximumf>, %58, %cst_33 [0] : vector<64x1xf32> to vector<1xf32>
    %60 = vector.shape_cast %59 : vector<1xf32> to vector<1x1xf32>
    %61 = vector.broadcast %60 : vector<1x1xf32> to vector<64x64xf32>
    %62 = arith.subf %56, %61 : vector<64x64xf32>
    %63 = math.exp %62 : vector<64x64xf32>
    %cst_34 = arith.constant dense<0.000000e+00> : vector<64xf32>
    %64 = vector.multi_reduction <add>, %63, %cst_34 [0] : vector<64x64xf32> to vector<64xf32>
    %65 = vector.shape_cast %64 : vector<64xf32> to vector<1x64xf32>
    %66 = tpu.reciprocal %65 : vector<1x64xf32> -> vector<1x64xf32>
    %67 = vector.broadcast %66 : vector<1x64xf32> to vector<64x64xf32>
    %68 = arith.mulf %63, %67 : vector<64x64xf32>
    %cst_35 = arith.constant dense<0.000000e+00> : vector<64xf32>
    %69 = vector.multi_reduction <add>, %68, %cst_35 [1] : vector<64x64xf32> to vector<64xf32>
    %70 = vector.shape_cast %69 : vector<64xf32> to vector<64x1xf32>
    %cst_36 = arith.constant 9.99999971E-10 : f32
    %71 = vector.broadcast %cst_36 : f32 to vector<64x1xf32>
    %72 = arith.addf %71, %70 : vector<64x1xf32>
    %73 = tpu.reciprocal %72 : vector<64x1xf32> -> vector<64x1xf32>
    %74 = vector.broadcast %73 : vector<64x1xf32> to vector<64x64xf32>
    %75 = arith.mulf %68, %74 : vector<64x64xf32>
    %cst_37 = arith.constant dense<0.000000e+00> : vector<64x64xf32>
    %76 = tpu.matmul %75, %54, %cst_37 {dimension_numbers = #tpu.dot_dimension_numbers<[1], [0], [0], [1], [0, 0, 1, 1], [], []>} : vector<64x64xf32>, vector<64x64xf32>, vector<64x64xf32> -> vector<64x64xf32>
    %77 = arith.subf %55, %76 : vector<64x64xf32>
    %78 = tpu.concatenate %52, %77 in 0 : vector<64x64xf32>, vector<64x64xf32> -> vector<128x64xf32>
    %c0_38 = arith.constant 0 : index
    %c0_39 = arith.constant 0 : index
    %c0_40 = arith.constant 0 : index
    %79 = vector.load %arg8[%c0_38, %c0_39, %c0_40] : memref<4x64x64xf32, #tpu.memory_space<vmem>>, vector<1x64x64xf32>
    %80 = vector.shape_cast %79 : vector<1x64x64xf32> to vector<64x64xf32>
    %cst_41 = arith.constant dense<0.000000e+00> : vector<128x64xf32>
    %81 = tpu.matmul %78, %80, %cst_41 {dimension_numbers = #tpu.dot_dimension_numbers<[1], [0], [0], [1], [0, 0, 1, 1], [], []>} : vector<128x64xf32>, vector<64x64xf32>, vector<128x64xf32> -> vector<128x64xf32>
    %c0_42 = arith.constant 0 : index
    %c0_43 = arith.constant 0 : index
    %c0_44 = arith.constant 0 : index
    %82 = vector.load %arg9[%c0_42, %c0_43, %c0_44] : memref<4x1x64xf32, #tpu.memory_space<vmem>>, vector<1x1x64xf32>
    %83 = vector.shape_cast %82 : vector<1x1x64xf32> to vector<1x64xf32>
    %84 = vector.broadcast %83 : vector<1x64xf32> to vector<128x64xf32>
    %85 = arith.addf %81, %84 : vector<128x64xf32>
    %cst_45 = arith.constant 0.000000e+00 : f32
    %86 = vector.broadcast %cst_45 : f32 to vector<128x64xf32>
    %87 = arith.maximumf %85, %86 : vector<128x64xf32>
    %88 = arith.addf %15, %87 : vector<128x64xf32>
    %c1 = arith.constant 1 : index
    %c0_46 = arith.constant 0 : index
    %c0_47 = arith.constant 0 : index
    %89 = vector.load %arg10[%c1, %c0_46, %c0_47] : memref<5x64x256xf32, #tpu.memory_space<vmem>>, vector<1x64x256xf32>
    %90 = vector.shape_cast %89 : vector<1x64x256xf32> to vector<64x256xf32>
    %cst_48 = arith.constant dense<0.000000e+00> : vector<128x256xf32>
    %91 = tpu.matmul %88, %90, %cst_48 {dimension_numbers = #tpu.dot_dimension_numbers<[1], [0], [0], [1], [0, 0, 1, 1], [], []>} : vector<128x64xf32>, vector<64x256xf32>, vector<128x256xf32> -> vector<128x256xf32>
    %92 = arith.addf %18, %91 : vector<128x256xf32>
    %c1_49 = arith.constant 1 : index
    %c0_50 = arith.constant 0 : index
    %c0_51 = arith.constant 0 : index
    %93 = vector.load %arg6[%c1_49, %c0_50, %c0_51] : memref<4x64x128xf32, #tpu.memory_space<vmem>>, vector<1x64x128xf32>
    %94 = vector.shape_cast %93 : vector<1x64x128xf32> to vector<64x128xf32>
    %cst_52 = arith.constant dense<0.000000e+00> : vector<128x128xf32>
    %95 = tpu.matmul %88, %94, %cst_52 {dimension_numbers = #tpu.dot_dimension_numbers<[1], [0], [0], [1], [0, 0, 1, 1], [], []>} : vector<128x64xf32>, vector<64x128xf32>, vector<128x128xf32> -> vector<128x128xf32>
    %c1_53 = arith.constant 1 : index
    %c0_54 = arith.constant 0 : index
    %c0_55 = arith.constant 0 : index
    %96 = vector.load %arg7[%c1_53, %c0_54, %c0_55] : memref<4x1x128xf32, #tpu.memory_space<vmem>>, vector<1x1x128xf32>
    %97 = vector.shape_cast %96 : vector<1x1x128xf32> to vector<1x128xf32>
    %98 = vector.broadcast %97 : vector<1x128xf32> to vector<128x128xf32>
    %99 = arith.addf %95, %98 : vector<128x128xf32>
    %100 = vector.extract_strided_slice %99 {offsets = [0, 0], sizes = [128, 64], strides = [1, 1]} : vector<128x128xf32> to vector<128x64xf32>
    %101 = vector.extract_strided_slice %99 {offsets = [0, 64], sizes = [128, 64], strides = [1, 1]} : vector<128x128xf32> to vector<128x64xf32>
    %102 = vector.extract_strided_slice %101 {offsets = [0, 0], sizes = [64, 64], strides = [1, 1]} : vector<128x64xf32> to vector<64x64xf32>
    %103 = vector.extract_strided_slice %100 {offsets = [0, 0], sizes = [64, 64], strides = [1, 1]} : vector<128x64xf32> to vector<64x64xf32>
    %104 = vector.extract_strided_slice %88 {offsets = [0, 0], sizes = [64, 64], strides = [1, 1]} : vector<128x64xf32> to vector<64x64xf32>
    %cst_56 = arith.constant dense<0.000000e+00> : vector<64x64xf32>
    %105 = tpu.matmul %102, %102, %cst_56 {dimension_numbers = #tpu.dot_dimension_numbers<[1], [1], [0], [0], [0, 0, 1, 0], [], []>} : vector<64x64xf32>, vector<64x64xf32>, vector<64x64xf32> -> vector<64x64xf32>
    %cst_57 = arith.constant dense<0xFF800000> : vector<64xf32>
    %106 = vector.multi_reduction <maximumf>, %105, %cst_57 [1] : vector<64x64xf32> to vector<64xf32>
    %107 = vector.shape_cast %106 : vector<64xf32> to vector<64x1xf32>
    %cst_58 = arith.constant dense<0xFF800000> : vector<1xf32>
    %108 = vector.multi_reduction <maximumf>, %107, %cst_58 [0] : vector<64x1xf32> to vector<1xf32>
    %109 = vector.shape_cast %108 : vector<1xf32> to vector<1x1xf32>
    %110 = vector.broadcast %109 : vector<1x1xf32> to vector<64x64xf32>
    %111 = arith.subf %105, %110 : vector<64x64xf32>
    %112 = math.exp %111 : vector<64x64xf32>
    %cst_59 = arith.constant dense<0.000000e+00> : vector<64xf32>
    %113 = vector.multi_reduction <add>, %112, %cst_59 [0] : vector<64x64xf32> to vector<64xf32>
    %114 = vector.shape_cast %113 : vector<64xf32> to vector<1x64xf32>
    %115 = tpu.reciprocal %114 : vector<1x64xf32> -> vector<1x64xf32>
    %116 = vector.broadcast %115 : vector<1x64xf32> to vector<64x64xf32>
    %117 = arith.mulf %112, %116 : vector<64x64xf32>
    %cst_60 = arith.constant dense<0.000000e+00> : vector<64xf32>
    %118 = vector.multi_reduction <add>, %117, %cst_60 [1] : vector<64x64xf32> to vector<64xf32>
    %119 = vector.shape_cast %118 : vector<64xf32> to vector<64x1xf32>
    %cst_61 = arith.constant 9.99999971E-10 : f32
    %120 = vector.broadcast %cst_61 : f32 to vector<64x1xf32>
    %121 = arith.addf %120, %119 : vector<64x1xf32>
    %122 = tpu.reciprocal %121 : vector<64x1xf32> -> vector<64x1xf32>
    %123 = vector.broadcast %122 : vector<64x1xf32> to vector<64x64xf32>
    %124 = arith.mulf %117, %123 : vector<64x64xf32>
    %cst_62 = arith.constant dense<0.000000e+00> : vector<64x64xf32>
    %125 = tpu.matmul %124, %103, %cst_62 {dimension_numbers = #tpu.dot_dimension_numbers<[1], [0], [0], [1], [0, 0, 1, 1], [], []>} : vector<64x64xf32>, vector<64x64xf32>, vector<64x64xf32> -> vector<64x64xf32>
    %126 = arith.subf %104, %125 : vector<64x64xf32>
    %127 = vector.extract_strided_slice %101 {offsets = [64, 0], sizes = [64, 64], strides = [1, 1]} : vector<128x64xf32> to vector<64x64xf32>
    %128 = vector.extract_strided_slice %100 {offsets = [64, 0], sizes = [64, 64], strides = [1, 1]} : vector<128x64xf32> to vector<64x64xf32>
    %129 = vector.extract_strided_slice %88 {offsets = [64, 0], sizes = [64, 64], strides = [1, 1]} : vector<128x64xf32> to vector<64x64xf32>
    %cst_63 = arith.constant dense<0.000000e+00> : vector<64x64xf32>
    %130 = tpu.matmul %127, %127, %cst_63 {dimension_numbers = #tpu.dot_dimension_numbers<[1], [1], [0], [0], [0, 0, 1, 0], [], []>} : vector<64x64xf32>, vector<64x64xf32>, vector<64x64xf32> -> vector<64x64xf32>
    %cst_64 = arith.constant dense<0xFF800000> : vector<64xf32>
    %131 = vector.multi_reduction <maximumf>, %130, %cst_64 [1] : vector<64x64xf32> to vector<64xf32>
    %132 = vector.shape_cast %131 : vector<64xf32> to vector<64x1xf32>
    %cst_65 = arith.constant dense<0xFF800000> : vector<1xf32>
    %133 = vector.multi_reduction <maximumf>, %132, %cst_65 [0] : vector<64x1xf32> to vector<1xf32>
    %134 = vector.shape_cast %133 : vector<1xf32> to vector<1x1xf32>
    %135 = vector.broadcast %134 : vector<1x1xf32> to vector<64x64xf32>
    %136 = arith.subf %130, %135 : vector<64x64xf32>
    %137 = math.exp %136 : vector<64x64xf32>
    %cst_66 = arith.constant dense<0.000000e+00> : vector<64xf32>
    %138 = vector.multi_reduction <add>, %137, %cst_66 [0] : vector<64x64xf32> to vector<64xf32>
    %139 = vector.shape_cast %138 : vector<64xf32> to vector<1x64xf32>
    %140 = tpu.reciprocal %139 : vector<1x64xf32> -> vector<1x64xf32>
    %141 = vector.broadcast %140 : vector<1x64xf32> to vector<64x64xf32>
    %142 = arith.mulf %137, %141 : vector<64x64xf32>
    %cst_67 = arith.constant dense<0.000000e+00> : vector<64xf32>
    %143 = vector.multi_reduction <add>, %142, %cst_67 [1] : vector<64x64xf32> to vector<64xf32>
    %144 = vector.shape_cast %143 : vector<64xf32> to vector<64x1xf32>
    %cst_68 = arith.constant 9.99999971E-10 : f32
    %145 = vector.broadcast %cst_68 : f32 to vector<64x1xf32>
    %146 = arith.addf %145, %144 : vector<64x1xf32>
    %147 = tpu.reciprocal %146 : vector<64x1xf32> -> vector<64x1xf32>
    %148 = vector.broadcast %147 : vector<64x1xf32> to vector<64x64xf32>
    %149 = arith.mulf %142, %148 : vector<64x64xf32>
    %cst_69 = arith.constant dense<0.000000e+00> : vector<64x64xf32>
    %150 = tpu.matmul %149, %128, %cst_69 {dimension_numbers = #tpu.dot_dimension_numbers<[1], [0], [0], [1], [0, 0, 1, 1], [], []>} : vector<64x64xf32>, vector<64x64xf32>, vector<64x64xf32> -> vector<64x64xf32>
    %151 = arith.subf %129, %150 : vector<64x64xf32>
    %152 = tpu.concatenate %126, %151 in 0 : vector<64x64xf32>, vector<64x64xf32> -> vector<128x64xf32>
    %c1_70 = arith.constant 1 : index
    %c0_71 = arith.constant 0 : index
    %c0_72 = arith.constant 0 : index
    %153 = vector.load %arg8[%c1_70, %c0_71, %c0_72] : memref<4x64x64xf32, #tpu.memory_space<vmem>>, vector<1x64x64xf32>
    %154 = vector.shape_cast %153 : vector<1x64x64xf32> to vector<64x64xf32>
    %cst_73 = arith.constant dense<0.000000e+00> : vector<128x64xf32>
    %155 = tpu.matmul %152, %154, %cst_73 {dimension_numbers = #tpu.dot_dimension_numbers<[1], [0], [0], [1], [0, 0, 1, 1], [], []>} : vector<128x64xf32>, vector<64x64xf32>, vector<128x64xf32> -> vector<128x64xf32>
    %c1_74 = arith.constant 1 : index
    %c0_75 = arith.constant 0 : index
    %c0_76 = arith.constant 0 : index
    %156 = vector.load %arg9[%c1_74, %c0_75, %c0_76] : memref<4x1x64xf32, #tpu.memory_space<vmem>>, vector<1x1x64xf32>
    %157 = vector.shape_cast %156 : vector<1x1x64xf32> to vector<1x64xf32>
    %158 = vector.broadcast %157 : vector<1x64xf32> to vector<128x64xf32>
    %159 = arith.addf %155, %158 : vector<128x64xf32>
    %cst_77 = arith.constant 0.000000e+00 : f32
    %160 = vector.broadcast %cst_77 : f32 to vector<128x64xf32>
    %161 = arith.maximumf %159, %160 : vector<128x64xf32>
    %162 = arith.addf %88, %161 : vector<128x64xf32>
    %c2 = arith.constant 2 : index
    %c0_78 = arith.constant 0 : index
    %c0_79 = arith.constant 0 : index
    %163 = vector.load %arg10[%c2, %c0_78, %c0_79] : memref<5x64x256xf32, #tpu.memory_space<vmem>>, vector<1x64x256xf32>
    %164 = vector.shape_cast %163 : vector<1x64x256xf32> to vector<64x256xf32>
    %cst_80 = arith.constant dense<0.000000e+00> : vector<128x256xf32>
    %165 = tpu.matmul %162, %164, %cst_80 {dimension_numbers = #tpu.dot_dimension_numbers<[1], [0], [0], [1], [0, 0, 1, 1], [], []>} : vector<128x64xf32>, vector<64x256xf32>, vector<128x256xf32> -> vector<128x256xf32>
    %166 = arith.addf %92, %165 : vector<128x256xf32>
    %c2_81 = arith.constant 2 : index
    %c0_82 = arith.constant 0 : index
    %c0_83 = arith.constant 0 : index
    %167 = vector.load %arg6[%c2_81, %c0_82, %c0_83] : memref<4x64x128xf32, #tpu.memory_space<vmem>>, vector<1x64x128xf32>
    %168 = vector.shape_cast %167 : vector<1x64x128xf32> to vector<64x128xf32>
    %cst_84 = arith.constant dense<0.000000e+00> : vector<128x128xf32>
    %169 = tpu.matmul %162, %168, %cst_84 {dimension_numbers = #tpu.dot_dimension_numbers<[1], [0], [0], [1], [0, 0, 1, 1], [], []>} : vector<128x64xf32>, vector<64x128xf32>, vector<128x128xf32> -> vector<128x128xf32>
    %c2_85 = arith.constant 2 : index
    %c0_86 = arith.constant 0 : index
    %c0_87 = arith.constant 0 : index
    %170 = vector.load %arg7[%c2_85, %c0_86, %c0_87] : memref<4x1x128xf32, #tpu.memory_space<vmem>>, vector<1x1x128xf32>
    %171 = vector.shape_cast %170 : vector<1x1x128xf32> to vector<1x128xf32>
    %172 = vector.broadcast %171 : vector<1x128xf32> to vector<128x128xf32>
    %173 = arith.addf %169, %172 : vector<128x128xf32>
    %174 = vector.extract_strided_slice %173 {offsets = [0, 0], sizes = [128, 64], strides = [1, 1]} : vector<128x128xf32> to vector<128x64xf32>
    %175 = vector.extract_strided_slice %173 {offsets = [0, 64], sizes = [128, 64], strides = [1, 1]} : vector<128x128xf32> to vector<128x64xf32>
    %176 = vector.extract_strided_slice %175 {offsets = [0, 0], sizes = [64, 64], strides = [1, 1]} : vector<128x64xf32> to vector<64x64xf32>
    %177 = vector.extract_strided_slice %174 {offsets = [0, 0], sizes = [64, 64], strides = [1, 1]} : vector<128x64xf32> to vector<64x64xf32>
    %178 = vector.extract_strided_slice %162 {offsets = [0, 0], sizes = [64, 64], strides = [1, 1]} : vector<128x64xf32> to vector<64x64xf32>
    %cst_88 = arith.constant dense<0.000000e+00> : vector<64x64xf32>
    %179 = tpu.matmul %176, %176, %cst_88 {dimension_numbers = #tpu.dot_dimension_numbers<[1], [1], [0], [0], [0, 0, 1, 0], [], []>} : vector<64x64xf32>, vector<64x64xf32>, vector<64x64xf32> -> vector<64x64xf32>
    %cst_89 = arith.constant dense<0xFF800000> : vector<64xf32>
    %180 = vector.multi_reduction <maximumf>, %179, %cst_89 [1] : vector<64x64xf32> to vector<64xf32>
    %181 = vector.shape_cast %180 : vector<64xf32> to vector<64x1xf32>
    %cst_90 = arith.constant dense<0xFF800000> : vector<1xf32>
    %182 = vector.multi_reduction <maximumf>, %181, %cst_90 [0] : vector<64x1xf32> to vector<1xf32>
    %183 = vector.shape_cast %182 : vector<1xf32> to vector<1x1xf32>
    %184 = vector.broadcast %183 : vector<1x1xf32> to vector<64x64xf32>
    %185 = arith.subf %179, %184 : vector<64x64xf32>
    %186 = math.exp %185 : vector<64x64xf32>
    %cst_91 = arith.constant dense<0.000000e+00> : vector<64xf32>
    %187 = vector.multi_reduction <add>, %186, %cst_91 [0] : vector<64x64xf32> to vector<64xf32>
    %188 = vector.shape_cast %187 : vector<64xf32> to vector<1x64xf32>
    %189 = tpu.reciprocal %188 : vector<1x64xf32> -> vector<1x64xf32>
    %190 = vector.broadcast %189 : vector<1x64xf32> to vector<64x64xf32>
    %191 = arith.mulf %186, %190 : vector<64x64xf32>
    %cst_92 = arith.constant dense<0.000000e+00> : vector<64xf32>
    %192 = vector.multi_reduction <add>, %191, %cst_92 [1] : vector<64x64xf32> to vector<64xf32>
    %193 = vector.shape_cast %192 : vector<64xf32> to vector<64x1xf32>
    %cst_93 = arith.constant 9.99999971E-10 : f32
    %194 = vector.broadcast %cst_93 : f32 to vector<64x1xf32>
    %195 = arith.addf %194, %193 : vector<64x1xf32>
    %196 = tpu.reciprocal %195 : vector<64x1xf32> -> vector<64x1xf32>
    %197 = vector.broadcast %196 : vector<64x1xf32> to vector<64x64xf32>
    %198 = arith.mulf %191, %197 : vector<64x64xf32>
    %cst_94 = arith.constant dense<0.000000e+00> : vector<64x64xf32>
    %199 = tpu.matmul %198, %177, %cst_94 {dimension_numbers = #tpu.dot_dimension_numbers<[1], [0], [0], [1], [0, 0, 1, 1], [], []>} : vector<64x64xf32>, vector<64x64xf32>, vector<64x64xf32> -> vector<64x64xf32>
    %200 = arith.subf %178, %199 : vector<64x64xf32>
    %201 = vector.extract_strided_slice %175 {offsets = [64, 0], sizes = [64, 64], strides = [1, 1]} : vector<128x64xf32> to vector<64x64xf32>
    %202 = vector.extract_strided_slice %174 {offsets = [64, 0], sizes = [64, 64], strides = [1, 1]} : vector<128x64xf32> to vector<64x64xf32>
    %203 = vector.extract_strided_slice %162 {offsets = [64, 0], sizes = [64, 64], strides = [1, 1]} : vector<128x64xf32> to vector<64x64xf32>
    %cst_95 = arith.constant dense<0.000000e+00> : vector<64x64xf32>
    %204 = tpu.matmul %201, %201, %cst_95 {dimension_numbers = #tpu.dot_dimension_numbers<[1], [1], [0], [0], [0, 0, 1, 0], [], []>} : vector<64x64xf32>, vector<64x64xf32>, vector<64x64xf32> -> vector<64x64xf32>
    %cst_96 = arith.constant dense<0xFF800000> : vector<64xf32>
    %205 = vector.multi_reduction <maximumf>, %204, %cst_96 [1] : vector<64x64xf32> to vector<64xf32>
    %206 = vector.shape_cast %205 : vector<64xf32> to vector<64x1xf32>
    %cst_97 = arith.constant dense<0xFF800000> : vector<1xf32>
    %207 = vector.multi_reduction <maximumf>, %206, %cst_97 [0] : vector<64x1xf32> to vector<1xf32>
    %208 = vector.shape_cast %207 : vector<1xf32> to vector<1x1xf32>
    %209 = vector.broadcast %208 : vector<1x1xf32> to vector<64x64xf32>
    %210 = arith.subf %204, %209 : vector<64x64xf32>
    %211 = math.exp %210 : vector<64x64xf32>
    %cst_98 = arith.constant dense<0.000000e+00> : vector<64xf32>
    %212 = vector.multi_reduction <add>, %211, %cst_98 [0] : vector<64x64xf32> to vector<64xf32>
    %213 = vector.shape_cast %212 : vector<64xf32> to vector<1x64xf32>
    %214 = tpu.reciprocal %213 : vector<1x64xf32> -> vector<1x64xf32>
    %215 = vector.broadcast %214 : vector<1x64xf32> to vector<64x64xf32>
    %216 = arith.mulf %211, %215 : vector<64x64xf32>
    %cst_99 = arith.constant dense<0.000000e+00> : vector<64xf32>
    %217 = vector.multi_reduction <add>, %216, %cst_99 [1] : vector<64x64xf32> to vector<64xf32>
    %218 = vector.shape_cast %217 : vector<64xf32> to vector<64x1xf32>
    %cst_100 = arith.constant 9.99999971E-10 : f32
    %219 = vector.broadcast %cst_100 : f32 to vector<64x1xf32>
    %220 = arith.addf %219, %218 : vector<64x1xf32>
    %221 = tpu.reciprocal %220 : vector<64x1xf32> -> vector<64x1xf32>
    %222 = vector.broadcast %221 : vector<64x1xf32> to vector<64x64xf32>
    %223 = arith.mulf %216, %222 : vector<64x64xf32>
    %cst_101 = arith.constant dense<0.000000e+00> : vector<64x64xf32>
    %224 = tpu.matmul %223, %202, %cst_101 {dimension_numbers = #tpu.dot_dimension_numbers<[1], [0], [0], [1], [0, 0, 1, 1], [], []>} : vector<64x64xf32>, vector<64x64xf32>, vector<64x64xf32> -> vector<64x64xf32>
    %225 = arith.subf %203, %224 : vector<64x64xf32>
    %226 = tpu.concatenate %200, %225 in 0 : vector<64x64xf32>, vector<64x64xf32> -> vector<128x64xf32>
    %c2_102 = arith.constant 2 : index
    %c0_103 = arith.constant 0 : index
    %c0_104 = arith.constant 0 : index
    %227 = vector.load %arg8[%c2_102, %c0_103, %c0_104] : memref<4x64x64xf32, #tpu.memory_space<vmem>>, vector<1x64x64xf32>
    %228 = vector.shape_cast %227 : vector<1x64x64xf32> to vector<64x64xf32>
    %cst_105 = arith.constant dense<0.000000e+00> : vector<128x64xf32>
    %229 = tpu.matmul %226, %228, %cst_105 {dimension_numbers = #tpu.dot_dimension_numbers<[1], [0], [0], [1], [0, 0, 1, 1], [], []>} : vector<128x64xf32>, vector<64x64xf32>, vector<128x64xf32> -> vector<128x64xf32>
    %c2_106 = arith.constant 2 : index
    %c0_107 = arith.constant 0 : index
    %c0_108 = arith.constant 0 : index
    %230 = vector.load %arg9[%c2_106, %c0_107, %c0_108] : memref<4x1x64xf32, #tpu.memory_space<vmem>>, vector<1x1x64xf32>
    %231 = vector.shape_cast %230 : vector<1x1x64xf32> to vector<1x64xf32>
    %232 = vector.broadcast %231 : vector<1x64xf32> to vector<128x64xf32>
    %233 = arith.addf %229, %232 : vector<128x64xf32>
    %cst_109 = arith.constant 0.000000e+00 : f32
    %234 = vector.broadcast %cst_109 : f32 to vector<128x64xf32>
    %235 = arith.maximumf %233, %234 : vector<128x64xf32>
    %236 = arith.addf %162, %235 : vector<128x64xf32>
    %c3 = arith.constant 3 : index
    %c0_110 = arith.constant 0 : index
    %c0_111 = arith.constant 0 : index
    %237 = vector.load %arg10[%c3, %c0_110, %c0_111] : memref<5x64x256xf32, #tpu.memory_space<vmem>>, vector<1x64x256xf32>
    %238 = vector.shape_cast %237 : vector<1x64x256xf32> to vector<64x256xf32>
    %cst_112 = arith.constant dense<0.000000e+00> : vector<128x256xf32>
    %239 = tpu.matmul %236, %238, %cst_112 {dimension_numbers = #tpu.dot_dimension_numbers<[1], [0], [0], [1], [0, 0, 1, 1], [], []>} : vector<128x64xf32>, vector<64x256xf32>, vector<128x256xf32> -> vector<128x256xf32>
    %240 = arith.addf %166, %239 : vector<128x256xf32>
    %c3_113 = arith.constant 3 : index
    %c0_114 = arith.constant 0 : index
    %c0_115 = arith.constant 0 : index
    %241 = vector.load %arg6[%c3_113, %c0_114, %c0_115] : memref<4x64x128xf32, #tpu.memory_space<vmem>>, vector<1x64x128xf32>
    %242 = vector.shape_cast %241 : vector<1x64x128xf32> to vector<64x128xf32>
    %cst_116 = arith.constant dense<0.000000e+00> : vector<128x128xf32>
    %243 = tpu.matmul %236, %242, %cst_116 {dimension_numbers = #tpu.dot_dimension_numbers<[1], [0], [0], [1], [0, 0, 1, 1], [], []>} : vector<128x64xf32>, vector<64x128xf32>, vector<128x128xf32> -> vector<128x128xf32>
    %c3_117 = arith.constant 3 : index
    %c0_118 = arith.constant 0 : index
    %c0_119 = arith.constant 0 : index
    %244 = vector.load %arg7[%c3_117, %c0_118, %c0_119] : memref<4x1x128xf32, #tpu.memory_space<vmem>>, vector<1x1x128xf32>
    %245 = vector.shape_cast %244 : vector<1x1x128xf32> to vector<1x128xf32>
    %246 = vector.broadcast %245 : vector<1x128xf32> to vector<128x128xf32>
    %247 = arith.addf %243, %246 : vector<128x128xf32>
    %248 = vector.extract_strided_slice %247 {offsets = [0, 0], sizes = [128, 64], strides = [1, 1]} : vector<128x128xf32> to vector<128x64xf32>
    %249 = vector.extract_strided_slice %247 {offsets = [0, 64], sizes = [128, 64], strides = [1, 1]} : vector<128x128xf32> to vector<128x64xf32>
    %250 = vector.extract_strided_slice %249 {offsets = [0, 0], sizes = [64, 64], strides = [1, 1]} : vector<128x64xf32> to vector<64x64xf32>
    %251 = vector.extract_strided_slice %248 {offsets = [0, 0], sizes = [64, 64], strides = [1, 1]} : vector<128x64xf32> to vector<64x64xf32>
    %252 = vector.extract_strided_slice %236 {offsets = [0, 0], sizes = [64, 64], strides = [1, 1]} : vector<128x64xf32> to vector<64x64xf32>
    %cst_120 = arith.constant dense<0.000000e+00> : vector<64x64xf32>
    %253 = tpu.matmul %250, %250, %cst_120 {dimension_numbers = #tpu.dot_dimension_numbers<[1], [1], [0], [0], [0, 0, 1, 0], [], []>} : vector<64x64xf32>, vector<64x64xf32>, vector<64x64xf32> -> vector<64x64xf32>
    %cst_121 = arith.constant dense<0xFF800000> : vector<64xf32>
    %254 = vector.multi_reduction <maximumf>, %253, %cst_121 [1] : vector<64x64xf32> to vector<64xf32>
    %255 = vector.shape_cast %254 : vector<64xf32> to vector<64x1xf32>
    %cst_122 = arith.constant dense<0xFF800000> : vector<1xf32>
    %256 = vector.multi_reduction <maximumf>, %255, %cst_122 [0] : vector<64x1xf32> to vector<1xf32>
    %257 = vector.shape_cast %256 : vector<1xf32> to vector<1x1xf32>
    %258 = vector.broadcast %257 : vector<1x1xf32> to vector<64x64xf32>
    %259 = arith.subf %253, %258 : vector<64x64xf32>
    %260 = math.exp %259 : vector<64x64xf32>
    %cst_123 = arith.constant dense<0.000000e+00> : vector<64xf32>
    %261 = vector.multi_reduction <add>, %260, %cst_123 [0] : vector<64x64xf32> to vector<64xf32>
    %262 = vector.shape_cast %261 : vector<64xf32> to vector<1x64xf32>
    %263 = tpu.reciprocal %262 : vector<1x64xf32> -> vector<1x64xf32>
    %264 = vector.broadcast %263 : vector<1x64xf32> to vector<64x64xf32>
    %265 = arith.mulf %260, %264 : vector<64x64xf32>
    %cst_124 = arith.constant dense<0.000000e+00> : vector<64xf32>
    %266 = vector.multi_reduction <add>, %265, %cst_124 [1] : vector<64x64xf32> to vector<64xf32>
    %267 = vector.shape_cast %266 : vector<64xf32> to vector<64x1xf32>
    %cst_125 = arith.constant 9.99999971E-10 : f32
    %268 = vector.broadcast %cst_125 : f32 to vector<64x1xf32>
    %269 = arith.addf %268, %267 : vector<64x1xf32>
    %270 = tpu.reciprocal %269 : vector<64x1xf32> -> vector<64x1xf32>
    %271 = vector.broadcast %270 : vector<64x1xf32> to vector<64x64xf32>
    %272 = arith.mulf %265, %271 : vector<64x64xf32>
    %cst_126 = arith.constant dense<0.000000e+00> : vector<64x64xf32>
    %273 = tpu.matmul %272, %251, %cst_126 {dimension_numbers = #tpu.dot_dimension_numbers<[1], [0], [0], [1], [0, 0, 1, 1], [], []>} : vector<64x64xf32>, vector<64x64xf32>, vector<64x64xf32> -> vector<64x64xf32>
    %274 = arith.subf %252, %273 : vector<64x64xf32>
    %275 = vector.extract_strided_slice %249 {offsets = [64, 0], sizes = [64, 64], strides = [1, 1]} : vector<128x64xf32> to vector<64x64xf32>
    %276 = vector.extract_strided_slice %248 {offsets = [64, 0], sizes = [64, 64], strides = [1, 1]} : vector<128x64xf32> to vector<64x64xf32>
    %277 = vector.extract_strided_slice %236 {offsets = [64, 0], sizes = [64, 64], strides = [1, 1]} : vector<128x64xf32> to vector<64x64xf32>
    %cst_127 = arith.constant dense<0.000000e+00> : vector<64x64xf32>
    %278 = tpu.matmul %275, %275, %cst_127 {dimension_numbers = #tpu.dot_dimension_numbers<[1], [1], [0], [0], [0, 0, 1, 0], [], []>} : vector<64x64xf32>, vector<64x64xf32>, vector<64x64xf32> -> vector<64x64xf32>
    %cst_128 = arith.constant dense<0xFF800000> : vector<64xf32>
    %279 = vector.multi_reduction <maximumf>, %278, %cst_128 [1] : vector<64x64xf32> to vector<64xf32>
    %280 = vector.shape_cast %279 : vector<64xf32> to vector<64x1xf32>
    %cst_129 = arith.constant dense<0xFF800000> : vector<1xf32>
    %281 = vector.multi_reduction <maximumf>, %280, %cst_129 [0] : vector<64x1xf32> to vector<1xf32>
    %282 = vector.shape_cast %281 : vector<1xf32> to vector<1x1xf32>
    %283 = vector.broadcast %282 : vector<1x1xf32> to vector<64x64xf32>
    %284 = arith.subf %278, %283 : vector<64x64xf32>
    %285 = math.exp %284 : vector<64x64xf32>
    %cst_130 = arith.constant dense<0.000000e+00> : vector<64xf32>
    %286 = vector.multi_reduction <add>, %285, %cst_130 [0] : vector<64x64xf32> to vector<64xf32>
    %287 = vector.shape_cast %286 : vector<64xf32> to vector<1x64xf32>
    %288 = tpu.reciprocal %287 : vector<1x64xf32> -> vector<1x64xf32>
    %289 = vector.broadcast %288 : vector<1x64xf32> to vector<64x64xf32>
    %290 = arith.mulf %285, %289 : vector<64x64xf32>
    %cst_131 = arith.constant dense<0.000000e+00> : vector<64xf32>
    %291 = vector.multi_reduction <add>, %290, %cst_131 [1] : vector<64x64xf32> to vector<64xf32>
    %292 = vector.shape_cast %291 : vector<64xf32> to vector<64x1xf32>
    %cst_132 = arith.constant 9.99999971E-10 : f32
    %293 = vector.broadcast %cst_132 : f32 to vector<64x1xf32>
    %294 = arith.addf %293, %292 : vector<64x1xf32>
    %295 = tpu.reciprocal %294 : vector<64x1xf32> -> vector<64x1xf32>
    %296 = vector.broadcast %295 : vector<64x1xf32> to vector<64x64xf32>
    %297 = arith.mulf %290, %296 : vector<64x64xf32>
    %cst_133 = arith.constant dense<0.000000e+00> : vector<64x64xf32>
    %298 = tpu.matmul %297, %276, %cst_133 {dimension_numbers = #tpu.dot_dimension_numbers<[1], [0], [0], [1], [0, 0, 1, 1], [], []>} : vector<64x64xf32>, vector<64x64xf32>, vector<64x64xf32> -> vector<64x64xf32>
    %299 = arith.subf %277, %298 : vector<64x64xf32>
    %300 = tpu.concatenate %274, %299 in 0 : vector<64x64xf32>, vector<64x64xf32> -> vector<128x64xf32>
    %c3_134 = arith.constant 3 : index
    %c0_135 = arith.constant 0 : index
    %c0_136 = arith.constant 0 : index
    %301 = vector.load %arg8[%c3_134, %c0_135, %c0_136] : memref<4x64x64xf32, #tpu.memory_space<vmem>>, vector<1x64x64xf32>
    %302 = vector.shape_cast %301 : vector<1x64x64xf32> to vector<64x64xf32>
    %cst_137 = arith.constant dense<0.000000e+00> : vector<128x64xf32>
    %303 = tpu.matmul %300, %302, %cst_137 {dimension_numbers = #tpu.dot_dimension_numbers<[1], [0], [0], [1], [0, 0, 1, 1], [], []>} : vector<128x64xf32>, vector<64x64xf32>, vector<128x64xf32> -> vector<128x64xf32>
    %c3_138 = arith.constant 3 : index
    %c0_139 = arith.constant 0 : index
    %c0_140 = arith.constant 0 : index
    %304 = vector.load %arg9[%c3_138, %c0_139, %c0_140] : memref<4x1x64xf32, #tpu.memory_space<vmem>>, vector<1x1x64xf32>
    %305 = vector.shape_cast %304 : vector<1x1x64xf32> to vector<1x64xf32>
    %306 = vector.broadcast %305 : vector<1x64xf32> to vector<128x64xf32>
    %307 = arith.addf %303, %306 : vector<128x64xf32>
    %cst_141 = arith.constant 0.000000e+00 : f32
    %308 = vector.broadcast %cst_141 : f32 to vector<128x64xf32>
    %309 = arith.maximumf %307, %308 : vector<128x64xf32>
    %310 = arith.addf %236, %309 : vector<128x64xf32>
    %c4 = arith.constant 4 : index
    %c0_142 = arith.constant 0 : index
    %c0_143 = arith.constant 0 : index
    %311 = vector.load %arg10[%c4, %c0_142, %c0_143] : memref<5x64x256xf32, #tpu.memory_space<vmem>>, vector<1x64x256xf32>
    %312 = vector.shape_cast %311 : vector<1x64x256xf32> to vector<64x256xf32>
    %cst_144 = arith.constant dense<0.000000e+00> : vector<128x256xf32>
    %313 = tpu.matmul %310, %312, %cst_144 {dimension_numbers = #tpu.dot_dimension_numbers<[1], [0], [0], [1], [0, 0, 1, 1], [], []>} : vector<128x64xf32>, vector<64x256xf32>, vector<128x256xf32> -> vector<128x256xf32>
    %314 = arith.addf %240, %313 : vector<128x256xf32>
    %c0_145 = arith.constant 0 : index
    %c0_146 = arith.constant 0 : index
    %315 = vector.load %arg11[%c0_145, %c0_146] : memref<1x256xf32, #tpu.memory_space<vmem>>, vector<1x256xf32>
    %316 = vector.broadcast %315 : vector<1x256xf32> to vector<128x256xf32>
    %317 = arith.addf %314, %316 : vector<128x256xf32>
    %cst_147 = arith.constant 0.000000e+00 : f32
    %318 = vector.broadcast %cst_147 : f32 to vector<128x256xf32>
    %319 = arith.cmpf oge, %317, %318 : vector<128x256xf32>
    %cst_148 = arith.constant 2.000000e-01 : f32
    %320 = vector.broadcast %cst_148 : f32 to vector<128x256xf32>
    %321 = arith.mulf %320, %317 : vector<128x256xf32>
    %322 = arith.select %319, %317, %321 : vector<128x256xi1>, vector<128x256xf32>
    %323 = vector.extract_strided_slice %322 {offsets = [0, 0], sizes = [64, 256], strides = [1, 1]} : vector<128x256xf32> to vector<64x256xf32>
    %324 = tpu.transpose %323, [1, 0] : vector<64x256xf32> -> vector<256x64xf32>
    %c0_149 = arith.constant 0 : index
    %c0_150 = arith.constant 0 : index
    %c0_151 = arith.constant 0 : index
    %325 = vector.load %arg12[%c0_149, %c0_150, %c0_151] : memref<2x256x64xf32, #tpu.memory_space<vmem>>, vector<1x256x64xf32>
    %326 = vector.shape_cast %325 : vector<1x256x64xf32> to vector<256x64xf32>
    %327 = vector.shape_cast %324 : vector<256x64xf32> to vector<1x256x64xf32>
    tpu.vector_store %arg12[%c0_149, %c0_150, %c0_151], %327 {strides = array<i32>} : memref<2x256x64xf32, #tpu.memory_space<vmem>>, vector<1x256x64xf32>,
    %cst_152 = arith.constant dense<0xFF800000> : vector<256xf32>
    %328 = vector.multi_reduction <maximumf>, %323, %cst_152 [0] : vector<64x256xf32> to vector<256xf32>
    %329 = vector.shape_cast %328 : vector<256xf32> to vector<1x256xf32>
    %c0_153 = arith.constant 0 : index
    %c0_154 = arith.constant 0 : index
    %c0_155 = arith.constant 0 : index
    %330 = vector.load %arg13[%c0_153, %c0_154, %c0_155] : memref<2x1x256xf32, #tpu.memory_space<vmem>>, vector<1x1x256xf32>
    %331 = vector.shape_cast %330 : vector<1x1x256xf32> to vector<1x256xf32>
    %332 = vector.shape_cast %329 : vector<1x256xf32> to vector<1x1x256xf32>
    tpu.vector_store %arg13[%c0_153, %c0_154, %c0_155], %332 {strides = array<i32>} : memref<2x1x256xf32, #tpu.memory_space<vmem>>, vector<1x1x256xf32>,
    %cst_156 = arith.constant dense<0.000000e+00> : vector<256xf32>
    %333 = vector.multi_reduction <add>, %323, %cst_156 [0] : vector<64x256xf32> to vector<256xf32>
    %334 = vector.shape_cast %333 : vector<256xf32> to vector<1x256xf32>
    %cst_157 = arith.constant 6.400000e+01 : f32
    %335 = vector.broadcast %cst_157 : f32 to vector<1x256xf32>
    %336 = arith.divf %334, %335 : vector<1x256xf32>
    %c0_158 = arith.constant 0 : index
    %c0_159 = arith.constant 0 : index
    %c0_160 = arith.constant 0 : index
    %337 = vector.load %arg14[%c0_158, %c0_159, %c0_160] : memref<2x1x256xf32, #tpu.memory_space<vmem>>, vector<1x1x256xf32>
    %338 = vector.shape_cast %337 : vector<1x1x256xf32> to vector<1x256xf32>
    %339 = vector.shape_cast %336 : vector<1x256xf32> to vector<1x1x256xf32>
    tpu.vector_store %arg14[%c0_158, %c0_159, %c0_160], %339 {strides = array<i32>} : memref<2x1x256xf32, #tpu.memory_space<vmem>>, vector<1x1x256xf32>,
    %340 = vector.extract_strided_slice %322 {offsets = [64, 0], sizes = [64, 256], strides = [1, 1]} : vector<128x256xf32> to vector<64x256xf32>
    %341 = tpu.transpose %340, [1, 0] : vector<64x256xf32> -> vector<256x64xf32>
    %c1_161 = arith.constant 1 : index
    %c0_162 = arith.constant 0 : index
    %c0_163 = arith.constant 0 : index
    %342 = vector.load %arg12[%c1_161, %c0_162, %c0_163] : memref<2x256x64xf32, #tpu.memory_space<vmem>>, vector<1x256x64xf32>
    %343 = vector.shape_cast %342 : vector<1x256x64xf32> to vector<256x64xf32>
    %344 = vector.shape_cast %341 : vector<256x64xf32> to vector<1x256x64xf32>
    tpu.vector_store %arg12[%c1_161, %c0_162, %c0_163], %344 {strides = array<i32>} : memref<2x256x64xf32, #tpu.memory_space<vmem>>, vector<1x256x64xf32>,
    %cst_164 = arith.constant dense<0xFF800000> : vector<256xf32>
    %345 = vector.multi_reduction <maximumf>, %340, %cst_164 [0] : vector<64x256xf32> to vector<256xf32>
    %346 = vector.shape_cast %345 : vector<256xf32> to vector<1x256xf32>
    %c1_165 = arith.constant 1 : index
    %c0_166 = arith.constant 0 : index
    %c0_167 = arith.constant 0 : index
    %347 = vector.load %arg13[%c1_165, %c0_166, %c0_167] : memref<2x1x256xf32, #tpu.memory_space<vmem>>, vector<1x1x256xf32>
    %348 = vector.shape_cast %347 : vector<1x1x256xf32> to vector<1x256xf32>
    %349 = vector.shape_cast %346 : vector<1x256xf32> to vector<1x1x256xf32>
    tpu.vector_store %arg13[%c1_165, %c0_166, %c0_167], %349 {strides = array<i32>} : memref<2x1x256xf32, #tpu.memory_space<vmem>>, vector<1x1x256xf32>,
    %cst_168 = arith.constant dense<0.000000e+00> : vector<256xf32>
    %350 = vector.multi_reduction <add>, %340, %cst_168 [0] : vector<64x256xf32> to vector<256xf32>
    %351 = vector.shape_cast %350 : vector<256xf32> to vector<1x256xf32>
    %cst_169 = arith.constant 6.400000e+01 : f32
    %352 = vector.broadcast %cst_169 : f32 to vector<1x256xf32>
    %353 = arith.divf %351, %352 : vector<1x256xf32>
    %c1_170 = arith.constant 1 : index
    %c0_171 = arith.constant 0 : index
    %c0_172 = arith.constant 0 : index
    %354 = vector.load %arg14[%c1_170, %c0_171, %c0_172] : memref<2x1x256xf32, #tpu.memory_space<vmem>>, vector<1x1x256xf32>
    %355 = vector.shape_cast %354 : vector<1x1x256xf32> to vector<1x256xf32>
    %356 = vector.shape_cast %353 : vector<1x256xf32> to vector<1x1x256xf32>
    tpu.vector_store %arg14[%c1_170, %c0_171, %c0_172], %356 {strides = array<i32>} : memref<2x1x256xf32, #tpu.memory_space<vmem>>, vector<1x1x256xf32>,
    return
  }
  func.func @transform_0(%arg0: i32) -> (i32, i32, i32) {
    %c0_i32 = arith.constant 0 : i32
    %c0_i32_0 = arith.constant 0 : i32
    %c0_i32_1 = arith.constant 0 : i32
    return %arg0, %c0_i32, %c0_i32_0 : i32, i32, i32
  }
  func.func @transform_1(%arg0: i32) -> (i32, i32) {
    %c0_i32 = arith.constant 0 : i32
    %c0_i32_0 = arith.constant 0 : i32
    %c0_i32_1 = arith.constant 0 : i32
    return %c0_i32, %c0_i32_0 : i32, i32
  }
  func.func @transform_2(%arg0: i32) -> (i32, i32) {
    %c0_i32 = arith.constant 0 : i32
    %c0_i32_0 = arith.constant 0 : i32
    %c0_i32_1 = arith.constant 0 : i32
    return %c0_i32, %c0_i32_0 : i32, i32
  }
  func.func @transform_3(%arg0: i32) -> (i32, i32) {
    %c0_i32 = arith.constant 0 : i32
    %c0_i32_0 = arith.constant 0 : i32
    %c0_i32_1 = arith.constant 0 : i32
    return %c0_i32, %c0_i32_0 : i32, i32
  }
  func.func @transform_4(%arg0: i32) -> (i32, i32) {
    %c0_i32 = arith.constant 0 : i32
    %c0_i32_0 = arith.constant 0 : i32
    %c0_i32_1 = arith.constant 0 : i32
    return %c0_i32, %c0_i32_0 : i32, i32
  }
  func.func @transform_5(%arg0: i32) -> (i32, i32, i32) {
    %c0_i32 = arith.constant 0 : i32
    %c0_i32_0 = arith.constant 0 : i32
    %c0_i32_1 = arith.constant 0 : i32
    %c0_i32_2 = arith.constant 0 : i32
    return %c0_i32, %c0_i32_0, %c0_i32_1 : i32, i32, i32
  }
  func.func @transform_6(%arg0: i32) -> (i32, i32, i32) {
    %c0_i32 = arith.constant 0 : i32
    %c0_i32_0 = arith.constant 0 : i32
    %c0_i32_1 = arith.constant 0 : i32
    %c0_i32_2 = arith.constant 0 : i32
    return %c0_i32, %c0_i32_0, %c0_i32_1 : i32, i32, i32
  }
  func.func @transform_7(%arg0: i32) -> (i32, i32, i32) {
    %c0_i32 = arith.constant 0 : i32
    %c0_i32_0 = arith.constant 0 : i32
    %c0_i32_1 = arith.constant 0 : i32
    %c0_i32_2 = arith.constant 0 : i32
    return %c0_i32, %c0_i32_0, %c0_i32_1 : i32, i32, i32
  }
  func.func @transform_8(%arg0: i32) -> (i32, i32, i32) {
    %c0_i32 = arith.constant 0 : i32
    %c0_i32_0 = arith.constant 0 : i32
    %c0_i32_1 = arith.constant 0 : i32
    %c0_i32_2 = arith.constant 0 : i32
    return %c0_i32, %c0_i32_0, %c0_i32_1 : i32, i32, i32
  }
  func.func @transform_9(%arg0: i32) -> (i32, i32, i32) {
    %c0_i32 = arith.constant 0 : i32
    %c0_i32_0 = arith.constant 0 : i32
    %c0_i32_1 = arith.constant 0 : i32
    %c0_i32_2 = arith.constant 0 : i32
    return %c0_i32, %c0_i32_0, %c0_i32_1 : i32, i32, i32
  }
  func.func @transform_10(%arg0: i32) -> (i32, i32) {
    %c0_i32 = arith.constant 0 : i32
    %c0_i32_0 = arith.constant 0 : i32
    %c0_i32_1 = arith.constant 0 : i32
    return %c0_i32, %c0_i32_0 : i32, i32
  }
  func.func @transform_11(%arg0: i32) -> (i32, i32, i32) {
    %c0_i32 = arith.constant 0 : i32
    %c0_i32_0 = arith.constant 0 : i32
    %c0_i32_1 = arith.constant 0 : i32
    return %arg0, %c0_i32, %c0_i32_0 : i32, i32, i32
  }
  func.func @transform_12(%arg0: i32) -> (i32, i32, i32) {
    %c0_i32 = arith.constant 0 : i32
    %c0_i32_0 = arith.constant 0 : i32
    %c0_i32_1 = arith.constant 0 : i32
    return %arg0, %c0_i32, %c0_i32_0 : i32, i32, i32
  }
  func.func @transform_13(%arg0: i32) -> (i32, i32, i32) {
    %c0_i32 = arith.constant 0 : i32
    %c0_i32_0 = arith.constant 0 : i32
    %c0_i32_1 = arith.constant 0 : i32
    return %arg0, %c0_i32, %c0_i32_0 : i32, i32, i32
  }
}

</mosaic_0001>

<llo_original>
// kernel: tpu_custom_call.1
$region0: #{tpu_custom_call.1}
  #allocation0 [shape = 'u32[]', space=smem, size = 0x4, offset = 0x4, fixed_abs, tag = 'smem constant byte address 0x4 - core index']
  #allocation1 [shape = 'u32[144,128]{1,0:T(1,128)}', space=vmem, size = 0x12000, scoped, tag = 'internal scratch']
  %s0 = inlined_call_operand.vmem [shape: f32[1,128,3], index: 0, kind: input, shape index: {}]
  %s1 = inlined_call_operand.vmem [shape: f32[3,64], index: 1, kind: input, shape index: {}]
  %s2 = inlined_call_operand.vmem [shape: f32[1,64], index: 2, kind: input, shape index: {}]
  %s3 = inlined_call_operand.vmem [shape: f32[64,64], index: 3, kind: input, shape index: {}]
  %s4 = inlined_call_operand.vmem [shape: f32[1,64], index: 4, kind: input, shape index: {}]
  %s5 = inlined_call_operand.hbm [shape: f32[4,64,128], index: 5, kind: input, shape index: {}]
  %s6 = inlined_call_operand.vmem [shape: f32[4,1,128], index: 6, kind: input, shape index: {}]
  %s7 = inlined_call_operand.hbm [shape: f32[4,64,64], index: 7, kind: input, shape index: {}]
  %s8 = inlined_call_operand.vmem [shape: f32[4,1,64], index: 8, kind: input, shape index: {}]
  %s9 = inlined_call_operand.hbm [shape: f32[5,64,256], index: 9, kind: input, shape index: {}]
  %s10 = inlined_call_operand.vmem [shape: f32[1,256], index: 10, kind: input, shape index: {}]
  %s11 = inlined_call_operand.vmem [shape: f32[2,256,64], index: 11, kind: output, shape index: {0}]
  %s12 = inlined_call_operand.hbm [shape: f32[2,1,256], index: 12, kind: output, shape index: {1}]
  %s13 = inlined_call_operand.hbm [shape: f32[2,1,256], index: 13, kind: output, shape index: {2}]
  %14 = xla_tuple %s11, %s12, %s13
  %s15 = sld [smem:[#allocation0]]
  $region82: #{tpu_custom_call.1} parent=0
    _
  %s17 = ssub.s32 1, %s15
  %s18 = scalar_select 0, %s17, %s15
  $region1: #{tpu_custom_call.1} parent=0
    #allocation2 [shape = 'u8[131072]{0}', space=vmem, size = 0x20000, scoped, tag = 'input window, operand 5, single buffered']
    #allocation3 [shape = 's32[1]{0}', space=sflag, size = 0x4, scoped, tag = 'scoped memory for tpu_custom_call.1']
    #allocation4 [shape = 's32[1]{0}', space=sflag, size = 0x4, scoped, tag = 'scoped memory for tpu_custom_call.1']
    #allocation5 [shape = 'u8[131072]{0}', space=vmem, size = 0x20000, scoped, tag = 'input window, operand 7, single buffered']
    #allocation6 [shape = 's32[1]{0}', space=sflag, size = 0x4, scoped, tag = 'scoped memory for tpu_custom_call.1']
    #allocation7 [shape = 'u8[327680]{0}', space=vmem, size = 0x50000, scoped, tag = 'input window, operand 9, single buffered']
    #allocation8 [shape = 'u8[2048]{0}', space=vmem, size = 0x800, scoped, tag = 'output window, operand 1, single buffered']
    #allocation9 [shape = 'u8[2048]{0}', space=vmem, size = 0x800, scoped, tag = 'output window, operand 2, single buffered']
    #allocation10 [shape = 's32[1]{0}', space=sflag, size = 0x4, scoped, tag = 'scoped memory for tpu_custom_call.1']
    %19 = vsyncpa [#allocation3], 0
    %20 = vsyncpa [#allocation6], 0
    %21 = vsyncpa [#allocation4], 0
    %22 = vsyncpa [#allocation10], 0
    // Predicated region
    $region2: #{tpu_custom_call.1} parent=1 // pred_check
      _
    $region3: #{tpu_custom_call.1} parent=1 // pred_check_branch
      %24 = sbr.rel (0) target = $region5
    $region4: #{tpu_custom_call.1} parent=1 // pred_region
      _
    $region5: #{tpu_custom_call.1} parent=1 // pred_fallthru
      _
    // Predicated region
    $region6: #{tpu_custom_call.1} parent=1 // pred_check
      _
    $region7: #{tpu_custom_call.1} parent=1 // pred_check_branch
      %26 = sbr.rel (0) target = $region9
    $region8: #{tpu_custom_call.1} parent=1 // pred_region
      _
    $region9: #{tpu_custom_call.1} parent=1 // pred_fallthru
      _
    // Predicated region
    $region10: #{tpu_custom_call.1} parent=1 // pred_check
      _
    $region11: #{tpu_custom_call.1} parent=1 // pred_check_branch
      %28 = sbr.rel (0) target = $region13
    $region12: #{tpu_custom_call.1} parent=1 // pred_region
      _
    $region13: #{tpu_custom_call.1} parent=1 // pred_fallthru
      _
    // Predicated region
    $region14: #{tpu_custom_call.1} parent=1 // pred_check
      _
    $region15: #{tpu_custom_call.1} parent=1 // pred_check_branch
      %30 = sbr.rel (0) target = $region17
    $region16: #{tpu_custom_call.1} parent=1 // pred_region
      _
    $region17: #{tpu_custom_call.1} parent=1 // pred_fallthru
      _
    // Predicated region
    $region18: #{tpu_custom_call.1} parent=1 // pred_check
      _
    $region19: #{tpu_custom_call.1} parent=1 // pred_check_branch
      %32 = sbr.rel (0) target = $region21
    $region20: #{tpu_custom_call.1} parent=1 // pred_region
      _
    $region21: #{tpu_custom_call.1} parent=1 // pred_fallthru
      _
    // Predicated region
    $region22: #{tpu_custom_call.1} parent=1 // pred_check
      _
    $region23: #{tpu_custom_call.1} parent=1 // pred_check_branch
      %34 = sbr.rel (0) target = $region25
    $region24: #{tpu_custom_call.1} parent=1 // pred_region
      %s36 = ssub.s32 4096, 4096
      %37 = vsyncadd [#allocation3], %s36
      %s38 = sshll.u32 [#allocation2], 4
      %s39 = int_to_ptr.vmem [resolvable:$true] %s38
      %44 = dma.hbm_to_vmem [thread:$0]  %s5, 4096, %s39, [#allocation3], 128, 128, 8
    $region25: #{tpu_custom_call.1} parent=1 // pred_fallthru
      _
    // Predicated region
    $region26: #{tpu_custom_call.1} parent=1 // pred_check
      _
    $region27: #{tpu_custom_call.1} parent=1 // pred_check_branch
      %46 = sbr.rel (0) target = $region29
    $region28: #{tpu_custom_call.1} parent=1 // pred_region
      _
    $region29: #{tpu_custom_call.1} parent=1 // pred_fallthru
      _
    // Predicated region
    $region30: #{tpu_custom_call.1} parent=1 // pred_check
      _
    $region31: #{tpu_custom_call.1} parent=1 // pred_check_branch
      %48 = sbr.rel (0) target = $region33
    $region32: #{tpu_custom_call.1} parent=1 // pred_region
      %s50 = ssub.s32 4096, 4096
      %51 = vsyncadd [#allocation6], %s50
      %s52 = sshll.u32 [#allocation5], 4
      %s53 = int_to_ptr.vmem [resolvable:$true] %s52
      %58 = dma.hbm_to_vmem [thread:$0]  %s7, 4096, %s53, [#allocation6], 128, 128, 8
    $region33: #{tpu_custom_call.1} parent=1 // pred_fallthru
      _
    // Predicated region
    $region34: #{tpu_custom_call.1} parent=1 // pred_check
      _
    $region35: #{tpu_custom_call.1} parent=1 // pred_check_branch
      %60 = sbr.rel (0) target = $region37
    $region36: #{tpu_custom_call.1} parent=1 // pred_region
      _
    $region37: #{tpu_custom_call.1} parent=1 // pred_fallthru
      _
    // Predicated region
    $region38: #{tpu_custom_call.1} parent=1 // pred_check
      _
    $region39: #{tpu_custom_call.1} parent=1 // pred_check_branch
      %62 = sbr.rel (0) target = $region41
    $region40: #{tpu_custom_call.1} parent=1 // pred_region
      %s64 = ssub.s32 10240, 10240
      %65 = vsyncadd [#allocation6], %s64
      %s66 = sshll.u32 [#allocation7], 4
      %s67 = int_to_ptr.vmem [resolvable:$true] %s66
      %72 = dma.hbm_to_vmem [thread:$0]  %s9, 10240, %s67, [#allocation6], 256, 256, 16
    $region41: #{tpu_custom_call.1} parent=1 // pred_fallthru
      _
    // Predicated region
    $region42: #{tpu_custom_call.1} parent=1 // pred_check
      _
    $region43: #{tpu_custom_call.1} parent=1 // pred_check_branch
      %74 = sbr.rel (0) target = $region45
    $region44: #{tpu_custom_call.1} parent=1 // pred_region
      _
    $region45: #{tpu_custom_call.1} parent=1 // pred_fallthru
      _
    // Predicated region
    $region46: #{tpu_custom_call.1} parent=1 // pred_check
      _
    $region47: #{tpu_custom_call.1} parent=1 // pred_check_branch
      %76 = sbr.rel (0) target = $region49
    $region48: #{tpu_custom_call.1} parent=1 // pred_region
      %77 = dma.done [#allocation3], 4096
    $region49: #{tpu_custom_call.1} parent=1 // pred_fallthru
      _
    // Predicated region
    $region50: #{tpu_custom_call.1} parent=1 // pred_check
      _
    $region51: #{tpu_custom_call.1} parent=1 // pred_check_branch
      %79 = sbr.rel (0) target = $region53
    $region52: #{tpu_custom_call.1} parent=1 // pred_region
      %80 = dma.done [#allocation6], 4096
    $region53: #{tpu_custom_call.1} parent=1 // pred_fallthru
      _
    // Predicated region
    $region54: #{tpu_custom_call.1} parent=1 // pred_check
      _
    $region55: #{tpu_custom_call.1} parent=1 // pred_check_branch
      %82 = sbr.rel (0) target = $region57
    $region56: #{tpu_custom_call.1} parent=1 // pred_region
      %83 = dma.done [#allocation6], 10240
    $region57: #{tpu_custom_call.1} parent=1 // pred_fallthru
      _
    %v84 = vld [vmem:[%s0] sm:$0xff]
    %v85 = vld [vmem:[%s0 + $0x8] sm:$0xff]
    %v86 = vld [vmem:[%s0 + $0x10] sm:$0xff]
    %v87 = vld [vmem:[%s0 + $0x18] sm:$0xff]
    %v88 = vld [vmem:[%s0 + $0x20] sm:$0xff]
    %v89 = vld [vmem:[%s0 + $0x28] sm:$0xff]
    %v90 = vld [vmem:[%s0 + $0x30] sm:$0xff]
    %v91 = vld [vmem:[%s0 + $0x38] sm:$0xff]
    %v92 = vld [vmem:[%s0 + $0x40] sm:$0xff]
    %v93 = vld [vmem:[%s0 + $0x48] sm:$0xff]
    %v94 = vld [vmem:[%s0 + $0x50] sm:$0xff]
    %v95 = vld [vmem:[%s0 + $0x58] sm:$0xff]
    %v96 = vld [vmem:[%s0 + $0x60] sm:$0xff]
    %v97 = vld [vmem:[%s0 + $0x68] sm:$0xff]
    %v98 = vld [vmem:[%s0 + $0x70] sm:$0xff]
    %v99 = vld [vmem:[%s0 + $0x78] sm:$0xff]
    %v100 = vld [vmem:[%s1] sm:$0x7]
    %v101 = vld [vmem:[%s2] sm:$0x1]
    %v103 = vlaneseq
    %v104 = vshrl.u32 %v103, 7
    %v105 = vsub.s32 0, %v104
    %v106 = vrot.slane %v101, %v105
    %vm108 = vcmask 23552
    %v110 = vsel %vm108, %v84, 0
    %v113 = vsel %vm108, %v85, 0
    %v116 = vsel %vm108, %v86, 0
    %v119 = vsel %vm108, %v87, 0
    %v122 = vsel %vm108, %v88, 0
    %v125 = vsel %vm108, %v89, 0
    %v128 = vsel %vm108, %v90, 0
    %v131 = vsel %vm108, %v91, 0
    %v134 = vsel %vm108, %v92, 0
    %v137 = vsel %vm108, %v93, 0
    %v140 = vsel %vm108, %v94, 0
    %v143 = vsel %vm108, %v95, 0
    %v146 = vsel %vm108, %v96, 0
    %v149 = vsel %vm108, %v97, 0
    %v152 = vsel %vm108, %v98, 0
    %v155 = vsel %vm108, %v99, 0
    %vm157 = vcmask 1042432
    %v159 = vsel %vm157, %v100, 0
    %161 = vmatprep.subr.mxu0 0.0
    %162 = vmatpush1.msra.mxu0 0.0
    %163 = vmatprep.subr.mxu0 0.0
    %164 = vmatpush1.msra.mxu0 0.0
    %165 = vmatprep.subr.mxu0 0.0
    %166 = vmatpush1.msra.mxu0 0.0
    %167 = vmatprep.subr.mxu0 0.0
    %168 = vmatpush1.msra.mxu0 0.0
    %169 = vmatprep.subr.mxu0 0.0
    %170 = vmatpush1.msra.mxu0 0.0
    %171 = vmatprep.subr.mxu0 0.0
    %172 = vmatpush1.msra.mxu0 0.0
    %173 = vmatprep.subr.mxu0 0.0
    %174 = vmatpush1.msra.mxu0 0.0
    %175 = vmatprep.subr.mxu0 0.0
    %176 = vmatpush1.msra.mxu0 0.0
    %177 = vmatprep.subr.mxu0 0.0
    %178 = vmatpush1.msra.mxu0 0.0
    %179 = vmatprep.subr.mxu0 0.0
    %180 = vmatpush1.msra.mxu0 0.0
    %181 = vmatprep.subr.mxu0 0.0
    %182 = vmatpush1.msra.mxu0 0.0
    %183 = vmatprep.subr.mxu0 0.0
    %184 = vmatpush1.msra.mxu0 0.0
    %185 = vmatprep.subr.mxu0 0.0
    %186 = vmatpush1.msra.mxu0 0.0
    %187 = vmatprep.subr.mxu0 0.0
    %188 = vmatpush1.msra.mxu0 0.0
    %189 = vmatprep.subr.mxu0 0.0
    %190 = vmatpush1.msra.mxu0 0.0
    %191 = vmatprep.subr.mxu0 0.0
    %192 = vmatpush1.msra.mxu0 %v159
    %193 = vmatprep.subr.mxu0 0.0
    %194 = vmatpush2.msra.mxu0 0.0
    %195 = vmatprep.subr.mxu0 0.0
    %196 = vmatpush2.msra.mxu0 0.0
    %197 = vmatprep.subr.mxu0 0.0
    %198 = vmatpush2.msra.mxu0 0.0
    %199 = vmatprep.subr.mxu0 0.0
    %200 = vmatpush2.msra.mxu0 0.0
    %201 = vmatprep.subr.mxu0 0.0
    %202 = vmatpush2.msra.mxu0 0.0
    %203 = vmatprep.subr.mxu0 0.0
    %204 = vmatpush2.msra.mxu0 0.0
    %205 = vmatprep.subr.mxu0 0.0
    %206 = vmatpush2.msra.mxu0 0.0
    %207 = vmatprep.subr.mxu0 0.0
    %208 = vmatpush2.msra.mxu0 0.0
    %209 = vmatprep.subr.mxu0 0.0
    %210 = vmatpush2.msra.mxu0 0.0
    %211 = vmatprep.subr.mxu0 0.0
    %212 = vmatpush2.msra.mxu0 0.0
    %213 = vmatprep.subr.mxu0 0.0
    %214 = vmatpush2.msra.mxu0 0.0
    %215 = vmatprep.subr.mxu0 0.0
    %216 = vmatpush2.msra.mxu0 0.0
    %217 = vmatprep.subr.mxu0 0.0
    %218 = vmatpush2.msra.mxu0 0.0
    %219 = vmatprep.subr.mxu0 0.0
    %220 = vmatpush2.msra.mxu0 0.0
    %221 = vmatprep.subr.mxu0 0.0
    %222 = vmatpush2.msra.mxu0 0.0
    %223 = vmatprep.subr.mxu0 0.0
    %224 = vmatpush2.msra.mxu0 0.0
    %225 = vmatprep.mubr.f32.mxu0 0.0
    %226 = vmatmul.mubr.f32.gmra.mxu0 %v110
    %v227 = vpop.f32.mrf.mxu0
    %v228 = vadd.f32 %v106, %v227
    %v229 = vpop.f32.mrf.mxu0
    %230 = vmatprep.mubr.f32.mxu0 0.0
    %231 = vmatmul.mubr.f32.gmra.mxu0 %v113
    %v232 = vpop.f32.mrf.mxu0
    %v233 = vadd.f32 %v106, %v232
    %v234 = vpop.f32.mrf.mxu0
    %235 = vmatprep.mubr.f32.mxu0 0.0
    %236 = vmatmul.mubr.f32.gmra.mxu0 %v116
    %v237 = vpop.f32.mrf.mxu0
    %v238 = vadd.f32 %v106, %v237
    %v239 = vpop.f32.mrf.mxu0
    %240 = vmatprep.mubr.f32.mxu0 0.0
    %241 = vmatmul.mubr.f32.gmra.mxu0 %v119
    %v242 = vpop.f32.mrf.mxu0
    %v243 = vadd.f32 %v106, %v242
    %v244 = vpop.f32.mrf.mxu0
    %245 = vmatprep.mubr.f32.mxu0 0.0
    %246 = vmatmul.mubr.f32.gmra.mxu0 %v122
    %v247 = vpop.f32.mrf.mxu0
    %v248 = vadd.f32 %v106, %v247
    %v249 = vpop.f32.mrf.mxu0
    %250 = vmatprep.mubr.f32.mxu0 0.0
    %251 = vmatmul.mubr.f32.gmra.mxu0 %v125
    %v252 = vpop.f32.mrf.mxu0
    %v253 = vadd.f32 %v106, %v252
    %v254 = vpop.f32.mrf.mxu0
    %255 = vmatprep.mubr.f32.mxu0 0.0
    %256 = vmatmul.mubr.f32.gmra.mxu0 %v128
    %v257 = vpop.f32.mrf.mxu0
    %v258 = vadd.f32 %v106, %v257
    %v259 = vpop.f32.mrf.mxu0
    %260 = vmatprep.mubr.f32.mxu0 0.0
    %261 = vmatmul.mubr.f32.gmra.mxu0 %v131
    %v262 = vpop.f32.mrf.mxu0
    %v263 = vadd.f32 %v106, %v262
    %v264 = vpop.f32.mrf.mxu0
    %265 = vmatprep.mubr.f32.mxu0 0.0
    %266 = vmatmul.mubr.f32.gmra.mxu0 %v134
    %v267 = vpop.f32.mrf.mxu0
    %v268 = vadd.f32 %v106, %v267
    %v269 = vpop.f32.mrf.mxu0
    %270 = vmatprep.mubr.f32.mxu0 0.0
    %271 = vmatmul.mubr.f32.gmra.mxu0 %v137
    %v272 = vpop.f32.mrf.mxu0
    %v273 = vadd.f32 %v106, %v272
    %v274 = vpop.f32.mrf.mxu0
    %275 = vmatprep.mubr.f32.mxu0 0.0
    %276 = vmatmul.mubr.f32.gmra.mxu0 %v140
    %v277 = vpop.f32.mrf.mxu0
    %v278 = vadd.f32 %v106, %v277
    %v279 = vpop.f32.mrf.mxu0
    %280 = vmatprep.mubr.f32.mxu0 0.0
    %281 = vmatmul.mubr.f32.gmra.mxu0 %v143
    %v282 = vpop.f32.mrf.mxu0
    %v283 = vadd.f32 %v106, %v282
    %v284 = vpop.f32.mrf.mxu0
    %285 = vmatprep.mubr.f32.mxu0 0.0
    %286 = vmatmul.mubr.f32.gmra.mxu0 %v146
    %v287 = vpop.f32.mrf.mxu0
    %v288 = vadd.f32 %v106, %v287
    %v289 = vpop.f32.mrf.mxu0
    %290 = vmatprep.mubr.f32.mxu0 0.0
    %291 = vmatmul.mubr.f32.gmra.mxu0 %v149
    %v292 = vpop.f32.mrf.mxu0
    %v293 = vadd.f32 %v106, %v292
    %v294 = vpop.f32.mrf.mxu0
    %295 = vmatprep.mubr.f32.mxu0 0.0
    %296 = vmatmul.mubr.f32.gmra.mxu0 %v152
    %v297 = vpop.f32.mrf.mxu0
    %v298 = vadd.f32 %v106, %v297
    %v299 = vpop.f32.mrf.mxu0
    %300 = vmatprep.mubr.f32.mxu0 0.0
    %301 = vmatmul.mubr.f32.gmra.mxu0 %v155
    %v302 = vpop.f32.mrf.mxu0
    %v303 = vadd.f32 %v106, %v302
    %v304 = vpop.f32.mrf.mxu0
    %305 = vdwg.mxu0
    %v306 = vmax.f32 %v228, 0.0
    %v307 = vmax.f32 %v233, 0.0
    %v308 = vmax.f32 %v238, 0.0
    %v309 = vmax.f32 %v243, 0.0
    %v310 = vmax.f32 %v248, 0.0
    %v311 = vmax.f32 %v253, 0.0
    %v312 = vmax.f32 %v258, 0.0
    %v313 = vmax.f32 %v263, 0.0
    %v314 = vmax.f32 %v268, 0.0
    %v315 = vmax.f32 %v273, 0.0
    %v316 = vmax.f32 %v278, 0.0
    %v317 = vmax.f32 %v283, 0.0
    %v318 = vmax.f32 %v288, 0.0
    %v319 = vmax.f32 %v293, 0.0
    %v320 = vmax.f32 %v298, 0.0
    %v321 = vmax.f32 %v303, 0.0
    %v322 = vld [vmem:[%s3] sm:$0xff]
    %v323 = vld [vmem:[%s3 + $0x8] sm:$0xff]
    %v324 = vld [vmem:[%s3 + $0x10] sm:$0xff]
    %v325 = vld [vmem:[%s3 + $0x18] sm:$0xff]
    %v326 = vld [vmem:[%s3 + $0x20] sm:$0xff]
    %v327 = vld [vmem:[%s3 + $0x28] sm:$0xff]
    %v328 = vld [vmem:[%s3 + $0x30] sm:$0xff]
    %v329 = vld [vmem:[%s3 + $0x38] sm:$0xff]
    %v330 = vld [vmem:[%s4] sm:$0x1]
    %v332 = vlaneseq
    %v333 = vshrl.u32 %v332, 7
    %v334 = vsub.s32 0, %v333
    %v335 = vrot.slane %v330, %v334
    %vm337 = vcmask 523264
    %v339 = vsel %vm337, %v306, 0
    %v342 = vsel %vm337, %v307, 0
    %v345 = vsel %vm337, %v308, 0
    %v348 = vsel %vm337, %v309, 0
    %v351 = vsel %vm337, %v310, 0
    %v354 = vsel %vm337, %v311, 0
    %v357 = vsel %vm337, %v312, 0
    %v360 = vsel %vm337, %v313, 0
    %v363 = vsel %vm337, %v314, 0
    %v366 = vsel %vm337, %v315, 0
    %v369 = vsel %vm337, %v316, 0
    %v372 = vsel %vm337, %v317, 0
    %v375 = vsel %vm337, %v318, 0
    %v378 = vsel %vm337, %v319, 0
    %v381 = vsel %vm337, %v320, 0
    %v384 = vsel %vm337, %v321, 0
    %386 = vmatprep.subr.mxu0 0.0
    %387 = vmatpush1.msra.mxu0 0.0
    %388 = vmatprep.subr.mxu0 0.0
    %389 = vmatpush1.msra.mxu0 0.0
    %390 = vmatprep.subr.mxu0 0.0
    %391 = vmatpush1.msra.mxu0 0.0
    %392 = vmatprep.subr.mxu0 0.0
    %393 = vmatpush1.msra.mxu0 0.0
    %394 = vmatprep.subr.mxu0 0.0
    %395 = vmatpush1.msra.mxu0 0.0
    %396 = vmatprep.subr.mxu0 0.0
    %397 = vmatpush1.msra.mxu0 0.0
    %398 = vmatprep.subr.mxu0 0.0
    %399 = vmatpush1.msra.mxu0 0.0
    %400 = vmatprep.subr.mxu0 0.0
    %401 = vmatpush1.msra.mxu0 0.0
    %402 = vmatprep.subr.mxu0 0.0
    %403 = vmatpush1.msra.mxu0 %v329
    %404 = vmatprep.subr.mxu0 0.0
    %405 = vmatpush1.msra.mxu0 %v328
    %406 = vmatprep.subr.mxu0 0.0
    %407 = vmatpush1.msra.mxu0 %v327
    %408 = vmatprep.subr.mxu0 0.0
    %409 = vmatpush1.msra.mxu0 %v326
    %410 = vmatprep.subr.mxu0 0.0
    %411 = vmatpush1.msra.mxu0 %v325
    %412 = vmatprep.subr.mxu0 0.0
    %413 = vmatpush1.msra.mxu0 %v324
    %414 = vmatprep.subr.mxu0 0.0
    %415 = vmatpush1.msra.mxu0 %v323
    %416 = vmatprep.subr.mxu0 0.0
    %417 = vmatpush1.msra.mxu0 %v322
    %418 = vmatprep.subr.mxu0 0.0
    %419 = vmatpush2.msra.mxu0 0.0
    %420 = vmatprep.subr.mxu0 0.0
    %421 = vmatpush2.msra.mxu0 0.0
    %422 = vmatprep.subr.mxu0 0.0
    %423 = vmatpush2.msra.mxu0 0.0
    %424 = vmatprep.subr.mxu0 0.0
    %425 = vmatpush2.msra.mxu0 0.0
    %426 = vmatprep.subr.mxu0 0.0
    %427 = vmatpush2.msra.mxu0 0.0
    %428 = vmatprep.subr.mxu0 0.0
    %429 = vmatpush2.msra.mxu0 0.0
    %430 = vmatprep.subr.mxu0 0.0
    %431 = vmatpush2.msra.mxu0 0.0
    %432 = vmatprep.subr.mxu0 0.0
    %433 = vmatpush2.msra.mxu0 0.0
    %434 = vmatprep.subr.mxu0 0.0
    %435 = vmatpush2.msra.mxu0 0.0
    %436 = vmatprep.subr.mxu0 0.0
    %437 = vmatpush2.msra.mxu0 0.0
    %438 = vmatprep.subr.mxu0 0.0
    %439 = vmatpush2.msra.mxu0 0.0
    %440 = vmatprep.subr.mxu0 0.0
    %441 = vmatpush2.msra.mxu0 0.0
    %442 = vmatprep.subr.mxu0 0.0
    %443 = vmatpush2.msra.mxu0 0.0
    %444 = vmatprep.subr.mxu0 0.0
    %445 = vmatpush2.msra.mxu0 0.0
    %446 = vmatprep.subr.mxu0 0.0
    %447 = vmatpush2.msra.mxu0 0.0
    %448 = vmatprep.subr.mxu0 0.0
    %449 = vmatpush2.msra.mxu0 0.0
    %450 = vmatprep.mubr.f32.mxu0 0.0
    %451 = vmatmul.mubr.f32.gmra.mxu0 %v339
    %v452 = vpop.f32.mrf.mxu0
    %v453 = vadd.f32 %v335, %v452
    %v454 = vpop.f32.mrf.mxu0
    %455 = vmatprep.mubr.f32.mxu0 0.0
    %456 = vmatmul.mubr.f32.gmra.mxu0 %v342
    %v457 = vpop.f32.mrf.mxu0
    %v458 = vadd.f32 %v335, %v457
    %v459 = vpop.f32.mrf.mxu0
    %460 = vmatprep.mubr.f32.mxu0 0.0
    %461 = vmatmul.mubr.f32.gmra.mxu0 %v345
    %v462 = vpop.f32.mrf.mxu0
    %v463 = vadd.f32 %v335, %v462
    %v464 = vpop.f32.mrf.mxu0
    %465 = vmatprep.mubr.f32.mxu0 0.0
    %466 = vmatmul.mubr.f32.gmra.mxu0 %v348
    %v467 = vpop.f32.mrf.mxu0
    %v468 = vadd.f32 %v335, %v467
    %v469 = vpop.f32.mrf.mxu0
    %470 = vmatprep.mubr.f32.mxu0 0.0
    %471 = vmatmul.mubr.f32.gmra.mxu0 %v351
    %v472 = vpop.f32.mrf.mxu0
    %v473 = vadd.f32 %v335, %v472
    %v474 = vpop.f32.mrf.mxu0
    %475 = vmatprep.mubr.f32.mxu0 0.0
    %476 = vmatmul.mubr.f32.gmra.mxu0 %v354
    %v477 = vpop.f32.mrf.mxu0
    %v478 = vadd.f32 %v335, %v477
    %v479 = vpop.f32.mrf.mxu0
    %480 = vmatprep.mubr.f32.mxu0 0.0
    %481 = vmatmul.mubr.f32.gmra.mxu0 %v357
    %v482 = vpop.f32.mrf.mxu0
    %v483 = vadd.f32 %v335, %v482
    %v484 = vpop.f32.mrf.mxu0
    %485 = vmatprep.mubr.f32.mxu0 0.0
    %486 = vmatmul.mubr.f32.gmra.mxu0 %v360
    %v487 = vpop.f32.mrf.mxu0
    %v488 = vadd.f32 %v335, %v487
    %v489 = vpop.f32.mrf.mxu0
    %490 = vmatprep.mubr.f32.mxu0 0.0
    %491 = vmatmul.mubr.f32.gmra.mxu0 %v363
    %v492 = vpop.f32.mrf.mxu0
    %v493 = vadd.f32 %v335, %v492
    %v494 = vpop.f32.mrf.mxu0
    %495 = vmatprep.mubr.f32.mxu0 0.0
    %496 = vmatmul.mubr.f32.gmra.mxu0 %v366
    %v497 = vpop.f32.mrf.mxu0
    %v498 = vadd.f32 %v335, %v497
    %v499 = vpop.f32.mrf.mxu0
    %500 = vmatprep.mubr.f32.mxu0 0.0
    %501 = vmatmul.mubr.f32.gmra.mxu0 %v369
    %v502 = vpop.f32.mrf.mxu0
    %v503 = vadd.f32 %v335, %v502
    %v504 = vpop.f32.mrf.mxu0
    %505 = vmatprep.mubr.f32.mxu0 0.0
    %506 = vmatmul.mubr.f32.gmra.mxu0 %v372
    %v507 = vpop.f32.mrf.mxu0
    %v508 = vadd.f32 %v335, %v507
    %v509 = vpop.f32.mrf.mxu0
    %510 = vmatprep.mubr.f32.mxu0 0.0
    %511 = vmatmul.mubr.f32.gmra.mxu0 %v375
    %v512 = vpop.f32.mrf.mxu0
    %v513 = vadd.f32 %v335, %v512
    %v514 = vpop.f32.mrf.mxu0
    %515 = vmatprep.mubr.f32.mxu0 0.0
    %516 = vmatmul.mubr.f32.gmra.mxu0 %v378
    %v517 = vpop.f32.mrf.mxu0
    %v518 = vadd.f32 %v335, %v517
    %v519 = vpop.f32.mrf.mxu0
    %520 = vmatprep.mubr.f32.mxu0 0.0
    %521 = vmatmul.mubr.f32.gmra.mxu0 %v381
    %v522 = vpop.f32.mrf.mxu0
    %v523 = vadd.f32 %v335, %v522
    %v524 = vpop.f32.mrf.mxu0
    %525 = vmatprep.mubr.f32.mxu0 0.0
    %526 = vmatmul.mubr.f32.gmra.mxu0 %v384
    %v527 = vpop.f32.mrf.mxu0
    %v528 = vadd.f32 %v335, %v527
    %v529 = vpop.f32.mrf.mxu0
    %530 = vdwg.mxu0
    %v531 = vmax.f32 %v453, 0.0
    %v532 = vmax.f32 %v458, 0.0
    %v533 = vmax.f32 %v463, 0.0
    %v534 = vmax.f32 %v468, 0.0
    %v535 = vmax.f32 %v473, 0.0
    %v536 = vmax.f32 %v478, 0.0
    %v537 = vmax.f32 %v483, 0.0
    %v538 = vmax.f32 %v488, 0.0
    %v539 = vmax.f32 %v493, 0.0
    %v540 = vmax.f32 %v498, 0.0
    %v541 = vmax.f32 %v503, 0.0
    %v542 = vmax.f32 %v508, 0.0
    %v543 = vmax.f32 %v513, 0.0
    %v544 = vmax.f32 %v518, 0.0
    %v545 = vmax.f32 %v523, 0.0
    %v546 = vmax.f32 %v528, 0.0
    %v547 = vld [vmem:[#allocation7] sm:$0xff]
    %v548 = vld [vmem:[#allocation7 + $0x8] sm:$0xff]
    %v549 = vld [vmem:[#allocation7 + $0x10] sm:$0xff]
    %v550 = vld [vmem:[#allocation7 + $0x18] sm:$0xff]
    %v551 = vld [vmem:[#allocation7 + $0x20] sm:$0xff]
    %v552 = vld [vmem:[#allocation7 + $0x28] sm:$0xff]
    %v553 = vld [vmem:[#allocation7 + $0x30] sm:$0xff]
    %v554 = vld [vmem:[#allocation7 + $0x38] sm:$0xff]
    %v555 = vld [vmem:[#allocation7 + $0x40] sm:$0xff]
    %v556 = vld [vmem:[#allocation7 + $0x48] sm:$0xff]
    %v557 = vld [vmem:[#allocation7 + $0x50] sm:$0xff]
    %v558 = vld [vmem:[#allocation7 + $0x58] sm:$0xff]
    %v559 = vld [vmem:[#allocation7 + $0x60] sm:$0xff]
    %v560 = vld [vmem:[#allocation7 + $0x68] sm:$0xff]
    %v561 = vld [vmem:[#allocation7 + $0x70] sm:$0xff]
    %v562 = vld [vmem:[#allocation7 + $0x78] sm:$0xff]
    %v563 = vld [vmem:[#allocation2] sm:$0xff]
    %v564 = vld [vmem:[#allocation2 + $0x8] sm:$0xff]
    %v565 = vld [vmem:[#allocation2 + $0x10] sm:$0xff]
    %v566 = vld [vmem:[#allocation2 + $0x18] sm:$0xff]
    %v567 = vld [vmem:[#allocation2 + $0x20] sm:$0xff]
    %v568 = vld [vmem:[#allocation2 + $0x28] sm:$0xff]
    %v569 = vld [vmem:[#allocation2 + $0x30] sm:$0xff]
    %v570 = vld [vmem:[#allocation2 + $0x38] sm:$0xff]
    %v571 = vld [vmem:[%s6] sm:$0x1]
    %v573 = vlaneseq
    %v574 = vshrl.u32 %v573, 7
    %v575 = vsub.s32 0, %v574
    %v576 = vrot.slane %v571, %v575
    %v579 = vsel %vm337, %v531, 0
    %v582 = vsel %vm337, %v532, 0
    %v585 = vsel %vm337, %v533, 0
    %v588 = vsel %vm337, %v534, 0
    %v591 = vsel %vm337, %v535, 0
    %v594 = vsel %vm337, %v536, 0
    %v597 = vsel %vm337, %v537, 0
    %v600 = vsel %vm337, %v538, 0
    %v603 = vsel %vm337, %v539, 0
    %v606 = vsel %vm337, %v540, 0
    %v609 = vsel %vm337, %v541, 0
    %v612 = vsel %vm337, %v542, 0
    %v615 = vsel %vm337, %v543, 0
    %v618 = vsel %vm337, %v544, 0
    %v621 = vsel %vm337, %v545, 0
    %v624 = vsel %vm337, %v546, 0
    %626 = vmatprep.subr.mxu0 0.0
    %627 = vmatpush1.msra.mxu0 0.0
    %628 = vmatprep.subr.mxu0 0.0
    %629 = vmatpush1.msra.mxu0 0.0
    %630 = vmatprep.subr.mxu0 0.0
    %631 = vmatpush1.msra.mxu0 0.0
    %632 = vmatprep.subr.mxu0 0.0
    %633 = vmatpush1.msra.mxu0 0.0
    %634 = vmatprep.subr.mxu0 0.0
    %635 = vmatpush1.msra.mxu0 0.0
    %636 = vmatprep.subr.mxu0 0.0
    %637 = vmatpush1.msra.mxu0 0.0
    %638 = vmatprep.subr.mxu0 0.0
    %639 = vmatpush1.msra.mxu0 0.0
    %640 = vmatprep.subr.mxu0 0.0
    %641 = vmatpush1.msra.mxu0 0.0
    %642 = vmatprep.subr.mxu0 0.0
    %643 = vmatpush1.msra.mxu0 %v570
    %644 = vmatprep.subr.mxu0 0.0
    %645 = vmatpush1.msra.mxu0 %v569
    %646 = vmatprep.subr.mxu0 0.0
    %647 = vmatpush1.msra.mxu0 %v568
    %648 = vmatprep.subr.mxu0 0.0
    %649 = vmatpush1.msra.mxu0 %v567
    %650 = vmatprep.subr.mxu0 0.0
    %651 = vmatpush1.msra.mxu0 %v566
    %652 = vmatprep.subr.mxu0 0.0
    %653 = vmatpush1.msra.mxu0 %v565
    %654 = vmatprep.subr.mxu0 0.0
    %655 = vmatpush1.msra.mxu0 %v564
    %656 = vmatprep.subr.mxu0 0.0
    %657 = vmatpush1.msra.mxu0 %v563
    %658 = vmatprep.subr.mxu0 0.0
    %659 = vmatpush2.msra.mxu0 0.0
    %660 = vmatprep.subr.mxu0 0.0
    %661 = vmatpush2.msra.mxu0 0.0
    %662 = vmatprep.subr.mxu0 0.0
    %663 = vmatpush2.msra.mxu0 0.0
    %664 = vmatprep.subr.mxu0 0.0
    %665 = vmatpush2.msra.mxu0 0.0
    %666 = vmatprep.subr.mxu0 0.0
    %667 = vmatpush2.msra.mxu0 0.0
    %668 = vmatprep.subr.mxu0 0.0
    %669 = vmatpush2.msra.mxu0 0.0
    %670 = vmatprep.subr.mxu0 0.0
    %671 = vmatpush2.msra.mxu0 0.0
    %672 = vmatprep.subr.mxu0 0.0
    %673 = vmatpush2.msra.mxu0 0.0
    %674 = vmatprep.subr.mxu0 0.0
    %675 = vmatpush2.msra.mxu0 0.0
    %676 = vmatprep.subr.mxu0 0.0
    %677 = vmatpush2.msra.mxu0 0.0
    %678 = vmatprep.subr.mxu0 0.0
    %679 = vmatpush2.msra.mxu0 0.0
    %680 = vmatprep.subr.mxu0 0.0
    %681 = vmatpush2.msra.mxu0 0.0
    %682 = vmatprep.subr.mxu0 0.0
    %683 = vmatpush2.msra.mxu0 0.0
    %684 = vmatprep.subr.mxu0 0.0
    %685 = vmatpush2.msra.mxu0 0.0
    %686 = vmatprep.subr.mxu0 0.0
    %687 = vmatpush2.msra.mxu0 0.0
    %688 = vmatprep.subr.mxu0 0.0
    %689 = vmatpush2.msra.mxu0 0.0
    %690 = vmatprep.mubr.f32.mxu0 0.0
    %691 = vmatmul.mubr.f32.gmra.mxu0 %v579
    %v692 = vpop.f32.mrf.mxu0
    %v693 = vadd.f32 %v576, %v692
    %v694 = vpop.f32.mrf.mxu0
    %695 = vmatprep.mubr.f32.mxu0 0.0
    %696 = vmatmul.mubr.f32.gmra.mxu0 %v582
    %v697 = vpop.f32.mrf.mxu0
    %v698 = vadd.f32 %v576, %v697
    %v699 = vpop.f32.mrf.mxu0
    %700 = vmatprep.mubr.f32.mxu0 0.0
    %701 = vmatmul.mubr.f32.gmra.mxu0 %v585
    %v702 = vpop.f32.mrf.mxu0
    %v703 = vadd.f32 %v576, %v702
    %v704 = vpop.f32.mrf.mxu0
    %705 = vmatprep.mubr.f32.mxu0 0.0
    %706 = vmatmul.mubr.f32.gmra.mxu0 %v588
    %v707 = vpop.f32.mrf.mxu0
    %v708 = vadd.f32 %v576, %v707
    %v709 = vpop.f32.mrf.mxu0
    %710 = vmatprep.mubr.f32.mxu0 0.0
    %711 = vmatmul.mubr.f32.gmra.mxu0 %v591
    %v712 = vpop.f32.mrf.mxu0
    %v713 = vadd.f32 %v576, %v712
    %v714 = vpop.f32.mrf.mxu0
    %715 = vmatprep.mubr.f32.mxu0 0.0
    %716 = vmatmul.mubr.f32.gmra.mxu0 %v594
    %v717 = vpop.f32.mrf.mxu0
    %v718 = vadd.f32 %v576, %v717
    %v719 = vpop.f32.mrf.mxu0
    %720 = vmatprep.mubr.f32.mxu0 0.0
    %721 = vmatmul.mubr.f32.gmra.mxu0 %v597
    %v722 = vpop.f32.mrf.mxu0
    %v723 = vadd.f32 %v576, %v722
    %v724 = vpop.f32.mrf.mxu0
    %725 = vmatprep.mubr.f32.mxu0 0.0
    %726 = vmatmul.mubr.f32.gmra.mxu0 %v600
    %v727 = vpop.f32.mrf.mxu0
    %v728 = vadd.f32 %v576, %v727
    %v729 = vpop.f32.mrf.mxu0
    %730 = vmatprep.mubr.f32.mxu0 0.0
    %731 = vmatmul.mubr.f32.gmra.mxu0 %v603
    %v732 = vpop.f32.mrf.mxu0
    %v733 = vadd.f32 %v576, %v732
    %v734 = vpop.f32.mrf.mxu0
    %735 = vmatprep.mubr.f32.mxu0 0.0
    %736 = vmatmul.mubr.f32.gmra.mxu0 %v606
    %v737 = vpop.f32.mrf.mxu0
    %v738 = vadd.f32 %v576, %v737
    %v739 = vpop.f32.mrf.mxu0
    %740 = vmatprep.mubr.f32.mxu0 0.0
    %741 = vmatmul.mubr.f32.gmra.mxu0 %v609
    %v742 = vpop.f32.mrf.mxu0
    %v743 = vadd.f32 %v576, %v742
    %v744 = vpop.f32.mrf.mxu0
    %745 = vmatprep.mubr.f32.mxu0 0.0
    %746 = vmatmul.mubr.f32.gmra.mxu0 %v612
    %v747 = vpop.f32.mrf.mxu0
    %v748 = vadd.f32 %v576, %v747
    %v749 = vpop.f32.mrf.mxu0
    %750 = vmatprep.mubr.f32.mxu0 0.0
    %751 = vmatmul.mubr.f32.gmra.mxu0 %v615
    %v752 = vpop.f32.mrf.mxu0
    %v753 = vadd.f32 %v576, %v752
    %v754 = vpop.f32.mrf.mxu0
    %755 = vmatprep.mubr.f32.mxu0 0.0
    %756 = vmatmul.mubr.f32.gmra.mxu0 %v618
    %v757 = vpop.f32.mrf.mxu0
    %v758 = vadd.f32 %v576, %v757
    %v759 = vpop.f32.mrf.mxu0
    %760 = vmatprep.mubr.f32.mxu0 0.0
    %761 = vmatmul.mubr.f32.gmra.mxu0 %v621
    %v762 = vpop.f32.mrf.mxu0
    %v763 = vadd.f32 %v576, %v762
    %v764 = vpop.f32.mrf.mxu0
    %765 = vmatprep.mubr.f32.mxu0 0.0
    %766 = vmatmul.mubr.f32.gmra.mxu0 %v624
    %v767 = vpop.f32.mrf.mxu0
    %v768 = vadd.f32 %v576, %v767
    %v769 = vpop.f32.mrf.mxu0
    %770 = vdwg.mxu0
    %779 = vrot.lane.b32.xlu0 %v693, 64
    %v780 = vpop.permute.xlu0 %779
    %781 = vrot.lane.b32.xlu0 %v698, 64
    %v782 = vpop.permute.xlu0 %781
    %783 = vrot.lane.b32.xlu0 %v703, 64
    %v784 = vpop.permute.xlu0 %783
    %785 = vrot.lane.b32.xlu0 %v708, 64
    %v786 = vpop.permute.xlu0 %785
    %787 = vrot.lane.b32.xlu0 %v713, 64
    %v788 = vpop.permute.xlu0 %787
    %789 = vrot.lane.b32.xlu0 %v718, 64
    %v790 = vpop.permute.xlu0 %789
    %791 = vrot.lane.b32.xlu0 %v723, 64
    %v792 = vpop.permute.xlu0 %791
    %793 = vrot.lane.b32.xlu0 %v728, 64
    %v794 = vpop.permute.xlu0 %793
    %v795 = vsel %vm337, %v780, 0
    %v797 = vsel %vm337, %v782, 0
    %v799 = vsel %vm337, %v784, 0
    %v801 = vsel %vm337, %v786, 0
    %v803 = vsel %vm337, %v788, 0
    %v805 = vsel %vm337, %v790, 0
    %v807 = vsel %vm337, %v792, 0
    %v809 = vsel %vm337, %v794, 0
    %811 = vmatprep.subr.mxu0 0.0
    %812 = vmatpush1.xpose.msra.mxu0 0.0
    %813 = vmatprep.subr.mxu0 0.0
    %814 = vmatpush1.xpose.msra.mxu0 0.0
    %815 = vmatprep.subr.mxu0 0.0
    %816 = vmatpush1.xpose.msra.mxu0 0.0
    %817 = vmatprep.subr.mxu0 0.0
    %818 = vmatpush1.xpose.msra.mxu0 0.0
    %819 = vmatprep.subr.mxu0 0.0
    %820 = vmatpush1.xpose.msra.mxu0 0.0
    %821 = vmatprep.subr.mxu0 0.0
    %822 = vmatpush1.xpose.msra.mxu0 0.0
    %823 = vmatprep.subr.mxu0 0.0
    %824 = vmatpush1.xpose.msra.mxu0 0.0
    %825 = vmatprep.subr.mxu0 0.0
    %826 = vmatpush1.xpose.msra.mxu0 0.0
    %827 = vmatprep.subr.mxu0 0.0
    %828 = vmatpush1.xpose.msra.mxu0 %v809
    %829 = vmatprep.subr.mxu0 0.0
    %830 = vmatpush1.xpose.msra.mxu0 %v807
    %831 = vmatprep.subr.mxu0 0.0
    %832 = vmatpush1.xpose.msra.mxu0 %v805
    %833 = vmatprep.subr.mxu0 0.0
    %834 = vmatpush1.xpose.msra.mxu0 %v803
    %835 = vmatprep.subr.mxu0 0.0
    %836 = vmatpush1.xpose.msra.mxu0 %v801
    %837 = vmatprep.subr.mxu0 0.0
    %838 = vmatpush1.xpose.msra.mxu0 %v799
    %839 = vmatprep.subr.mxu0 0.0
    %840 = vmatpush1.xpose.msra.mxu0 %v797
    %841 = vmatprep.subr.mxu0 0.0
    %842 = vmatpush1.xpose.msra.mxu0 %v795
    %843 = vmatprep.subr.mxu0 0.0
    %844 = vmatpush2.xpose.msra.mxu0 0.0
    %845 = vmatprep.subr.mxu0 0.0
    %846 = vmatpush2.xpose.msra.mxu0 0.0
    %847 = vmatprep.subr.mxu0 0.0
    %848 = vmatpush2.xpose.msra.mxu0 0.0
    %849 = vmatprep.subr.mxu0 0.0
    %850 = vmatpush2.xpose.msra.mxu0 0.0
    %851 = vmatprep.subr.mxu0 0.0
    %852 = vmatpush2.xpose.msra.mxu0 0.0
    %853 = vmatprep.subr.mxu0 0.0
    %854 = vmatpush2.xpose.msra.mxu0 0.0
    %855 = vmatprep.subr.mxu0 0.0
    %856 = vmatpush2.xpose.msra.mxu0 0.0
    %857 = vmatprep.subr.mxu0 0.0
    %858 = vmatpush2.xpose.msra.mxu0 0.0
    %859 = vmatprep.subr.mxu0 0.0
    %860 = vmatpush2.xpose.msra.mxu0 0.0
    %861 = vmatprep.subr.mxu0 0.0
    %862 = vmatpush2.xpose.msra.mxu0 0.0
    %863 = vmatprep.subr.mxu0 0.0
    %864 = vmatpush2.xpose.msra.mxu0 0.0
    %865 = vmatprep.subr.mxu0 0.0
    %866 = vmatpush2.xpose.msra.mxu0 0.0
    %867 = vmatprep.subr.mxu0 0.0
    %868 = vmatpush2.xpose.msra.mxu0 0.0
    %869 = vmatprep.subr.mxu0 0.0
    %870 = vmatpush2.xpose.msra.mxu0 0.0
    %871 = vmatprep.subr.mxu0 0.0
    %872 = vmatpush2.xpose.msra.mxu0 0.0
    %873 = vmatprep.subr.mxu0 0.0
    %874 = vmatpush2.xpose.msra.mxu0 0.0
    %875 = vmatprep.mubr.f32.mxu0 0.0
    %876 = vmatmul.mubr.f32.gmra.mxu0 %v795
    %v877 = vpop.f32.mrf.mxu0
    %v878 = vadd.f32 0.0, %v877
    %v879 = vpop.f32.mrf.mxu0
    %880 = vmatprep.mubr.f32.mxu0 0.0
    %881 = vmatmul.mubr.f32.gmra.mxu0 %v797
    %v882 = vpop.f32.mrf.mxu0
    %v883 = vadd.f32 0.0, %v882
    %v884 = vpop.f32.mrf.mxu0
    %885 = vmatprep.mubr.f32.mxu0 0.0
    %886 = vmatmul.mubr.f32.gmra.mxu0 %v799
    %v887 = vpop.f32.mrf.mxu0
    %v888 = vadd.f32 0.0, %v887
    %v889 = vpop.f32.mrf.mxu0
    %890 = vmatprep.mubr.f32.mxu0 0.0
    %891 = vmatmul.mubr.f32.gmra.mxu0 %v801
    %v892 = vpop.f32.mrf.mxu0
    %v893 = vadd.f32 0.0, %v892
    %v894 = vpop.f32.mrf.mxu0
    %895 = vmatprep.mubr.f32.mxu0 0.0
    %896 = vmatmul.mubr.f32.gmra.mxu0 %v803
    %v897 = vpop.f32.mrf.mxu0
    %v898 = vadd.f32 0.0, %v897
    %v899 = vpop.f32.mrf.mxu0
    %900 = vmatprep.mubr.f32.mxu0 0.0
    %901 = vmatmul.mubr.f32.gmra.mxu0 %v805
    %v902 = vpop.f32.mrf.mxu0
    %v903 = vadd.f32 0.0, %v902
    %v904 = vpop.f32.mrf.mxu0
    %905 = vmatprep.mubr.f32.mxu0 0.0
    %906 = vmatmul.mubr.f32.gmra.mxu0 %v807
    %v907 = vpop.f32.mrf.mxu0
    %v908 = vadd.f32 0.0, %v907
    %v909 = vpop.f32.mrf.mxu0
    %910 = vmatprep.mubr.f32.mxu0 0.0
    %911 = vmatmul.mubr.f32.gmra.mxu0 %v809
    %v912 = vpop.f32.mrf.mxu0
    %v913 = vadd.f32 0.0, %v912
    %v914 = vpop.f32.mrf.mxu0
    %915 = vdwg.mxu0
    %v916 = vsel %vm337, %v878, -inf
    %917 = vmax.xlane.f32.xlu0 %v916
    %v918 = vpop.xlane.xlu0 %917
    %v919 = vsel %vm337, %v883, -inf
    %920 = vmax.xlane.f32.xlu0 %v919
    %v921 = vpop.xlane.xlu0 %920
    %v922 = vsel %vm337, %v888, -inf
    %923 = vmax.xlane.f32.xlu0 %v922
    %v924 = vpop.xlane.xlu0 %923
    %v925 = vsel %vm337, %v893, -inf
    %926 = vmax.xlane.f32.xlu0 %v925
    %v927 = vpop.xlane.xlu0 %926
    %v928 = vsel %vm337, %v898, -inf
    %929 = vmax.xlane.f32.xlu0 %v928
    %v930 = vpop.xlane.xlu0 %929
    %v931 = vsel %vm337, %v903, -inf
    %932 = vmax.xlane.f32.xlu0 %v931
    %v933 = vpop.xlane.xlu0 %932
    %v934 = vsel %vm337, %v908, -inf
    %935 = vmax.xlane.f32.xlu0 %v934
    %v936 = vpop.xlane.xlu0 %935
    %v937 = vsel %vm337, %v913, -inf
    %938 = vmax.xlane.f32.xlu0 %v937
    %v939 = vpop.xlane.xlu0 %938
    %v940 = vmax.f32 %v918, %v930
    %v941 = vmax.f32 %v921, %v933
    %v942 = vmax.f32 %v924, %v936
    %v943 = vmax.f32 %v927, %v939
    %v944 = vmax.f32 %v940, %v941
    %v945 = vmax.f32 %v942, %v943
    %v946 = vmax.f32 %v944, %v945
    %v947 = vrot.slane %v946, 4
    %v948 = vmax.f32 %v946, %v947
    %v949 = vrot.slane %v948, 2
    %v950 = vmax.f32 %v948, %v949
    %v951 = vrot.slane %v950, 1
    %v952 = vmax.f32 %v950, %v951
    %v953 = vsub.f32 %v878, %v952
    %v954 = vsub.f32 %v883, %v952
    %v955 = vsub.f32 %v888, %v952
    %v956 = vsub.f32 %v893, %v952
    %v957 = vsub.f32 %v898, %v952
    %v958 = vsub.f32 %v903, %v952
    %v959 = vsub.f32 %v908, %v952
    %v960 = vsub.f32 %v913, %v952
    %v961 = vmul.f32 %v953, 1.442695
    %v962 = vpow.pop %v961
    %v963 = vmul.f32 %v954, 1.442695
    %v964 = vpow.pop %v963
    %v965 = vmul.f32 %v955, 1.442695
    %v966 = vpow.pop %v965
    %v967 = vmul.f32 %v956, 1.442695
    %v968 = vpow.pop %v967
    %v969 = vmul.f32 %v957, 1.442695
    %v970 = vpow.pop %v969
    %v971 = vmul.f32 %v958, 1.442695
    %v972 = vpow.pop %v971
    %v973 = vmul.f32 %v959, 1.442695
    %v974 = vpow.pop %v973
    %v975 = vmul.f32 %v960, 1.442695
    %v976 = vpow.pop %v975
    %v977 = vsel %vm337, %v962, 0.0
    %v978 = vsel %vm337, %v964, 0.0
    %v979 = vadd.f32 %v977, %v978
    %v980 = vsel %vm337, %v966, 0.0
    %v981 = vadd.f32 %v979, %v980
    %v982 = vsel %vm337, %v968, 0.0
    %v983 = vadd.f32 %v981, %v982
    %v984 = vsel %vm337, %v970, 0.0
    %v985 = vadd.f32 %v983, %v984
    %v986 = vsel %vm337, %v972, 0.0
    %v987 = vadd.f32 %v985, %v986
    %v988 = vsel %vm337, %v974, 0.0
    %v989 = vadd.f32 %v987, %v988
    %v990 = vsel %vm337, %v976, 0.0
    %v991 = vadd.f32 %v989, %v990
    %v992 = vrot.slane %v991, 4
    %v993 = vadd.f32 %v991, %v992
    %v994 = vrot.slane %v993, 2
    %v995 = vadd.f32 %v993, %v994
    %v996 = vrot.slane %v995, 1
    %v997 = vadd.f32 %v995, %v996
    %v998 = vrcp.pop %v997
    %v999 = vmul.f32 %v962, %v998
    %v1000 = vmul.f32 %v964, %v998
    %v1001 = vmul.f32 %v966, %v998
    %v1002 = vmul.f32 %v968, %v998
    %v1003 = vmul.f32 %v970, %v998
    %v1004 = vmul.f32 %v972, %v998
    %v1005 = vmul.f32 %v974, %v998
    %v1006 = vmul.f32 %v976, %v998
    %v1007 = vsel %vm337, %v999, 0.0
    %1008 = vadd.xlane.f32.xlu0 %v1007
    %v1009 = vpop.xlane.xlu0 %1008
    %v1010 = vsel %vm337, %v1000, 0.0
    %1011 = vadd.xlane.f32.xlu0 %v1010
    %v1012 = vpop.xlane.xlu0 %1011
    %v1013 = vsel %vm337, %v1001, 0.0
    %1014 = vadd.xlane.f32.xlu0 %v1013
    %v1015 = vpop.xlane.xlu0 %1014
    %v1016 = vsel %vm337, %v1002, 0.0
    %1017 = vadd.xlane.f32.xlu0 %v1016
    %v1018 = vpop.xlane.xlu0 %1017
    %v1019 = vsel %vm337, %v1003, 0.0
    %1020 = vadd.xlane.f32.xlu0 %v1019
    %v1021 = vpop.xlane.xlu0 %1020
    %v1022 = vsel %vm337, %v1004, 0.0
    %1023 = vadd.xlane.f32.xlu0 %v1022
    %v1024 = vpop.xlane.xlu0 %1023
    %v1025 = vsel %vm337, %v1005, 0.0
    %1026 = vadd.xlane.f32.xlu0 %v1025
    %v1027 = vpop.xlane.xlu0 %1026
    %v1028 = vsel %vm337, %v1006, 0.0
    %1029 = vadd.xlane.f32.xlu0 %v1028
    %v1030 = vpop.xlane.xlu0 %1029
    %v1031 = vadd.f32 %v1009, 1e-09
    %v1032 = vadd.f32 %v1012, 1e-09
    %v1033 = vadd.f32 %v1015, 1e-09
    %v1034 = vadd.f32 %v1018, 1e-09
    %v1035 = vadd.f32 %v1021, 1e-09
    %v1036 = vadd.f32 %v1024, 1e-09
    %v1037 = vadd.f32 %v1027, 1e-09
    %v1038 = vadd.f32 %v1030, 1e-09
    %v1039 = vrcp.pop %v1031
    %v1040 = vrcp.pop %v1032
    %v1041 = vrcp.pop %v1033
    %v1042 = vrcp.pop %v1034
    %v1043 = vrcp.pop %v1035
    %v1044 = vrcp.pop %v1036
    %v1045 = vrcp.pop %v1037
    %v1046 = vrcp.pop %v1038
    %v1047 = vmul.f32 %v999, %v1039
    %v1048 = vmul.f32 %v1000, %v1040
    %v1049 = vmul.f32 %v1001, %v1041
    %v1050 = vmul.f32 %v1002, %v1042
    %v1051 = vmul.f32 %v1003, %v1043
    %v1052 = vmul.f32 %v1004, %v1044
    %v1053 = vmul.f32 %v1005, %v1045
    %v1054 = vmul.f32 %v1006, %v1046
    %v1056 = vsel %vm337, %v1047, 0
    %v1059 = vsel %vm337, %v1048, 0
    %v1062 = vsel %vm337, %v1049, 0
    %v1065 = vsel %vm337, %v1050, 0
    %v1068 = vsel %vm337, %v1051, 0
    %v1071 = vsel %vm337, %v1052, 0
    %v1074 = vsel %vm337, %v1053, 0
    %v1077 = vsel %vm337, %v1054, 0
    %1079 = vmatprep.subr.mxu0 0.0
    %1080 = vmatpush1.msra.mxu0 0.0
    %1081 = vmatprep.subr.mxu0 0.0
    %1082 = vmatpush1.msra.mxu0 0.0
    %1083 = vmatprep.subr.mxu0 0.0
    %1084 = vmatpush1.msra.mxu0 0.0
    %1085 = vmatprep.subr.mxu0 0.0
    %1086 = vmatpush1.msra.mxu0 0.0
    %1087 = vmatprep.subr.mxu0 0.0
    %1088 = vmatpush1.msra.mxu0 0.0
    %1089 = vmatprep.subr.mxu0 0.0
    %1090 = vmatpush1.msra.mxu0 0.0
    %1091 = vmatprep.subr.mxu0 0.0
    %1092 = vmatpush1.msra.mxu0 0.0
    %1093 = vmatprep.subr.mxu0 0.0
    %1094 = vmatpush1.msra.mxu0 0.0
    %1095 = vmatprep.subr.mxu0 0.0
    %1096 = vmatpush1.msra.mxu0 %v728
    %1097 = vmatprep.subr.mxu0 0.0
    %1098 = vmatpush1.msra.mxu0 %v723
    %1099 = vmatprep.subr.mxu0 0.0
    %1100 = vmatpush1.msra.mxu0 %v718
    %1101 = vmatprep.subr.mxu0 0.0
    %1102 = vmatpush1.msra.mxu0 %v713
    %1103 = vmatprep.subr.mxu0 0.0
    %1104 = vmatpush1.msra.mxu0 %v708
    %1105 = vmatprep.subr.mxu0 0.0
    %1106 = vmatpush1.msra.mxu0 %v703
    %1107 = vmatprep.subr.mxu0 0.0
    %1108 = vmatpush1.msra.mxu0 %v698
    %1109 = vmatprep.subr.mxu0 0.0
    %1110 = vmatpush1.msra.mxu0 %v693
    %1111 = vmatprep.subr.mxu0 0.0
    %1112 = vmatpush2.msra.mxu0 0.0
    %1113 = vmatprep.subr.mxu0 0.0
    %1114 = vmatpush2.msra.mxu0 0.0
    %1115 = vmatprep.subr.mxu0 0.0
    %1116 = vmatpush2.msra.mxu0 0.0
    %1117 = vmatprep.subr.mxu0 0.0
    %1118 = vmatpush2.msra.mxu0 0.0
    %1119 = vmatprep.subr.mxu0 0.0
    %1120 = vmatpush2.msra.mxu0 0.0
    %1121 = vmatprep.subr.mxu0 0.0
    %1122 = vmatpush2.msra.mxu0 0.0
    %1123 = vmatprep.subr.mxu0 0.0
    %1124 = vmatpush2.msra.mxu0 0.0
    %1125 = vmatprep.subr.mxu0 0.0
    %1126 = vmatpush2.msra.mxu0 0.0
    %1127 = vmatprep.subr.mxu0 0.0
    %1128 = vmatpush2.msra.mxu0 0.0
    %1129 = vmatprep.subr.mxu0 0.0
    %1130 = vmatpush2.msra.mxu0 0.0
    %1131 = vmatprep.subr.mxu0 0.0
    %1132 = vmatpush2.msra.mxu0 0.0
    %1133 = vmatprep.subr.mxu0 0.0
    %1134 = vmatpush2.msra.mxu0 0.0
    %1135 = vmatprep.subr.mxu0 0.0
    %1136 = vmatpush2.msra.mxu0 0.0
    %1137 = vmatprep.subr.mxu0 0.0
    %1138 = vmatpush2.msra.mxu0 0.0
    %1139 = vmatprep.subr.mxu0 0.0
    %1140 = vmatpush2.msra.mxu0 0.0
    %1141 = vmatprep.subr.mxu0 0.0
    %1142 = vmatpush2.msra.mxu0 0.0
    %1143 = vmatprep.mubr.f32.mxu0 0.0
    %1144 = vmatmul.mubr.f32.gmra.mxu0 %v1056
    %v1145 = vpop.f32.mrf.mxu0
    %v1146 = vadd.f32 0.0, %v1145
    %v1147 = vpop.f32.mrf.mxu0
    %1148 = vmatprep.mubr.f32.mxu0 0.0
    %1149 = vmatmul.mubr.f32.gmra.mxu0 %v1059
    %v1150 = vpop.f32.mrf.mxu0
    %v1151 = vadd.f32 0.0, %v1150
    %v1152 = vpop.f32.mrf.mxu0
    %1153 = vmatprep.mubr.f32.mxu0 0.0
    %1154 = vmatmul.mubr.f32.gmra.mxu0 %v1062
    %v1155 = vpop.f32.mrf.mxu0
    %v1156 = vadd.f32 0.0, %v1155
    %v1157 = vpop.f32.mrf.mxu0
    %1158 = vmatprep.mubr.f32.mxu0 0.0
    %1159 = vmatmul.mubr.f32.gmra.mxu0 %v1065
    %v1160 = vpop.f32.mrf.mxu0
    %v1161 = vadd.f32 0.0, %v1160
    %v1162 = vpop.f32.mrf.mxu0
    %1163 = vmatprep.mubr.f32.mxu0 0.0
    %1164 = vmatmul.mubr.f32.gmra.mxu0 %v1068
    %v1165 = vpop.f32.mrf.mxu0
    %v1166 = vadd.f32 0.0, %v1165
    %v1167 = vpop.f32.mrf.mxu0
    %1168 = vmatprep.mubr.f32.mxu0 0.0
    %1169 = vmatmul.mubr.f32.gmra.mxu0 %v1071
    %v1170 = vpop.f32.mrf.mxu0
    %v1171 = vadd.f32 0.0, %v1170
    %v1172 = vpop.f32.mrf.mxu0
    %1173 = vmatprep.mubr.f32.mxu0 0.0
    %1174 = vmatmul.mubr.f32.gmra.mxu0 %v1074
    %v1175 = vpop.f32.mrf.mxu0
    %v1176 = vadd.f32 0.0, %v1175
    %v1177 = vpop.f32.mrf.mxu0
    %1178 = vmatprep.mubr.f32.mxu0 0.0
    %1179 = vmatmul.mubr.f32.gmra.mxu0 %v1077
    %v1180 = vpop.f32.mrf.mxu0
    %v1181 = vadd.f32 0.0, %v1180
    %v1182 = vpop.f32.mrf.mxu0
    %1183 = vdwg.mxu0
    %v1184 = vsub.f32 %v531, %v1146
    %v1185 = vsub.f32 %v532, %v1151
    %v1186 = vsub.f32 %v533, %v1156
    %v1187 = vsub.f32 %v534, %v1161
    %v1188 = vsub.f32 %v535, %v1166
    %v1189 = vsub.f32 %v536, %v1171
    %v1190 = vsub.f32 %v537, %v1176
    %v1191 = vsub.f32 %v538, %v1181
    %1200 = vrot.lane.b32.xlu0 %v733, 64
    %v1201 = vpop.permute.xlu0 %1200
    %1202 = vrot.lane.b32.xlu0 %v738, 64
    %v1203 = vpop.permute.xlu0 %1202
    %1204 = vrot.lane.b32.xlu0 %v743, 64
    %v1205 = vpop.permute.xlu0 %1204
    %1206 = vrot.lane.b32.xlu0 %v748, 64
    %v1207 = vpop.permute.xlu0 %1206
    %1208 = vrot.lane.b32.xlu0 %v753, 64
    %v1209 = vpop.permute.xlu0 %1208
    %1210 = vrot.lane.b32.xlu0 %v758, 64
    %v1211 = vpop.permute.xlu0 %1210
    %1212 = vrot.lane.b32.xlu0 %v763, 64
    %v1213 = vpop.permute.xlu0 %1212
    %1214 = vrot.lane.b32.xlu0 %v768, 64
    %v1215 = vpop.permute.xlu0 %1214
    %v1216 = vsel %vm337, %v1201, 0
    %v1218 = vsel %vm337, %v1203, 0
    %v1220 = vsel %vm337, %v1205, 0
    %v1222 = vsel %vm337, %v1207, 0
    %v1224 = vsel %vm337, %v1209, 0
    %v1226 = vsel %vm337, %v1211, 0
    %v1228 = vsel %vm337, %v1213, 0
    %v1230 = vsel %vm337, %v1215, 0
    %1232 = vmatprep.subr.mxu0 0.0
    %1233 = vmatpush1.xpose.msra.mxu0 0.0
    %1234 = vmatprep.subr.mxu0 0.0
    %1235 = vmatpush1.xpose.msra.mxu0 0.0
    %1236 = vmatprep.subr.mxu0 0.0
    %1237 = vmatpush1.xpose.msra.mxu0 0.0
    %1238 = vmatprep.subr.mxu0 0.0
    %1239 = vmatpush1.xpose.msra.mxu0 0.0
    %1240 = vmatprep.subr.mxu0 0.0
    %1241 = vmatpush1.xpose.msra.mxu0 0.0
    %1242 = vmatprep.subr.mxu0 0.0
    %1243 = vmatpush1.xpose.msra.mxu0 0.0
    %1244 = vmatprep.subr.mxu0 0.0
    %1245 = vmatpush1.xpose.msra.mxu0 0.0
    %1246 = vmatprep.subr.mxu0 0.0
    %1247 = vmatpush1.xpose.msra.mxu0 0.0
    %1248 = vmatprep.subr.mxu0 0.0
    %1249 = vmatpush1.xpose.msra.mxu0 %v1230
    %1250 = vmatprep.subr.mxu0 0.0
    %1251 = vmatpush1.xpose.msra.mxu0 %v1228
    %1252 = vmatprep.subr.mxu0 0.0
    %1253 = vmatpush1.xpose.msra.mxu0 %v1226
    %1254 = vmatprep.subr.mxu0 0.0
    %1255 = vmatpush1.xpose.msra.mxu0 %v1224
    %1256 = vmatprep.subr.mxu0 0.0
    %1257 = vmatpush1.xpose.msra.mxu0 %v1222
    %1258 = vmatprep.subr.mxu0 0.0
    %1259 = vmatpush1.xpose.msra.mxu0 %v1220
    %1260 = vmatprep.subr.mxu0 0.0
    %1261 = vmatpush1.xpose.msra.mxu0 %v1218
    %1262 = vmatprep.subr.mxu0 0.0
    %1263 = vmatpush1.xpose.msra.mxu0 %v1216
    %1264 = vmatprep.subr.mxu0 0.0
    %1265 = vmatpush2.xpose.msra.mxu0 0.0
    %1266 = vmatprep.subr.mxu0 0.0
    %1267 = vmatpush2.xpose.msra.mxu0 0.0
    %1268 = vmatprep.subr.mxu0 0.0
    %1269 = vmatpush2.xpose.msra.mxu0 0.0
    %1270 = vmatprep.subr.mxu0 0.0
    %1271 = vmatpush2.xpose.msra.mxu0 0.0
    %1272 = vmatprep.subr.mxu0 0.0
    %1273 = vmatpush2.xpose.msra.mxu0 0.0
    %1274 = vmatprep.subr.mxu0 0.0
    %1275 = vmatpush2.xpose.msra.mxu0 0.0
    %1276 = vmatprep.subr.mxu0 0.0
    %1277 = vmatpush2.xpose.msra.mxu0 0.0
    %1278 = vmatprep.subr.mxu0 0.0
    %1279 = vmatpush2.xpose.msra.mxu0 0.0
    %1280 = vmatprep.subr.mxu0 0.0
    %1281 = vmatpush2.xpose.msra.mxu0 0.0
    %1282 = vmatprep.subr.mxu0 0.0
    %1283 = vmatpush2.xpose.msra.mxu0 0.0
    %1284 = vmatprep.subr.mxu0 0.0
    %1285 = vmatpush2.xpose.msra.mxu0 0.0
    %1286 = vmatprep.subr.mxu0 0.0
    %1287 = vmatpush2.xpose.msra.mxu0 0.0
    %1288 = vmatprep.subr.mxu0 0.0
    %1289 = vmatpush2.xpose.msra.mxu0 0.0
    %1290 = vmatprep.subr.mxu0 0.0
    %1291 = vmatpush2.xpose.msra.mxu0 0.0
    %1292 = vmatprep.subr.mxu0 0.0
    %1293 = vmatpush2.xpose.msra.mxu0 0.0
    %1294 = vmatprep.subr.mxu0 0.0
    %1295 = vmatpush2.xpose.msra.mxu0 0.0
    %1296 = vmatprep.mubr.f32.mxu0 0.0
    %1297 = vmatmul.mubr.f32.gmra.mxu0 %v1216
    %v1298 = vpop.f32.mrf.mxu0
    %v1299 = vadd.f32 0.0, %v1298
    %v1300 = vpop.f32.mrf.mxu0
    %1301 = vmatprep.mubr.f32.mxu0 0.0
    %1302 = vmatmul.mubr.f32.gmra.mxu0 %v1218
    %v1303 = vpop.f32.mrf.mxu0
    %v1304 = vadd.f32 0.0, %v1303
    %v1305 = vpop.f32.mrf.mxu0
    %1306 = vmatprep.mubr.f32.mxu0 0.0
    %1307 = vmatmul.mubr.f32.gmra.mxu0 %v1220
    %v1308 = vpop.f32.mrf.mxu0
    %v1309 = vadd.f32 0.0, %v1308
    %v1310 = vpop.f32.mrf.mxu0
    %1311 = vmatprep.mubr.f32.mxu0 0.0
    %1312 = vmatmul.mubr.f32.gmra.mxu0 %v1222
    %v1313 = vpop.f32.mrf.mxu0
    %v1314 = vadd.f32 0.0, %v1313
    %v1315 = vpop.f32.mrf.mxu0
    %1316 = vmatprep.mubr.f32.mxu0 0.0
    %1317 = vmatmul.mubr.f32.gmra.mxu0 %v1224
    %v1318 = vpop.f32.mrf.mxu0
    %v1319 = vadd.f32 0.0, %v1318
    %v1320 = vpop.f32.mrf.mxu0
    %1321 = vmatprep.mubr.f32.mxu0 0.0
    %1322 = vmatmul.mubr.f32.gmra.mxu0 %v1226
    %v1323 = vpop.f32.mrf.mxu0
    %v1324 = vadd.f32 0.0, %v1323
    %v1325 = vpop.f32.mrf.mxu0
    %1326 = vmatprep.mubr.f32.mxu0 0.0
    %1327 = vmatmul.mubr.f32.gmra.mxu0 %v1228
    %v1328 = vpop.f32.mrf.mxu0
    %v1329 = vadd.f32 0.0, %v1328
    %v1330 = vpop.f32.mrf.mxu0
    %1331 = vmatprep.mubr.f32.mxu0 0.0
    %1332 = vmatmul.mubr.f32.gmra.mxu0 %v1230
    %v1333 = vpop.f32.mrf.mxu0
    %v1334 = vadd.f32 0.0, %v1333
    %v1335 = vpop.f32.mrf.mxu0
    %1336 = vdwg.mxu0
    %v1337 = vsel %vm337, %v1299, -inf
    %1338 = vmax.xlane.f32.xlu0 %v1337
    %v1339 = vpop.xlane.xlu0 %1338
    %v1340 = vsel %vm337, %v1304, -inf
    %1341 = vmax.xlane.f32.xlu0 %v1340
    %v1342 = vpop.xlane.xlu0 %1341
    %v1343 = vsel %vm337, %v1309, -inf
    %1344 = vmax.xlane.f32.xlu0 %v1343
    %v1345 = vpop.xlane.xlu0 %1344
    %v1346 = vsel %vm337, %v1314, -inf
    %1347 = vmax.xlane.f32.xlu0 %v1346
    %v1348 = vpop.xlane.xlu0 %1347
    %v1349 = vsel %vm337, %v1319, -inf
    %1350 = vmax.xlane.f32.xlu0 %v1349
    %v1351 = vpop.xlane.xlu0 %1350
    %v1352 = vsel %vm337, %v1324, -inf
    %1353 = vmax.xlane.f32.xlu0 %v1352
    %v1354 = vpop.xlane.xlu0 %1353
    %v1355 = vsel %vm337, %v1329, -inf
    %1356 = vmax.xlane.f32.xlu0 %v1355
    %v1357 = vpop.xlane.xlu0 %1356
    %v1358 = vsel %vm337, %v1334, -inf
    %1359 = vmax.xlane.f32.xlu0 %v1358
    %v1360 = vpop.xlane.xlu0 %1359
    %v1361 = vmax.f32 %v1339, %v1351
    %v1362 = vmax.f32 %v1342, %v1354
    %v1363 = vmax.f32 %v1345, %v1357
    %v1364 = vmax.f32 %v1348, %v1360
    %v1365 = vmax.f32 %v1361, %v1362
    %v1366 = vmax.f32 %v1363, %v1364
    %v1367 = vmax.f32 %v1365, %v1366
    %v1368 = vrot.slane %v1367, 4
    %v1369 = vmax.f32 %v1367, %v1368
    %v1370 = vrot.slane %v1369, 2
    %v1371 = vmax.f32 %v1369, %v1370
    %v1372 = vrot.slane %v1371, 1
    %v1373 = vmax.f32 %v1371, %v1372
    %v1374 = vsub.f32 %v1299, %v1373
    %v1375 = vsub.f32 %v1304, %v1373
    %v1376 = vsub.f32 %v1309, %v1373
    %v1377 = vsub.f32 %v1314, %v1373
    %v1378 = vsub.f32 %v1319, %v1373
    %v1379 = vsub.f32 %v1324, %v1373
    %v1380 = vsub.f32 %v1329, %v1373
    %v1381 = vsub.f32 %v1334, %v1373
    %v1382 = vmul.f32 %v1374, 1.442695
    %v1383 = vpow.pop %v1382
    %v1384 = vmul.f32 %v1375, 1.442695
    %v1385 = vpow.pop %v1384
    %v1386 = vmul.f32 %v1376, 1.442695
    %v1387 = vpow.pop %v1386
    %v1388 = vmul.f32 %v1377, 1.442695
    %v1389 = vpow.pop %v1388
    %v1390 = vmul.f32 %v1378, 1.442695
    %v1391 = vpow.pop %v1390
    %v1392 = vmul.f32 %v1379, 1.442695
    %v1393 = vpow.pop %v1392
    %v1394 = vmul.f32 %v1380, 1.442695
    %v1395 = vpow.pop %v1394
    %v1396 = vmul.f32 %v1381, 1.442695
    %v1397 = vpow.pop %v1396
    %v1398 = vsel %vm337, %v1383, 0.0
    %v1399 = vsel %vm337, %v1385, 0.0
    %v1400 = vadd.f32 %v1398, %v1399
    %v1401 = vsel %vm337, %v1387, 0.0
    %v1402 = vadd.f32 %v1400, %v1401
    %v1403 = vsel %vm337, %v1389, 0.0
    %v1404 = vadd.f32 %v1402, %v1403
    %v1405 = vsel %vm337, %v1391, 0.0
    %v1406 = vadd.f32 %v1404, %v1405
    %v1407 = vsel %vm337, %v1393, 0.0
    %v1408 = vadd.f32 %v1406, %v1407
    %v1409 = vsel %vm337, %v1395, 0.0
    %v1410 = vadd.f32 %v1408, %v1409
    %v1411 = vsel %vm337, %v1397, 0.0
    %v1412 = vadd.f32 %v1410, %v1411
    %v1413 = vrot.slane %v1412, 4
    %v1414 = vadd.f32 %v1412, %v1413
    %v1415 = vrot.slane %v1414, 2
    %v1416 = vadd.f32 %v1414, %v1415
    %v1417 = vrot.slane %v1416, 1
    %v1418 = vadd.f32 %v1416, %v1417
    %v1419 = vrcp.pop %v1418
    %v1420 = vmul.f32 %v1383, %v1419
    %v1421 = vmul.f32 %v1385, %v1419
    %v1422 = vmul.f32 %v1387, %v1419
    %v1423 = vmul.f32 %v1389, %v1419
    %v1424 = vmul.f32 %v1391, %v1419
    %v1425 = vmul.f32 %v1393, %v1419
    %v1426 = vmul.f32 %v1395, %v1419
    %v1427 = vmul.f32 %v1397, %v1419
    %v1428 = vsel %vm337, %v1420, 0.0
    %1429 = vadd.xlane.f32.xlu0 %v1428
    %v1430 = vpop.xlane.xlu0 %1429
    %v1431 = vsel %vm337, %v1421, 0.0
    %1432 = vadd.xlane.f32.xlu0 %v1431
    %v1433 = vpop.xlane.xlu0 %1432
    %v1434 = vsel %vm337, %v1422, 0.0
    %1435 = vadd.xlane.f32.xlu0 %v1434
    %v1436 = vpop.xlane.xlu0 %1435
    %v1437 = vsel %vm337, %v1423, 0.0
    %1438 = vadd.xlane.f32.xlu0 %v1437
    %v1439 = vpop.xlane.xlu0 %1438
    %v1440 = vsel %vm337, %v1424, 0.0
    %1441 = vadd.xlane.f32.xlu0 %v1440
    %v1442 = vpop.xlane.xlu0 %1441
    %v1443 = vsel %vm337, %v1425, 0.0
    %1444 = vadd.xlane.f32.xlu0 %v1443
    %v1445 = vpop.xlane.xlu0 %1444
    %v1446 = vsel %vm337, %v1426, 0.0
    %1447 = vadd.xlane.f32.xlu0 %v1446
    %v1448 = vpop.xlane.xlu0 %1447
    %v1449 = vsel %vm337, %v1427, 0.0
    %1450 = vadd.xlane.f32.xlu0 %v1449
    %v1451 = vpop.xlane.xlu0 %1450
    %v1452 = vadd.f32 %v1430, 1e-09
    %v1453 = vadd.f32 %v1433, 1e-09
    %v1454 = vadd.f32 %v1436, 1e-09
    %v1455 = vadd.f32 %v1439, 1e-09
    %v1456 = vadd.f32 %v1442, 1e-09
    %v1457 = vadd.f32 %v1445, 1e-09
    %v1458 = vadd.f32 %v1448, 1e-09
    %v1459 = vadd.f32 %v1451, 1e-09
    %v1460 = vrcp.pop %v1452
    %v1461 = vrcp.pop %v1453
    %v1462 = vrcp.pop %v1454
    %v1463 = vrcp.pop %v1455
    %v1464 = vrcp.pop %v1456
    %v1465 = vrcp.pop %v1457
    %v1466 = vrcp.pop %v1458
    %v1467 = vrcp.pop %v1459
    %v1468 = vmul.f32 %v1420, %v1460
    %v1469 = vmul.f32 %v1421, %v1461
    %v1470 = vmul.f32 %v1422, %v1462
    %v1471 = vmul.f32 %v1423, %v1463
    %v1472 = vmul.f32 %v1424, %v1464
    %v1473 = vmul.f32 %v1425, %v1465
    %v1474 = vmul.f32 %v1426, %v1466
    %v1475 = vmul.f32 %v1427, %v1467
    %v1477 = vsel %vm337, %v1468, 0
    %v1480 = vsel %vm337, %v1469, 0
    %v1483 = vsel %vm337, %v1470, 0
    %v1486 = vsel %vm337, %v1471, 0
    %v1489 = vsel %vm337, %v1472, 0
    %v1492 = vsel %vm337, %v1473, 0
    %v1495 = vsel %vm337, %v1474, 0
    %v1498 = vsel %vm337, %v1475, 0
    %1500 = vmatprep.subr.mxu0 0.0
    %1501 = vmatpush1.msra.mxu0 0.0
    %1502 = vmatprep.subr.mxu0 0.0
    %1503 = vmatpush1.msra.mxu0 0.0
    %1504 = vmatprep.subr.mxu0 0.0
    %1505 = vmatpush1.msra.mxu0 0.0
    %1506 = vmatprep.subr.mxu0 0.0
    %1507 = vmatpush1.msra.mxu0 0.0
    %1508 = vmatprep.subr.mxu0 0.0
    %1509 = vmatpush1.msra.mxu0 0.0
    %1510 = vmatprep.subr.mxu0 0.0
    %1511 = vmatpush1.msra.mxu0 0.0
    %1512 = vmatprep.subr.mxu0 0.0
    %1513 = vmatpush1.msra.mxu0 0.0
    %1514 = vmatprep.subr.mxu0 0.0
    %1515 = vmatpush1.msra.mxu0 0.0
    %1516 = vmatprep.subr.mxu0 0.0
    %1517 = vmatpush1.msra.mxu0 %v768
    %1518 = vmatprep.subr.mxu0 0.0
    %1519 = vmatpush1.msra.mxu0 %v763
    %1520 = vmatprep.subr.mxu0 0.0
    %1521 = vmatpush1.msra.mxu0 %v758
    %1522 = vmatprep.subr.mxu0 0.0
    %1523 = vmatpush1.msra.mxu0 %v753
    %1524 = vmatprep.subr.mxu0 0.0
    %1525 = vmatpush1.msra.mxu0 %v748
    %1526 = vmatprep.subr.mxu0 0.0
    %1527 = vmatpush1.msra.mxu0 %v743
    %1528 = vmatprep.subr.mxu0 0.0
    %1529 = vmatpush1.msra.mxu0 %v738
    %1530 = vmatprep.subr.mxu0 0.0
    %1531 = vmatpush1.msra.mxu0 %v733
    %1532 = vmatprep.subr.mxu0 0.0
    %1533 = vmatpush2.msra.mxu0 0.0
    %1534 = vmatprep.subr.mxu0 0.0
    %1535 = vmatpush2.msra.mxu0 0.0
    %1536 = vmatprep.subr.mxu0 0.0
    %1537 = vmatpush2.msra.mxu0 0.0
    %1538 = vmatprep.subr.mxu0 0.0
    %1539 = vmatpush2.msra.mxu0 0.0
    %1540 = vmatprep.subr.mxu0 0.0
    %1541 = vmatpush2.msra.mxu0 0.0
    %1542 = vmatprep.subr.mxu0 0.0
    %1543 = vmatpush2.msra.mxu0 0.0
    %1544 = vmatprep.subr.mxu0 0.0
    %1545 = vmatpush2.msra.mxu0 0.0
    %1546 = vmatprep.subr.mxu0 0.0
    %1547 = vmatpush2.msra.mxu0 0.0
    %1548 = vmatprep.subr.mxu0 0.0
    %1549 = vmatpush2.msra.mxu0 0.0
    %1550 = vmatprep.subr.mxu0 0.0
    %1551 = vmatpush2.msra.mxu0 0.0
    %1552 = vmatprep.subr.mxu0 0.0
    %1553 = vmatpush2.msra.mxu0 0.0
    %1554 = vmatprep.subr.mxu0 0.0
    %1555 = vmatpush2.msra.mxu0 0.0
    %1556 = vmatprep.subr.mxu0 0.0
    %1557 = vmatpush2.msra.mxu0 0.0
    %1558 = vmatprep.subr.mxu0 0.0
    %1559 = vmatpush2.msra.mxu0 0.0
    %1560 = vmatprep.subr.mxu0 0.0
    %1561 = vmatpush2.msra.mxu0 0.0
    %1562 = vmatprep.subr.mxu0 0.0
    %1563 = vmatpush2.msra.mxu0 0.0
    %1564 = vmatprep.mubr.f32.mxu0 0.0
    %1565 = vmatmul.mubr.f32.gmra.mxu0 %v1477
    %v1566 = vpop.f32.mrf.mxu0
    %v1567 = vadd.f32 0.0, %v1566
    %v1568 = vpop.f32.mrf.mxu0
    %1569 = vmatprep.mubr.f32.mxu0 0.0
    %1570 = vmatmul.mubr.f32.gmra.mxu0 %v1480
    %v1571 = vpop.f32.mrf.mxu0
    %v1572 = vadd.f32 0.0, %v1571
    %v1573 = vpop.f32.mrf.mxu0
    %1574 = vmatprep.mubr.f32.mxu0 0.0
    %1575 = vmatmul.mubr.f32.gmra.mxu0 %v1483
    %v1576 = vpop.f32.mrf.mxu0
    %v1577 = vadd.f32 0.0, %v1576
    %v1578 = vpop.f32.mrf.mxu0
    %1579 = vmatprep.mubr.f32.mxu0 0.0
    %1580 = vmatmul.mubr.f32.gmra.mxu0 %v1486
    %v1581 = vpop.f32.mrf.mxu0
    %v1582 = vadd.f32 0.0, %v1581
    %v1583 = vpop.f32.mrf.mxu0
    %1584 = vmatprep.mubr.f32.mxu0 0.0
    %1585 = vmatmul.mubr.f32.gmra.mxu0 %v1489
    %v1586 = vpop.f32.mrf.mxu0
    %v1587 = vadd.f32 0.0, %v1586
    %v1588 = vpop.f32.mrf.mxu0
    %1589 = vmatprep.mubr.f32.mxu0 0.0
    %1590 = vmatmul.mubr.f32.gmra.mxu0 %v1492
    %v1591 = vpop.f32.mrf.mxu0
    %v1592 = vadd.f32 0.0, %v1591
    %v1593 = vpop.f32.mrf.mxu0
    %1594 = vmatprep.mubr.f32.mxu0 0.0
    %1595 = vmatmul.mubr.f32.gmra.mxu0 %v1495
    %v1596 = vpop.f32.mrf.mxu0
    %v1597 = vadd.f32 0.0, %v1596
    %v1598 = vpop.f32.mrf.mxu0
    %1599 = vmatprep.mubr.f32.mxu0 0.0
    %1600 = vmatmul.mubr.f32.gmra.mxu0 %v1498
    %v1601 = vpop.f32.mrf.mxu0
    %v1602 = vadd.f32 0.0, %v1601
    %v1603 = vpop.f32.mrf.mxu0
    %1604 = vdwg.mxu0
    %v1605 = vsub.f32 %v539, %v1567
    %v1606 = vsub.f32 %v540, %v1572
    %v1607 = vsub.f32 %v541, %v1577
    %v1608 = vsub.f32 %v542, %v1582
    %v1609 = vsub.f32 %v543, %v1587
    %v1610 = vsub.f32 %v544, %v1592
    %v1611 = vsub.f32 %v545, %v1597
    %v1612 = vsub.f32 %v546, %v1602
    %v1613 = vld [vmem:[#allocation5] sm:$0xff]
    %v1614 = vld [vmem:[#allocation5 + $0x8] sm:$0xff]
    %v1615 = vld [vmem:[#allocation5 + $0x10] sm:$0xff]
    %v1616 = vld [vmem:[#allocation5 + $0x18] sm:$0xff]
    %v1617 = vld [vmem:[#allocation5 + $0x20] sm:$0xff]
    %v1618 = vld [vmem:[#allocation5 + $0x28] sm:$0xff]
    %v1619 = vld [vmem:[#allocation5 + $0x30] sm:$0xff]
    %v1620 = vld [vmem:[#allocation5 + $0x38] sm:$0xff]
    %v1621 = vld [vmem:[%s8] sm:$0x1]
    %v1623 = vlaneseq
    %v1624 = vshrl.u32 %v1623, 7
    %v1625 = vsub.s32 0, %v1624
    %v1626 = vrot.slane %v1621, %v1625
    %v1629 = vsel %vm337, %v1184, 0
    %v1632 = vsel %vm337, %v1185, 0
    %v1635 = vsel %vm337, %v1186, 0
    %v1638 = vsel %vm337, %v1187, 0
    %v1641 = vsel %vm337, %v1188, 0
    %v1644 = vsel %vm337, %v1189, 0
    %v1647 = vsel %vm337, %v1190, 0
    %v1650 = vsel %vm337, %v1191, 0
    %v1653 = vsel %vm337, %v1605, 0
    %v1656 = vsel %vm337, %v1606, 0
    %v1659 = vsel %vm337, %v1607, 0
    %v1662 = vsel %vm337, %v1608, 0
    %v1665 = vsel %vm337, %v1609, 0
    %v1668 = vsel %vm337, %v1610, 0
    %v1671 = vsel %vm337, %v1611, 0
    %v1674 = vsel %vm337, %v1612, 0
    %1676 = vmatprep.subr.mxu0 0.0
    %1677 = vmatpush1.msra.mxu0 0.0
    %1678 = vmatprep.subr.mxu0 0.0
    %1679 = vmatpush1.msra.mxu0 0.0
    %1680 = vmatprep.subr.mxu0 0.0
    %1681 = vmatpush1.msra.mxu0 0.0
    %1682 = vmatprep.subr.mxu0 0.0
    %1683 = vmatpush1.msra.mxu0 0.0
    %1684 = vmatprep.subr.mxu0 0.0
    %1685 = vmatpush1.msra.mxu0 0.0
    %1686 = vmatprep.subr.mxu0 0.0
    %1687 = vmatpush1.msra.mxu0 0.0
    %1688 = vmatprep.subr.mxu0 0.0
    %1689 = vmatpush1.msra.mxu0 0.0
    %1690 = vmatprep.subr.mxu0 0.0
    %1691 = vmatpush1.msra.mxu0 0.0
    %1692 = vmatprep.subr.mxu0 0.0
    %1693 = vmatpush1.msra.mxu0 %v1620
    %1694 = vmatprep.subr.mxu0 0.0
    %1695 = vmatpush1.msra.mxu0 %v1619
    %1696 = vmatprep.subr.mxu0 0.0
    %1697 = vmatpush1.msra.mxu0 %v1618
    %1698 = vmatprep.subr.mxu0 0.0
    %1699 = vmatpush1.msra.mxu0 %v1617
    %1700 = vmatprep.subr.mxu0 0.0
    %1701 = vmatpush1.msra.mxu0 %v1616
    %1702 = vmatprep.subr.mxu0 0.0
    %1703 = vmatpush1.msra.mxu0 %v1615
    %1704 = vmatprep.subr.mxu0 0.0
    %1705 = vmatpush1.msra.mxu0 %v1614
    %1706 = vmatprep.subr.mxu0 0.0
    %1707 = vmatpush1.msra.mxu0 %v1613
    %1708 = vmatprep.subr.mxu0 0.0
    %1709 = vmatpush2.msra.mxu0 0.0
    %1710 = vmatprep.subr.mxu0 0.0
    %1711 = vmatpush2.msra.mxu0 0.0
    %1712 = vmatprep.subr.mxu0 0.0
    %1713 = vmatpush2.msra.mxu0 0.0
    %1714 = vmatprep.subr.mxu0 0.0
    %1715 = vmatpush2.msra.mxu0 0.0
    %1716 = vmatprep.subr.mxu0 0.0
    %1717 = vmatpush2.msra.mxu0 0.0
    %1718 = vmatprep.subr.mxu0 0.0
    %1719 = vmatpush2.msra.mxu0 0.0
    %1720 = vmatprep.subr.mxu0 0.0
    %1721 = vmatpush2.msra.mxu0 0.0
    %1722 = vmatprep.subr.mxu0 0.0
    %1723 = vmatpush2.msra.mxu0 0.0
    %1724 = vmatprep.subr.mxu0 0.0
    %1725 = vmatpush2.msra.mxu0 0.0
    %1726 = vmatprep.subr.mxu0 0.0
    %1727 = vmatpush2.msra.mxu0 0.0
    %1728 = vmatprep.subr.mxu0 0.0
    %1729 = vmatpush2.msra.mxu0 0.0
    %1730 = vmatprep.subr.mxu0 0.0
    %1731 = vmatpush2.msra.mxu0 0.0
    %1732 = vmatprep.subr.mxu0 0.0
    %1733 = vmatpush2.msra.mxu0 0.0
    %1734 = vmatprep.subr.mxu0 0.0
    %1735 = vmatpush2.msra.mxu0 0.0
    %1736 = vmatprep.subr.mxu0 0.0
    %1737 = vmatpush2.msra.mxu0 0.0
    %1738 = vmatprep.subr.mxu0 0.0
    %1739 = vmatpush2.msra.mxu0 0.0
    %1740 = vmatprep.mubr.f32.mxu0 0.0
    %1741 = vmatmul.mubr.f32.gmra.mxu0 %v1629
    %v1742 = vpop.f32.mrf.mxu0
    %v1743 = vadd.f32 %v1626, %v1742
    %v1744 = vpop.f32.mrf.mxu0
    %1745 = vmatprep.mubr.f32.mxu0 0.0
    %1746 = vmatmul.mubr.f32.gmra.mxu0 %v1632
    %v1747 = vpop.f32.mrf.mxu0
    %v1748 = vadd.f32 %v1626, %v1747
    %v1749 = vpop.f32.mrf.mxu0
    %1750 = vmatprep.mubr.f32.mxu0 0.0
    %1751 = vmatmul.mubr.f32.gmra.mxu0 %v1635
    %v1752 = vpop.f32.mrf.mxu0
    %v1753 = vadd.f32 %v1626, %v1752
    %v1754 = vpop.f32.mrf.mxu0
    %1755 = vmatprep.mubr.f32.mxu0 0.0
    %1756 = vmatmul.mubr.f32.gmra.mxu0 %v1638
    %v1757 = vpop.f32.mrf.mxu0
    %v1758 = vadd.f32 %v1626, %v1757
    %v1759 = vpop.f32.mrf.mxu0
    %1760 = vmatprep.mubr.f32.mxu0 0.0
    %1761 = vmatmul.mubr.f32.gmra.mxu0 %v1641
    %v1762 = vpop.f32.mrf.mxu0
    %v1763 = vadd.f32 %v1626, %v1762
    %v1764 = vpop.f32.mrf.mxu0
    %1765 = vmatprep.mubr.f32.mxu0 0.0
    %1766 = vmatmul.mubr.f32.gmra.mxu0 %v1644
    %v1767 = vpop.f32.mrf.mxu0
    %v1768 = vadd.f32 %v1626, %v1767
    %v1769 = vpop.f32.mrf.mxu0
    %1770 = vmatprep.mubr.f32.mxu0 0.0
    %1771 = vmatmul.mubr.f32.gmra.mxu0 %v1647
    %v1772 = vpop.f32.mrf.mxu0
    %v1773 = vadd.f32 %v1626, %v1772
    %v1774 = vpop.f32.mrf.mxu0
    %1775 = vmatprep.mubr.f32.mxu0 0.0
    %1776 = vmatmul.mubr.f32.gmra.mxu0 %v1650
    %v1777 = vpop.f32.mrf.mxu0
    %v1778 = vadd.f32 %v1626, %v1777
    %v1779 = vpop.f32.mrf.mxu0
    %1780 = vmatprep.mubr.f32.mxu0 0.0
    %1781 = vmatmul.mubr.f32.gmra.mxu0 %v1653
    %v1782 = vpop.f32.mrf.mxu0
    %v1783 = vadd.f32 %v1626, %v1782
    %v1784 = vpop.f32.mrf.mxu0
    %1785 = vmatprep.mubr.f32.mxu0 0.0
    %1786 = vmatmul.mubr.f32.gmra.mxu0 %v1656
    %v1787 = vpop.f32.mrf.mxu0
    %v1788 = vadd.f32 %v1626, %v1787
    %v1789 = vpop.f32.mrf.mxu0
    %1790 = vmatprep.mubr.f32.mxu0 0.0
    %1791 = vmatmul.mubr.f32.gmra.mxu0 %v1659
    %v1792 = vpop.f32.mrf.mxu0
    %v1793 = vadd.f32 %v1626, %v1792
    %v1794 = vpop.f32.mrf.mxu0
    %1795 = vmatprep.mubr.f32.mxu0 0.0
    %1796 = vmatmul.mubr.f32.gmra.mxu0 %v1662
    %v1797 = vpop.f32.mrf.mxu0
    %v1798 = vadd.f32 %v1626, %v1797
    %v1799 = vpop.f32.mrf.mxu0
    %1800 = vmatprep.mubr.f32.mxu0 0.0
    %1801 = vmatmul.mubr.f32.gmra.mxu0 %v1665
    %v1802 = vpop.f32.mrf.mxu0
    %v1803 = vadd.f32 %v1626, %v1802
    %v1804 = vpop.f32.mrf.mxu0
    %1805 = vmatprep.mubr.f32.mxu0 0.0
    %1806 = vmatmul.mubr.f32.gmra.mxu0 %v1668
    %v1807 = vpop.f32.mrf.mxu0
    %v1808 = vadd.f32 %v1626, %v1807
    %v1809 = vpop.f32.mrf.mxu0
    %1810 = vmatprep.mubr.f32.mxu0 0.0
    %1811 = vmatmul.mubr.f32.gmra.mxu0 %v1671
    %v1812 = vpop.f32.mrf.mxu0
    %v1813 = vadd.f32 %v1626, %v1812
    %v1814 = vpop.f32.mrf.mxu0
    %1815 = vmatprep.mubr.f32.mxu0 0.0
    %1816 = vmatmul.mubr.f32.gmra.mxu0 %v1674
    %v1817 = vpop.f32.mrf.mxu0
    %v1818 = vadd.f32 %v1626, %v1817
    %v1819 = vpop.f32.mrf.mxu0
    %1820 = vdwg.mxu0
    %v1821 = vmax.f32 %v1743, 0.0
    %v1822 = vmax.f32 %v1748, 0.0
    %v1823 = vmax.f32 %v1753, 0.0
    %v1824 = vmax.f32 %v1758, 0.0
    %v1825 = vmax.f32 %v1763, 0.0
    %v1826 = vmax.f32 %v1768, 0.0
    %v1827 = vmax.f32 %v1773, 0.0
    %v1828 = vmax.f32 %v1778, 0.0
    %v1829 = vmax.f32 %v1783, 0.0
    %v1830 = vmax.f32 %v1788, 0.0
    %v1831 = vmax.f32 %v1793, 0.0
    %v1832 = vmax.f32 %v1798, 0.0
    %v1833 = vmax.f32 %v1803, 0.0
    %v1834 = vmax.f32 %v1808, 0.0
    %v1835 = vmax.f32 %v1813, 0.0
    %v1836 = vmax.f32 %v1818, 0.0
    %v1837 = vadd.f32 %v531, %v1821
    %v1838 = vadd.f32 %v532, %v1822
    %v1839 = vadd.f32 %v533, %v1823
    %v1840 = vadd.f32 %v534, %v1824
    %v1841 = vadd.f32 %v535, %v1825
    %v1842 = vadd.f32 %v536, %v1826
    %v1843 = vadd.f32 %v537, %v1827
    %v1844 = vadd.f32 %v538, %v1828
    %v1845 = vadd.f32 %v539, %v1829
    %v1846 = vadd.f32 %v540, %v1830
    %v1847 = vadd.f32 %v541, %v1831
    %v1848 = vadd.f32 %v542, %v1832
    %v1849 = vadd.f32 %v543, %v1833
    %v1850 = vadd.f32 %v544, %v1834
    %v1851 = vadd.f32 %v545, %v1835
    %v1852 = vadd.f32 %v546, %v1836
    %s1853 = scalar_lea.vmem [#allocation7], 128
    %v1854 = vld [vmem:[%s1853] sm:$0xff]
    %v1855 = vld [vmem:[%s1853 + $0x8] sm:$0xff]
    %v1856 = vld [vmem:[%s1853 + $0x10] sm:$0xff]
    %v1857 = vld [vmem:[%s1853 + $0x18] sm:$0xff]
    %v1858 = vld [vmem:[%s1853 + $0x20] sm:$0xff]
    %v1859 = vld [vmem:[%s1853 + $0x28] sm:$0xff]
    %v1860 = vld [vmem:[%s1853 + $0x30] sm:$0xff]
    %v1861 = vld [vmem:[%s1853 + $0x38] sm:$0xff]
    %v1862 = vld [vmem:[%s1853 + $0x40] sm:$0xff]
    %v1863 = vld [vmem:[%s1853 + $0x48] sm:$0xff]
    %v1864 = vld [vmem:[%s1853 + $0x50] sm:$0xff]
    %v1865 = vld [vmem:[%s1853 + $0x58] sm:$0xff]
    %v1866 = vld [vmem:[%s1853 + $0x60] sm:$0xff]
    %v1867 = vld [vmem:[%s1853 + $0x68] sm:$0xff]
    %v1868 = vld [vmem:[%s1853 + $0x70] sm:$0xff]
    %v1869 = vld [vmem:[%s1853 + $0x78] sm:$0xff]
    %v1871 = vsel %vm337, %v1837, 0
    %v1874 = vsel %vm337, %v1838, 0
    %v1877 = vsel %vm337, %v1839, 0
    %v1880 = vsel %vm337, %v1840, 0
    %v1883 = vsel %vm337, %v1841, 0
    %v1886 = vsel %vm337, %v1842, 0
    %v1889 = vsel %vm337, %v1843, 0
    %v1892 = vsel %vm337, %v1844, 0
    %v1895 = vsel %vm337, %v1845, 0
    %v1898 = vsel %vm337, %v1846, 0
    %v1901 = vsel %vm337, %v1847, 0
    %v1904 = vsel %vm337, %v1848, 0
    %v1907 = vsel %vm337, %v1849, 0
    %v1910 = vsel %vm337, %v1850, 0
    %v1913 = vsel %vm337, %v1851, 0
    %v1916 = vsel %vm337, %v1852, 0
    %1918 = vmatprep.subr.mxu0 0.0
    %1919 = vmatpush1.msra.mxu0 0.0
    %1920 = vmatprep.subr.mxu0 0.0
    %1921 = vmatpush1.msra.mxu0 0.0
    %1922 = vmatprep.subr.mxu0 0.0
    %1923 = vmatpush1.msra.mxu0 0.0
    %1924 = vmatprep.subr.mxu0 0.0
    %1925 = vmatpush1.msra.mxu0 0.0
    %1926 = vmatprep.subr.mxu0 0.0
    %1927 = vmatpush1.msra.mxu0 0.0
    %1928 = vmatprep.subr.mxu0 0.0
    %1929 = vmatpush1.msra.mxu0 0.0
    %1930 = vmatprep.subr.mxu0 0.0
    %1931 = vmatpush1.msra.mxu0 0.0
    %1932 = vmatprep.subr.mxu0 0.0
    %1933 = vmatpush1.msra.mxu0 0.0
    %1934 = vmatprep.subr.mxu0 %v1869
    %1935 = vmatpush1.msra.mxu0 %v1868
    %1936 = vmatprep.subr.mxu0 %v1867
    %1937 = vmatpush1.msra.mxu0 %v1866
    %1938 = vmatprep.subr.mxu0 %v1865
    %1939 = vmatpush1.msra.mxu0 %v1864
    %1940 = vmatprep.subr.mxu0 %v1863
    %1941 = vmatpush1.msra.mxu0 %v1862
    %1942 = vmatprep.subr.mxu0 %v1861
    %1943 = vmatpush1.msra.mxu0 %v1860
    %1944 = vmatprep.subr.mxu0 %v1859
    %1945 = vmatpush1.msra.mxu0 %v1858
    %1946 = vmatprep.subr.mxu0 %v1857
    %1947 = vmatpush1.msra.mxu0 %v1856
    %1948 = vmatprep.subr.mxu0 %v1855
    %1949 = vmatpush1.msra.mxu0 %v1854
    %1950 = vmatprep.subr.mxu0 0.0
    %1951 = vmatpush2.msra.mxu0 0.0
    %1952 = vmatprep.subr.mxu0 0.0
    %1953 = vmatpush2.msra.mxu0 0.0
    %1954 = vmatprep.subr.mxu0 0.0
    %1955 = vmatpush2.msra.mxu0 0.0
    %1956 = vmatprep.subr.mxu0 0.0
    %1957 = vmatpush2.msra.mxu0 0.0
    %1958 = vmatprep.subr.mxu0 0.0
    %1959 = vmatpush2.msra.mxu0 0.0
    %1960 = vmatprep.subr.mxu0 0.0
    %1961 = vmatpush2.msra.mxu0 0.0
    %1962 = vmatprep.subr.mxu0 0.0
    %1963 = vmatpush2.msra.mxu0 0.0
    %1964 = vmatprep.subr.mxu0 0.0
    %1965 = vmatpush2.msra.mxu0 0.0
    %1966 = vmatprep.subr.mxu0 0.0
    %1967 = vmatpush2.msra.mxu0 0.0
    %1968 = vmatprep.subr.mxu0 0.0
    %1969 = vmatpush2.msra.mxu0 0.0
    %1970 = vmatprep.subr.mxu0 0.0
    %1971 = vmatpush2.msra.mxu0 0.0
    %1972 = vmatprep.subr.mxu0 0.0
    %1973 = vmatpush2.msra.mxu0 0.0
    %1974 = vmatprep.subr.mxu0 0.0
    %1975 = vmatpush2.msra.mxu0 0.0
    %1976 = vmatprep.subr.mxu0 0.0
    %1977 = vmatpush2.msra.mxu0 0.0
    %1978 = vmatprep.subr.mxu0 0.0
    %1979 = vmatpush2.msra.mxu0 0.0
    %1980 = vmatprep.subr.mxu0 0.0
    %1981 = vmatpush2.msra.mxu0 0.0
    %1982 = vmatprep.mubr.f32.mxu0 0.0
    %1983 = vmatmul.mubr.f32.gmra.mxu0 %v1871
    %v1984 = vpop.f32.mrf.mxu0
    %v1985 = vadd.f32 0.0, %v1984
    %v1986 = vpop.f32.mrf.mxu0
    %v1987 = vadd.f32 0.0, %v1986
    %1988 = vmatprep.mubr.f32.mxu0 0.0
    %1989 = vmatmul.mubr.f32.gmra.mxu0 %v1874
    %v1990 = vpop.f32.mrf.mxu0
    %v1991 = vadd.f32 0.0, %v1990
    %v1992 = vpop.f32.mrf.mxu0
    %v1993 = vadd.f32 0.0, %v1992
    %1994 = vmatprep.mubr.f32.mxu0 0.0
    %1995 = vmatmul.mubr.f32.gmra.mxu0 %v1877
    %v1996 = vpop.f32.mrf.mxu0
    %v1997 = vadd.f32 0.0, %v1996
    %v1998 = vpop.f32.mrf.mxu0
    %v1999 = vadd.f32 0.0, %v1998
    %2000 = vmatprep.mubr.f32.mxu0 0.0
    %2001 = vmatmul.mubr.f32.gmra.mxu0 %v1880
    %v2002 = vpop.f32.mrf.mxu0
    %v2003 = vadd.f32 0.0, %v2002
    %v2004 = vpop.f32.mrf.mxu0
    %v2005 = vadd.f32 0.0, %v2004
    %2006 = vmatprep.mubr.f32.mxu0 0.0
    %2007 = vmatmul.mubr.f32.gmra.mxu0 %v1883
    %v2008 = vpop.f32.mrf.mxu0
    %v2009 = vadd.f32 0.0, %v2008
    %v2010 = vpop.f32.mrf.mxu0
    %v2011 = vadd.f32 0.0, %v2010
    %2012 = vmatprep.mubr.f32.mxu0 0.0
    %2013 = vmatmul.mubr.f32.gmra.mxu0 %v1886
    %v2014 = vpop.f32.mrf.mxu0
    %v2015 = vadd.f32 0.0, %v2014
    %v2016 = vpop.f32.mrf.mxu0
    %v2017 = vadd.f32 0.0, %v2016
    %2018 = vmatprep.mubr.f32.mxu0 0.0
    %2019 = vmatmul.mubr.f32.gmra.mxu0 %v1889
    %v2020 = vpop.f32.mrf.mxu0
    %v2021 = vadd.f32 0.0, %v2020
    %v2022 = vpop.f32.mrf.mxu0
    %v2023 = vadd.f32 0.0, %v2022
    %2024 = vmatprep.mubr.f32.mxu0 0.0
    %2025 = vmatmul.mubr.f32.gmra.mxu0 %v1892
    %v2026 = vpop.f32.mrf.mxu0
    %v2027 = vadd.f32 0.0, %v2026
    %v2028 = vpop.f32.mrf.mxu0
    %v2029 = vadd.f32 0.0, %v2028
    %2030 = vmatprep.mubr.f32.mxu0 0.0
    %2031 = vmatmul.mubr.f32.gmra.mxu0 %v1895
    %v2032 = vpop.f32.mrf.mxu0
    %v2033 = vadd.f32 0.0, %v2032
    %v2034 = vpop.f32.mrf.mxu0
    %v2035 = vadd.f32 0.0, %v2034
    %2036 = vmatprep.mubr.f32.mxu0 0.0
    %2037 = vmatmul.mubr.f32.gmra.mxu0 %v1898
    %v2038 = vpop.f32.mrf.mxu0
    %v2039 = vadd.f32 0.0, %v2038
    %v2040 = vpop.f32.mrf.mxu0
    %v2041 = vadd.f32 0.0, %v2040
    %2042 = vmatprep.mubr.f32.mxu0 0.0
    %2043 = vmatmul.mubr.f32.gmra.mxu0 %v1901
    %v2044 = vpop.f32.mrf.mxu0
    %v2045 = vadd.f32 0.0, %v2044
    %v2046 = vpop.f32.mrf.mxu0
    %v2047 = vadd.f32 0.0, %v2046
    %2048 = vmatprep.mubr.f32.mxu0 0.0
    %2049 = vmatmul.mubr.f32.gmra.mxu0 %v1904
    %v2050 = vpop.f32.mrf.mxu0
    %v2051 = vadd.f32 0.0, %v2050
    %v2052 = vpop.f32.mrf.mxu0
    %v2053 = vadd.f32 0.0, %v2052
    %2054 = vmatprep.mubr.f32.mxu0 0.0
    %2055 = vmatmul.mubr.f32.gmra.mxu0 %v1907
    %v2056 = vpop.f32.mrf.mxu0
    %v2057 = vadd.f32 0.0, %v2056
    %v2058 = vpop.f32.mrf.mxu0
    %v2059 = vadd.f32 0.0, %v2058
    %2060 = vmatprep.mubr.f32.mxu0 0.0
    %2061 = vmatmul.mubr.f32.gmra.mxu0 %v1910
    %v2062 = vpop.f32.mrf.mxu0
    %v2063 = vadd.f32 0.0, %v2062
    %v2064 = vpop.f32.mrf.mxu0
    %v2065 = vadd.f32 0.0, %v2064
    %2066 = vmatprep.mubr.f32.mxu0 0.0
    %2067 = vmatmul.mubr.f32.gmra.mxu0 %v1913
    %v2068 = vpop.f32.mrf.mxu0
    %v2069 = vadd.f32 0.0, %v2068
    %v2070 = vpop.f32.mrf.mxu0
    %v2071 = vadd.f32 0.0, %v2070
    %2072 = vmatprep.mubr.f32.mxu0 0.0
    %2073 = vmatmul.mubr.f32.gmra.mxu0 %v1916
    %v2074 = vpop.f32.mrf.mxu0
    %v2075 = vadd.f32 0.0, %v2074
    %v2076 = vpop.f32.mrf.mxu0
    %v2077 = vadd.f32 0.0, %v2076
    %2078 = vdwg.mxu0
    %2079 = vmatprep.subr.mxu0 0.0
    %2080 = vmatpush1.msra.mxu0 0.0
    %2081 = vmatprep.subr.mxu0 0.0
    %2082 = vmatpush1.msra.mxu0 0.0
    %2083 = vmatprep.subr.mxu0 0.0
    %2084 = vmatpush1.msra.mxu0 0.0
    %2085 = vmatprep.subr.mxu0 0.0
    %2086 = vmatpush1.msra.mxu0 0.0
    %2087 = vmatprep.subr.mxu0 0.0
    %2088 = vmatpush1.msra.mxu0 0.0
    %2089 = vmatprep.subr.mxu0 0.0
    %2090 = vmatpush1.msra.mxu0 0.0
    %2091 = vmatprep.subr.mxu0 0.0
    %2092 = vmatpush1.msra.mxu0 0.0
    %2093 = vmatprep.subr.mxu0 0.0
    %2094 = vmatpush1.msra.mxu0 0.0
    %2095 = vmatprep.subr.mxu0 %v562
    %2096 = vmatpush1.msra.mxu0 %v561
    %2097 = vmatprep.subr.mxu0 %v560
    %2098 = vmatpush1.msra.mxu0 %v559
    %2099 = vmatprep.subr.mxu0 %v558
    %2100 = vmatpush1.msra.mxu0 %v557
    %2101 = vmatprep.subr.mxu0 %v556
    %2102 = vmatpush1.msra.mxu0 %v555
    %2103 = vmatprep.subr.mxu0 %v554
    %2104 = vmatpush1.msra.mxu0 %v553
    %2105 = vmatprep.subr.mxu0 %v552
    %2106 = vmatpush1.msra.mxu0 %v551
    %2107 = vmatprep.subr.mxu0 %v550
    %2108 = vmatpush1.msra.mxu0 %v549
    %2109 = vmatprep.subr.mxu0 %v548
    %2110 = vmatpush1.msra.mxu0 %v547
    %2111 = vmatprep.subr.mxu0 0.0
    %2112 = vmatpush2.msra.mxu0 0.0
    %2113 = vmatprep.subr.mxu0 0.0
    %2114 = vmatpush2.msra.mxu0 0.0
    %2115 = vmatprep.subr.mxu0 0.0
    %2116 = vmatpush2.msra.mxu0 0.0
    %2117 = vmatprep.subr.mxu0 0.0
    %2118 = vmatpush2.msra.mxu0 0.0
    %2119 = vmatprep.subr.mxu0 0.0
    %2120 = vmatpush2.msra.mxu0 0.0
    %2121 = vmatprep.subr.mxu0 0.0
    %2122 = vmatpush2.msra.mxu0 0.0
    %2123 = vmatprep.subr.mxu0 0.0
    %2124 = vmatpush2.msra.mxu0 0.0
    %2125 = vmatprep.subr.mxu0 0.0
    %2126 = vmatpush2.msra.mxu0 0.0
    %2127 = vmatprep.subr.mxu0 0.0
    %2128 = vmatpush2.msra.mxu0 0.0
    %2129 = vmatprep.subr.mxu0 0.0
    %2130 = vmatpush2.msra.mxu0 0.0
    %2131 = vmatprep.subr.mxu0 0.0
    %2132 = vmatpush2.msra.mxu0 0.0
    %2133 = vmatprep.subr.mxu0 0.0
    %2134 = vmatpush2.msra.mxu0 0.0
    %2135 = vmatprep.subr.mxu0 0.0
    %2136 = vmatpush2.msra.mxu0 0.0
    %2137 = vmatprep.subr.mxu0 0.0
    %2138 = vmatpush2.msra.mxu0 0.0
    %2139 = vmatprep.subr.mxu0 0.0
    %2140 = vmatpush2.msra.mxu0 0.0
    %2141 = vmatprep.subr.mxu0 0.0
    %2142 = vmatpush2.msra.mxu0 0.0
    %2143 = vmatprep.mubr.f32.mxu0 0.0
    %2144 = vmatmul.mubr.f32.gmra.mxu0 %v579
    %v2145 = vpop.f32.mrf.mxu0
    %v2146 = vadd.f32 %v1985, %v2145
    %v2147 = vpop.f32.mrf.mxu0
    %v2148 = vadd.f32 %v1987, %v2147
    %2149 = vmatprep.mubr.f32.mxu0 0.0
    %2150 = vmatmul.mubr.f32.gmra.mxu0 %v582
    %v2151 = vpop.f32.mrf.mxu0
    %v2152 = vadd.f32 %v1991, %v2151
    %v2153 = vpop.f32.mrf.mxu0
    %v2154 = vadd.f32 %v1993, %v2153
    %2155 = vmatprep.mubr.f32.mxu0 0.0
    %2156 = vmatmul.mubr.f32.gmra.mxu0 %v585
    %v2157 = vpop.f32.mrf.mxu0
    %v2158 = vadd.f32 %v1997, %v2157
    %v2159 = vpop.f32.mrf.mxu0
    %v2160 = vadd.f32 %v1999, %v2159
    %2161 = vmatprep.mubr.f32.mxu0 0.0
    %2162 = vmatmul.mubr.f32.gmra.mxu0 %v588
    %v2163 = vpop.f32.mrf.mxu0
    %v2164 = vadd.f32 %v2003, %v2163
    %v2165 = vpop.f32.mrf.mxu0
    %v2166 = vadd.f32 %v2005, %v2165
    %2167 = vmatprep.mubr.f32.mxu0 0.0
    %2168 = vmatmul.mubr.f32.gmra.mxu0 %v591
    %v2169 = vpop.f32.mrf.mxu0
    %v2170 = vadd.f32 %v2009, %v2169
    %v2171 = vpop.f32.mrf.mxu0
    %v2172 = vadd.f32 %v2011, %v2171
    %2173 = vmatprep.mubr.f32.mxu0 0.0
    %2174 = vmatmul.mubr.f32.gmra.mxu0 %v594
    %v2175 = vpop.f32.mrf.mxu0
    %v2176 = vadd.f32 %v2015, %v2175
    %v2177 = vpop.f32.mrf.mxu0
    %v2178 = vadd.f32 %v2017, %v2177
    %2179 = vmatprep.mubr.f32.mxu0 0.0
    %2180 = vmatmul.mubr.f32.gmra.mxu0 %v597
    %v2181 = vpop.f32.mrf.mxu0
    %v2182 = vadd.f32 %v2021, %v2181
    %v2183 = vpop.f32.mrf.mxu0
    %v2184 = vadd.f32 %v2023, %v2183
    %2185 = vmatprep.mubr.f32.mxu0 0.0
    %2186 = vmatmul.mubr.f32.gmra.mxu0 %v600
    %v2187 = vpop.f32.mrf.mxu0
    %v2188 = vadd.f32 %v2027, %v2187
    %v2189 = vpop.f32.mrf.mxu0
    %v2190 = vadd.f32 %v2029, %v2189
    %2191 = vmatprep.mubr.f32.mxu0 0.0
    %2192 = vmatmul.mubr.f32.gmra.mxu0 %v603
    %v2193 = vpop.f32.mrf.mxu0
    %v2194 = vadd.f32 %v2033, %v2193
    %v2195 = vpop.f32.mrf.mxu0
    %v2196 = vadd.f32 %v2035, %v2195
    %2197 = vmatprep.mubr.f32.mxu0 0.0
    %2198 = vmatmul.mubr.f32.gmra.mxu0 %v606
    %v2199 = vpop.f32.mrf.mxu0
    %v2200 = vadd.f32 %v2039, %v2199
    %v2201 = vpop.f32.mrf.mxu0
    %v2202 = vadd.f32 %v2041, %v2201
    %2203 = vmatprep.mubr.f32.mxu0 0.0
    %2204 = vmatmul.mubr.f32.gmra.mxu0 %v609
    %v2205 = vpop.f32.mrf.mxu0
    %v2206 = vadd.f32 %v2045, %v2205
    %v2207 = vpop.f32.mrf.mxu0
    %v2208 = vadd.f32 %v2047, %v2207
    %2209 = vmatprep.mubr.f32.mxu0 0.0
    %2210 = vmatmul.mubr.f32.gmra.mxu0 %v612
    %v2211 = vpop.f32.mrf.mxu0
    %v2212 = vadd.f32 %v2051, %v2211
    %v2213 = vpop.f32.mrf.mxu0
    %v2214 = vadd.f32 %v2053, %v2213
    %2215 = vmatprep.mubr.f32.mxu0 0.0
    %2216 = vmatmul.mubr.f32.gmra.mxu0 %v615
    %v2217 = vpop.f32.mrf.mxu0
    %v2218 = vadd.f32 %v2057, %v2217
    %v2219 = vpop.f32.mrf.mxu0
    %v2220 = vadd.f32 %v2059, %v2219
    %2221 = vmatprep.mubr.f32.mxu0 0.0
    %2222 = vmatmul.mubr.f32.gmra.mxu0 %v618
    %v2223 = vpop.f32.mrf.mxu0
    %v2224 = vadd.f32 %v2063, %v2223
    %v2225 = vpop.f32.mrf.mxu0
    %v2226 = vadd.f32 %v2065, %v2225
    %2227 = vmatprep.mubr.f32.mxu0 0.0
    %2228 = vmatmul.mubr.f32.gmra.mxu0 %v621
    %v2229 = vpop.f32.mrf.mxu0
    %v2230 = vadd.f32 %v2069, %v2229
    %v2231 = vpop.f32.mrf.mxu0
    %v2232 = vadd.f32 %v2071, %v2231
    %2233 = vmatprep.mubr.f32.mxu0 0.0
    %2234 = vmatmul.mubr.f32.gmra.mxu0 %v624
    %v2235 = vpop.f32.mrf.mxu0
    %v2236 = vadd.f32 %v2075, %v2235
    %v2237 = vpop.f32.mrf.mxu0
    %v2238 = vadd.f32 %v2077, %v2237
    %2239 = vdwg.mxu0
    %s2240 = scalar_lea.vmem [#allocation2], 64
    %v2241 = vld [vmem:[%s2240] sm:$0xff]
    %v2242 = vld [vmem:[%s2240 + $0x8] sm:$0xff]
    %v2243 = vld [vmem:[%s2240 + $0x10] sm:$0xff]
    %v2244 = vld [vmem:[%s2240 + $0x18] sm:$0xff]
    %v2245 = vld [vmem:[%s2240 + $0x20] sm:$0xff]
    %v2246 = vld [vmem:[%s2240 + $0x28] sm:$0xff]
    %v2247 = vld [vmem:[%s2240 + $0x30] sm:$0xff]
    %v2248 = vld [vmem:[%s2240 + $0x38] sm:$0xff]
    %s2249 = scalar_lea.vmem %s6, 1
    %v2250 = vld [vmem:[%s2249] sm:$0x1]
    %v2252 = vlaneseq
    %v2253 = vshrl.u32 %v2252, 7
    %v2254 = vsub.s32 0, %v2253
    %v2255 = vrot.slane %v2250, %v2254
    %2257 = vmatprep.subr.mxu0 0.0
    %2258 = vmatpush1.msra.mxu0 0.0
    %2259 = vmatprep.subr.mxu0 0.0
    %2260 = vmatpush1.msra.mxu0 0.0
    %2261 = vmatprep.subr.mxu0 0.0
    %2262 = vmatpush1.msra.mxu0 0.0
    %2263 = vmatprep.subr.mxu0 0.0
    %2264 = vmatpush1.msra.mxu0 0.0
    %2265 = vmatprep.subr.mxu0 0.0
    %2266 = vmatpush1.msra.mxu0 0.0
    %2267 = vmatprep.subr.mxu0 0.0
    %2268 = vmatpush1.msra.mxu0 0.0
    %2269 = vmatprep.subr.mxu0 0.0
    %2270 = vmatpush1.msra.mxu0 0.0
    %2271 = vmatprep.subr.mxu0 0.0
    %2272 = vmatpush1.msra.mxu0 0.0
    %2273 = vmatprep.subr.mxu0 0.0
    %2274 = vmatpush1.msra.mxu0 %v2248
    %2275 = vmatprep.subr.mxu0 0.0
    %2276 = vmatpush1.msra.mxu0 %v2247
    %2277 = vmatprep.subr.mxu0 0.0
    %2278 = vmatpush1.msra.mxu0 %v2246
    %2279 = vmatprep.subr.mxu0 0.0
    %2280 = vmatpush1.msra.mxu0 %v2245
    %2281 = vmatprep.subr.mxu0 0.0
    %2282 = vmatpush1.msra.mxu0 %v2244
    %2283 = vmatprep.subr.mxu0 0.0
    %2284 = vmatpush1.msra.mxu0 %v2243
    %2285 = vmatprep.subr.mxu0 0.0
    %2286 = vmatpush1.msra.mxu0 %v2242
    %2287 = vmatprep.subr.mxu0 0.0
    %2288 = vmatpush1.msra.mxu0 %v2241
    %2289 = vmatprep.subr.mxu0 0.0
    %2290 = vmatpush2.msra.mxu0 0.0
    %2291 = vmatprep.subr.mxu0 0.0
    %2292 = vmatpush2.msra.mxu0 0.0
    %2293 = vmatprep.subr.mxu0 0.0
    %2294 = vmatpush2.msra.mxu0 0.0
    %2295 = vmatprep.subr.mxu0 0.0
    %2296 = vmatpush2.msra.mxu0 0.0
    %2297 = vmatprep.subr.mxu0 0.0
    %2298 = vmatpush2.msra.mxu0 0.0
    %2299 = vmatprep.subr.mxu0 0.0
    %2300 = vmatpush2.msra.mxu0 0.0
    %2301 = vmatprep.subr.mxu0 0.0
    %2302 = vmatpush2.msra.mxu0 0.0
    %2303 = vmatprep.subr.mxu0 0.0
    %2304 = vmatpush2.msra.mxu0 0.0
    %2305 = vmatprep.subr.mxu0 0.0
    %2306 = vmatpush2.msra.mxu0 0.0
    %2307 = vmatprep.subr.mxu0 0.0
    %2308 = vmatpush2.msra.mxu0 0.0
    %2309 = vmatprep.subr.mxu0 0.0
    %2310 = vmatpush2.msra.mxu0 0.0
    %2311 = vmatprep.subr.mxu0 0.0
    %2312 = vmatpush2.msra.mxu0 0.0
    %2313 = vmatprep.subr.mxu0 0.0
    %2314 = vmatpush2.msra.mxu0 0.0
    %2315 = vmatprep.subr.mxu0 0.0
    %2316 = vmatpush2.msra.mxu0 0.0
    %2317 = vmatprep.subr.mxu0 0.0
    %2318 = vmatpush2.msra.mxu0 0.0
    %2319 = vmatprep.subr.mxu0 0.0
    %2320 = vmatpush2.msra.mxu0 0.0
    %2321 = vmatprep.mubr.f32.mxu0 0.0
    %2322 = vmatmul.mubr.f32.gmra.mxu0 %v1871
    %v2323 = vpop.f32.mrf.mxu0
    %v2324 = vadd.f32 %v2255, %v2323
    %v2325 = vpop.f32.mrf.mxu0
    %2326 = vmatprep.mubr.f32.mxu0 0.0
    %2327 = vmatmul.mubr.f32.gmra.mxu0 %v1874
    %v2328 = vpop.f32.mrf.mxu0
    %v2329 = vadd.f32 %v2255, %v2328
    %v2330 = vpop.f32.mrf.mxu0
    %2331 = vmatprep.mubr.f32.mxu0 0.0
    %2332 = vmatmul.mubr.f32.gmra.mxu0 %v1877
    %v2333 = vpop.f32.mrf.mxu0
    %v2334 = vadd.f32 %v2255, %v2333
    %v2335 = vpop.f32.mrf.mxu0
    %2336 = vmatprep.mubr.f32.mxu0 0.0
    %2337 = vmatmul.mubr.f32.gmra.mxu0 %v1880
    %v2338 = vpop.f32.mrf.mxu0
    %v2339 = vadd.f32 %v2255, %v2338
    %v2340 = vpop.f32.mrf.mxu0
    %2341 = vmatprep.mubr.f32.mxu0 0.0
    %2342 = vmatmul.mubr.f32.gmra.mxu0 %v1883
    %v2343 = vpop.f32.mrf.mxu0
    %v2344 = vadd.f32 %v2255, %v2343
    %v2345 = vpop.f32.mrf.mxu0
    %2346 = vmatprep.mubr.f32.mxu0 0.0
    %2347 = vmatmul.mubr.f32.gmra.mxu0 %v1886
    %v2348 = vpop.f32.mrf.mxu0
    %v2349 = vadd.f32 %v2255, %v2348
    %v2350 = vpop.f32.mrf.mxu0
    %2351 = vmatprep.mubr.f32.mxu0 0.0
    %2352 = vmatmul.mubr.f32.gmra.mxu0 %v1889
    %v2353 = vpop.f32.mrf.mxu0
    %v2354 = vadd.f32 %v2255, %v2353
    %v2355 = vpop.f32.mrf.mxu0
    %2356 = vmatprep.mubr.f32.mxu0 0.0
    %2357 = vmatmul.mubr.f32.gmra.mxu0 %v1892
    %v2358 = vpop.f32.mrf.mxu0
    %v2359 = vadd.f32 %v2255, %v2358
    %v2360 = vpop.f32.mrf.mxu0
    %2361 = vmatprep.mubr.f32.mxu0 0.0
    %2362 = vmatmul.mubr.f32.gmra.mxu0 %v1895
    %v2363 = vpop.f32.mrf.mxu0
    %v2364 = vadd.f32 %v2255, %v2363
    %v2365 = vpop.f32.mrf.mxu0
    %2366 = vmatprep.mubr.f32.mxu0 0.0
    %2367 = vmatmul.mubr.f32.gmra.mxu0 %v1898
    %v2368 = vpop.f32.mrf.mxu0
    %v2369 = vadd.f32 %v2255, %v2368
    %v2370 = vpop.f32.mrf.mxu0
    %2371 = vmatprep.mubr.f32.mxu0 0.0
    %2372 = vmatmul.mubr.f32.gmra.mxu0 %v1901
    %v2373 = vpop.f32.mrf.mxu0
    %v2374 = vadd.f32 %v2255, %v2373
    %v2375 = vpop.f32.mrf.mxu0
    %2376 = vmatprep.mubr.f32.mxu0 0.0
    %2377 = vmatmul.mubr.f32.gmra.mxu0 %v1904
    %v2378 = vpop.f32.mrf.mxu0
    %v2379 = vadd.f32 %v2255, %v2378
    %v2380 = vpop.f32.mrf.mxu0
    %2381 = vmatprep.mubr.f32.mxu0 0.0
    %2382 = vmatmul.mubr.f32.gmra.mxu0 %v1907
    %v2383 = vpop.f32.mrf.mxu0
    %v2384 = vadd.f32 %v2255, %v2383
    %v2385 = vpop.f32.mrf.mxu0
    %2386 = vmatprep.mubr.f32.mxu0 0.0
    %2387 = vmatmul.mubr.f32.gmra.mxu0 %v1910
    %v2388 = vpop.f32.mrf.mxu0
    %v2389 = vadd.f32 %v2255, %v2388
    %v2390 = vpop.f32.mrf.mxu0
    %2391 = vmatprep.mubr.f32.mxu0 0.0
    %2392 = vmatmul.mubr.f32.gmra.mxu0 %v1913
    %v2393 = vpop.f32.mrf.mxu0
    %v2394 = vadd.f32 %v2255, %v2393
    %v2395 = vpop.f32.mrf.mxu0
    %2396 = vmatprep.mubr.f32.mxu0 0.0
    %2397 = vmatmul.mubr.f32.gmra.mxu0 %v1916
    %v2398 = vpop.f32.mrf.mxu0
    %v2399 = vadd.f32 %v2255, %v2398
    %v2400 = vpop.f32.mrf.mxu0
    %2401 = vdwg.mxu0
    %2410 = vrot.lane.b32.xlu0 %v2324, 64
    %v2411 = vpop.permute.xlu0 %2410
    %2412 = vrot.lane.b32.xlu0 %v2329, 64
    %v2413 = vpop.permute.xlu0 %2412
    %2414 = vrot.lane.b32.xlu0 %v2334, 64
    %v2415 = vpop.permute.xlu0 %2414
    %2416 = vrot.lane.b32.xlu0 %v2339, 64
    %v2417 = vpop.permute.xlu0 %2416
    %2418 = vrot.lane.b32.xlu0 %v2344, 64
    %v2419 = vpop.permute.xlu0 %2418
    %2420 = vrot.lane.b32.xlu0 %v2349, 64
    %v2421 = vpop.permute.xlu0 %2420
    %2422 = vrot.lane.b32.xlu0 %v2354, 64
    %v2423 = vpop.permute.xlu0 %2422
    %2424 = vrot.lane.b32.xlu0 %v2359, 64
    %v2425 = vpop.permute.xlu0 %2424
    %v2426 = vsel %vm337, %v2411, 0
    %v2428 = vsel %vm337, %v2413, 0
    %v2430 = vsel %vm337, %v2415, 0
    %v2432 = vsel %vm337, %v2417, 0
    %v2434 = vsel %vm337, %v2419, 0
    %v2436 = vsel %vm337, %v2421, 0
    %v2438 = vsel %vm337, %v2423, 0
    %v2440 = vsel %vm337, %v2425, 0
    %2442 = vmatprep.subr.mxu0 0.0
    %2443 = vmatpush1.xpose.msra.mxu0 0.0
    %2444 = vmatprep.subr.mxu0 0.0
    %2445 = vmatpush1.xpose.msra.mxu0 0.0
    %2446 = vmatprep.subr.mxu0 0.0
    %2447 = vmatpush1.xpose.msra.mxu0 0.0
    %2448 = vmatprep.subr.mxu0 0.0
    %2449 = vmatpush1.xpose.msra.mxu0 0.0
    %2450 = vmatprep.subr.mxu0 0.0
    %2451 = vmatpush1.xpose.msra.mxu0 0.0
    %2452 = vmatprep.subr.mxu0 0.0
    %2453 = vmatpush1.xpose.msra.mxu0 0.0
    %2454 = vmatprep.subr.mxu0 0.0
    %2455 = vmatpush1.xpose.msra.mxu0 0.0
    %2456 = vmatprep.subr.mxu0 0.0
    %2457 = vmatpush1.xpose.msra.mxu0 0.0
    %2458 = vmatprep.subr.mxu0 0.0
    %2459 = vmatpush1.xpose.msra.mxu0 %v2440
    %2460 = vmatprep.subr.mxu0 0.0
    %2461 = vmatpush1.xpose.msra.mxu0 %v2438
    %2462 = vmatprep.subr.mxu0 0.0
    %2463 = vmatpush1.xpose.msra.mxu0 %v2436
    %2464 = vmatprep.subr.mxu0 0.0
    %2465 = vmatpush1.xpose.msra.mxu0 %v2434
    %2466 = vmatprep.subr.mxu0 0.0
    %2467 = vmatpush1.xpose.msra.mxu0 %v2432
    %2468 = vmatprep.subr.mxu0 0.0
    %2469 = vmatpush1.xpose.msra.mxu0 %v2430
    %2470 = vmatprep.subr.mxu0 0.0
    %2471 = vmatpush1.xpose.msra.mxu0 %v2428
    %2472 = vmatprep.subr.mxu0 0.0
    %2473 = vmatpush1.xpose.msra.mxu0 %v2426
    %2474 = vmatprep.subr.mxu0 0.0
    %2475 = vmatpush2.xpose.msra.mxu0 0.0
    %2476 = vmatprep.subr.mxu0 0.0
    %2477 = vmatpush2.xpose.msra.mxu0 0.0
    %2478 = vmatprep.subr.mxu0 0.0
    %2479 = vmatpush2.xpose.msra.mxu0 0.0
    %2480 = vmatprep.subr.mxu0 0.0
    %2481 = vmatpush2.xpose.msra.mxu0 0.0
    %2482 = vmatprep.subr.mxu0 0.0
    %2483 = vmatpush2.xpose.msra.mxu0 0.0
    %2484 = vmatprep.subr.mxu0 0.0
    %2485 = vmatpush2.xpose.msra.mxu0 0.0
    %2486 = vmatprep.subr.mxu0 0.0
    %2487 = vmatpush2.xpose.msra.mxu0 0.0
    %2488 = vmatprep.subr.mxu0 0.0
    %2489 = vmatpush2.xpose.msra.mxu0 0.0
    %2490 = vmatprep.subr.mxu0 0.0
    %2491 = vmatpush2.xpose.msra.mxu0 0.0
    %2492 = vmatprep.subr.mxu0 0.0
    %2493 = vmatpush2.xpose.msra.mxu0 0.0
    %2494 = vmatprep.subr.mxu0 0.0
    %2495 = vmatpush2.xpose.msra.mxu0 0.0
    %2496 = vmatprep.subr.mxu0 0.0
    %2497 = vmatpush2.xpose.msra.mxu0 0.0
    %2498 = vmatprep.subr.mxu0 0.0
    %2499 = vmatpush2.xpose.msra.mxu0 0.0
    %2500 = vmatprep.subr.mxu0 0.0
    %2501 = vmatpush2.xpose.msra.mxu0 0.0
    %2502 = vmatprep.subr.mxu0 0.0
    %2503 = vmatpush2.xpose.msra.mxu0 0.0
    %2504 = vmatprep.subr.mxu0 0.0
    %2505 = vmatpush2.xpose.msra.mxu0 0.0
    %2506 = vmatprep.mubr.f32.mxu0 0.0
    %2507 = vmatmul.mubr.f32.gmra.mxu0 %v2426
    %v2508 = vpop.f32.mrf.mxu0
    %v2509 = vadd.f32 0.0, %v2508
    %v2510 = vpop.f32.mrf.mxu0
    %2511 = vmatprep.mubr.f32.mxu0 0.0
    %2512 = vmatmul.mubr.f32.gmra.mxu0 %v2428
    %v2513 = vpop.f32.mrf.mxu0
    %v2514 = vadd.f32 0.0, %v2513
    %v2515 = vpop.f32.mrf.mxu0
    %2516 = vmatprep.mubr.f32.mxu0 0.0
    %2517 = vmatmul.mubr.f32.gmra.mxu0 %v2430
    %v2518 = vpop.f32.mrf.mxu0
    %v2519 = vadd.f32 0.0, %v2518
    %v2520 = vpop.f32.mrf.mxu0
    %2521 = vmatprep.mubr.f32.mxu0 0.0
    %2522 = vmatmul.mubr.f32.gmra.mxu0 %v2432
    %v2523 = vpop.f32.mrf.mxu0
    %v2524 = vadd.f32 0.0, %v2523
    %v2525 = vpop.f32.mrf.mxu0
    %2526 = vmatprep.mubr.f32.mxu0 0.0
    %2527 = vmatmul.mubr.f32.gmra.mxu0 %v2434
    %v2528 = vpop.f32.mrf.mxu0
    %v2529 = vadd.f32 0.0, %v2528
    %v2530 = vpop.f32.mrf.mxu0
    %2531 = vmatprep.mubr.f32.mxu0 0.0
    %2532 = vmatmul.mubr.f32.gmra.mxu0 %v2436
    %v2533 = vpop.f32.mrf.mxu0
    %v2534 = vadd.f32 0.0, %v2533
    %v2535 = vpop.f32.mrf.mxu0
    %2536 = vmatprep.mubr.f32.mxu0 0.0
    %2537 = vmatmul.mubr.f32.gmra.mxu0 %v2438
    %v2538 = vpop.f32.mrf.mxu0
    %v2539 = vadd.f32 0.0, %v2538
    %v2540 = vpop.f32.mrf.mxu0
    %2541 = vmatprep.mubr.f32.mxu0 0.0
    %2542 = vmatmul.mubr.f32.gmra.mxu0 %v2440
    %v2543 = vpop.f32.mrf.mxu0
    %v2544 = vadd.f32 0.0, %v2543
    %v2545 = vpop.f32.mrf.mxu0
    %2546 = vdwg.mxu0
    %v2547 = vsel %vm337, %v2509, -inf
    %2548 = vmax.xlane.f32.xlu0 %v2547
    %v2549 = vpop.xlane.xlu0 %2548
    %v2550 = vsel %vm337, %v2514, -inf
    %2551 = vmax.xlane.f32.xlu0 %v2550
    %v2552 = vpop.xlane.xlu0 %2551
    %v2553 = vsel %vm337, %v2519, -inf
    %2554 = vmax.xlane.f32.xlu0 %v2553
    %v2555 = vpop.xlane.xlu0 %2554
    %v2556 = vsel %vm337, %v2524, -inf
    %2557 = vmax.xlane.f32.xlu0 %v2556
    %v2558 = vpop.xlane.xlu0 %2557
    %v2559 = vsel %vm337, %v2529, -inf
    %2560 = vmax.xlane.f32.xlu0 %v2559
    %v2561 = vpop.xlane.xlu0 %2560
    %v2562 = vsel %vm337, %v2534, -inf
    %2563 = vmax.xlane.f32.xlu0 %v2562
    %v2564 = vpop.xlane.xlu0 %2563
    %v2565 = vsel %vm337, %v2539, -inf
    %2566 = vmax.xlane.f32.xlu0 %v2565
    %v2567 = vpop.xlane.xlu0 %2566
    %v2568 = vsel %vm337, %v2544, -inf
    %2569 = vmax.xlane.f32.xlu0 %v2568
    %v2570 = vpop.xlane.xlu0 %2569
    %v2571 = vmax.f32 %v2549, %v2561
    %v2572 = vmax.f32 %v2552, %v2564
    %v2573 = vmax.f32 %v2555, %v2567
    %v2574 = vmax.f32 %v2558, %v2570
    %v2575 = vmax.f32 %v2571, %v2572
    %v2576 = vmax.f32 %v2573, %v2574
    %v2577 = vmax.f32 %v2575, %v2576
    %v2578 = vrot.slane %v2577, 4
    %v2579 = vmax.f32 %v2577, %v2578
    %v2580 = vrot.slane %v2579, 2
    %v2581 = vmax.f32 %v2579, %v2580
    %v2582 = vrot.slane %v2581, 1
    %v2583 = vmax.f32 %v2581, %v2582
    %v2584 = vsub.f32 %v2509, %v2583
    %v2585 = vsub.f32 %v2514, %v2583
    %v2586 = vsub.f32 %v2519, %v2583
    %v2587 = vsub.f32 %v2524, %v2583
    %v2588 = vsub.f32 %v2529, %v2583
    %v2589 = vsub.f32 %v2534, %v2583
    %v2590 = vsub.f32 %v2539, %v2583
    %v2591 = vsub.f32 %v2544, %v2583
    %v2592 = vmul.f32 %v2584, 1.442695
    %v2593 = vpow.pop %v2592
    %v2594 = vmul.f32 %v2585, 1.442695
    %v2595 = vpow.pop %v2594
    %v2596 = vmul.f32 %v2586, 1.442695
    %v2597 = vpow.pop %v2596
    %v2598 = vmul.f32 %v2587, 1.442695
    %v2599 = vpow.pop %v2598
    %v2600 = vmul.f32 %v2588, 1.442695
    %v2601 = vpow.pop %v2600
    %v2602 = vmul.f32 %v2589, 1.442695
    %v2603 = vpow.pop %v2602
    %v2604 = vmul.f32 %v2590, 1.442695
    %v2605 = vpow.pop %v2604
    %v2606 = vmul.f32 %v2591, 1.442695
    %v2607 = vpow.pop %v2606
    %v2608 = vsel %vm337, %v2593, 0.0
    %v2609 = vsel %vm337, %v2595, 0.0
    %v2610 = vadd.f32 %v2608, %v2609
    %v2611 = vsel %vm337, %v2597, 0.0
    %v2612 = vadd.f32 %v2610, %v2611
    %v2613 = vsel %vm337, %v2599, 0.0
    %v2614 = vadd.f32 %v2612, %v2613
    %v2615 = vsel %vm337, %v2601, 0.0
    %v2616 = vadd.f32 %v2614, %v2615
    %v2617 = vsel %vm337, %v2603, 0.0
    %v2618 = vadd.f32 %v2616, %v2617
    %v2619 = vsel %vm337, %v2605, 0.0
    %v2620 = vadd.f32 %v2618, %v2619
    %v2621 = vsel %vm337, %v2607, 0.0
    %v2622 = vadd.f32 %v2620, %v2621
    %v2623 = vrot.slane %v2622, 4
    %v2624 = vadd.f32 %v2622, %v2623
    %v2625 = vrot.slane %v2624, 2
    %v2626 = vadd.f32 %v2624, %v2625
    %v2627 = vrot.slane %v2626, 1
    %v2628 = vadd.f32 %v2626, %v2627
    %v2629 = vrcp.pop %v2628
    %v2630 = vmul.f32 %v2593, %v2629
    %v2631 = vmul.f32 %v2595, %v2629
    %v2632 = vmul.f32 %v2597, %v2629
    %v2633 = vmul.f32 %v2599, %v2629
    %v2634 = vmul.f32 %v2601, %v2629
    %v2635 = vmul.f32 %v2603, %v2629
    %v2636 = vmul.f32 %v2605, %v2629
    %v2637 = vmul.f32 %v2607, %v2629
    %v2638 = vsel %vm337, %v2630, 0.0
    %2639 = vadd.xlane.f32.xlu0 %v2638
    %v2640 = vpop.xlane.xlu0 %2639
    %v2641 = vsel %vm337, %v2631, 0.0
    %2642 = vadd.xlane.f32.xlu0 %v2641
    %v2643 = vpop.xlane.xlu0 %2642
    %v2644 = vsel %vm337, %v2632, 0.0
    %2645 = vadd.xlane.f32.xlu0 %v2644
    %v2646 = vpop.xlane.xlu0 %2645
    %v2647 = vsel %vm337, %v2633, 0.0
    %2648 = vadd.xlane.f32.xlu0 %v2647
    %v2649 = vpop.xlane.xlu0 %2648
    %v2650 = vsel %vm337, %v2634, 0.0
    %2651 = vadd.xlane.f32.xlu0 %v2650
    %v2652 = vpop.xlane.xlu0 %2651
    %v2653 = vsel %vm337, %v2635, 0.0
    %2654 = vadd.xlane.f32.xlu0 %v2653
    %v2655 = vpop.xlane.xlu0 %2654
    %v2656 = vsel %vm337, %v2636, 0.0
    %2657 = vadd.xlane.f32.xlu0 %v2656
    %v2658 = vpop.xlane.xlu0 %2657
    %v2659 = vsel %vm337, %v2637, 0.0
    %2660 = vadd.xlane.f32.xlu0 %v2659
    %v2661 = vpop.xlane.xlu0 %2660
    %v2662 = vadd.f32 %v2640, 1e-09
    %v2663 = vadd.f32 %v2643, 1e-09
    %v2664 = vadd.f32 %v2646, 1e-09
    %v2665 = vadd.f32 %v2649, 1e-09
    %v2666 = vadd.f32 %v2652, 1e-09
    %v2667 = vadd.f32 %v2655, 1e-09
    %v2668 = vadd.f32 %v2658, 1e-09
    %v2669 = vadd.f32 %v2661, 1e-09
    %v2670 = vrcp.pop %v2662
    %v2671 = vrcp.pop %v2663
    %v2672 = vrcp.pop %v2664
    %v2673 = vrcp.pop %v2665
    %v2674 = vrcp.pop %v2666
    %v2675 = vrcp.pop %v2667
    %v2676 = vrcp.pop %v2668
    %v2677 = vrcp.pop %v2669
    %v2678 = vmul.f32 %v2630, %v2670
    %v2679 = vmul.f32 %v2631, %v2671
    %v2680 = vmul.f32 %v2632, %v2672
    %v2681 = vmul.f32 %v2633, %v2673
    %v2682 = vmul.f32 %v2634, %v2674
    %v2683 = vmul.f32 %v2635, %v2675
    %v2684 = vmul.f32 %v2636, %v2676
    %v2685 = vmul.f32 %v2637, %v2677
    %v2687 = vsel %vm337, %v2678, 0
    %v2690 = vsel %vm337, %v2679, 0
    %v2693 = vsel %vm337, %v2680, 0
    %v2696 = vsel %vm337, %v2681, 0
    %v2699 = vsel %vm337, %v2682, 0
    %v2702 = vsel %vm337, %v2683, 0
    %v2705 = vsel %vm337, %v2684, 0
    %v2708 = vsel %vm337, %v2685, 0
    %2710 = vmatprep.subr.mxu0 0.0
    %2711 = vmatpush1.msra.mxu0 0.0
    %2712 = vmatprep.subr.mxu0 0.0
    %2713 = vmatpush1.msra.mxu0 0.0
    %2714 = vmatprep.subr.mxu0 0.0
    %2715 = vmatpush1.msra.mxu0 0.0
    %2716 = vmatprep.subr.mxu0 0.0
    %2717 = vmatpush1.msra.mxu0 0.0
    %2718 = vmatprep.subr.mxu0 0.0
    %2719 = vmatpush1.msra.mxu0 0.0
    %2720 = vmatprep.subr.mxu0 0.0
    %2721 = vmatpush1.msra.mxu0 0.0
    %2722 = vmatprep.subr.mxu0 0.0
    %2723 = vmatpush1.msra.mxu0 0.0
    %2724 = vmatprep.subr.mxu0 0.0
    %2725 = vmatpush1.msra.mxu0 0.0
    %2726 = vmatprep.subr.mxu0 0.0
    %2727 = vmatpush1.msra.mxu0 %v2359
    %2728 = vmatprep.subr.mxu0 0.0
    %2729 = vmatpush1.msra.mxu0 %v2354
    %2730 = vmatprep.subr.mxu0 0.0
    %2731 = vmatpush1.msra.mxu0 %v2349
    %2732 = vmatprep.subr.mxu0 0.0
    %2733 = vmatpush1.msra.mxu0 %v2344
    %2734 = vmatprep.subr.mxu0 0.0
    %2735 = vmatpush1.msra.mxu0 %v2339
    %2736 = vmatprep.subr.mxu0 0.0
    %2737 = vmatpush1.msra.mxu0 %v2334
    %2738 = vmatprep.subr.mxu0 0.0
    %2739 = vmatpush1.msra.mxu0 %v2329
    %2740 = vmatprep.subr.mxu0 0.0
    %2741 = vmatpush1.msra.mxu0 %v2324
    %2742 = vmatprep.subr.mxu0 0.0
    %2743 = vmatpush2.msra.mxu0 0.0
    %2744 = vmatprep.subr.mxu0 0.0
    %2745 = vmatpush2.msra.mxu0 0.0
    %2746 = vmatprep.subr.mxu0 0.0
    %2747 = vmatpush2.msra.mxu0 0.0
    %2748 = vmatprep.subr.mxu0 0.0
    %2749 = vmatpush2.msra.mxu0 0.0
    %2750 = vmatprep.subr.mxu0 0.0
    %2751 = vmatpush2.msra.mxu0 0.0
    %2752 = vmatprep.subr.mxu0 0.0
    %2753 = vmatpush2.msra.mxu0 0.0
    %2754 = vmatprep.subr.mxu0 0.0
    %2755 = vmatpush2.msra.mxu0 0.0
    %2756 = vmatprep.subr.mxu0 0.0
    %2757 = vmatpush2.msra.mxu0 0.0
    %2758 = vmatprep.subr.mxu0 0.0
    %2759 = vmatpush2.msra.mxu0 0.0
    %2760 = vmatprep.subr.mxu0 0.0
    %2761 = vmatpush2.msra.mxu0 0.0
    %2762 = vmatprep.subr.mxu0 0.0
    %2763 = vmatpush2.msra.mxu0 0.0
    %2764 = vmatprep.subr.mxu0 0.0
    %2765 = vmatpush2.msra.mxu0 0.0
    %2766 = vmatprep.subr.mxu0 0.0
    %2767 = vmatpush2.msra.mxu0 0.0
    %2768 = vmatprep.subr.mxu0 0.0
    %2769 = vmatpush2.msra.mxu0 0.0
    %2770 = vmatprep.subr.mxu0 0.0
    %2771 = vmatpush2.msra.mxu0 0.0
    %2772 = vmatprep.subr.mxu0 0.0
    %2773 = vmatpush2.msra.mxu0 0.0
    %2774 = vmatprep.mubr.f32.mxu0 0.0
    %2775 = vmatmul.mubr.f32.gmra.mxu0 %v2687
    %v2776 = vpop.f32.mrf.mxu0
    %v2777 = vadd.f32 0.0, %v2776
    %v2778 = vpop.f32.mrf.mxu0
    %2779 = vmatprep.mubr.f32.mxu0 0.0
    %2780 = vmatmul.mubr.f32.gmra.mxu0 %v2690
    %v2781 = vpop.f32.mrf.mxu0
    %v2782 = vadd.f32 0.0, %v2781
    %v2783 = vpop.f32.mrf.mxu0
    %2784 = vmatprep.mubr.f32.mxu0 0.0
    %2785 = vmatmul.mubr.f32.gmra.mxu0 %v2693
    %v2786 = vpop.f32.mrf.mxu0
    %v2787 = vadd.f32 0.0, %v2786
    %v2788 = vpop.f32.mrf.mxu0
    %2789 = vmatprep.mubr.f32.mxu0 0.0
    %2790 = vmatmul.mubr.f32.gmra.mxu0 %v2696
    %v2791 = vpop.f32.mrf.mxu0
    %v2792 = vadd.f32 0.0, %v2791
    %v2793 = vpop.f32.mrf.mxu0
    %2794 = vmatprep.mubr.f32.mxu0 0.0
    %2795 = vmatmul.mubr.f32.gmra.mxu0 %v2699
    %v2796 = vpop.f32.mrf.mxu0
    %v2797 = vadd.f32 0.0, %v2796
    %v2798 = vpop.f32.mrf.mxu0
    %2799 = vmatprep.mubr.f32.mxu0 0.0
    %2800 = vmatmul.mubr.f32.gmra.mxu0 %v2702
    %v2801 = vpop.f32.mrf.mxu0
    %v2802 = vadd.f32 0.0, %v2801
    %v2803 = vpop.f32.mrf.mxu0
    %2804 = vmatprep.mubr.f32.mxu0 0.0
    %2805 = vmatmul.mubr.f32.gmra.mxu0 %v2705
    %v2806 = vpop.f32.mrf.mxu0
    %v2807 = vadd.f32 0.0, %v2806
    %v2808 = vpop.f32.mrf.mxu0
    %2809 = vmatprep.mubr.f32.mxu0 0.0
    %2810 = vmatmul.mubr.f32.gmra.mxu0 %v2708
    %v2811 = vpop.f32.mrf.mxu0
    %v2812 = vadd.f32 0.0, %v2811
    %v2813 = vpop.f32.mrf.mxu0
    %2814 = vdwg.mxu0
    %v2815 = vsub.f32 %v1837, %v2777
    %v2816 = vsub.f32 %v1838, %v2782
    %v2817 = vsub.f32 %v1839, %v2787
    %v2818 = vsub.f32 %v1840, %v2792
    %v2819 = vsub.f32 %v1841, %v2797
    %v2820 = vsub.f32 %v1842, %v2802
    %v2821 = vsub.f32 %v1843, %v2807
    %v2822 = vsub.f32 %v1844, %v2812
    %2831 = vrot.lane.b32.xlu0 %v2364, 64
    %v2832 = vpop.permute.xlu0 %2831
    %2833 = vrot.lane.b32.xlu0 %v2369, 64
    %v2834 = vpop.permute.xlu0 %2833
    %2835 = vrot.lane.b32.xlu0 %v2374, 64
    %v2836 = vpop.permute.xlu0 %2835
    %2837 = vrot.lane.b32.xlu0 %v2379, 64
    %v2838 = vpop.permute.xlu0 %2837
    %2839 = vrot.lane.b32.xlu0 %v2384, 64
    %v2840 = vpop.permute.xlu0 %2839
    %2841 = vrot.lane.b32.xlu0 %v2389, 64
    %v2842 = vpop.permute.xlu0 %2841
    %2843 = vrot.lane.b32.xlu0 %v2394, 64
    %v2844 = vpop.permute.xlu0 %2843
    %2845 = vrot.lane.b32.xlu0 %v2399, 64
    %v2846 = vpop.permute.xlu0 %2845
    %v2847 = vsel %vm337, %v2832, 0
    %v2849 = vsel %vm337, %v2834, 0
    %v2851 = vsel %vm337, %v2836, 0
    %v2853 = vsel %vm337, %v2838, 0
    %v2855 = vsel %vm337, %v2840, 0
    %v2857 = vsel %vm337, %v2842, 0
    %v2859 = vsel %vm337, %v2844, 0
    %v2861 = vsel %vm337, %v2846, 0
    %2863 = vmatprep.subr.mxu0 0.0
    %2864 = vmatpush1.xpose.msra.mxu0 0.0
    %2865 = vmatprep.subr.mxu0 0.0
    %2866 = vmatpush1.xpose.msra.mxu0 0.0
    %2867 = vmatprep.subr.mxu0 0.0
    %2868 = vmatpush1.xpose.msra.mxu0 0.0
    %2869 = vmatprep.subr.mxu0 0.0
    %2870 = vmatpush1.xpose.msra.mxu0 0.0
    %2871 = vmatprep.subr.mxu0 0.0
    %2872 = vmatpush1.xpose.msra.mxu0 0.0
    %2873 = vmatprep.subr.mxu0 0.0
    %2874 = vmatpush1.xpose.msra.mxu0 0.0
    %2875 = vmatprep.subr.mxu0 0.0
    %2876 = vmatpush1.xpose.msra.mxu0 0.0
    %2877 = vmatprep.subr.mxu0 0.0
    %2878 = vmatpush1.xpose.msra.mxu0 0.0
    %2879 = vmatprep.subr.mxu0 0.0
    %2880 = vmatpush1.xpose.msra.mxu0 %v2861
    %2881 = vmatprep.subr.mxu0 0.0
    %2882 = vmatpush1.xpose.msra.mxu0 %v2859
    %2883 = vmatprep.subr.mxu0 0.0
    %2884 = vmatpush1.xpose.msra.mxu0 %v2857
    %2885 = vmatprep.subr.mxu0 0.0
    %2886 = vmatpush1.xpose.msra.mxu0 %v2855
    %2887 = vmatprep.subr.mxu0 0.0
    %2888 = vmatpush1.xpose.msra.mxu0 %v2853
    %2889 = vmatprep.subr.mxu0 0.0
    %2890 = vmatpush1.xpose.msra.mxu0 %v2851
    %2891 = vmatprep.subr.mxu0 0.0
    %2892 = vmatpush1.xpose.msra.mxu0 %v2849
    %2893 = vmatprep.subr.mxu0 0.0
    %2894 = vmatpush1.xpose.msra.mxu0 %v2847
    %2895 = vmatprep.subr.mxu0 0.0
    %2896 = vmatpush2.xpose.msra.mxu0 0.0
    %2897 = vmatprep.subr.mxu0 0.0
    %2898 = vmatpush2.xpose.msra.mxu0 0.0
    %2899 = vmatprep.subr.mxu0 0.0
    %2900 = vmatpush2.xpose.msra.mxu0 0.0
    %2901 = vmatprep.subr.mxu0 0.0
    %2902 = vmatpush2.xpose.msra.mxu0 0.0
    %2903 = vmatprep.subr.mxu0 0.0
    %2904 = vmatpush2.xpose.msra.mxu0 0.0
    %2905 = vmatprep.subr.mxu0 0.0
    %2906 = vmatpush2.xpose.msra.mxu0 0.0
    %2907 = vmatprep.subr.mxu0 0.0
    %2908 = vmatpush2.xpose.msra.mxu0 0.0
    %2909 = vmatprep.subr.mxu0 0.0
    %2910 = vmatpush2.xpose.msra.mxu0 0.0
    %2911 = vmatprep.subr.mxu0 0.0
    %2912 = vmatpush2.xpose.msra.mxu0 0.0
    %2913 = vmatprep.subr.mxu0 0.0
    %2914 = vmatpush2.xpose.msra.mxu0 0.0
    %2915 = vmatprep.subr.mxu0 0.0
    %2916 = vmatpush2.xpose.msra.mxu0 0.0
    %2917 = vmatprep.subr.mxu0 0.0
    %2918 = vmatpush2.xpose.msra.mxu0 0.0
    %2919 = vmatprep.subr.mxu0 0.0
    %2920 = vmatpush2.xpose.msra.mxu0 0.0
    %2921 = vmatprep.subr.mxu0 0.0
    %2922 = vmatpush2.xpose.msra.mxu0 0.0
    %2923 = vmatprep.subr.mxu0 0.0
    %2924 = vmatpush2.xpose.msra.mxu0 0.0
    %2925 = vmatprep.subr.mxu0 0.0
    %2926 = vmatpush2.xpose.msra.mxu0 0.0
    %2927 = vmatprep.mubr.f32.mxu0 0.0
    %2928 = vmatmul.mubr.f32.gmra.mxu0 %v2847
    %v2929 = vpop.f32.mrf.mxu0
    %v2930 = vadd.f32 0.0, %v2929
    %v2931 = vpop.f32.mrf.mxu0
    %2932 = vmatprep.mubr.f32.mxu0 0.0
    %2933 = vmatmul.mubr.f32.gmra.mxu0 %v2849
    %v2934 = vpop.f32.mrf.mxu0
    %v2935 = vadd.f32 0.0, %v2934
    %v2936 = vpop.f32.mrf.mxu0
    %2937 = vmatprep.mubr.f32.mxu0 0.0
    %2938 = vmatmul.mubr.f32.gmra.mxu0 %v2851
    %v2939 = vpop.f32.mrf.mxu0
    %v2940 = vadd.f32 0.0, %v2939
    %v2941 = vpop.f32.mrf.mxu0
    %2942 = vmatprep.mubr.f32.mxu0 0.0
    %2943 = vmatmul.mubr.f32.gmra.mxu0 %v2853
    %v2944 = vpop.f32.mrf.mxu0
    %v2945 = vadd.f32 0.0, %v2944
    %v2946 = vpop.f32.mrf.mxu0
    %2947 = vmatprep.mubr.f32.mxu0 0.0
    %2948 = vmatmul.mubr.f32.gmra.mxu0 %v2855
    %v2949 = vpop.f32.mrf.mxu0
    %v2950 = vadd.f32 0.0, %v2949
    %v2951 = vpop.f32.mrf.mxu0
    %2952 = vmatprep.mubr.f32.mxu0 0.0
    %2953 = vmatmul.mubr.f32.gmra.mxu0 %v2857
    %v2954 = vpop.f32.mrf.mxu0
    %v2955 = vadd.f32 0.0, %v2954
    %v2956 = vpop.f32.mrf.mxu0
    %2957 = vmatprep.mubr.f32.mxu0 0.0
    %2958 = vmatmul.mubr.f32.gmra.mxu0 %v2859
    %v2959 = vpop.f32.mrf.mxu0
    %v2960 = vadd.f32 0.0, %v2959
    %v2961 = vpop.f32.mrf.mxu0
    %2962 = vmatprep.mubr.f32.mxu0 0.0
    %2963 = vmatmul.mubr.f32.gmra.mxu0 %v2861
    %v2964 = vpop.f32.mrf.mxu0
    %v2965 = vadd.f32 0.0, %v2964
    %v2966 = vpop.f32.mrf.mxu0
    %2967 = vdwg.mxu0
    %v2968 = vsel %vm337, %v2930, -inf
    %2969 = vmax.xlane.f32.xlu0 %v2968
    %v2970 = vpop.xlane.xlu0 %2969
    %v2971 = vsel %vm337, %v2935, -inf
    %2972 = vmax.xlane.f32.xlu0 %v2971
    %v2973 = vpop.xlane.xlu0 %2972
    %v2974 = vsel %vm337, %v2940, -inf
    %2975 = vmax.xlane.f32.xlu0 %v2974
    %v2976 = vpop.xlane.xlu0 %2975
    %v2977 = vsel %vm337, %v2945, -inf
    %2978 = vmax.xlane.f32.xlu0 %v2977
    %v2979 = vpop.xlane.xlu0 %2978
    %v2980 = vsel %vm337, %v2950, -inf
    %2981 = vmax.xlane.f32.xlu0 %v2980
    %v2982 = vpop.xlane.xlu0 %2981
    %v2983 = vsel %vm337, %v2955, -inf
    %2984 = vmax.xlane.f32.xlu0 %v2983
    %v2985 = vpop.xlane.xlu0 %2984
    %v2986 = vsel %vm337, %v2960, -inf
    %2987 = vmax.xlane.f32.xlu0 %v2986
    %v2988 = vpop.xlane.xlu0 %2987
    %v2989 = vsel %vm337, %v2965, -inf
    %2990 = vmax.xlane.f32.xlu0 %v2989
    %v2991 = vpop.xlane.xlu0 %2990
    %v2992 = vmax.f32 %v2970, %v2982
    %v2993 = vmax.f32 %v2973, %v2985
    %v2994 = vmax.f32 %v2976, %v2988
    %v2995 = vmax.f32 %v2979, %v2991
    %v2996 = vmax.f32 %v2992, %v2993
    %v2997 = vmax.f32 %v2994, %v2995
    %v2998 = vmax.f32 %v2996, %v2997
    %v2999 = vrot.slane %v2998, 4
    %v3000 = vmax.f32 %v2998, %v2999
    %v3001 = vrot.slane %v3000, 2
    %v3002 = vmax.f32 %v3000, %v3001
    %v3003 = vrot.slane %v3002, 1
    %v3004 = vmax.f32 %v3002, %v3003
    %v3005 = vsub.f32 %v2930, %v3004
    %v3006 = vsub.f32 %v2935, %v3004
    %v3007 = vsub.f32 %v2940, %v3004
    %v3008 = vsub.f32 %v2945, %v3004
    %v3009 = vsub.f32 %v2950, %v3004
    %v3010 = vsub.f32 %v2955, %v3004
    %v3011 = vsub.f32 %v2960, %v3004
    %v3012 = vsub.f32 %v2965, %v3004
    %v3013 = vmul.f32 %v3005, 1.442695
    %v3014 = vpow.pop %v3013
    %v3015 = vmul.f32 %v3006, 1.442695
    %v3016 = vpow.pop %v3015
    %v3017 = vmul.f32 %v3007, 1.442695
    %v3018 = vpow.pop %v3017
    %v3019 = vmul.f32 %v3008, 1.442695
    %v3020 = vpow.pop %v3019
    %v3021 = vmul.f32 %v3009, 1.442695
    %v3022 = vpow.pop %v3021
    %v3023 = vmul.f32 %v3010, 1.442695
    %v3024 = vpow.pop %v3023
    %v3025 = vmul.f32 %v3011, 1.442695
    %v3026 = vpow.pop %v3025
    %v3027 = vmul.f32 %v3012, 1.442695
    %v3028 = vpow.pop %v3027
    %v3029 = vsel %vm337, %v3014, 0.0
    %v3030 = vsel %vm337, %v3016, 0.0
    %v3031 = vadd.f32 %v3029, %v3030
    %v3032 = vsel %vm337, %v3018, 0.0
    %v3033 = vadd.f32 %v3031, %v3032
    %v3034 = vsel %vm337, %v3020, 0.0
    %v3035 = vadd.f32 %v3033, %v3034
    %v3036 = vsel %vm337, %v3022, 0.0
    %v3037 = vadd.f32 %v3035, %v3036
    %v3038 = vsel %vm337, %v3024, 0.0
    %v3039 = vadd.f32 %v3037, %v3038
    %v3040 = vsel %vm337, %v3026, 0.0
    %v3041 = vadd.f32 %v3039, %v3040
    %v3042 = vsel %vm337, %v3028, 0.0
    %v3043 = vadd.f32 %v3041, %v3042
    %v3044 = vrot.slane %v3043, 4
    %v3045 = vadd.f32 %v3043, %v3044
    %v3046 = vrot.slane %v3045, 2
    %v3047 = vadd.f32 %v3045, %v3046
    %v3048 = vrot.slane %v3047, 1
    %v3049 = vadd.f32 %v3047, %v3048
    %v3050 = vrcp.pop %v3049
    %v3051 = vmul.f32 %v3014, %v3050
    %v3052 = vmul.f32 %v3016, %v3050
    %v3053 = vmul.f32 %v3018, %v3050
    %v3054 = vmul.f32 %v3020, %v3050
    %v3055 = vmul.f32 %v3022, %v3050
    %v3056 = vmul.f32 %v3024, %v3050
    %v3057 = vmul.f32 %v3026, %v3050
    %v3058 = vmul.f32 %v3028, %v3050
    %v3059 = vsel %vm337, %v3051, 0.0
    %3060 = vadd.xlane.f32.xlu0 %v3059
    %v3061 = vpop.xlane.xlu0 %3060
    %v3062 = vsel %vm337, %v3052, 0.0
    %3063 = vadd.xlane.f32.xlu0 %v3062
    %v3064 = vpop.xlane.xlu0 %3063
    %v3065 = vsel %vm337, %v3053, 0.0
    %3066 = vadd.xlane.f32.xlu0 %v3065
    %v3067 = vpop.xlane.xlu0 %3066
    %v3068 = vsel %vm337, %v3054, 0.0
    %3069 = vadd.xlane.f32.xlu0 %v3068
    %v3070 = vpop.xlane.xlu0 %3069
    %v3071 = vsel %vm337, %v3055, 0.0
    %3072 = vadd.xlane.f32.xlu0 %v3071
    %v3073 = vpop.xlane.xlu0 %3072
    %v3074 = vsel %vm337, %v3056, 0.0
    %3075 = vadd.xlane.f32.xlu0 %v3074
    %v3076 = vpop.xlane.xlu0 %3075
    %v3077 = vsel %vm337, %v3057, 0.0
    %3078 = vadd.xlane.f32.xlu0 %v3077
    %v3079 = vpop.xlane.xlu0 %3078
    %v3080 = vsel %vm337, %v3058, 0.0
    %3081 = vadd.xlane.f32.xlu0 %v3080
    %v3082 = vpop.xlane.xlu0 %3081
    %v3083 = vadd.f32 %v3061, 1e-09
    %v3084 = vadd.f32 %v3064, 1e-09
    %v3085 = vadd.f32 %v3067, 1e-09
    %v3086 = vadd.f32 %v3070, 1e-09
    %v3087 = vadd.f32 %v3073, 1e-09
    %v3088 = vadd.f32 %v3076, 1e-09
    %v3089 = vadd.f32 %v3079, 1e-09
    %v3090 = vadd.f32 %v3082, 1e-09
    %v3091 = vrcp.pop %v3083
    %v3092 = vrcp.pop %v3084
    %v3093 = vrcp.pop %v3085
    %v3094 = vrcp.pop %v3086
    %v3095 = vrcp.pop %v3087
    %v3096 = vrcp.pop %v3088
    %v3097 = vrcp.pop %v3089
    %v3098 = vrcp.pop %v3090
    %v3099 = vmul.f32 %v3051, %v3091
    %v3100 = vmul.f32 %v3052, %v3092
    %v3101 = vmul.f32 %v3053, %v3093
    %v3102 = vmul.f32 %v3054, %v3094
    %v3103 = vmul.f32 %v3055, %v3095
    %v3104 = vmul.f32 %v3056, %v3096
    %v3105 = vmul.f32 %v3057, %v3097
    %v3106 = vmul.f32 %v3058, %v3098
    %v3108 = vsel %vm337, %v3099, 0
    %v3111 = vsel %vm337, %v3100, 0
    %v3114 = vsel %vm337, %v3101, 0
    %v3117 = vsel %vm337, %v3102, 0
    %v3120 = vsel %vm337, %v3103, 0
    %v3123 = vsel %vm337, %v3104, 0
    %v3126 = vsel %vm337, %v3105, 0
    %v3129 = vsel %vm337, %v3106, 0
    %3131 = vmatprep.subr.mxu0 0.0
    %3132 = vmatpush1.msra.mxu0 0.0
    %3133 = vmatprep.subr.mxu0 0.0
    %3134 = vmatpush1.msra.mxu0 0.0
    %3135 = vmatprep.subr.mxu0 0.0
    %3136 = vmatpush1.msra.mxu0 0.0
    %3137 = vmatprep.subr.mxu0 0.0
    %3138 = vmatpush1.msra.mxu0 0.0
    %3139 = vmatprep.subr.mxu0 0.0
    %3140 = vmatpush1.msra.mxu0 0.0
    %3141 = vmatprep.subr.mxu0 0.0
    %3142 = vmatpush1.msra.mxu0 0.0
    %3143 = vmatprep.subr.mxu0 0.0
    %3144 = vmatpush1.msra.mxu0 0.0
    %3145 = vmatprep.subr.mxu0 0.0
    %3146 = vmatpush1.msra.mxu0 0.0
    %3147 = vmatprep.subr.mxu0 0.0
    %3148 = vmatpush1.msra.mxu0 %v2399
    %3149 = vmatprep.subr.mxu0 0.0
    %3150 = vmatpush1.msra.mxu0 %v2394
    %3151 = vmatprep.subr.mxu0 0.0
    %3152 = vmatpush1.msra.mxu0 %v2389
    %3153 = vmatprep.subr.mxu0 0.0
    %3154 = vmatpush1.msra.mxu0 %v2384
    %3155 = vmatprep.subr.mxu0 0.0
    %3156 = vmatpush1.msra.mxu0 %v2379
    %3157 = vmatprep.subr.mxu0 0.0
    %3158 = vmatpush1.msra.mxu0 %v2374
    %3159 = vmatprep.subr.mxu0 0.0
    %3160 = vmatpush1.msra.mxu0 %v2369
    %3161 = vmatprep.subr.mxu0 0.0
    %3162 = vmatpush1.msra.mxu0 %v2364
    %3163 = vmatprep.subr.mxu0 0.0
    %3164 = vmatpush2.msra.mxu0 0.0
    %3165 = vmatprep.subr.mxu0 0.0
    %3166 = vmatpush2.msra.mxu0 0.0
    %3167 = vmatprep.subr.mxu0 0.0
    %3168 = vmatpush2.msra.mxu0 0.0
    %3169 = vmatprep.subr.mxu0 0.0
    %3170 = vmatpush2.msra.mxu0 0.0
    %3171 = vmatprep.subr.mxu0 0.0
    %3172 = vmatpush2.msra.mxu0 0.0
    %3173 = vmatprep.subr.mxu0 0.0
    %3174 = vmatpush2.msra.mxu0 0.0
    %3175 = vmatprep.subr.mxu0 0.0
    %3176 = vmatpush2.msra.mxu0 0.0
    %3177 = vmatprep.subr.mxu0 0.0
    %3178 = vmatpush2.msra.mxu0 0.0
    %3179 = vmatprep.subr.mxu0 0.0
    %3180 = vmatpush2.msra.mxu0 0.0
    %3181 = vmatprep.subr.mxu0 0.0
    %3182 = vmatpush2.msra.mxu0 0.0
    %3183 = vmatprep.subr.mxu0 0.0
    %3184 = vmatpush2.msra.mxu0 0.0
    %3185 = vmatprep.subr.mxu0 0.0
    %3186 = vmatpush2.msra.mxu0 0.0
    %3187 = vmatprep.subr.mxu0 0.0
    %3188 = vmatpush2.msra.mxu0 0.0
    %3189 = vmatprep.subr.mxu0 0.0
    %3190 = vmatpush2.msra.mxu0 0.0
    %3191 = vmatprep.subr.mxu0 0.0
    %3192 = vmatpush2.msra.mxu0 0.0
    %3193 = vmatprep.subr.mxu0 0.0
    %3194 = vmatpush2.msra.mxu0 0.0
    %3195 = vmatprep.mubr.f32.mxu0 0.0
    %3196 = vmatmul.mubr.f32.gmra.mxu0 %v3108
    %v3197 = vpop.f32.mrf.mxu0
    %v3198 = vadd.f32 0.0, %v3197
    %v3199 = vpop.f32.mrf.mxu0
    %3200 = vmatprep.mubr.f32.mxu0 0.0
    %3201 = vmatmul.mubr.f32.gmra.mxu0 %v3111
    %v3202 = vpop.f32.mrf.mxu0
    %v3203 = vadd.f32 0.0, %v3202
    %v3204 = vpop.f32.mrf.mxu0
    %3205 = vmatprep.mubr.f32.mxu0 0.0
    %3206 = vmatmul.mubr.f32.gmra.mxu0 %v3114
    %v3207 = vpop.f32.mrf.mxu0
    %v3208 = vadd.f32 0.0, %v3207
    %v3209 = vpop.f32.mrf.mxu0
    %3210 = vmatprep.mubr.f32.mxu0 0.0
    %3211 = vmatmul.mubr.f32.gmra.mxu0 %v3117
    %v3212 = vpop.f32.mrf.mxu0
    %v3213 = vadd.f32 0.0, %v3212
    %v3214 = vpop.f32.mrf.mxu0
    %3215 = vmatprep.mubr.f32.mxu0 0.0
    %3216 = vmatmul.mubr.f32.gmra.mxu0 %v3120
    %v3217 = vpop.f32.mrf.mxu0
    %v3218 = vadd.f32 0.0, %v3217
    %v3219 = vpop.f32.mrf.mxu0
    %3220 = vmatprep.mubr.f32.mxu0 0.0
    %3221 = vmatmul.mubr.f32.gmra.mxu0 %v3123
    %v3222 = vpop.f32.mrf.mxu0
    %v3223 = vadd.f32 0.0, %v3222
    %v3224 = vpop.f32.mrf.mxu0
    %3225 = vmatprep.mubr.f32.mxu0 0.0
    %3226 = vmatmul.mubr.f32.gmra.mxu0 %v3126
    %v3227 = vpop.f32.mrf.mxu0
    %v3228 = vadd.f32 0.0, %v3227
    %v3229 = vpop.f32.mrf.mxu0
    %3230 = vmatprep.mubr.f32.mxu0 0.0
    %3231 = vmatmul.mubr.f32.gmra.mxu0 %v3129
    %v3232 = vpop.f32.mrf.mxu0
    %v3233 = vadd.f32 0.0, %v3232
    %v3234 = vpop.f32.mrf.mxu0
    %3235 = vdwg.mxu0
    %v3236 = vsub.f32 %v1845, %v3198
    %v3237 = vsub.f32 %v1846, %v3203
    %v3238 = vsub.f32 %v1847, %v3208
    %v3239 = vsub.f32 %v1848, %v3213
    %v3240 = vsub.f32 %v1849, %v3218
    %v3241 = vsub.f32 %v1850, %v3223
    %v3242 = vsub.f32 %v1851, %v3228
    %v3243 = vsub.f32 %v1852, %v3233
    %s3244 = scalar_lea.vmem [#allocation5], 64
    %v3245 = vld [vmem:[%s3244] sm:$0xff]
    %v3246 = vld [vmem:[%s3244 + $0x8] sm:$0xff]
    %v3247 = vld [vmem:[%s3244 + $0x10] sm:$0xff]
    %v3248 = vld [vmem:[%s3244 + $0x18] sm:$0xff]
    %v3249 = vld [vmem:[%s3244 + $0x20] sm:$0xff]
    %v3250 = vld [vmem:[%s3244 + $0x28] sm:$0xff]
    %v3251 = vld [vmem:[%s3244 + $0x30] sm:$0xff]
    %v3252 = vld [vmem:[%s3244 + $0x38] sm:$0xff]
    %s3253 = scalar_lea.vmem %s8, 1
    %v3254 = vld [vmem:[%s3253] sm:$0x1]
    %v3256 = vlaneseq
    %v3257 = vshrl.u32 %v3256, 7
    %v3258 = vsub.s32 0, %v3257
    %v3259 = vrot.slane %v3254, %v3258
    %v3262 = vsel %vm337, %v2815, 0
    %v3265 = vsel %vm337, %v2816, 0
    %v3268 = vsel %vm337, %v2817, 0
    %v3271 = vsel %vm337, %v2818, 0
    %v3274 = vsel %vm337, %v2819, 0
    %v3277 = vsel %vm337, %v2820, 0
    %v3280 = vsel %vm337, %v2821, 0
    %v3283 = vsel %vm337, %v2822, 0
    %v3286 = vsel %vm337, %v3236, 0
    %v3289 = vsel %vm337, %v3237, 0
    %v3292 = vsel %vm337, %v3238, 0
    %v3295 = vsel %vm337, %v3239, 0
    %v3298 = vsel %vm337, %v3240, 0
    %v3301 = vsel %vm337, %v3241, 0
    %v3304 = vsel %vm337, %v3242, 0
    %v3307 = vsel %vm337, %v3243, 0
    %3309 = vmatprep.subr.mxu0 0.0
    %3310 = vmatpush1.msra.mxu0 0.0
    %3311 = vmatprep.subr.mxu0 0.0
    %3312 = vmatpush1.msra.mxu0 0.0
    %3313 = vmatprep.subr.mxu0 0.0
    %3314 = vmatpush1.msra.mxu0 0.0
    %3315 = vmatprep.subr.mxu0 0.0
    %3316 = vmatpush1.msra.mxu0 0.0
    %3317 = vmatprep.subr.mxu0 0.0
    %3318 = vmatpush1.msra.mxu0 0.0
    %3319 = vmatprep.subr.mxu0 0.0
    %3320 = vmatpush1.msra.mxu0 0.0
    %3321 = vmatprep.subr.mxu0 0.0
    %3322 = vmatpush1.msra.mxu0 0.0
    %3323 = vmatprep.subr.mxu0 0.0
    %3324 = vmatpush1.msra.mxu0 0.0
    %3325 = vmatprep.subr.mxu0 0.0
    %3326 = vmatpush1.msra.mxu0 %v3252
    %3327 = vmatprep.subr.mxu0 0.0
    %3328 = vmatpush1.msra.mxu0 %v3251
    %3329 = vmatprep.subr.mxu0 0.0
    %3330 = vmatpush1.msra.mxu0 %v3250
    %3331 = vmatprep.subr.mxu0 0.0
    %3332 = vmatpush1.msra.mxu0 %v3249
    %3333 = vmatprep.subr.mxu0 0.0
    %3334 = vmatpush1.msra.mxu0 %v3248
    %3335 = vmatprep.subr.mxu0 0.0
    %3336 = vmatpush1.msra.mxu0 %v3247
    %3337 = vmatprep.subr.mxu0 0.0
    %3338 = vmatpush1.msra.mxu0 %v3246
    %3339 = vmatprep.subr.mxu0 0.0
    %3340 = vmatpush1.msra.mxu0 %v3245
    %3341 = vmatprep.subr.mxu0 0.0
    %3342 = vmatpush2.msra.mxu0 0.0
    %3343 = vmatprep.subr.mxu0 0.0
    %3344 = vmatpush2.msra.mxu0 0.0
    %3345 = vmatprep.subr.mxu0 0.0
    %3346 = vmatpush2.msra.mxu0 0.0
    %3347 = vmatprep.subr.mxu0 0.0
    %3348 = vmatpush2.msra.mxu0 0.0
    %3349 = vmatprep.subr.mxu0 0.0
    %3350 = vmatpush2.msra.mxu0 0.0
    %3351 = vmatprep.subr.mxu0 0.0
    %3352 = vmatpush2.msra.mxu0 0.0
    %3353 = vmatprep.subr.mxu0 0.0
    %3354 = vmatpush2.msra.mxu0 0.0
    %3355 = vmatprep.subr.mxu0 0.0
    %3356 = vmatpush2.msra.mxu0 0.0
    %3357 = vmatprep.subr.mxu0 0.0
    %3358 = vmatpush2.msra.mxu0 0.0
    %3359 = vmatprep.subr.mxu0 0.0
    %3360 = vmatpush2.msra.mxu0 0.0
    %3361 = vmatprep.subr.mxu0 0.0
    %3362 = vmatpush2.msra.mxu0 0.0
    %3363 = vmatprep.subr.mxu0 0.0
    %3364 = vmatpush2.msra.mxu0 0.0
    %3365 = vmatprep.subr.mxu0 0.0
    %3366 = vmatpush2.msra.mxu0 0.0
    %3367 = vmatprep.subr.mxu0 0.0
    %3368 = vmatpush2.msra.mxu0 0.0
    %3369 = vmatprep.subr.mxu0 0.0
    %3370 = vmatpush2.msra.mxu0 0.0
    %3371 = vmatprep.subr.mxu0 0.0
    %3372 = vmatpush2.msra.mxu0 0.0
    %3373 = vmatprep.mubr.f32.mxu0 0.0
    %3374 = vmatmul.mubr.f32.gmra.mxu0 %v3262
    %v3375 = vpop.f32.mrf.mxu0
    %v3376 = vadd.f32 %v3259, %v3375
    %v3377 = vpop.f32.mrf.mxu0
    %3378 = vmatprep.mubr.f32.mxu0 0.0
    %3379 = vmatmul.mubr.f32.gmra.mxu0 %v3265
    %v3380 = vpop.f32.mrf.mxu0
    %v3381 = vadd.f32 %v3259, %v3380
    %v3382 = vpop.f32.mrf.mxu0
    %3383 = vmatprep.mubr.f32.mxu0 0.0
    %3384 = vmatmul.mubr.f32.gmra.mxu0 %v3268
    %v3385 = vpop.f32.mrf.mxu0
    %v3386 = vadd.f32 %v3259, %v3385
    %v3387 = vpop.f32.mrf.mxu0
    %3388 = vmatprep.mubr.f32.mxu0 0.0
    %3389 = vmatmul.mubr.f32.gmra.mxu0 %v3271
    %v3390 = vpop.f32.mrf.mxu0
    %v3391 = vadd.f32 %v3259, %v3390
    %v3392 = vpop.f32.mrf.mxu0
    %3393 = vmatprep.mubr.f32.mxu0 0.0
    %3394 = vmatmul.mubr.f32.gmra.mxu0 %v3274
    %v3395 = vpop.f32.mrf.mxu0
    %v3396 = vadd.f32 %v3259, %v3395
    %v3397 = vpop.f32.mrf.mxu0
    %3398 = vmatprep.mubr.f32.mxu0 0.0
    %3399 = vmatmul.mubr.f32.gmra.mxu0 %v3277
    %v3400 = vpop.f32.mrf.mxu0
    %v3401 = vadd.f32 %v3259, %v3400
    %v3402 = vpop.f32.mrf.mxu0
    %3403 = vmatprep.mubr.f32.mxu0 0.0
    %3404 = vmatmul.mubr.f32.gmra.mxu0 %v3280
    %v3405 = vpop.f32.mrf.mxu0
    %v3406 = vadd.f32 %v3259, %v3405
    %v3407 = vpop.f32.mrf.mxu0
    %3408 = vmatprep.mubr.f32.mxu0 0.0
    %3409 = vmatmul.mubr.f32.gmra.mxu0 %v3283
    %v3410 = vpop.f32.mrf.mxu0
    %v3411 = vadd.f32 %v3259, %v3410
    %v3412 = vpop.f32.mrf.mxu0
    %3413 = vmatprep.mubr.f32.mxu0 0.0
    %3414 = vmatmul.mubr.f32.gmra.mxu0 %v3286
    %v3415 = vpop.f32.mrf.mxu0
    %v3416 = vadd.f32 %v3259, %v3415
    %v3417 = vpop.f32.mrf.mxu0
    %3418 = vmatprep.mubr.f32.mxu0 0.0
    %3419 = vmatmul.mubr.f32.gmra.mxu0 %v3289
    %v3420 = vpop.f32.mrf.mxu0
    %v3421 = vadd.f32 %v3259, %v3420
    %v3422 = vpop.f32.mrf.mxu0
    %3423 = vmatprep.mubr.f32.mxu0 0.0
    %3424 = vmatmul.mubr.f32.gmra.mxu0 %v3292
    %v3425 = vpop.f32.mrf.mxu0
    %v3426 = vadd.f32 %v3259, %v3425
    %v3427 = vpop.f32.mrf.mxu0
    %3428 = vmatprep.mubr.f32.mxu0 0.0
    %3429 = vmatmul.mubr.f32.gmra.mxu0 %v3295
    %v3430 = vpop.f32.mrf.mxu0
    %v3431 = vadd.f32 %v3259, %v3430
    %v3432 = vpop.f32.mrf.mxu0
    %3433 = vmatprep.mubr.f32.mxu0 0.0
    %3434 = vmatmul.mubr.f32.gmra.mxu0 %v3298
    %v3435 = vpop.f32.mrf.mxu0
    %v3436 = vadd.f32 %v3259, %v3435
    %v3437 = vpop.f32.mrf.mxu0
    %3438 = vmatprep.mubr.f32.mxu0 0.0
    %3439 = vmatmul.mubr.f32.gmra.mxu0 %v3301
    %v3440 = vpop.f32.mrf.mxu0
    %v3441 = vadd.f32 %v3259, %v3440
    %v3442 = vpop.f32.mrf.mxu0
    %3443 = vmatprep.mubr.f32.mxu0 0.0
    %3444 = vmatmul.mubr.f32.gmra.mxu0 %v3304
    %v3445 = vpop.f32.mrf.mxu0
    %v3446 = vadd.f32 %v3259, %v3445
    %v3447 = vpop.f32.mrf.mxu0
    %3448 = vmatprep.mubr.f32.mxu0 0.0
    %3449 = vmatmul.mubr.f32.gmra.mxu0 %v3307
    %v3450 = vpop.f32.mrf.mxu0
    %v3451 = vadd.f32 %v3259, %v3450
    %v3452 = vpop.f32.mrf.mxu0
    %3453 = vdwg.mxu0
    %v3454 = vmax.f32 %v3376, 0.0
    %v3455 = vmax.f32 %v3381, 0.0
    %v3456 = vmax.f32 %v3386, 0.0
    %v3457 = vmax.f32 %v3391, 0.0
    %v3458 = vmax.f32 %v3396, 0.0
    %v3459 = vmax.f32 %v3401, 0.0
    %v3460 = vmax.f32 %v3406, 0.0
    %v3461 = vmax.f32 %v3411, 0.0
    %v3462 = vmax.f32 %v3416, 0.0
    %v3463 = vmax.f32 %v3421, 0.0
    %v3464 = vmax.f32 %v3426, 0.0
    %v3465 = vmax.f32 %v3431, 0.0
    %v3466 = vmax.f32 %v3436, 0.0
    %v3467 = vmax.f32 %v3441, 0.0
    %v3468 = vmax.f32 %v3446, 0.0
    %v3469 = vmax.f32 %v3451, 0.0
    %v3470 = vadd.f32 %v1837, %v3454
    %v3471 = vadd.f32 %v1838, %v3455
    %v3472 = vadd.f32 %v1839, %v3456
    %v3473 = vadd.f32 %v1840, %v3457
    %v3474 = vadd.f32 %v1841, %v3458
    %v3475 = vadd.f32 %v1842, %v3459
    %v3476 = vadd.f32 %v1843, %v3460
    %v3477 = vadd.f32 %v1844, %v3461
    %v3478 = vadd.f32 %v1845, %v3462
    %v3479 = vadd.f32 %v1846, %v3463
    %v3480 = vadd.f32 %v1847, %v3464
    %v3481 = vadd.f32 %v1848, %v3465
    %v3482 = vadd.f32 %v1849, %v3466
    %v3483 = vadd.f32 %v1850, %v3467
    %v3484 = vadd.f32 %v1851, %v3468
    %v3485 = vadd.f32 %v1852, %v3469
    %s3486 = scalar_lea.vmem [#allocation7], 256
    %v3487 = vld [vmem:[%s3486] sm:$0xff]
    %v3488 = vld [vmem:[%s3486 + $0x8] sm:$0xff]
    %v3489 = vld [vmem:[%s3486 + $0x10] sm:$0xff]
    %v3490 = vld [vmem:[%s3486 + $0x18] sm:$0xff]
    %v3491 = vld [vmem:[%s3486 + $0x20] sm:$0xff]
    %v3492 = vld [vmem:[%s3486 + $0x28] sm:$0xff]
    %v3493 = vld [vmem:[%s3486 + $0x30] sm:$0xff]
    %v3494 = vld [vmem:[%s3486 + $0x38] sm:$0xff]
    %v3495 = vld [vmem:[%s3486 + $0x40] sm:$0xff]
    %v3496 = vld [vmem:[%s3486 + $0x48] sm:$0xff]
    %v3497 = vld [vmem:[%s3486 + $0x50] sm:$0xff]
    %v3498 = vld [vmem:[%s3486 + $0x58] sm:$0xff]
    %v3499 = vld [vmem:[%s3486 + $0x60] sm:$0xff]
    %v3500 = vld [vmem:[%s3486 + $0x68] sm:$0xff]
    %v3501 = vld [vmem:[%s3486 + $0x70] sm:$0xff]
    %v3502 = vld [vmem:[%s3486 + $0x78] sm:$0xff]
    %v3504 = vsel %vm337, %v3470, 0
    %v3507 = vsel %vm337, %v3471, 0
    %v3510 = vsel %vm337, %v3472, 0
    %v3513 = vsel %vm337, %v3473, 0
    %v3516 = vsel %vm337, %v3474, 0
    %v3519 = vsel %vm337, %v3475, 0
    %v3522 = vsel %vm337, %v3476, 0
    %v3525 = vsel %vm337, %v3477, 0
    %v3528 = vsel %vm337, %v3478, 0
    %v3531 = vsel %vm337, %v3479, 0
    %v3534 = vsel %vm337, %v3480, 0
    %v3537 = vsel %vm337, %v3481, 0
    %v3540 = vsel %vm337, %v3482, 0
    %v3543 = vsel %vm337, %v3483, 0
    %v3546 = vsel %vm337, %v3484, 0
    %v3549 = vsel %vm337, %v3485, 0
    %3551 = vmatprep.subr.mxu0 0.0
    %3552 = vmatpush1.msra.mxu0 0.0
    %3553 = vmatprep.subr.mxu0 0.0
    %3554 = vmatpush1.msra.mxu0 0.0
    %3555 = vmatprep.subr.mxu0 0.0
    %3556 = vmatpush1.msra.mxu0 0.0
    %3557 = vmatprep.subr.mxu0 0.0
    %3558 = vmatpush1.msra.mxu0 0.0
    %3559 = vmatprep.subr.mxu0 0.0
    %3560 = vmatpush1.msra.mxu0 0.0
    %3561 = vmatprep.subr.mxu0 0.0
    %3562 = vmatpush1.msra.mxu0 0.0
    %3563 = vmatprep.subr.mxu0 0.0
    %3564 = vmatpush1.msra.mxu0 0.0
    %3565 = vmatprep.subr.mxu0 0.0
    %3566 = vmatpush1.msra.mxu0 0.0
    %3567 = vmatprep.subr.mxu0 %v3502
    %3568 = vmatpush1.msra.mxu0 %v3501
    %3569 = vmatprep.subr.mxu0 %v3500
    %3570 = vmatpush1.msra.mxu0 %v3499
    %3571 = vmatprep.subr.mxu0 %v3498
    %3572 = vmatpush1.msra.mxu0 %v3497
    %3573 = vmatprep.subr.mxu0 %v3496
    %3574 = vmatpush1.msra.mxu0 %v3495
    %3575 = vmatprep.subr.mxu0 %v3494
    %3576 = vmatpush1.msra.mxu0 %v3493
    %3577 = vmatprep.subr.mxu0 %v3492
    %3578 = vmatpush1.msra.mxu0 %v3491
    %3579 = vmatprep.subr.mxu0 %v3490
    %3580 = vmatpush1.msra.mxu0 %v3489
    %3581 = vmatprep.subr.mxu0 %v3488
    %3582 = vmatpush1.msra.mxu0 %v3487
    %3583 = vmatprep.subr.mxu0 0.0
    %3584 = vmatpush2.msra.mxu0 0.0
    %3585 = vmatprep.subr.mxu0 0.0
    %3586 = vmatpush2.msra.mxu0 0.0
    %3587 = vmatprep.subr.mxu0 0.0
    %3588 = vmatpush2.msra.mxu0 0.0
    %3589 = vmatprep.subr.mxu0 0.0
    %3590 = vmatpush2.msra.mxu0 0.0
    %3591 = vmatprep.subr.mxu0 0.0
    %3592 = vmatpush2.msra.mxu0 0.0
    %3593 = vmatprep.subr.mxu0 0.0
    %3594 = vmatpush2.msra.mxu0 0.0
    %3595 = vmatprep.subr.mxu0 0.0
    %3596 = vmatpush2.msra.mxu0 0.0
    %3597 = vmatprep.subr.mxu0 0.0
    %3598 = vmatpush2.msra.mxu0 0.0
    %3599 = vmatprep.subr.mxu0 0.0
    %3600 = vmatpush2.msra.mxu0 0.0
    %3601 = vmatprep.subr.mxu0 0.0
    %3602 = vmatpush2.msra.mxu0 0.0
    %3603 = vmatprep.subr.mxu0 0.0
    %3604 = vmatpush2.msra.mxu0 0.0
    %3605 = vmatprep.subr.mxu0 0.0
    %3606 = vmatpush2.msra.mxu0 0.0
    %3607 = vmatprep.subr.mxu0 0.0
    %3608 = vmatpush2.msra.mxu0 0.0
    %3609 = vmatprep.subr.mxu0 0.0
    %3610 = vmatpush2.msra.mxu0 0.0
    %3611 = vmatprep.subr.mxu0 0.0
    %3612 = vmatpush2.msra.mxu0 0.0
    %3613 = vmatprep.subr.mxu0 0.0
    %3614 = vmatpush2.msra.mxu0 0.0
    %3615 = vmatprep.mubr.f32.mxu0 0.0
    %3616 = vmatmul.mubr.f32.gmra.mxu0 %v3504
    %v3617 = vpop.f32.mrf.mxu0
    %v3618 = vadd.f32 0.0, %v3617
    %v3619 = vpop.f32.mrf.mxu0
    %v3620 = vadd.f32 0.0, %v3619
    %3621 = vmatprep.mubr.f32.mxu0 0.0
    %3622 = vmatmul.mubr.f32.gmra.mxu0 %v3507
    %v3623 = vpop.f32.mrf.mxu0
    %v3624 = vadd.f32 0.0, %v3623
    %v3625 = vpop.f32.mrf.mxu0
    %v3626 = vadd.f32 0.0, %v3625
    %3627 = vmatprep.mubr.f32.mxu0 0.0
    %3628 = vmatmul.mubr.f32.gmra.mxu0 %v3510
    %v3629 = vpop.f32.mrf.mxu0
    %v3630 = vadd.f32 0.0, %v3629
    %v3631 = vpop.f32.mrf.mxu0
    %v3632 = vadd.f32 0.0, %v3631
    %3633 = vmatprep.mubr.f32.mxu0 0.0
    %3634 = vmatmul.mubr.f32.gmra.mxu0 %v3513
    %v3635 = vpop.f32.mrf.mxu0
    %v3636 = vadd.f32 0.0, %v3635
    %v3637 = vpop.f32.mrf.mxu0
    %v3638 = vadd.f32 0.0, %v3637
    %3639 = vmatprep.mubr.f32.mxu0 0.0
    %3640 = vmatmul.mubr.f32.gmra.mxu0 %v3516
    %v3641 = vpop.f32.mrf.mxu0
    %v3642 = vadd.f32 0.0, %v3641
    %v3643 = vpop.f32.mrf.mxu0
    %v3644 = vadd.f32 0.0, %v3643
    %3645 = vmatprep.mubr.f32.mxu0 0.0
    %3646 = vmatmul.mubr.f32.gmra.mxu0 %v3519
    %v3647 = vpop.f32.mrf.mxu0
    %v3648 = vadd.f32 0.0, %v3647
    %v3649 = vpop.f32.mrf.mxu0
    %v3650 = vadd.f32 0.0, %v3649
    %3651 = vmatprep.mubr.f32.mxu0 0.0
    %3652 = vmatmul.mubr.f32.gmra.mxu0 %v3522
    %v3653 = vpop.f32.mrf.mxu0
    %v3654 = vadd.f32 0.0, %v3653
    %v3655 = vpop.f32.mrf.mxu0
    %v3656 = vadd.f32 0.0, %v3655
    %3657 = vmatprep.mubr.f32.mxu0 0.0
    %3658 = vmatmul.mubr.f32.gmra.mxu0 %v3525
    %v3659 = vpop.f32.mrf.mxu0
    %v3660 = vadd.f32 0.0, %v3659
    %v3661 = vpop.f32.mrf.mxu0
    %v3662 = vadd.f32 0.0, %v3661
    %3663 = vmatprep.mubr.f32.mxu0 0.0
    %3664 = vmatmul.mubr.f32.gmra.mxu0 %v3528
    %v3665 = vpop.f32.mrf.mxu0
    %v3666 = vadd.f32 0.0, %v3665
    %v3667 = vpop.f32.mrf.mxu0
    %v3668 = vadd.f32 0.0, %v3667
    %3669 = vmatprep.mubr.f32.mxu0 0.0
    %3670 = vmatmul.mubr.f32.gmra.mxu0 %v3531
    %v3671 = vpop.f32.mrf.mxu0
    %v3672 = vadd.f32 0.0, %v3671
    %v3673 = vpop.f32.mrf.mxu0
    %v3674 = vadd.f32 0.0, %v3673
    %3675 = vmatprep.mubr.f32.mxu0 0.0
    %3676 = vmatmul.mubr.f32.gmra.mxu0 %v3534
    %v3677 = vpop.f32.mrf.mxu0
    %v3678 = vadd.f32 0.0, %v3677
    %v3679 = vpop.f32.mrf.mxu0
    %v3680 = vadd.f32 0.0, %v3679
    %3681 = vmatprep.mubr.f32.mxu0 0.0
    %3682 = vmatmul.mubr.f32.gmra.mxu0 %v3537
    %v3683 = vpop.f32.mrf.mxu0
    %v3684 = vadd.f32 0.0, %v3683
    %v3685 = vpop.f32.mrf.mxu0
    %v3686 = vadd.f32 0.0, %v3685
    %3687 = vmatprep.mubr.f32.mxu0 0.0
    %3688 = vmatmul.mubr.f32.gmra.mxu0 %v3540
    %v3689 = vpop.f32.mrf.mxu0
    %v3690 = vadd.f32 0.0, %v3689
    %v3691 = vpop.f32.mrf.mxu0
    %v3692 = vadd.f32 0.0, %v3691
    %3693 = vmatprep.mubr.f32.mxu0 0.0
    %3694 = vmatmul.mubr.f32.gmra.mxu0 %v3543
    %v3695 = vpop.f32.mrf.mxu0
    %v3696 = vadd.f32 0.0, %v3695
    %v3697 = vpop.f32.mrf.mxu0
    %v3698 = vadd.f32 0.0, %v3697
    %3699 = vmatprep.mubr.f32.mxu0 0.0
    %3700 = vmatmul.mubr.f32.gmra.mxu0 %v3546
    %v3701 = vpop.f32.mrf.mxu0
    %v3702 = vadd.f32 0.0, %v3701
    %v3703 = vpop.f32.mrf.mxu0
    %v3704 = vadd.f32 0.0, %v3703
    %3705 = vmatprep.mubr.f32.mxu0 0.0
    %3706 = vmatmul.mubr.f32.gmra.mxu0 %v3549
    %v3707 = vpop.f32.mrf.mxu0
    %v3708 = vadd.f32 0.0, %v3707
    %v3709 = vpop.f32.mrf.mxu0
    %v3710 = vadd.f32 0.0, %v3709
    %3711 = vdwg.mxu0
    %v3712 = vadd.f32 %v2146, %v3618
    %v3713 = vadd.f32 %v2148, %v3620
    %v3714 = vadd.f32 %v2152, %v3624
    %v3715 = vadd.f32 %v2154, %v3626
    %v3716 = vadd.f32 %v2158, %v3630
    %v3717 = vadd.f32 %v2160, %v3632
    %v3718 = vadd.f32 %v2164, %v3636
    %v3719 = vadd.f32 %v2166, %v3638
    %v3720 = vadd.f32 %v2170, %v3642
    %v3721 = vadd.f32 %v2172, %v3644
    %v3722 = vadd.f32 %v2176, %v3648
    %v3723 = vadd.f32 %v2178, %v3650
    %v3724 = vadd.f32 %v2182, %v3654
    %v3725 = vadd.f32 %v2184, %v3656
    %v3726 = vadd.f32 %v2188, %v3660
    %v3727 = vadd.f32 %v2190, %v3662
    %v3728 = vadd.f32 %v2194, %v3666
    %v3729 = vadd.f32 %v2196, %v3668
    %v3730 = vadd.f32 %v2200, %v3672
    %v3731 = vadd.f32 %v2202, %v3674
    %v3732 = vadd.f32 %v2206, %v3678
    %v3733 = vadd.f32 %v2208, %v3680
    %v3734 = vadd.f32 %v2212, %v3684
    %v3735 = vadd.f32 %v2214, %v3686
    %v3736 = vadd.f32 %v2218, %v3690
    %v3737 = vadd.f32 %v2220, %v3692
    %v3738 = vadd.f32 %v2224, %v3696
    %v3739 = vadd.f32 %v2226, %v3698
    %v3740 = vadd.f32 %v2230, %v3702
    %v3741 = vadd.f32 %v2232, %v3704
    %v3742 = vadd.f32 %v2236, %v3708
    %v3743 = vadd.f32 %v2238, %v3710
    %s3744 = scalar_lea.vmem [#allocation2], 128
    %v3745 = vld [vmem:[%s3744] sm:$0xff]
    %v3746 = vld [vmem:[%s3744 + $0x8] sm:$0xff]
    %v3747 = vld [vmem:[%s3744 + $0x10] sm:$0xff]
    %v3748 = vld [vmem:[%s3744 + $0x18] sm:$0xff]
    %v3749 = vld [vmem:[%s3744 + $0x20] sm:$0xff]
    %v3750 = vld [vmem:[%s3744 + $0x28] sm:$0xff]
    %v3751 = vld [vmem:[%s3744 + $0x30] sm:$0xff]
    %v3752 = vld [vmem:[%s3744 + $0x38] sm:$0xff]
    %s3753 = scalar_lea.vmem %s6, 2
    %v3754 = vld [vmem:[%s3753] sm:$0x1]
    %v3756 = vlaneseq
    %v3757 = vshrl.u32 %v3756, 7
    %v3758 = vsub.s32 0, %v3757
    %v3759 = vrot.slane %v3754, %v3758
    %3761 = vmatprep.subr.mxu0 0.0
    %3762 = vmatpush1.msra.mxu0 0.0
    %3763 = vmatprep.subr.mxu0 0.0
    %3764 = vmatpush1.msra.mxu0 0.0
    %3765 = vmatprep.subr.mxu0 0.0
    %3766 = vmatpush1.msra.mxu0 0.0
    %3767 = vmatprep.subr.mxu0 0.0
    %3768 = vmatpush1.msra.mxu0 0.0
    %3769 = vmatprep.subr.mxu0 0.0
    %3770 = vmatpush1.msra.mxu0 0.0
    %3771 = vmatprep.subr.mxu0 0.0
    %3772 = vmatpush1.msra.mxu0 0.0
    %3773 = vmatprep.subr.mxu0 0.0
    %3774 = vmatpush1.msra.mxu0 0.0
    %3775 = vmatprep.subr.mxu0 0.0
    %3776 = vmatpush1.msra.mxu0 0.0
    %3777 = vmatprep.subr.mxu0 0.0
    %3778 = vmatpush1.msra.mxu0 %v3752
    %3779 = vmatprep.subr.mxu0 0.0
    %3780 = vmatpush1.msra.mxu0 %v3751
    %3781 = vmatprep.subr.mxu0 0.0
    %3782 = vmatpush1.msra.mxu0 %v3750
    %3783 = vmatprep.subr.mxu0 0.0
    %3784 = vmatpush1.msra.mxu0 %v3749
    %3785 = vmatprep.subr.mxu0 0.0
    %3786 = vmatpush1.msra.mxu0 %v3748
    %3787 = vmatprep.subr.mxu0 0.0
    %3788 = vmatpush1.msra.mxu0 %v3747
    %3789 = vmatprep.subr.mxu0 0.0
    %3790 = vmatpush1.msra.mxu0 %v3746
    %3791 = vmatprep.subr.mxu0 0.0
    %3792 = vmatpush1.msra.mxu0 %v3745
    %3793 = vmatprep.subr.mxu0 0.0
    %3794 = vmatpush2.msra.mxu0 0.0
    %3795 = vmatprep.subr.mxu0 0.0
    %3796 = vmatpush2.msra.mxu0 0.0
    %3797 = vmatprep.subr.mxu0 0.0
    %3798 = vmatpush2.msra.mxu0 0.0
    %3799 = vmatprep.subr.mxu0 0.0
    %3800 = vmatpush2.msra.mxu0 0.0
    %3801 = vmatprep.subr.mxu0 0.0
    %3802 = vmatpush2.msra.mxu0 0.0
    %3803 = vmatprep.subr.mxu0 0.0
    %3804 = vmatpush2.msra.mxu0 0.0
    %3805 = vmatprep.subr.mxu0 0.0
    %3806 = vmatpush2.msra.mxu0 0.0
    %3807 = vmatprep.subr.mxu0 0.0
    %3808 = vmatpush2.msra.mxu0 0.0
    %3809 = vmatprep.subr.mxu0 0.0
    %3810 = vmatpush2.msra.mxu0 0.0
    %3811 = vmatprep.subr.mxu0 0.0
    %3812 = vmatpush2.msra.mxu0 0.0
    %3813 = vmatprep.subr.mxu0 0.0
    %3814 = vmatpush2.msra.mxu0 0.0
    %3815 = vmatprep.subr.mxu0 0.0
    %3816 = vmatpush2.msra.mxu0 0.0
    %3817 = vmatprep.subr.mxu0 0.0
    %3818 = vmatpush2.msra.mxu0 0.0
    %3819 = vmatprep.subr.mxu0 0.0
    %3820 = vmatpush2.msra.mxu0 0.0
    %3821 = vmatprep.subr.mxu0 0.0
    %3822 = vmatpush2.msra.mxu0 0.0
    %3823 = vmatprep.subr.mxu0 0.0
    %3824 = vmatpush2.msra.mxu0 0.0
    %3825 = vmatprep.mubr.f32.mxu0 0.0
    %3826 = vmatmul.mubr.f32.gmra.mxu0 %v3504
    %v3827 = vpop.f32.mrf.mxu0
    %v3828 = vadd.f32 %v3759, %v3827
    %v3829 = vpop.f32.mrf.mxu0
    %3830 = vmatprep.mubr.f32.mxu0 0.0
    %3831 = vmatmul.mubr.f32.gmra.mxu0 %v3507
    %v3832 = vpop.f32.mrf.mxu0
    %v3833 = vadd.f32 %v3759, %v3832
    %v3834 = vpop.f32.mrf.mxu0
    %3835 = vmatprep.mubr.f32.mxu0 0.0
    %3836 = vmatmul.mubr.f32.gmra.mxu0 %v3510
    %v3837 = vpop.f32.mrf.mxu0
    %v3838 = vadd.f32 %v3759, %v3837
    %v3839 = vpop.f32.mrf.mxu0
    %3840 = vmatprep.mubr.f32.mxu0 0.0
    %3841 = vmatmul.mubr.f32.gmra.mxu0 %v3513
    %v3842 = vpop.f32.mrf.mxu0
    %v3843 = vadd.f32 %v3759, %v3842
    %v3844 = vpop.f32.mrf.mxu0
    %3845 = vmatprep.mubr.f32.mxu0 0.0
    %3846 = vmatmul.mubr.f32.gmra.mxu0 %v3516
    %v3847 = vpop.f32.mrf.mxu0
    %v3848 = vadd.f32 %v3759, %v3847
    %v3849 = vpop.f32.mrf.mxu0
    %3850 = vmatprep.mubr.f32.mxu0 0.0
    %3851 = vmatmul.mubr.f32.gmra.mxu0 %v3519
    %v3852 = vpop.f32.mrf.mxu0
    %v3853 = vadd.f32 %v3759, %v3852
    %v3854 = vpop.f32.mrf.mxu0
    %3855 = vmatprep.mubr.f32.mxu0 0.0
    %3856 = vmatmul.mubr.f32.gmra.mxu0 %v3522
    %v3857 = vpop.f32.mrf.mxu0
    %v3858 = vadd.f32 %v3759, %v3857
    %v3859 = vpop.f32.mrf.mxu0
    %3860 = vmatprep.mubr.f32.mxu0 0.0
    %3861 = vmatmul.mubr.f32.gmra.mxu0 %v3525
    %v3862 = vpop.f32.mrf.mxu0
    %v3863 = vadd.f32 %v3759, %v3862
    %v3864 = vpop.f32.mrf.mxu0
    %3865 = vmatprep.mubr.f32.mxu0 0.0
    %3866 = vmatmul.mubr.f32.gmra.mxu0 %v3528
    %v3867 = vpop.f32.mrf.mxu0
    %v3868 = vadd.f32 %v3759, %v3867
    %v3869 = vpop.f32.mrf.mxu0
    %3870 = vmatprep.mubr.f32.mxu0 0.0
    %3871 = vmatmul.mubr.f32.gmra.mxu0 %v3531
    %v3872 = vpop.f32.mrf.mxu0
    %v3873 = vadd.f32 %v3759, %v3872
    %v3874 = vpop.f32.mrf.mxu0
    %3875 = vmatprep.mubr.f32.mxu0 0.0
    %3876 = vmatmul.mubr.f32.gmra.mxu0 %v3534
    %v3877 = vpop.f32.mrf.mxu0
    %v3878 = vadd.f32 %v3759, %v3877
    %v3879 = vpop.f32.mrf.mxu0
    %3880 = vmatprep.mubr.f32.mxu0 0.0
    %3881 = vmatmul.mubr.f32.gmra.mxu0 %v3537
    %v3882 = vpop.f32.mrf.mxu0
    %v3883 = vadd.f32 %v3759, %v3882
    %v3884 = vpop.f32.mrf.mxu0
    %3885 = vmatprep.mubr.f32.mxu0 0.0
    %3886 = vmatmul.mubr.f32.gmra.mxu0 %v3540
    %v3887 = vpop.f32.mrf.mxu0
    %v3888 = vadd.f32 %v3759, %v3887
    %v3889 = vpop.f32.mrf.mxu0
    %3890 = vmatprep.mubr.f32.mxu0 0.0
    %3891 = vmatmul.mubr.f32.gmra.mxu0 %v3543
    %v3892 = vpop.f32.mrf.mxu0
    %v3893 = vadd.f32 %v3759, %v3892
    %v3894 = vpop.f32.mrf.mxu0
    %3895 = vmatprep.mubr.f32.mxu0 0.0
    %3896 = vmatmul.mubr.f32.gmra.mxu0 %v3546
    %v3897 = vpop.f32.mrf.mxu0
    %v3898 = vadd.f32 %v3759, %v3897
    %v3899 = vpop.f32.mrf.mxu0
    %3900 = vmatprep.mubr.f32.mxu0 0.0
    %3901 = vmatmul.mubr.f32.gmra.mxu0 %v3549
    %v3902 = vpop.f32.mrf.mxu0
    %v3903 = vadd.f32 %v3759, %v3902
    %v3904 = vpop.f32.mrf.mxu0
    %3905 = vdwg.mxu0
    %3914 = vrot.lane.b32.xlu0 %v3828, 64
    %v3915 = vpop.permute.xlu0 %3914
    %3916 = vrot.lane.b32.xlu0 %v3833, 64
    %v3917 = vpop.permute.xlu0 %3916
    %3918 = vrot.lane.b32.xlu0 %v3838, 64
    %v3919 = vpop.permute.xlu0 %3918
    %3920 = vrot.lane.b32.xlu0 %v3843, 64
    %v3921 = vpop.permute.xlu0 %3920
    %3922 = vrot.lane.b32.xlu0 %v3848, 64
    %v3923 = vpop.permute.xlu0 %3922
    %3924 = vrot.lane.b32.xlu0 %v3853, 64
    %v3925 = vpop.permute.xlu0 %3924
    %3926 = vrot.lane.b32.xlu0 %v3858, 64
    %v3927 = vpop.permute.xlu0 %3926
    %3928 = vrot.lane.b32.xlu0 %v3863, 64
    %v3929 = vpop.permute.xlu0 %3928
    %v3930 = vsel %vm337, %v3915, 0
    %v3932 = vsel %vm337, %v3917, 0
    %v3934 = vsel %vm337, %v3919, 0
    %v3936 = vsel %vm337, %v3921, 0
    %v3938 = vsel %vm337, %v3923, 0
    %v3940 = vsel %vm337, %v3925, 0
    %v3942 = vsel %vm337, %v3927, 0
    %v3944 = vsel %vm337, %v3929, 0
    %3946 = vmatprep.subr.mxu0 0.0
    %3947 = vmatpush1.xpose.msra.mxu0 0.0
    %3948 = vmatprep.subr.mxu0 0.0
    %3949 = vmatpush1.xpose.msra.mxu0 0.0
    %3950 = vmatprep.subr.mxu0 0.0
    %3951 = vmatpush1.xpose.msra.mxu0 0.0
    %3952 = vmatprep.subr.mxu0 0.0
    %3953 = vmatpush1.xpose.msra.mxu0 0.0
    %3954 = vmatprep.subr.mxu0 0.0
    %3955 = vmatpush1.xpose.msra.mxu0 0.0
    %3956 = vmatprep.subr.mxu0 0.0
    %3957 = vmatpush1.xpose.msra.mxu0 0.0
    %3958 = vmatprep.subr.mxu0 0.0
    %3959 = vmatpush1.xpose.msra.mxu0 0.0
    %3960 = vmatprep.subr.mxu0 0.0
    %3961 = vmatpush1.xpose.msra.mxu0 0.0
    %3962 = vmatprep.subr.mxu0 0.0
    %3963 = vmatpush1.xpose.msra.mxu0 %v3944
    %3964 = vmatprep.subr.mxu0 0.0
    %3965 = vmatpush1.xpose.msra.mxu0 %v3942
    %3966 = vmatprep.subr.mxu0 0.0
    %3967 = vmatpush1.xpose.msra.mxu0 %v3940
    %3968 = vmatprep.subr.mxu0 0.0
    %3969 = vmatpush1.xpose.msra.mxu0 %v3938
    %3970 = vmatprep.subr.mxu0 0.0
    %3971 = vmatpush1.xpose.msra.mxu0 %v3936
    %3972 = vmatprep.subr.mxu0 0.0
    %3973 = vmatpush1.xpose.msra.mxu0 %v3934
    %3974 = vmatprep.subr.mxu0 0.0
    %3975 = vmatpush1.xpose.msra.mxu0 %v3932
    %3976 = vmatprep.subr.mxu0 0.0
    %3977 = vmatpush1.xpose.msra.mxu0 %v3930
    %3978 = vmatprep.subr.mxu0 0.0
    %3979 = vmatpush2.xpose.msra.mxu0 0.0
    %3980 = vmatprep.subr.mxu0 0.0
    %3981 = vmatpush2.xpose.msra.mxu0 0.0
    %3982 = vmatprep.subr.mxu0 0.0
    %3983 = vmatpush2.xpose.msra.mxu0 0.0
    %3984 = vmatprep.subr.mxu0 0.0
    %3985 = vmatpush2.xpose.msra.mxu0 0.0
    %3986 = vmatprep.subr.mxu0 0.0
    %3987 = vmatpush2.xpose.msra.mxu0 0.0
    %3988 = vmatprep.subr.mxu0 0.0
    %3989 = vmatpush2.xpose.msra.mxu0 0.0
    %3990 = vmatprep.subr.mxu0 0.0
    %3991 = vmatpush2.xpose.msra.mxu0 0.0
    %3992 = vmatprep.subr.mxu0 0.0
    %3993 = vmatpush2.xpose.msra.mxu0 0.0
    %3994 = vmatprep.subr.mxu0 0.0
    %3995 = vmatpush2.xpose.msra.mxu0 0.0
    %3996 = vmatprep.subr.mxu0 0.0
    %3997 = vmatpush2.xpose.msra.mxu0 0.0
    %3998 = vmatprep.subr.mxu0 0.0
    %3999 = vmatpush2.xpose.msra.mxu0 0.0
    %4000 = vmatprep.subr.mxu0 0.0
    %4001 = vmatpush2.xpose.msra.mxu0 0.0
    %4002 = vmatprep.subr.mxu0 0.0
    %4003 = vmatpush2.xpose.msra.mxu0 0.0
    %4004 = vmatprep.subr.mxu0 0.0
    %4005 = vmatpush2.xpose.msra.mxu0 0.0
    %4006 = vmatprep.subr.mxu0 0.0
    %4007 = vmatpush2.xpose.msra.mxu0 0.0
    %4008 = vmatprep.subr.mxu0 0.0
    %4009 = vmatpush2.xpose.msra.mxu0 0.0
    %4010 = vmatprep.mubr.f32.mxu0 0.0
    %4011 = vmatmul.mubr.f32.gmra.mxu0 %v3930
    %v4012 = vpop.f32.mrf.mxu0
    %v4013 = vadd.f32 0.0, %v4012
    %v4014 = vpop.f32.mrf.mxu0
    %4015 = vmatprep.mubr.f32.mxu0 0.0
    %4016 = vmatmul.mubr.f32.gmra.mxu0 %v3932
    %v4017 = vpop.f32.mrf.mxu0
    %v4018 = vadd.f32 0.0, %v4017
    %v4019 = vpop.f32.mrf.mxu0
    %4020 = vmatprep.mubr.f32.mxu0 0.0
    %4021 = vmatmul.mubr.f32.gmra.mxu0 %v3934
    %v4022 = vpop.f32.mrf.mxu0
    %v4023 = vadd.f32 0.0, %v4022
    %v4024 = vpop.f32.mrf.mxu0
    %4025 = vmatprep.mubr.f32.mxu0 0.0
    %4026 = vmatmul.mubr.f32.gmra.mxu0 %v3936
    %v4027 = vpop.f32.mrf.mxu0
    %v4028 = vadd.f32 0.0, %v4027
    %v4029 = vpop.f32.mrf.mxu0
    %4030 = vmatprep.mubr.f32.mxu0 0.0
    %4031 = vmatmul.mubr.f32.gmra.mxu0 %v3938
    %v4032 = vpop.f32.mrf.mxu0
    %v4033 = vadd.f32 0.0, %v4032
    %v4034 = vpop.f32.mrf.mxu0
    %4035 = vmatprep.mubr.f32.mxu0 0.0
    %4036 = vmatmul.mubr.f32.gmra.mxu0 %v3940
    %v4037 = vpop.f32.mrf.mxu0
    %v4038 = vadd.f32 0.0, %v4037
    %v4039 = vpop.f32.mrf.mxu0
    %4040 = vmatprep.mubr.f32.mxu0 0.0
    %4041 = vmatmul.mubr.f32.gmra.mxu0 %v3942
    %v4042 = vpop.f32.mrf.mxu0
    %v4043 = vadd.f32 0.0, %v4042
    %v4044 = vpop.f32.mrf.mxu0
    %4045 = vmatprep.mubr.f32.mxu0 0.0
    %4046 = vmatmul.mubr.f32.gmra.mxu0 %v3944
    %v4047 = vpop.f32.mrf.mxu0
    %v4048 = vadd.f32 0.0, %v4047
    %v4049 = vpop.f32.mrf.mxu0
    %4050 = vdwg.mxu0
    %v4051 = vsel %vm337, %v4013, -inf
    %4052 = vmax.xlane.f32.xlu0 %v4051
    %v4053 = vpop.xlane.xlu0 %4052
    %v4054 = vsel %vm337, %v4018, -inf
    %4055 = vmax.xlane.f32.xlu0 %v4054
    %v4056 = vpop.xlane.xlu0 %4055
    %v4057 = vsel %vm337, %v4023, -inf
    %4058 = vmax.xlane.f32.xlu0 %v4057
    %v4059 = vpop.xlane.xlu0 %4058
    %v4060 = vsel %vm337, %v4028, -inf
    %4061 = vmax.xlane.f32.xlu0 %v4060
    %v4062 = vpop.xlane.xlu0 %4061
    %v4063 = vsel %vm337, %v4033, -inf
    %4064 = vmax.xlane.f32.xlu0 %v4063
    %v4065 = vpop.xlane.xlu0 %4064
    %v4066 = vsel %vm337, %v4038, -inf
    %4067 = vmax.xlane.f32.xlu0 %v4066
    %v4068 = vpop.xlane.xlu0 %4067
    %v4069 = vsel %vm337, %v4043, -inf
    %4070 = vmax.xlane.f32.xlu0 %v4069
    %v4071 = vpop.xlane.xlu0 %4070
    %v4072 = vsel %vm337, %v4048, -inf
    %4073 = vmax.xlane.f32.xlu0 %v4072
    %v4074 = vpop.xlane.xlu0 %4073
    %v4075 = vmax.f32 %v4053, %v4065
    %v4076 = vmax.f32 %v4056, %v4068
    %v4077 = vmax.f32 %v4059, %v4071
    %v4078 = vmax.f32 %v4062, %v4074
    %v4079 = vmax.f32 %v4075, %v4076
    %v4080 = vmax.f32 %v4077, %v4078
    %v4081 = vmax.f32 %v4079, %v4080
    %v4082 = vrot.slane %v4081, 4
    %v4083 = vmax.f32 %v4081, %v4082
    %v4084 = vrot.slane %v4083, 2
    %v4085 = vmax.f32 %v4083, %v4084
    %v4086 = vrot.slane %v4085, 1
    %v4087 = vmax.f32 %v4085, %v4086
    %v4088 = vsub.f32 %v4013, %v4087
    %v4089 = vsub.f32 %v4018, %v4087
    %v4090 = vsub.f32 %v4023, %v4087
    %v4091 = vsub.f32 %v4028, %v4087
    %v4092 = vsub.f32 %v4033, %v4087
    %v4093 = vsub.f32 %v4038, %v4087
    %v4094 = vsub.f32 %v4043, %v4087
    %v4095 = vsub.f32 %v4048, %v4087
    %v4096 = vmul.f32 %v4088, 1.442695
    %v4097 = vpow.pop %v4096
    %v4098 = vmul.f32 %v4089, 1.442695
    %v4099 = vpow.pop %v4098
    %v4100 = vmul.f32 %v4090, 1.442695
    %v4101 = vpow.pop %v4100
    %v4102 = vmul.f32 %v4091, 1.442695
    %v4103 = vpow.pop %v4102
    %v4104 = vmul.f32 %v4092, 1.442695
    %v4105 = vpow.pop %v4104
    %v4106 = vmul.f32 %v4093, 1.442695
    %v4107 = vpow.pop %v4106
    %v4108 = vmul.f32 %v4094, 1.442695
    %v4109 = vpow.pop %v4108
    %v4110 = vmul.f32 %v4095, 1.442695
    %v4111 = vpow.pop %v4110
    %v4112 = vsel %vm337, %v4097, 0.0
    %v4113 = vsel %vm337, %v4099, 0.0
    %v4114 = vadd.f32 %v4112, %v4113
    %v4115 = vsel %vm337, %v4101, 0.0
    %v4116 = vadd.f32 %v4114, %v4115
    %v4117 = vsel %vm337, %v4103, 0.0
    %v4118 = vadd.f32 %v4116, %v4117
    %v4119 = vsel %vm337, %v4105, 0.0
    %v4120 = vadd.f32 %v4118, %v4119
    %v4121 = vsel %vm337, %v4107, 0.0
    %v4122 = vadd.f32 %v4120, %v4121
    %v4123 = vsel %vm337, %v4109, 0.0
    %v4124 = vadd.f32 %v4122, %v4123
    %v4125 = vsel %vm337, %v4111, 0.0
    %v4126 = vadd.f32 %v4124, %v4125
    %v4127 = vrot.slane %v4126, 4
    %v4128 = vadd.f32 %v4126, %v4127
    %v4129 = vrot.slane %v4128, 2
    %v4130 = vadd.f32 %v4128, %v4129
    %v4131 = vrot.slane %v4130, 1
    %v4132 = vadd.f32 %v4130, %v4131
    %v4133 = vrcp.pop %v4132
    %v4134 = vmul.f32 %v4097, %v4133
    %v4135 = vmul.f32 %v4099, %v4133
    %v4136 = vmul.f32 %v4101, %v4133
    %v4137 = vmul.f32 %v4103, %v4133
    %v4138 = vmul.f32 %v4105, %v4133
    %v4139 = vmul.f32 %v4107, %v4133
    %v4140 = vmul.f32 %v4109, %v4133
    %v4141 = vmul.f32 %v4111, %v4133
    %v4142 = vsel %vm337, %v4134, 0.0
    %4143 = vadd.xlane.f32.xlu0 %v4142
    %v4144 = vpop.xlane.xlu0 %4143
    %v4145 = vsel %vm337, %v4135, 0.0
    %4146 = vadd.xlane.f32.xlu0 %v4145
    %v4147 = vpop.xlane.xlu0 %4146
    %v4148 = vsel %vm337, %v4136, 0.0
    %4149 = vadd.xlane.f32.xlu0 %v4148
    %v4150 = vpop.xlane.xlu0 %4149
    %v4151 = vsel %vm337, %v4137, 0.0
    %4152 = vadd.xlane.f32.xlu0 %v4151
    %v4153 = vpop.xlane.xlu0 %4152
    %v4154 = vsel %vm337, %v4138, 0.0
    %4155 = vadd.xlane.f32.xlu0 %v4154
    %v4156 = vpop.xlane.xlu0 %4155
    %v4157 = vsel %vm337, %v4139, 0.0
    %4158 = vadd.xlane.f32.xlu0 %v4157
    %v4159 = vpop.xlane.xlu0 %4158
    %v4160 = vsel %vm337, %v4140, 0.0
    %4161 = vadd.xlane.f32.xlu0 %v4160
    %v4162 = vpop.xlane.xlu0 %4161
    %v4163 = vsel %vm337, %v4141, 0.0
    %4164 = vadd.xlane.f32.xlu0 %v4163
    %v4165 = vpop.xlane.xlu0 %4164
    %v4166 = vadd.f32 %v4144, 1e-09
    %v4167 = vadd.f32 %v4147, 1e-09
    %v4168 = vadd.f32 %v4150, 1e-09
    %v4169 = vadd.f32 %v4153, 1e-09
    %v4170 = vadd.f32 %v4156, 1e-09
    %v4171 = vadd.f32 %v4159, 1e-09
    %v4172 = vadd.f32 %v4162, 1e-09
    %v4173 = vadd.f32 %v4165, 1e-09
    %v4174 = vrcp.pop %v4166
    %v4175 = vrcp.pop %v4167
    %v4176 = vrcp.pop %v4168
    %v4177 = vrcp.pop %v4169
    %v4178 = vrcp.pop %v4170
    %v4179 = vrcp.pop %v4171
    %v4180 = vrcp.pop %v4172
    %v4181 = vrcp.pop %v4173
    %v4182 = vmul.f32 %v4134, %v4174
    %v4183 = vmul.f32 %v4135, %v4175
    %v4184 = vmul.f32 %v4136, %v4176
    %v4185 = vmul.f32 %v4137, %v4177
    %v4186 = vmul.f32 %v4138, %v4178
    %v4187 = vmul.f32 %v4139, %v4179
    %v4188 = vmul.f32 %v4140, %v4180
    %v4189 = vmul.f32 %v4141, %v4181
    %v4191 = vsel %vm337, %v4182, 0
    %v4194 = vsel %vm337, %v4183, 0
    %v4197 = vsel %vm337, %v4184, 0
    %v4200 = vsel %vm337, %v4185, 0
    %v4203 = vsel %vm337, %v4186, 0
    %v4206 = vsel %vm337, %v4187, 0
    %v4209 = vsel %vm337, %v4188, 0
    %v4212 = vsel %vm337, %v4189, 0
    %4214 = vmatprep.subr.mxu0 0.0
    %4215 = vmatpush1.msra.mxu0 0.0
    %4216 = vmatprep.subr.mxu0 0.0
    %4217 = vmatpush1.msra.mxu0 0.0
    %4218 = vmatprep.subr.mxu0 0.0
    %4219 = vmatpush1.msra.mxu0 0.0
    %4220 = vmatprep.subr.mxu0 0.0
    %4221 = vmatpush1.msra.mxu0 0.0
    %4222 = vmatprep.subr.mxu0 0.0
    %4223 = vmatpush1.msra.mxu0 0.0
    %4224 = vmatprep.subr.mxu0 0.0
    %4225 = vmatpush1.msra.mxu0 0.0
    %4226 = vmatprep.subr.mxu0 0.0
    %4227 = vmatpush1.msra.mxu0 0.0
    %4228 = vmatprep.subr.mxu0 0.0
    %4229 = vmatpush1.msra.mxu0 0.0
    %4230 = vmatprep.subr.mxu0 0.0
    %4231 = vmatpush1.msra.mxu0 %v3863
    %4232 = vmatprep.subr.mxu0 0.0
    %4233 = vmatpush1.msra.mxu0 %v3858
    %4234 = vmatprep.subr.mxu0 0.0
    %4235 = vmatpush1.msra.mxu0 %v3853
    %4236 = vmatprep.subr.mxu0 0.0
    %4237 = vmatpush1.msra.mxu0 %v3848
    %4238 = vmatprep.subr.mxu0 0.0
    %4239 = vmatpush1.msra.mxu0 %v3843
    %4240 = vmatprep.subr.mxu0 0.0
    %4241 = vmatpush1.msra.mxu0 %v3838
    %4242 = vmatprep.subr.mxu0 0.0
    %4243 = vmatpush1.msra.mxu0 %v3833
    %4244 = vmatprep.subr.mxu0 0.0
    %4245 = vmatpush1.msra.mxu0 %v3828
    %4246 = vmatprep.subr.mxu0 0.0
    %4247 = vmatpush2.msra.mxu0 0.0
    %4248 = vmatprep.subr.mxu0 0.0
    %4249 = vmatpush2.msra.mxu0 0.0
    %4250 = vmatprep.subr.mxu0 0.0
    %4251 = vmatpush2.msra.mxu0 0.0
    %4252 = vmatprep.subr.mxu0 0.0
    %4253 = vmatpush2.msra.mxu0 0.0
    %4254 = vmatprep.subr.mxu0 0.0
    %4255 = vmatpush2.msra.mxu0 0.0
    %4256 = vmatprep.subr.mxu0 0.0
    %4257 = vmatpush2.msra.mxu0 0.0
    %4258 = vmatprep.subr.mxu0 0.0
    %4259 = vmatpush2.msra.mxu0 0.0
    %4260 = vmatprep.subr.mxu0 0.0
    %4261 = vmatpush2.msra.mxu0 0.0
    %4262 = vmatprep.subr.mxu0 0.0
    %4263 = vmatpush2.msra.mxu0 0.0
    %4264 = vmatprep.subr.mxu0 0.0
    %4265 = vmatpush2.msra.mxu0 0.0
    %4266 = vmatprep.subr.mxu0 0.0
    %4267 = vmatpush2.msra.mxu0 0.0
    %4268 = vmatprep.subr.mxu0 0.0
    %4269 = vmatpush2.msra.mxu0 0.0
    %4270 = vmatprep.subr.mxu0 0.0
    %4271 = vmatpush2.msra.mxu0 0.0
    %4272 = vmatprep.subr.mxu0 0.0
    %4273 = vmatpush2.msra.mxu0 0.0
    %4274 = vmatprep.subr.mxu0 0.0
    %4275 = vmatpush2.msra.mxu0 0.0
    %4276 = vmatprep.subr.mxu0 0.0
    %4277 = vmatpush2.msra.mxu0 0.0
    %4278 = vmatprep.mubr.f32.mxu0 0.0
    %4279 = vmatmul.mubr.f32.gmra.mxu0 %v4191
    %v4280 = vpop.f32.mrf.mxu0
    %v4281 = vadd.f32 0.0, %v4280
    %v4282 = vpop.f32.mrf.mxu0
    %4283 = vmatprep.mubr.f32.mxu0 0.0
    %4284 = vmatmul.mubr.f32.gmra.mxu0 %v4194
    %v4285 = vpop.f32.mrf.mxu0
    %v4286 = vadd.f32 0.0, %v4285
    %v4287 = vpop.f32.mrf.mxu0
    %4288 = vmatprep.mubr.f32.mxu0 0.0
    %4289 = vmatmul.mubr.f32.gmra.mxu0 %v4197
    %v4290 = vpop.f32.mrf.mxu0
    %v4291 = vadd.f32 0.0, %v4290
    %v4292 = vpop.f32.mrf.mxu0
    %4293 = vmatprep.mubr.f32.mxu0 0.0
    %4294 = vmatmul.mubr.f32.gmra.mxu0 %v4200
    %v4295 = vpop.f32.mrf.mxu0
    %v4296 = vadd.f32 0.0, %v4295
    %v4297 = vpop.f32.mrf.mxu0
    %4298 = vmatprep.mubr.f32.mxu0 0.0
    %4299 = vmatmul.mubr.f32.gmra.mxu0 %v4203
    %v4300 = vpop.f32.mrf.mxu0
    %v4301 = vadd.f32 0.0, %v4300
    %v4302 = vpop.f32.mrf.mxu0
    %4303 = vmatprep.mubr.f32.mxu0 0.0
    %4304 = vmatmul.mubr.f32.gmra.mxu0 %v4206
    %v4305 = vpop.f32.mrf.mxu0
    %v4306 = vadd.f32 0.0, %v4305
    %v4307 = vpop.f32.mrf.mxu0
    %4308 = vmatprep.mubr.f32.mxu0 0.0
    %4309 = vmatmul.mubr.f32.gmra.mxu0 %v4209
    %v4310 = vpop.f32.mrf.mxu0
    %v4311 = vadd.f32 0.0, %v4310
    %v4312 = vpop.f32.mrf.mxu0
    %4313 = vmatprep.mubr.f32.mxu0 0.0
    %4314 = vmatmul.mubr.f32.gmra.mxu0 %v4212
    %v4315 = vpop.f32.mrf.mxu0
    %v4316 = vadd.f32 0.0, %v4315
    %v4317 = vpop.f32.mrf.mxu0
    %4318 = vdwg.mxu0
    %v4319 = vsub.f32 %v3470, %v4281
    %v4320 = vsub.f32 %v3471, %v4286
    %v4321 = vsub.f32 %v3472, %v4291
    %v4322 = vsub.f32 %v3473, %v4296
    %v4323 = vsub.f32 %v3474, %v4301
    %v4324 = vsub.f32 %v3475, %v4306
    %v4325 = vsub.f32 %v3476, %v4311
    %v4326 = vsub.f32 %v3477, %v4316
    %4335 = vrot.lane.b32.xlu0 %v3868, 64
    %v4336 = vpop.permute.xlu0 %4335
    %4337 = vrot.lane.b32.xlu0 %v3873, 64
    %v4338 = vpop.permute.xlu0 %4337
    %4339 = vrot.lane.b32.xlu0 %v3878, 64
    %v4340 = vpop.permute.xlu0 %4339
    %4341 = vrot.lane.b32.xlu0 %v3883, 64
    %v4342 = vpop.permute.xlu0 %4341
    %4343 = vrot.lane.b32.xlu0 %v3888, 64
    %v4344 = vpop.permute.xlu0 %4343
    %4345 = vrot.lane.b32.xlu0 %v3893, 64
    %v4346 = vpop.permute.xlu0 %4345
    %4347 = vrot.lane.b32.xlu0 %v3898, 64
    %v4348 = vpop.permute.xlu0 %4347
    %4349 = vrot.lane.b32.xlu0 %v3903, 64
    %v4350 = vpop.permute.xlu0 %4349
    %v4351 = vsel %vm337, %v4336, 0
    %v4353 = vsel %vm337, %v4338, 0
    %v4355 = vsel %vm337, %v4340, 0
    %v4357 = vsel %vm337, %v4342, 0
    %v4359 = vsel %vm337, %v4344, 0
    %v4361 = vsel %vm337, %v4346, 0
    %v4363 = vsel %vm337, %v4348, 0
    %v4365 = vsel %vm337, %v4350, 0
    %4367 = vmatprep.subr.mxu0 0.0
    %4368 = vmatpush1.xpose.msra.mxu0 0.0
    %4369 = vmatprep.subr.mxu0 0.0
    %4370 = vmatpush1.xpose.msra.mxu0 0.0
    %4371 = vmatprep.subr.mxu0 0.0
    %4372 = vmatpush1.xpose.msra.mxu0 0.0
    %4373 = vmatprep.subr.mxu0 0.0
    %4374 = vmatpush1.xpose.msra.mxu0 0.0
    %4375 = vmatprep.subr.mxu0 0.0
    %4376 = vmatpush1.xpose.msra.mxu0 0.0
    %4377 = vmatprep.subr.mxu0 0.0
    %4378 = vmatpush1.xpose.msra.mxu0 0.0
    %4379 = vmatprep.subr.mxu0 0.0
    %4380 = vmatpush1.xpose.msra.mxu0 0.0
    %4381 = vmatprep.subr.mxu0 0.0
    %4382 = vmatpush1.xpose.msra.mxu0 0.0
    %4383 = vmatprep.subr.mxu0 0.0
    %4384 = vmatpush1.xpose.msra.mxu0 %v4365
    %4385 = vmatprep.subr.mxu0 0.0
    %4386 = vmatpush1.xpose.msra.mxu0 %v4363
    %4387 = vmatprep.subr.mxu0 0.0
    %4388 = vmatpush1.xpose.msra.mxu0 %v4361
    %4389 = vmatprep.subr.mxu0 0.0
    %4390 = vmatpush1.xpose.msra.mxu0 %v4359
    %4391 = vmatprep.subr.mxu0 0.0
    %4392 = vmatpush1.xpose.msra.mxu0 %v4357
    %4393 = vmatprep.subr.mxu0 0.0
    %4394 = vmatpush1.xpose.msra.mxu0 %v4355
    %4395 = vmatprep.subr.mxu0 0.0
    %4396 = vmatpush1.xpose.msra.mxu0 %v4353
    %4397 = vmatprep.subr.mxu0 0.0
    %4398 = vmatpush1.xpose.msra.mxu0 %v4351
    %4399 = vmatprep.subr.mxu0 0.0
    %4400 = vmatpush2.xpose.msra.mxu0 0.0
    %4401 = vmatprep.subr.mxu0 0.0
    %4402 = vmatpush2.xpose.msra.mxu0 0.0
    %4403 = vmatprep.subr.mxu0 0.0
    %4404 = vmatpush2.xpose.msra.mxu0 0.0
    %4405 = vmatprep.subr.mxu0 0.0
    %4406 = vmatpush2.xpose.msra.mxu0 0.0
    %4407 = vmatprep.subr.mxu0 0.0
    %4408 = vmatpush2.xpose.msra.mxu0 0.0
    %4409 = vmatprep.subr.mxu0 0.0
    %4410 = vmatpush2.xpose.msra.mxu0 0.0
    %4411 = vmatprep.subr.mxu0 0.0
    %4412 = vmatpush2.xpose.msra.mxu0 0.0
    %4413 = vmatprep.subr.mxu0 0.0
    %4414 = vmatpush2.xpose.msra.mxu0 0.0
    %4415 = vmatprep.subr.mxu0 0.0
    %4416 = vmatpush2.xpose.msra.mxu0 0.0
    %4417 = vmatprep.subr.mxu0 0.0
    %4418 = vmatpush2.xpose.msra.mxu0 0.0
    %4419 = vmatprep.subr.mxu0 0.0
    %4420 = vmatpush2.xpose.msra.mxu0 0.0
    %4421 = vmatprep.subr.mxu0 0.0
    %4422 = vmatpush2.xpose.msra.mxu0 0.0
    %4423 = vmatprep.subr.mxu0 0.0
    %4424 = vmatpush2.xpose.msra.mxu0 0.0
    %4425 = vmatprep.subr.mxu0 0.0
    %4426 = vmatpush2.xpose.msra.mxu0 0.0
    %4427 = vmatprep.subr.mxu0 0.0
    %4428 = vmatpush2.xpose.msra.mxu0 0.0
    %4429 = vmatprep.subr.mxu0 0.0
    %4430 = vmatpush2.xpose.msra.mxu0 0.0
    %4431 = vmatprep.mubr.f32.mxu0 0.0
    %4432 = vmatmul.mubr.f32.gmra.mxu0 %v4351
    %v4433 = vpop.f32.mrf.mxu0
    %v4434 = vadd.f32 0.0, %v4433
    %v4435 = vpop.f32.mrf.mxu0
    %4436 = vmatprep.mubr.f32.mxu0 0.0
    %4437 = vmatmul.mubr.f32.gmra.mxu0 %v4353
    %v4438 = vpop.f32.mrf.mxu0
    %v4439 = vadd.f32 0.0, %v4438
    %v4440 = vpop.f32.mrf.mxu0
    %4441 = vmatprep.mubr.f32.mxu0 0.0
    %4442 = vmatmul.mubr.f32.gmra.mxu0 %v4355
    %v4443 = vpop.f32.mrf.mxu0
    %v4444 = vadd.f32 0.0, %v4443
    %v4445 = vpop.f32.mrf.mxu0
    %4446 = vmatprep.mubr.f32.mxu0 0.0
    %4447 = vmatmul.mubr.f32.gmra.mxu0 %v4357
    %v4448 = vpop.f32.mrf.mxu0
    %v4449 = vadd.f32 0.0, %v4448
    %v4450 = vpop.f32.mrf.mxu0
    %4451 = vmatprep.mubr.f32.mxu0 0.0
    %4452 = vmatmul.mubr.f32.gmra.mxu0 %v4359
    %v4453 = vpop.f32.mrf.mxu0
    %v4454 = vadd.f32 0.0, %v4453
    %v4455 = vpop.f32.mrf.mxu0
    %4456 = vmatprep.mubr.f32.mxu0 0.0
    %4457 = vmatmul.mubr.f32.gmra.mxu0 %v4361
    %v4458 = vpop.f32.mrf.mxu0
    %v4459 = vadd.f32 0.0, %v4458
    %v4460 = vpop.f32.mrf.mxu0
    %4461 = vmatprep.mubr.f32.mxu0 0.0
    %4462 = vmatmul.mubr.f32.gmra.mxu0 %v4363
    %v4463 = vpop.f32.mrf.mxu0
    %v4464 = vadd.f32 0.0, %v4463
    %v4465 = vpop.f32.mrf.mxu0
    %4466 = vmatprep.mubr.f32.mxu0 0.0
    %4467 = vmatmul.mubr.f32.gmra.mxu0 %v4365
    %v4468 = vpop.f32.mrf.mxu0
    %v4469 = vadd.f32 0.0, %v4468
    %v4470 = vpop.f32.mrf.mxu0
    %4471 = vdwg.mxu0
    %v4472 = vsel %vm337, %v4434, -inf
    %4473 = vmax.xlane.f32.xlu0 %v4472
    %v4474 = vpop.xlane.xlu0 %4473
    %v4475 = vsel %vm337, %v4439, -inf
    %4476 = vmax.xlane.f32.xlu0 %v4475
    %v4477 = vpop.xlane.xlu0 %4476
    %v4478 = vsel %vm337, %v4444, -inf
    %4479 = vmax.xlane.f32.xlu0 %v4478
    %v4480 = vpop.xlane.xlu0 %4479
    %v4481 = vsel %vm337, %v4449, -inf
    %4482 = vmax.xlane.f32.xlu0 %v4481
    %v4483 = vpop.xlane.xlu0 %4482
    %v4484 = vsel %vm337, %v4454, -inf
    %4485 = vmax.xlane.f32.xlu0 %v4484
    %v4486 = vpop.xlane.xlu0 %4485
    %v4487 = vsel %vm337, %v4459, -inf
    %4488 = vmax.xlane.f32.xlu0 %v4487
    %v4489 = vpop.xlane.xlu0 %4488
    %v4490 = vsel %vm337, %v4464, -inf
    %4491 = vmax.xlane.f32.xlu0 %v4490
    %v4492 = vpop.xlane.xlu0 %4491
    %v4493 = vsel %vm337, %v4469, -inf
    %4494 = vmax.xlane.f32.xlu0 %v4493
    %v4495 = vpop.xlane.xlu0 %4494
    %v4496 = vmax.f32 %v4474, %v4486
    %v4497 = vmax.f32 %v4477, %v4489
    %v4498 = vmax.f32 %v4480, %v4492
    %v4499 = vmax.f32 %v4483, %v4495
    %v4500 = vmax.f32 %v4496, %v4497
    %v4501 = vmax.f32 %v4498, %v4499
    %v4502 = vmax.f32 %v4500, %v4501
    %v4503 = vrot.slane %v4502, 4
    %v4504 = vmax.f32 %v4502, %v4503
    %v4505 = vrot.slane %v4504, 2
    %v4506 = vmax.f32 %v4504, %v4505
    %v4507 = vrot.slane %v4506, 1
    %v4508 = vmax.f32 %v4506, %v4507
    %v4509 = vsub.f32 %v4434, %v4508
    %v4510 = vsub.f32 %v4439, %v4508
    %v4511 = vsub.f32 %v4444, %v4508
    %v4512 = vsub.f32 %v4449, %v4508
    %v4513 = vsub.f32 %v4454, %v4508
    %v4514 = vsub.f32 %v4459, %v4508
    %v4515 = vsub.f32 %v4464, %v4508
    %v4516 = vsub.f32 %v4469, %v4508
    %v4517 = vmul.f32 %v4509, 1.442695
    %v4518 = vpow.pop %v4517
    %v4519 = vmul.f32 %v4510, 1.442695
    %v4520 = vpow.pop %v4519
    %v4521 = vmul.f32 %v4511, 1.442695
    %v4522 = vpow.pop %v4521
    %v4523 = vmul.f32 %v4512, 1.442695
    %v4524 = vpow.pop %v4523
    %v4525 = vmul.f32 %v4513, 1.442695
    %v4526 = vpow.pop %v4525
    %v4527 = vmul.f32 %v4514, 1.442695
    %v4528 = vpow.pop %v4527
    %v4529 = vmul.f32 %v4515, 1.442695
    %v4530 = vpow.pop %v4529
    %v4531 = vmul.f32 %v4516, 1.442695
    %v4532 = vpow.pop %v4531
    %v4533 = vsel %vm337, %v4518, 0.0
    %v4534 = vsel %vm337, %v4520, 0.0
    %v4535 = vadd.f32 %v4533, %v4534
    %v4536 = vsel %vm337, %v4522, 0.0
    %v4537 = vadd.f32 %v4535, %v4536
    %v4538 = vsel %vm337, %v4524, 0.0
    %v4539 = vadd.f32 %v4537, %v4538
    %v4540 = vsel %vm337, %v4526, 0.0
    %v4541 = vadd.f32 %v4539, %v4540
    %v4542 = vsel %vm337, %v4528, 0.0
    %v4543 = vadd.f32 %v4541, %v4542
    %v4544 = vsel %vm337, %v4530, 0.0
    %v4545 = vadd.f32 %v4543, %v4544
    %v4546 = vsel %vm337, %v4532, 0.0
    %v4547 = vadd.f32 %v4545, %v4546
    %v4548 = vrot.slane %v4547, 4
    %v4549 = vadd.f32 %v4547, %v4548
    %v4550 = vrot.slane %v4549, 2
    %v4551 = vadd.f32 %v4549, %v4550
    %v4552 = vrot.slane %v4551, 1
    %v4553 = vadd.f32 %v4551, %v4552
    %v4554 = vrcp.pop %v4553
    %v4555 = vmul.f32 %v4518, %v4554
    %v4556 = vmul.f32 %v4520, %v4554
    %v4557 = vmul.f32 %v4522, %v4554
    %v4558 = vmul.f32 %v4524, %v4554
    %v4559 = vmul.f32 %v4526, %v4554
    %v4560 = vmul.f32 %v4528, %v4554
    %v4561 = vmul.f32 %v4530, %v4554
    %v4562 = vmul.f32 %v4532, %v4554
    %v4563 = vsel %vm337, %v4555, 0.0
    %4564 = vadd.xlane.f32.xlu0 %v4563
    %v4565 = vpop.xlane.xlu0 %4564
    %v4566 = vsel %vm337, %v4556, 0.0
    %4567 = vadd.xlane.f32.xlu0 %v4566
    %v4568 = vpop.xlane.xlu0 %4567
    %v4569 = vsel %vm337, %v4557, 0.0
    %4570 = vadd.xlane.f32.xlu0 %v4569
    %v4571 = vpop.xlane.xlu0 %4570
    %v4572 = vsel %vm337, %v4558, 0.0
    %4573 = vadd.xlane.f32.xlu0 %v4572
    %v4574 = vpop.xlane.xlu0 %4573
    %v4575 = vsel %vm337, %v4559, 0.0
    %4576 = vadd.xlane.f32.xlu0 %v4575
    %v4577 = vpop.xlane.xlu0 %4576
    %v4578 = vsel %vm337, %v4560, 0.0
    %4579 = vadd.xlane.f32.xlu0 %v4578
    %v4580 = vpop.xlane.xlu0 %4579
    %v4581 = vsel %vm337, %v4561, 0.0
    %4582 = vadd.xlane.f32.xlu0 %v4581
    %v4583 = vpop.xlane.xlu0 %4582
    %v4584 = vsel %vm337, %v4562, 0.0
    %4585 = vadd.xlane.f32.xlu0 %v4584
    %v4586 = vpop.xlane.xlu0 %4585
    %v4587 = vadd.f32 %v4565, 1e-09
    %v4588 = vadd.f32 %v4568, 1e-09
    %v4589 = vadd.f32 %v4571, 1e-09
    %v4590 = vadd.f32 %v4574, 1e-09
    %v4591 = vadd.f32 %v4577, 1e-09
    %v4592 = vadd.f32 %v4580, 1e-09
    %v4593 = vadd.f32 %v4583, 1e-09
    %v4594 = vadd.f32 %v4586, 1e-09
    %v4595 = vrcp.pop %v4587
    %v4596 = vrcp.pop %v4588
    %v4597 = vrcp.pop %v4589
    %v4598 = vrcp.pop %v4590
    %v4599 = vrcp.pop %v4591
    %v4600 = vrcp.pop %v4592
    %v4601 = vrcp.pop %v4593
    %v4602 = vrcp.pop %v4594
    %v4603 = vmul.f32 %v4555, %v4595
    %v4604 = vmul.f32 %v4556, %v4596
    %v4605 = vmul.f32 %v4557, %v4597
    %v4606 = vmul.f32 %v4558, %v4598
    %v4607 = vmul.f32 %v4559, %v4599
    %v4608 = vmul.f32 %v4560, %v4600
    %v4609 = vmul.f32 %v4561, %v4601
    %v4610 = vmul.f32 %v4562, %v4602
    %v4612 = vsel %vm337, %v4603, 0
    %v4615 = vsel %vm337, %v4604, 0
    %v4618 = vsel %vm337, %v4605, 0
    %v4621 = vsel %vm337, %v4606, 0
    %v4624 = vsel %vm337, %v4607, 0
    %v4627 = vsel %vm337, %v4608, 0
    %v4630 = vsel %vm337, %v4609, 0
    %v4633 = vsel %vm337, %v4610, 0
    %4635 = vmatprep.subr.mxu0 0.0
    %4636 = vmatpush1.msra.mxu0 0.0
    %4637 = vmatprep.subr.mxu0 0.0
    %4638 = vmatpush1.msra.mxu0 0.0
    %4639 = vmatprep.subr.mxu0 0.0
    %4640 = vmatpush1.msra.mxu0 0.0
    %4641 = vmatprep.subr.mxu0 0.0
    %4642 = vmatpush1.msra.mxu0 0.0
    %4643 = vmatprep.subr.mxu0 0.0
    %4644 = vmatpush1.msra.mxu0 0.0
    %4645 = vmatprep.subr.mxu0 0.0
    %4646 = vmatpush1.msra.mxu0 0.0
    %4647 = vmatprep.subr.mxu0 0.0
    %4648 = vmatpush1.msra.mxu0 0.0
    %4649 = vmatprep.subr.mxu0 0.0
    %4650 = vmatpush1.msra.mxu0 0.0
    %4651 = vmatprep.subr.mxu0 0.0
    %4652 = vmatpush1.msra.mxu0 %v3903
    %4653 = vmatprep.subr.mxu0 0.0
    %4654 = vmatpush1.msra.mxu0 %v3898
    %4655 = vmatprep.subr.mxu0 0.0
    %4656 = vmatpush1.msra.mxu0 %v3893
    %4657 = vmatprep.subr.mxu0 0.0
    %4658 = vmatpush1.msra.mxu0 %v3888
    %4659 = vmatprep.subr.mxu0 0.0
    %4660 = vmatpush1.msra.mxu0 %v3883
    %4661 = vmatprep.subr.mxu0 0.0
    %4662 = vmatpush1.msra.mxu0 %v3878
    %4663 = vmatprep.subr.mxu0 0.0
    %4664 = vmatpush1.msra.mxu0 %v3873
    %4665 = vmatprep.subr.mxu0 0.0
    %4666 = vmatpush1.msra.mxu0 %v3868
    %4667 = vmatprep.subr.mxu0 0.0
    %4668 = vmatpush2.msra.mxu0 0.0
    %4669 = vmatprep.subr.mxu0 0.0
    %4670 = vmatpush2.msra.mxu0 0.0
    %4671 = vmatprep.subr.mxu0 0.0
    %4672 = vmatpush2.msra.mxu0 0.0
    %4673 = vmatprep.subr.mxu0 0.0
    %4674 = vmatpush2.msra.mxu0 0.0
    %4675 = vmatprep.subr.mxu0 0.0
    %4676 = vmatpush2.msra.mxu0 0.0
    %4677 = vmatprep.subr.mxu0 0.0
    %4678 = vmatpush2.msra.mxu0 0.0
    %4679 = vmatprep.subr.mxu0 0.0
    %4680 = vmatpush2.msra.mxu0 0.0
    %4681 = vmatprep.subr.mxu0 0.0
    %4682 = vmatpush2.msra.mxu0 0.0
    %4683 = vmatprep.subr.mxu0 0.0
    %4684 = vmatpush2.msra.mxu0 0.0
    %4685 = vmatprep.subr.mxu0 0.0
    %4686 = vmatpush2.msra.mxu0 0.0
    %4687 = vmatprep.subr.mxu0 0.0
    %4688 = vmatpush2.msra.mxu0 0.0
    %4689 = vmatprep.subr.mxu0 0.0
    %4690 = vmatpush2.msra.mxu0 0.0
    %4691 = vmatprep.subr.mxu0 0.0
    %4692 = vmatpush2.msra.mxu0 0.0
    %4693 = vmatprep.subr.mxu0 0.0
    %4694 = vmatpush2.msra.mxu0 0.0
    %4695 = vmatprep.subr.mxu0 0.0
    %4696 = vmatpush2.msra.mxu0 0.0
    %4697 = vmatprep.subr.mxu0 0.0
    %4698 = vmatpush2.msra.mxu0 0.0
    %4699 = vmatprep.mubr.f32.mxu0 0.0
    %4700 = vmatmul.mubr.f32.gmra.mxu0 %v4612
    %v4701 = vpop.f32.mrf.mxu0
    %v4702 = vadd.f32 0.0, %v4701
    %v4703 = vpop.f32.mrf.mxu0
    %4704 = vmatprep.mubr.f32.mxu0 0.0
    %4705 = vmatmul.mubr.f32.gmra.mxu0 %v4615
    %v4706 = vpop.f32.mrf.mxu0
    %v4707 = vadd.f32 0.0, %v4706
    %v4708 = vpop.f32.mrf.mxu0
    %4709 = vmatprep.mubr.f32.mxu0 0.0
    %4710 = vmatmul.mubr.f32.gmra.mxu0 %v4618
    %v4711 = vpop.f32.mrf.mxu0
    %v4712 = vadd.f32 0.0, %v4711
    %v4713 = vpop.f32.mrf.mxu0
    %4714 = vmatprep.mubr.f32.mxu0 0.0
    %4715 = vmatmul.mubr.f32.gmra.mxu0 %v4621
    %v4716 = vpop.f32.mrf.mxu0
    %v4717 = vadd.f32 0.0, %v4716
    %v4718 = vpop.f32.mrf.mxu0
    %4719 = vmatprep.mubr.f32.mxu0 0.0
    %4720 = vmatmul.mubr.f32.gmra.mxu0 %v4624
    %v4721 = vpop.f32.mrf.mxu0
    %v4722 = vadd.f32 0.0, %v4721
    %v4723 = vpop.f32.mrf.mxu0
    %4724 = vmatprep.mubr.f32.mxu0 0.0
    %4725 = vmatmul.mubr.f32.gmra.mxu0 %v4627
    %v4726 = vpop.f32.mrf.mxu0
    %v4727 = vadd.f32 0.0, %v4726
    %v4728 = vpop.f32.mrf.mxu0
    %4729 = vmatprep.mubr.f32.mxu0 0.0
    %4730 = vmatmul.mubr.f32.gmra.mxu0 %v4630
    %v4731 = vpop.f32.mrf.mxu0
    %v4732 = vadd.f32 0.0, %v4731
    %v4733 = vpop.f32.mrf.mxu0
    %4734 = vmatprep.mubr.f32.mxu0 0.0
    %4735 = vmatmul.mubr.f32.gmra.mxu0 %v4633
    %v4736 = vpop.f32.mrf.mxu0
    %v4737 = vadd.f32 0.0, %v4736
    %v4738 = vpop.f32.mrf.mxu0
    %4739 = vdwg.mxu0
    %v4740 = vsub.f32 %v3478, %v4702
    %v4741 = vsub.f32 %v3479, %v4707
    %v4742 = vsub.f32 %v3480, %v4712
    %v4743 = vsub.f32 %v3481, %v4717
    %v4744 = vsub.f32 %v3482, %v4722
    %v4745 = vsub.f32 %v3483, %v4727
    %v4746 = vsub.f32 %v3484, %v4732
    %v4747 = vsub.f32 %v3485, %v4737
    %s4748 = scalar_lea.vmem [#allocation5], 128
    %v4749 = vld [vmem:[%s4748] sm:$0xff]
    %v4750 = vld [vmem:[%s4748 + $0x8] sm:$0xff]
    %v4751 = vld [vmem:[%s4748 + $0x10] sm:$0xff]
    %v4752 = vld [vmem:[%s4748 + $0x18] sm:$0xff]
    %v4753 = vld [vmem:[%s4748 + $0x20] sm:$0xff]
    %v4754 = vld [vmem:[%s4748 + $0x28] sm:$0xff]
    %v4755 = vld [vmem:[%s4748 + $0x30] sm:$0xff]
    %v4756 = vld [vmem:[%s4748 + $0x38] sm:$0xff]
    %s4757 = scalar_lea.vmem %s8, 2
    %v4758 = vld [vmem:[%s4757] sm:$0x1]
    %v4760 = vlaneseq
    %v4761 = vshrl.u32 %v4760, 7
    %v4762 = vsub.s32 0, %v4761
    %v4763 = vrot.slane %v4758, %v4762
    %v4766 = vsel %vm337, %v4319, 0
    %v4769 = vsel %vm337, %v4320, 0
    %v4772 = vsel %vm337, %v4321, 0
    %v4775 = vsel %vm337, %v4322, 0
    %v4778 = vsel %vm337, %v4323, 0
    %v4781 = vsel %vm337, %v4324, 0
    %v4784 = vsel %vm337, %v4325, 0
    %v4787 = vsel %vm337, %v4326, 0
    %v4790 = vsel %vm337, %v4740, 0
    %v4793 = vsel %vm337, %v4741, 0
    %v4796 = vsel %vm337, %v4742, 0
    %v4799 = vsel %vm337, %v4743, 0
    %v4802 = vsel %vm337, %v4744, 0
    %v4805 = vsel %vm337, %v4745, 0
    %v4808 = vsel %vm337, %v4746, 0
    %v4811 = vsel %vm337, %v4747, 0
    %4813 = vmatprep.subr.mxu0 0.0
    %4814 = vmatpush1.msra.mxu0 0.0
    %4815 = vmatprep.subr.mxu0 0.0
    %4816 = vmatpush1.msra.mxu0 0.0
    %4817 = vmatprep.subr.mxu0 0.0
    %4818 = vmatpush1.msra.mxu0 0.0
    %4819 = vmatprep.subr.mxu0 0.0
    %4820 = vmatpush1.msra.mxu0 0.0
    %4821 = vmatprep.subr.mxu0 0.0
    %4822 = vmatpush1.msra.mxu0 0.0
    %4823 = vmatprep.subr.mxu0 0.0
    %4824 = vmatpush1.msra.mxu0 0.0
    %4825 = vmatprep.subr.mxu0 0.0
    %4826 = vmatpush1.msra.mxu0 0.0
    %4827 = vmatprep.subr.mxu0 0.0
    %4828 = vmatpush1.msra.mxu0 0.0
    %4829 = vmatprep.subr.mxu0 0.0
    %4830 = vmatpush1.msra.mxu0 %v4756
    %4831 = vmatprep.subr.mxu0 0.0
    %4832 = vmatpush1.msra.mxu0 %v4755
    %4833 = vmatprep.subr.mxu0 0.0
    %4834 = vmatpush1.msra.mxu0 %v4754
    %4835 = vmatprep.subr.mxu0 0.0
    %4836 = vmatpush1.msra.mxu0 %v4753
    %4837 = vmatprep.subr.mxu0 0.0
    %4838 = vmatpush1.msra.mxu0 %v4752
    %4839 = vmatprep.subr.mxu0 0.0
    %4840 = vmatpush1.msra.mxu0 %v4751
    %4841 = vmatprep.subr.mxu0 0.0
    %4842 = vmatpush1.msra.mxu0 %v4750
    %4843 = vmatprep.subr.mxu0 0.0
    %4844 = vmatpush1.msra.mxu0 %v4749
    %4845 = vmatprep.subr.mxu0 0.0
    %4846 = vmatpush2.msra.mxu0 0.0
    %4847 = vmatprep.subr.mxu0 0.0
    %4848 = vmatpush2.msra.mxu0 0.0
    %4849 = vmatprep.subr.mxu0 0.0
    %4850 = vmatpush2.msra.mxu0 0.0
    %4851 = vmatprep.subr.mxu0 0.0
    %4852 = vmatpush2.msra.mxu0 0.0
    %4853 = vmatprep.subr.mxu0 0.0
    %4854 = vmatpush2.msra.mxu0 0.0
    %4855 = vmatprep.subr.mxu0 0.0
    %4856 = vmatpush2.msra.mxu0 0.0
    %4857 = vmatprep.subr.mxu0 0.0
    %4858 = vmatpush2.msra.mxu0 0.0
    %4859 = vmatprep.subr.mxu0 0.0
    %4860 = vmatpush2.msra.mxu0 0.0
    %4861 = vmatprep.subr.mxu0 0.0
    %4862 = vmatpush2.msra.mxu0 0.0
    %4863 = vmatprep.subr.mxu0 0.0
    %4864 = vmatpush2.msra.mxu0 0.0
    %4865 = vmatprep.subr.mxu0 0.0
    %4866 = vmatpush2.msra.mxu0 0.0
    %4867 = vmatprep.subr.mxu0 0.0
    %4868 = vmatpush2.msra.mxu0 0.0
    %4869 = vmatprep.subr.mxu0 0.0
    %4870 = vmatpush2.msra.mxu0 0.0
    %4871 = vmatprep.subr.mxu0 0.0
    %4872 = vmatpush2.msra.mxu0 0.0
    %4873 = vmatprep.subr.mxu0 0.0
    %4874 = vmatpush2.msra.mxu0 0.0
    %4875 = vmatprep.subr.mxu0 0.0
    %4876 = vmatpush2.msra.mxu0 0.0
    %4877 = vmatprep.mubr.f32.mxu0 0.0
    %4878 = vmatmul.mubr.f32.gmra.mxu0 %v4766
    %v4879 = vpop.f32.mrf.mxu0
    %v4880 = vadd.f32 %v4763, %v4879
    %v4881 = vpop.f32.mrf.mxu0
    %4882 = vmatprep.mubr.f32.mxu0 0.0
    %4883 = vmatmul.mubr.f32.gmra.mxu0 %v4769
    %v4884 = vpop.f32.mrf.mxu0
    %v4885 = vadd.f32 %v4763, %v4884
    %v4886 = vpop.f32.mrf.mxu0
    %4887 = vmatprep.mubr.f32.mxu0 0.0
    %4888 = vmatmul.mubr.f32.gmra.mxu0 %v4772
    %v4889 = vpop.f32.mrf.mxu0
    %v4890 = vadd.f32 %v4763, %v4889
    %v4891 = vpop.f32.mrf.mxu0
    %4892 = vmatprep.mubr.f32.mxu0 0.0
    %4893 = vmatmul.mubr.f32.gmra.mxu0 %v4775
    %v4894 = vpop.f32.mrf.mxu0
    %v4895 = vadd.f32 %v4763, %v4894
    %v4896 = vpop.f32.mrf.mxu0
    %4897 = vmatprep.mubr.f32.mxu0 0.0
    %4898 = vmatmul.mubr.f32.gmra.mxu0 %v4778
    %v4899 = vpop.f32.mrf.mxu0
    %v4900 = vadd.f32 %v4763, %v4899
    %v4901 = vpop.f32.mrf.mxu0
    %4902 = vmatprep.mubr.f32.mxu0 0.0
    %4903 = vmatmul.mubr.f32.gmra.mxu0 %v4781
    %v4904 = vpop.f32.mrf.mxu0
    %v4905 = vadd.f32 %v4763, %v4904
    %v4906 = vpop.f32.mrf.mxu0
    %4907 = vmatprep.mubr.f32.mxu0 0.0
    %4908 = vmatmul.mubr.f32.gmra.mxu0 %v4784
    %v4909 = vpop.f32.mrf.mxu0
    %v4910 = vadd.f32 %v4763, %v4909
    %v4911 = vpop.f32.mrf.mxu0
    %4912 = vmatprep.mubr.f32.mxu0 0.0
    %4913 = vmatmul.mubr.f32.gmra.mxu0 %v4787
    %v4914 = vpop.f32.mrf.mxu0
    %v4915 = vadd.f32 %v4763, %v4914
    %v4916 = vpop.f32.mrf.mxu0
    %4917 = vmatprep.mubr.f32.mxu0 0.0
    %4918 = vmatmul.mubr.f32.gmra.mxu0 %v4790
    %v4919 = vpop.f32.mrf.mxu0
    %v4920 = vadd.f32 %v4763, %v4919
    %v4921 = vpop.f32.mrf.mxu0
    %4922 = vmatprep.mubr.f32.mxu0 0.0
    %4923 = vmatmul.mubr.f32.gmra.mxu0 %v4793
    %v4924 = vpop.f32.mrf.mxu0
    %v4925 = vadd.f32 %v4763, %v4924
    %v4926 = vpop.f32.mrf.mxu0
    %4927 = vmatprep.mubr.f32.mxu0 0.0
    %4928 = vmatmul.mubr.f32.gmra.mxu0 %v4796
    %v4929 = vpop.f32.mrf.mxu0
    %v4930 = vadd.f32 %v4763, %v4929
    %v4931 = vpop.f32.mrf.mxu0
    %4932 = vmatprep.mubr.f32.mxu0 0.0
    %4933 = vmatmul.mubr.f32.gmra.mxu0 %v4799
    %v4934 = vpop.f32.mrf.mxu0
    %v4935 = vadd.f32 %v4763, %v4934
    %v4936 = vpop.f32.mrf.mxu0
    %4937 = vmatprep.mubr.f32.mxu0 0.0
    %4938 = vmatmul.mubr.f32.gmra.mxu0 %v4802
    %v4939 = vpop.f32.mrf.mxu0
    %v4940 = vadd.f32 %v4763, %v4939
    %v4941 = vpop.f32.mrf.mxu0
    %4942 = vmatprep.mubr.f32.mxu0 0.0
    %4943 = vmatmul.mubr.f32.gmra.mxu0 %v4805
    %v4944 = vpop.f32.mrf.mxu0
    %v4945 = vadd.f32 %v4763, %v4944
    %v4946 = vpop.f32.mrf.mxu0
    %4947 = vmatprep.mubr.f32.mxu0 0.0
    %4948 = vmatmul.mubr.f32.gmra.mxu0 %v4808
    %v4949 = vpop.f32.mrf.mxu0
    %v4950 = vadd.f32 %v4763, %v4949
    %v4951 = vpop.f32.mrf.mxu0
    %4952 = vmatprep.mubr.f32.mxu0 0.0
    %4953 = vmatmul.mubr.f32.gmra.mxu0 %v4811
    %v4954 = vpop.f32.mrf.mxu0
    %v4955 = vadd.f32 %v4763, %v4954
    %v4956 = vpop.f32.mrf.mxu0
    %4957 = vdwg.mxu0
    %v4958 = vmax.f32 %v4880, 0.0
    %v4959 = vmax.f32 %v4885, 0.0
    %v4960 = vmax.f32 %v4890, 0.0
    %v4961 = vmax.f32 %v4895, 0.0
    %v4962 = vmax.f32 %v4900, 0.0
    %v4963 = vmax.f32 %v4905, 0.0
    %v4964 = vmax.f32 %v4910, 0.0
    %v4965 = vmax.f32 %v4915, 0.0
    %v4966 = vmax.f32 %v4920, 0.0
    %v4967 = vmax.f32 %v4925, 0.0
    %v4968 = vmax.f32 %v4930, 0.0
    %v4969 = vmax.f32 %v4935, 0.0
    %v4970 = vmax.f32 %v4940, 0.0
    %v4971 = vmax.f32 %v4945, 0.0
    %v4972 = vmax.f32 %v4950, 0.0
    %v4973 = vmax.f32 %v4955, 0.0
    %v4974 = vadd.f32 %v3470, %v4958
    %v4975 = vadd.f32 %v3471, %v4959
    %v4976 = vadd.f32 %v3472, %v4960
    %v4977 = vadd.f32 %v3473, %v4961
    %v4978 = vadd.f32 %v3474, %v4962
    %v4979 = vadd.f32 %v3475, %v4963
    %v4980 = vadd.f32 %v3476, %v4964
    %v4981 = vadd.f32 %v3477, %v4965
    %v4982 = vadd.f32 %v3478, %v4966
    %v4983 = vadd.f32 %v3479, %v4967
    %v4984 = vadd.f32 %v3480, %v4968
    %v4985 = vadd.f32 %v3481, %v4969
    %v4986 = vadd.f32 %v3482, %v4970
    %v4987 = vadd.f32 %v3483, %v4971
    %v4988 = vadd.f32 %v3484, %v4972
    %v4989 = vadd.f32 %v3485, %v4973
    %s4990 = scalar_lea.vmem [#allocation7], 384
    %v4991 = vld [vmem:[%s4990] sm:$0xff]
    %v4992 = vld [vmem:[%s4990 + $0x8] sm:$0xff]
    %v4993 = vld [vmem:[%s4990 + $0x10] sm:$0xff]
    %v4994 = vld [vmem:[%s4990 + $0x18] sm:$0xff]
    %v4995 = vld [vmem:[%s4990 + $0x20] sm:$0xff]
    %v4996 = vld [vmem:[%s4990 + $0x28] sm:$0xff]
    %v4997 = vld [vmem:[%s4990 + $0x30] sm:$0xff]
    %v4998 = vld [vmem:[%s4990 + $0x38] sm:$0xff]
    %v4999 = vld [vmem:[%s4990 + $0x40] sm:$0xff]
    %v5000 = vld [vmem:[%s4990 + $0x48] sm:$0xff]
    %v5001 = vld [vmem:[%s4990 + $0x50] sm:$0xff]
    %v5002 = vld [vmem:[%s4990 + $0x58] sm:$0xff]
    %v5003 = vld [vmem:[%s4990 + $0x60] sm:$0xff]
    %v5004 = vld [vmem:[%s4990 + $0x68] sm:$0xff]
    %v5005 = vld [vmem:[%s4990 + $0x70] sm:$0xff]
    %v5006 = vld [vmem:[%s4990 + $0x78] sm:$0xff]
    %v5008 = vsel %vm337, %v4974, 0
    %v5011 = vsel %vm337, %v4975, 0
    %v5014 = vsel %vm337, %v4976, 0
    %v5017 = vsel %vm337, %v4977, 0
    %v5020 = vsel %vm337, %v4978, 0
    %v5023 = vsel %vm337, %v4979, 0
    %v5026 = vsel %vm337, %v4980, 0
    %v5029 = vsel %vm337, %v4981, 0
    %v5032 = vsel %vm337, %v4982, 0
    %v5035 = vsel %vm337, %v4983, 0
    %v5038 = vsel %vm337, %v4984, 0
    %v5041 = vsel %vm337, %v4985, 0
    %v5044 = vsel %vm337, %v4986, 0
    %v5047 = vsel %vm337, %v4987, 0
    %v5050 = vsel %vm337, %v4988, 0
    %v5053 = vsel %vm337, %v4989, 0
    %5055 = vmatprep.subr.mxu0 0.0
    %5056 = vmatpush1.msra.mxu0 0.0
    %5057 = vmatprep.subr.mxu0 0.0
    %5058 = vmatpush1.msra.mxu0 0.0
    %5059 = vmatprep.subr.mxu0 0.0
    %5060 = vmatpush1.msra.mxu0 0.0
    %5061 = vmatprep.subr.mxu0 0.0
    %5062 = vmatpush1.msra.mxu0 0.0
    %5063 = vmatprep.subr.mxu0 0.0
    %5064 = vmatpush1.msra.mxu0 0.0
    %5065 = vmatprep.subr.mxu0 0.0
    %5066 = vmatpush1.msra.mxu0 0.0
    %5067 = vmatprep.subr.mxu0 0.0
    %5068 = vmatpush1.msra.mxu0 0.0
    %5069 = vmatprep.subr.mxu0 0.0
    %5070 = vmatpush1.msra.mxu0 0.0
    %5071 = vmatprep.subr.mxu0 %v5006
    %5072 = vmatpush1.msra.mxu0 %v5005
    %5073 = vmatprep.subr.mxu0 %v5004
    %5074 = vmatpush1.msra.mxu0 %v5003
    %5075 = vmatprep.subr.mxu0 %v5002
    %5076 = vmatpush1.msra.mxu0 %v5001
    %5077 = vmatprep.subr.mxu0 %v5000
    %5078 = vmatpush1.msra.mxu0 %v4999
    %5079 = vmatprep.subr.mxu0 %v4998
    %5080 = vmatpush1.msra.mxu0 %v4997
    %5081 = vmatprep.subr.mxu0 %v4996
    %5082 = vmatpush1.msra.mxu0 %v4995
    %5083 = vmatprep.subr.mxu0 %v4994
    %5084 = vmatpush1.msra.mxu0 %v4993
    %5085 = vmatprep.subr.mxu0 %v4992
    %5086 = vmatpush1.msra.mxu0 %v4991
    %5087 = vmatprep.subr.mxu0 0.0
    %5088 = vmatpush2.msra.mxu0 0.0
    %5089 = vmatprep.subr.mxu0 0.0
    %5090 = vmatpush2.msra.mxu0 0.0
    %5091 = vmatprep.subr.mxu0 0.0
    %5092 = vmatpush2.msra.mxu0 0.0
    %5093 = vmatprep.subr.mxu0 0.0
    %5094 = vmatpush2.msra.mxu0 0.0
    %5095 = vmatprep.subr.mxu0 0.0
    %5096 = vmatpush2.msra.mxu0 0.0
    %5097 = vmatprep.subr.mxu0 0.0
    %5098 = vmatpush2.msra.mxu0 0.0
    %5099 = vmatprep.subr.mxu0 0.0
    %5100 = vmatpush2.msra.mxu0 0.0
    %5101 = vmatprep.subr.mxu0 0.0
    %5102 = vmatpush2.msra.mxu0 0.0
    %5103 = vmatprep.subr.mxu0 0.0
    %5104 = vmatpush2.msra.mxu0 0.0
    %5105 = vmatprep.subr.mxu0 0.0
    %5106 = vmatpush2.msra.mxu0 0.0
    %5107 = vmatprep.subr.mxu0 0.0
    %5108 = vmatpush2.msra.mxu0 0.0
    %5109 = vmatprep.subr.mxu0 0.0
    %5110 = vmatpush2.msra.mxu0 0.0
    %5111 = vmatprep.subr.mxu0 0.0
    %5112 = vmatpush2.msra.mxu0 0.0
    %5113 = vmatprep.subr.mxu0 0.0
    %5114 = vmatpush2.msra.mxu0 0.0
    %5115 = vmatprep.subr.mxu0 0.0
    %5116 = vmatpush2.msra.mxu0 0.0
    %5117 = vmatprep.subr.mxu0 0.0
    %5118 = vmatpush2.msra.mxu0 0.0
    %5119 = vmatprep.mubr.f32.mxu0 0.0
    %5120 = vmatmul.mubr.f32.gmra.mxu0 %v5008
    %v5121 = vpop.f32.mrf.mxu0
    %v5122 = vadd.f32 0.0, %v5121
    %v5123 = vpop.f32.mrf.mxu0
    %v5124 = vadd.f32 0.0, %v5123
    %5125 = vmatprep.mubr.f32.mxu0 0.0
    %5126 = vmatmul.mubr.f32.gmra.mxu0 %v5011
    %v5127 = vpop.f32.mrf.mxu0
    %v5128 = vadd.f32 0.0, %v5127
    %v5129 = vpop.f32.mrf.mxu0
    %v5130 = vadd.f32 0.0, %v5129
    %5131 = vmatprep.mubr.f32.mxu0 0.0
    %5132 = vmatmul.mubr.f32.gmra.mxu0 %v5014
    %v5133 = vpop.f32.mrf.mxu0
    %v5134 = vadd.f32 0.0, %v5133
    %v5135 = vpop.f32.mrf.mxu0
    %v5136 = vadd.f32 0.0, %v5135
    %5137 = vmatprep.mubr.f32.mxu0 0.0
    %5138 = vmatmul.mubr.f32.gmra.mxu0 %v5017
    %v5139 = vpop.f32.mrf.mxu0
    %v5140 = vadd.f32 0.0, %v5139
    %v5141 = vpop.f32.mrf.mxu0
    %v5142 = vadd.f32 0.0, %v5141
    %5143 = vmatprep.mubr.f32.mxu0 0.0
    %5144 = vmatmul.mubr.f32.gmra.mxu0 %v5020
    %v5145 = vpop.f32.mrf.mxu0
    %v5146 = vadd.f32 0.0, %v5145
    %v5147 = vpop.f32.mrf.mxu0
    %v5148 = vadd.f32 0.0, %v5147
    %5149 = vmatprep.mubr.f32.mxu0 0.0
    %5150 = vmatmul.mubr.f32.gmra.mxu0 %v5023
    %v5151 = vpop.f32.mrf.mxu0
    %v5152 = vadd.f32 0.0, %v5151
    %v5153 = vpop.f32.mrf.mxu0
    %v5154 = vadd.f32 0.0, %v5153
    %5155 = vmatprep.mubr.f32.mxu0 0.0
    %5156 = vmatmul.mubr.f32.gmra.mxu0 %v5026
    %v5157 = vpop.f32.mrf.mxu0
    %v5158 = vadd.f32 0.0, %v5157
    %v5159 = vpop.f32.mrf.mxu0
    %v5160 = vadd.f32 0.0, %v5159
    %5161 = vmatprep.mubr.f32.mxu0 0.0
    %5162 = vmatmul.mubr.f32.gmra.mxu0 %v5029
    %v5163 = vpop.f32.mrf.mxu0
    %v5164 = vadd.f32 0.0, %v5163
    %v5165 = vpop.f32.mrf.mxu0
    %v5166 = vadd.f32 0.0, %v5165
    %5167 = vmatprep.mubr.f32.mxu0 0.0
    %5168 = vmatmul.mubr.f32.gmra.mxu0 %v5032
    %v5169 = vpop.f32.mrf.mxu0
    %v5170 = vadd.f32 0.0, %v5169
    %v5171 = vpop.f32.mrf.mxu0
    %v5172 = vadd.f32 0.0, %v5171
    %5173 = vmatprep.mubr.f32.mxu0 0.0
    %5174 = vmatmul.mubr.f32.gmra.mxu0 %v5035
    %v5175 = vpop.f32.mrf.mxu0
    %v5176 = vadd.f32 0.0, %v5175
    %v5177 = vpop.f32.mrf.mxu0
    %v5178 = vadd.f32 0.0, %v5177
    %5179 = vmatprep.mubr.f32.mxu0 0.0
    %5180 = vmatmul.mubr.f32.gmra.mxu0 %v5038
    %v5181 = vpop.f32.mrf.mxu0
    %v5182 = vadd.f32 0.0, %v5181
    %v5183 = vpop.f32.mrf.mxu0
    %v5184 = vadd.f32 0.0, %v5183
    %5185 = vmatprep.mubr.f32.mxu0 0.0
    %5186 = vmatmul.mubr.f32.gmra.mxu0 %v5041
    %v5187 = vpop.f32.mrf.mxu0
    %v5188 = vadd.f32 0.0, %v5187
    %v5189 = vpop.f32.mrf.mxu0
    %v5190 = vadd.f32 0.0, %v5189
    %5191 = vmatprep.mubr.f32.mxu0 0.0
    %5192 = vmatmul.mubr.f32.gmra.mxu0 %v5044
    %v5193 = vpop.f32.mrf.mxu0
    %v5194 = vadd.f32 0.0, %v5193
    %v5195 = vpop.f32.mrf.mxu0
    %v5196 = vadd.f32 0.0, %v5195
    %5197 = vmatprep.mubr.f32.mxu0 0.0
    %5198 = vmatmul.mubr.f32.gmra.mxu0 %v5047
    %v5199 = vpop.f32.mrf.mxu0
    %v5200 = vadd.f32 0.0, %v5199
    %v5201 = vpop.f32.mrf.mxu0
    %v5202 = vadd.f32 0.0, %v5201
    %5203 = vmatprep.mubr.f32.mxu0 0.0
    %5204 = vmatmul.mubr.f32.gmra.mxu0 %v5050
    %v5205 = vpop.f32.mrf.mxu0
    %v5206 = vadd.f32 0.0, %v5205
    %v5207 = vpop.f32.mrf.mxu0
    %v5208 = vadd.f32 0.0, %v5207
    %5209 = vmatprep.mubr.f32.mxu0 0.0
    %5210 = vmatmul.mubr.f32.gmra.mxu0 %v5053
    %v5211 = vpop.f32.mrf.mxu0
    %v5212 = vadd.f32 0.0, %v5211
    %v5213 = vpop.f32.mrf.mxu0
    %v5214 = vadd.f32 0.0, %v5213
    %5215 = vdwg.mxu0
    %v5216 = vadd.f32 %v3712, %v5122
    %v5217 = vadd.f32 %v3713, %v5124
    %v5218 = vadd.f32 %v3714, %v5128
    %v5219 = vadd.f32 %v3715, %v5130
    %v5220 = vadd.f32 %v3716, %v5134
    %v5221 = vadd.f32 %v3717, %v5136
    %v5222 = vadd.f32 %v3718, %v5140
    %v5223 = vadd.f32 %v3719, %v5142
    %v5224 = vadd.f32 %v3720, %v5146
    %v5225 = vadd.f32 %v3721, %v5148
    %v5226 = vadd.f32 %v3722, %v5152
    %v5227 = vadd.f32 %v3723, %v5154
    %v5228 = vadd.f32 %v3724, %v5158
    %v5229 = vadd.f32 %v3725, %v5160
    %v5230 = vadd.f32 %v3726, %v5164
    %v5231 = vadd.f32 %v3727, %v5166
    %v5232 = vadd.f32 %v3728, %v5170
    %v5233 = vadd.f32 %v3729, %v5172
    %v5234 = vadd.f32 %v3730, %v5176
    %v5235 = vadd.f32 %v3731, %v5178
    %v5236 = vadd.f32 %v3732, %v5182
    %v5237 = vadd.f32 %v3733, %v5184
    %v5238 = vadd.f32 %v3734, %v5188
    %v5239 = vadd.f32 %v3735, %v5190
    %v5240 = vadd.f32 %v3736, %v5194
    %v5241 = vadd.f32 %v3737, %v5196
    %v5242 = vadd.f32 %v3738, %v5200
    %v5243 = vadd.f32 %v3739, %v5202
    %v5244 = vadd.f32 %v3740, %v5206
    %v5245 = vadd.f32 %v3741, %v5208
    %v5246 = vadd.f32 %v3742, %v5212
    %v5247 = vadd.f32 %v3743, %v5214
    %s5248 = scalar_lea.vmem [#allocation2], 192
    %v5249 = vld [vmem:[%s5248] sm:$0xff]
    %v5250 = vld [vmem:[%s5248 + $0x8] sm:$0xff]
    %v5251 = vld [vmem:[%s5248 + $0x10] sm:$0xff]
    %v5252 = vld [vmem:[%s5248 + $0x18] sm:$0xff]
    %v5253 = vld [vmem:[%s5248 + $0x20] sm:$0xff]
    %v5254 = vld [vmem:[%s5248 + $0x28] sm:$0xff]
    %v5255 = vld [vmem:[%s5248 + $0x30] sm:$0xff]
    %v5256 = vld [vmem:[%s5248 + $0x38] sm:$0xff]
    %s5257 = scalar_lea.vmem %s6, 3
    %v5258 = vld [vmem:[%s5257] sm:$0x1]
    %v5260 = vlaneseq
    %v5261 = vshrl.u32 %v5260, 7
    %v5262 = vsub.s32 0, %v5261
    %v5263 = vrot.slane %v5258, %v5262
    %5265 = vmatprep.subr.mxu0 0.0
    %5266 = vmatpush1.msra.mxu0 0.0
    %5267 = vmatprep.subr.mxu0 0.0
    %5268 = vmatpush1.msra.mxu0 0.0
    %5269 = vmatprep.subr.mxu0 0.0
    %5270 = vmatpush1.msra.mxu0 0.0
    %5271 = vmatprep.subr.mxu0 0.0
    %5272 = vmatpush1.msra.mxu0 0.0
    %5273 = vmatprep.subr.mxu0 0.0
    %5274 = vmatpush1.msra.mxu0 0.0
    %5275 = vmatprep.subr.mxu0 0.0
    %5276 = vmatpush1.msra.mxu0 0.0
    %5277 = vmatprep.subr.mxu0 0.0
    %5278 = vmatpush1.msra.mxu0 0.0
    %5279 = vmatprep.subr.mxu0 0.0
    %5280 = vmatpush1.msra.mxu0 0.0
    %5281 = vmatprep.subr.mxu0 0.0
    %5282 = vmatpush1.msra.mxu0 %v5256
    %5283 = vmatprep.subr.mxu0 0.0
    %5284 = vmatpush1.msra.mxu0 %v5255
    %5285 = vmatprep.subr.mxu0 0.0
    %5286 = vmatpush1.msra.mxu0 %v5254
    %5287 = vmatprep.subr.mxu0 0.0
    %5288 = vmatpush1.msra.mxu0 %v5253
    %5289 = vmatprep.subr.mxu0 0.0
    %5290 = vmatpush1.msra.mxu0 %v5252
    %5291 = vmatprep.subr.mxu0 0.0
    %5292 = vmatpush1.msra.mxu0 %v5251
    %5293 = vmatprep.subr.mxu0 0.0
    %5294 = vmatpush1.msra.mxu0 %v5250
    %5295 = vmatprep.subr.mxu0 0.0
    %5296 = vmatpush1.msra.mxu0 %v5249
    %5297 = vmatprep.subr.mxu0 0.0
    %5298 = vmatpush2.msra.mxu0 0.0
    %5299 = vmatprep.subr.mxu0 0.0
    %5300 = vmatpush2.msra.mxu0 0.0
    %5301 = vmatprep.subr.mxu0 0.0
    %5302 = vmatpush2.msra.mxu0 0.0
    %5303 = vmatprep.subr.mxu0 0.0
    %5304 = vmatpush2.msra.mxu0 0.0
    %5305 = vmatprep.subr.mxu0 0.0
    %5306 = vmatpush2.msra.mxu0 0.0
    %5307 = vmatprep.subr.mxu0 0.0
    %5308 = vmatpush2.msra.mxu0 0.0
    %5309 = vmatprep.subr.mxu0 0.0
    %5310 = vmatpush2.msra.mxu0 0.0
    %5311 = vmatprep.subr.mxu0 0.0
    %5312 = vmatpush2.msra.mxu0 0.0
    %5313 = vmatprep.subr.mxu0 0.0
    %5314 = vmatpush2.msra.mxu0 0.0
    %5315 = vmatprep.subr.mxu0 0.0
    %5316 = vmatpush2.msra.mxu0 0.0
    %5317 = vmatprep.subr.mxu0 0.0
    %5318 = vmatpush2.msra.mxu0 0.0
    %5319 = vmatprep.subr.mxu0 0.0
    %5320 = vmatpush2.msra.mxu0 0.0
    %5321 = vmatprep.subr.mxu0 0.0
    %5322 = vmatpush2.msra.mxu0 0.0
    %5323 = vmatprep.subr.mxu0 0.0
    %5324 = vmatpush2.msra.mxu0 0.0
    %5325 = vmatprep.subr.mxu0 0.0
    %5326 = vmatpush2.msra.mxu0 0.0
    %5327 = vmatprep.subr.mxu0 0.0
    %5328 = vmatpush2.msra.mxu0 0.0
    %5329 = vmatprep.mubr.f32.mxu0 0.0
    %5330 = vmatmul.mubr.f32.gmra.mxu0 %v5008
    %v5331 = vpop.f32.mrf.mxu0
    %v5332 = vadd.f32 %v5263, %v5331
    %v5333 = vpop.f32.mrf.mxu0
    %5334 = vmatprep.mubr.f32.mxu0 0.0
    %5335 = vmatmul.mubr.f32.gmra.mxu0 %v5011
    %v5336 = vpop.f32.mrf.mxu0
    %v5337 = vadd.f32 %v5263, %v5336
    %v5338 = vpop.f32.mrf.mxu0
    %5339 = vmatprep.mubr.f32.mxu0 0.0
    %5340 = vmatmul.mubr.f32.gmra.mxu0 %v5014
    %v5341 = vpop.f32.mrf.mxu0
    %v5342 = vadd.f32 %v5263, %v5341
    %v5343 = vpop.f32.mrf.mxu0
    %5344 = vmatprep.mubr.f32.mxu0 0.0
    %5345 = vmatmul.mubr.f32.gmra.mxu0 %v5017
    %v5346 = vpop.f32.mrf.mxu0
    %v5347 = vadd.f32 %v5263, %v5346
    %v5348 = vpop.f32.mrf.mxu0
    %5349 = vmatprep.mubr.f32.mxu0 0.0
    %5350 = vmatmul.mubr.f32.gmra.mxu0 %v5020
    %v5351 = vpop.f32.mrf.mxu0
    %v5352 = vadd.f32 %v5263, %v5351
    %v5353 = vpop.f32.mrf.mxu0
    %5354 = vmatprep.mubr.f32.mxu0 0.0
    %5355 = vmatmul.mubr.f32.gmra.mxu0 %v5023
    %v5356 = vpop.f32.mrf.mxu0
    %v5357 = vadd.f32 %v5263, %v5356
    %v5358 = vpop.f32.mrf.mxu0
    %5359 = vmatprep.mubr.f32.mxu0 0.0
    %5360 = vmatmul.mubr.f32.gmra.mxu0 %v5026
    %v5361 = vpop.f32.mrf.mxu0
    %v5362 = vadd.f32 %v5263, %v5361
    %v5363 = vpop.f32.mrf.mxu0
    %5364 = vmatprep.mubr.f32.mxu0 0.0
    %5365 = vmatmul.mubr.f32.gmra.mxu0 %v5029
    %v5366 = vpop.f32.mrf.mxu0
    %v5367 = vadd.f32 %v5263, %v5366
    %v5368 = vpop.f32.mrf.mxu0
    %5369 = vmatprep.mubr.f32.mxu0 0.0
    %5370 = vmatmul.mubr.f32.gmra.mxu0 %v5032
    %v5371 = vpop.f32.mrf.mxu0
    %v5372 = vadd.f32 %v5263, %v5371
    %v5373 = vpop.f32.mrf.mxu0
    %5374 = vmatprep.mubr.f32.mxu0 0.0
    %5375 = vmatmul.mubr.f32.gmra.mxu0 %v5035
    %v5376 = vpop.f32.mrf.mxu0
    %v5377 = vadd.f32 %v5263, %v5376
    %v5378 = vpop.f32.mrf.mxu0
    %5379 = vmatprep.mubr.f32.mxu0 0.0
    %5380 = vmatmul.mubr.f32.gmra.mxu0 %v5038
    %v5381 = vpop.f32.mrf.mxu0
    %v5382 = vadd.f32 %v5263, %v5381
    %v5383 = vpop.f32.mrf.mxu0
    %5384 = vmatprep.mubr.f32.mxu0 0.0
    %5385 = vmatmul.mubr.f32.gmra.mxu0 %v5041
    %v5386 = vpop.f32.mrf.mxu0
    %v5387 = vadd.f32 %v5263, %v5386
    %v5388 = vpop.f32.mrf.mxu0
    %5389 = vmatprep.mubr.f32.mxu0 0.0
    %5390 = vmatmul.mubr.f32.gmra.mxu0 %v5044
    %v5391 = vpop.f32.mrf.mxu0
    %v5392 = vadd.f32 %v5263, %v5391
    %v5393 = vpop.f32.mrf.mxu0
    %5394 = vmatprep.mubr.f32.mxu0 0.0
    %5395 = vmatmul.mubr.f32.gmra.mxu0 %v5047
    %v5396 = vpop.f32.mrf.mxu0
    %v5397 = vadd.f32 %v5263, %v5396
    %v5398 = vpop.f32.mrf.mxu0
    %5399 = vmatprep.mubr.f32.mxu0 0.0
    %5400 = vmatmul.mubr.f32.gmra.mxu0 %v5050
    %v5401 = vpop.f32.mrf.mxu0
    %v5402 = vadd.f32 %v5263, %v5401
    %v5403 = vpop.f32.mrf.mxu0
    %5404 = vmatprep.mubr.f32.mxu0 0.0
    %5405 = vmatmul.mubr.f32.gmra.mxu0 %v5053
    %v5406 = vpop.f32.mrf.mxu0
    %v5407 = vadd.f32 %v5263, %v5406
    %v5408 = vpop.f32.mrf.mxu0
    %5409 = vdwg.mxu0
    %5418 = vrot.lane.b32.xlu0 %v5332, 64
    %v5419 = vpop.permute.xlu0 %5418
    %5420 = vrot.lane.b32.xlu0 %v5337, 64
    %v5421 = vpop.permute.xlu0 %5420
    %5422 = vrot.lane.b32.xlu0 %v5342, 64
    %v5423 = vpop.permute.xlu0 %5422
    %5424 = vrot.lane.b32.xlu0 %v5347, 64
    %v5425 = vpop.permute.xlu0 %5424
    %5426 = vrot.lane.b32.xlu0 %v5352, 64
    %v5427 = vpop.permute.xlu0 %5426
    %5428 = vrot.lane.b32.xlu0 %v5357, 64
    %v5429 = vpop.permute.xlu0 %5428
    %5430 = vrot.lane.b32.xlu0 %v5362, 64
    %v5431 = vpop.permute.xlu0 %5430
    %5432 = vrot.lane.b32.xlu0 %v5367, 64
    %v5433 = vpop.permute.xlu0 %5432
    %v5434 = vsel %vm337, %v5419, 0
    %v5436 = vsel %vm337, %v5421, 0
    %v5438 = vsel %vm337, %v5423, 0
    %v5440 = vsel %vm337, %v5425, 0
    %v5442 = vsel %vm337, %v5427, 0
    %v5444 = vsel %vm337, %v5429, 0
    %v5446 = vsel %vm337, %v5431, 0
    %v5448 = vsel %vm337, %v5433, 0
    %5450 = vmatprep.subr.mxu0 0.0
    %5451 = vmatpush1.xpose.msra.mxu0 0.0
    %5452 = vmatprep.subr.mxu0 0.0
    %5453 = vmatpush1.xpose.msra.mxu0 0.0
    %5454 = vmatprep.subr.mxu0 0.0
    %5455 = vmatpush1.xpose.msra.mxu0 0.0
    %5456 = vmatprep.subr.mxu0 0.0
    %5457 = vmatpush1.xpose.msra.mxu0 0.0
    %5458 = vmatprep.subr.mxu0 0.0
    %5459 = vmatpush1.xpose.msra.mxu0 0.0
    %5460 = vmatprep.subr.mxu0 0.0
    %5461 = vmatpush1.xpose.msra.mxu0 0.0
    %5462 = vmatprep.subr.mxu0 0.0
    %5463 = vmatpush1.xpose.msra.mxu0 0.0
    %5464 = vmatprep.subr.mxu0 0.0
    %5465 = vmatpush1.xpose.msra.mxu0 0.0
    %5466 = vmatprep.subr.mxu0 0.0
    %5467 = vmatpush1.xpose.msra.mxu0 %v5448
    %5468 = vmatprep.subr.mxu0 0.0
    %5469 = vmatpush1.xpose.msra.mxu0 %v5446
    %5470 = vmatprep.subr.mxu0 0.0
    %5471 = vmatpush1.xpose.msra.mxu0 %v5444
    %5472 = vmatprep.subr.mxu0 0.0
    %5473 = vmatpush1.xpose.msra.mxu0 %v5442
    %5474 = vmatprep.subr.mxu0 0.0
    %5475 = vmatpush1.xpose.msra.mxu0 %v5440
    %5476 = vmatprep.subr.mxu0 0.0
    %5477 = vmatpush1.xpose.msra.mxu0 %v5438
    %5478 = vmatprep.subr.mxu0 0.0
    %5479 = vmatpush1.xpose.msra.mxu0 %v5436
    %5480 = vmatprep.subr.mxu0 0.0
    %5481 = vmatpush1.xpose.msra.mxu0 %v5434
    %5482 = vmatprep.subr.mxu0 0.0
    %5483 = vmatpush2.xpose.msra.mxu0 0.0
    %5484 = vmatprep.subr.mxu0 0.0
    %5485 = vmatpush2.xpose.msra.mxu0 0.0
    %5486 = vmatprep.subr.mxu0 0.0
    %5487 = vmatpush2.xpose.msra.mxu0 0.0
    %5488 = vmatprep.subr.mxu0 0.0
    %5489 = vmatpush2.xpose.msra.mxu0 0.0
    %5490 = vmatprep.subr.mxu0 0.0
    %5491 = vmatpush2.xpose.msra.mxu0 0.0
    %5492 = vmatprep.subr.mxu0 0.0
    %5493 = vmatpush2.xpose.msra.mxu0 0.0
    %5494 = vmatprep.subr.mxu0 0.0
    %5495 = vmatpush2.xpose.msra.mxu0 0.0
    %5496 = vmatprep.subr.mxu0 0.0
    %5497 = vmatpush2.xpose.msra.mxu0 0.0
    %5498 = vmatprep.subr.mxu0 0.0
    %5499 = vmatpush2.xpose.msra.mxu0 0.0
    %5500 = vmatprep.subr.mxu0 0.0
    %5501 = vmatpush2.xpose.msra.mxu0 0.0
    %5502 = vmatprep.subr.mxu0 0.0
    %5503 = vmatpush2.xpose.msra.mxu0 0.0
    %5504 = vmatprep.subr.mxu0 0.0
    %5505 = vmatpush2.xpose.msra.mxu0 0.0
    %5506 = vmatprep.subr.mxu0 0.0
    %5507 = vmatpush2.xpose.msra.mxu0 0.0
    %5508 = vmatprep.subr.mxu0 0.0
    %5509 = vmatpush2.xpose.msra.mxu0 0.0
    %5510 = vmatprep.subr.mxu0 0.0
    %5511 = vmatpush2.xpose.msra.mxu0 0.0
    %5512 = vmatprep.subr.mxu0 0.0
    %5513 = vmatpush2.xpose.msra.mxu0 0.0
    %5514 = vmatprep.mubr.f32.mxu0 0.0
    %5515 = vmatmul.mubr.f32.gmra.mxu0 %v5434
    %v5516 = vpop.f32.mrf.mxu0
    %v5517 = vadd.f32 0.0, %v5516
    %v5518 = vpop.f32.mrf.mxu0
    %5519 = vmatprep.mubr.f32.mxu0 0.0
    %5520 = vmatmul.mubr.f32.gmra.mxu0 %v5436
    %v5521 = vpop.f32.mrf.mxu0
    %v5522 = vadd.f32 0.0, %v5521
    %v5523 = vpop.f32.mrf.mxu0
    %5524 = vmatprep.mubr.f32.mxu0 0.0
    %5525 = vmatmul.mubr.f32.gmra.mxu0 %v5438
    %v5526 = vpop.f32.mrf.mxu0
    %v5527 = vadd.f32 0.0, %v5526
    %v5528 = vpop.f32.mrf.mxu0
    %5529 = vmatprep.mubr.f32.mxu0 0.0
    %5530 = vmatmul.mubr.f32.gmra.mxu0 %v5440
    %v5531 = vpop.f32.mrf.mxu0
    %v5532 = vadd.f32 0.0, %v5531
    %v5533 = vpop.f32.mrf.mxu0
    %5534 = vmatprep.mubr.f32.mxu0 0.0
    %5535 = vmatmul.mubr.f32.gmra.mxu0 %v5442
    %v5536 = vpop.f32.mrf.mxu0
    %v5537 = vadd.f32 0.0, %v5536
    %v5538 = vpop.f32.mrf.mxu0
    %5539 = vmatprep.mubr.f32.mxu0 0.0
    %5540 = vmatmul.mubr.f32.gmra.mxu0 %v5444
    %v5541 = vpop.f32.mrf.mxu0
    %v5542 = vadd.f32 0.0, %v5541
    %v5543 = vpop.f32.mrf.mxu0
    %5544 = vmatprep.mubr.f32.mxu0 0.0
    %5545 = vmatmul.mubr.f32.gmra.mxu0 %v5446
    %v5546 = vpop.f32.mrf.mxu0
    %v5547 = vadd.f32 0.0, %v5546
    %v5548 = vpop.f32.mrf.mxu0
    %5549 = vmatprep.mubr.f32.mxu0 0.0
    %5550 = vmatmul.mubr.f32.gmra.mxu0 %v5448
    %v5551 = vpop.f32.mrf.mxu0
    %v5552 = vadd.f32 0.0, %v5551
    %v5553 = vpop.f32.mrf.mxu0
    %5554 = vdwg.mxu0
    %v5555 = vsel %vm337, %v5517, -inf
    %5556 = vmax.xlane.f32.xlu0 %v5555
    %v5557 = vpop.xlane.xlu0 %5556
    %v5558 = vsel %vm337, %v5522, -inf
    %5559 = vmax.xlane.f32.xlu0 %v5558
    %v5560 = vpop.xlane.xlu0 %5559
    %v5561 = vsel %vm337, %v5527, -inf
    %5562 = vmax.xlane.f32.xlu0 %v5561
    %v5563 = vpop.xlane.xlu0 %5562
    %v5564 = vsel %vm337, %v5532, -inf
    %5565 = vmax.xlane.f32.xlu0 %v5564
    %v5566 = vpop.xlane.xlu0 %5565
    %v5567 = vsel %vm337, %v5537, -inf
    %5568 = vmax.xlane.f32.xlu0 %v5567
    %v5569 = vpop.xlane.xlu0 %5568
    %v5570 = vsel %vm337, %v5542, -inf
    %5571 = vmax.xlane.f32.xlu0 %v5570
    %v5572 = vpop.xlane.xlu0 %5571
    %v5573 = vsel %vm337, %v5547, -inf
    %5574 = vmax.xlane.f32.xlu0 %v5573
    %v5575 = vpop.xlane.xlu0 %5574
    %v5576 = vsel %vm337, %v5552, -inf
    %5577 = vmax.xlane.f32.xlu0 %v5576
    %v5578 = vpop.xlane.xlu0 %5577
    %v5579 = vmax.f32 %v5557, %v5569
    %v5580 = vmax.f32 %v5560, %v5572
    %v5581 = vmax.f32 %v5563, %v5575
    %v5582 = vmax.f32 %v5566, %v5578
    %v5583 = vmax.f32 %v5579, %v5580
    %v5584 = vmax.f32 %v5581, %v5582
    %v5585 = vmax.f32 %v5583, %v5584
    %v5586 = vrot.slane %v5585, 4
    %v5587 = vmax.f32 %v5585, %v5586
    %v5588 = vrot.slane %v5587, 2
    %v5589 = vmax.f32 %v5587, %v5588
    %v5590 = vrot.slane %v5589, 1
    %v5591 = vmax.f32 %v5589, %v5590
    %v5592 = vsub.f32 %v5517, %v5591
    %v5593 = vsub.f32 %v5522, %v5591
    %v5594 = vsub.f32 %v5527, %v5591
    %v5595 = vsub.f32 %v5532, %v5591
    %v5596 = vsub.f32 %v5537, %v5591
    %v5597 = vsub.f32 %v5542, %v5591
    %v5598 = vsub.f32 %v5547, %v5591
    %v5599 = vsub.f32 %v5552, %v5591
    %v5600 = vmul.f32 %v5592, 1.442695
    %v5601 = vpow.pop %v5600
    %v5602 = vmul.f32 %v5593, 1.442695
    %v5603 = vpow.pop %v5602
    %v5604 = vmul.f32 %v5594, 1.442695
    %v5605 = vpow.pop %v5604
    %v5606 = vmul.f32 %v5595, 1.442695
    %v5607 = vpow.pop %v5606
    %v5608 = vmul.f32 %v5596, 1.442695
    %v5609 = vpow.pop %v5608
    %v5610 = vmul.f32 %v5597, 1.442695
    %v5611 = vpow.pop %v5610
    %v5612 = vmul.f32 %v5598, 1.442695
    %v5613 = vpow.pop %v5612
    %v5614 = vmul.f32 %v5599, 1.442695
    %v5615 = vpow.pop %v5614
    %v5616 = vsel %vm337, %v5601, 0.0
    %v5617 = vsel %vm337, %v5603, 0.0
    %v5618 = vadd.f32 %v5616, %v5617
    %v5619 = vsel %vm337, %v5605, 0.0
    %v5620 = vadd.f32 %v5618, %v5619
    %v5621 = vsel %vm337, %v5607, 0.0
    %v5622 = vadd.f32 %v5620, %v5621
    %v5623 = vsel %vm337, %v5609, 0.0
    %v5624 = vadd.f32 %v5622, %v5623
    %v5625 = vsel %vm337, %v5611, 0.0
    %v5626 = vadd.f32 %v5624, %v5625
    %v5627 = vsel %vm337, %v5613, 0.0
    %v5628 = vadd.f32 %v5626, %v5627
    %v5629 = vsel %vm337, %v5615, 0.0
    %v5630 = vadd.f32 %v5628, %v5629
    %v5631 = vrot.slane %v5630, 4
    %v5632 = vadd.f32 %v5630, %v5631
    %v5633 = vrot.slane %v5632, 2
    %v5634 = vadd.f32 %v5632, %v5633
    %v5635 = vrot.slane %v5634, 1
    %v5636 = vadd.f32 %v5634, %v5635
    %v5637 = vrcp.pop %v5636
    %v5638 = vmul.f32 %v5601, %v5637
    %v5639 = vmul.f32 %v5603, %v5637
    %v5640 = vmul.f32 %v5605, %v5637
    %v5641 = vmul.f32 %v5607, %v5637
    %v5642 = vmul.f32 %v5609, %v5637
    %v5643 = vmul.f32 %v5611, %v5637
    %v5644 = vmul.f32 %v5613, %v5637
    %v5645 = vmul.f32 %v5615, %v5637
    %v5646 = vsel %vm337, %v5638, 0.0
    %5647 = vadd.xlane.f32.xlu0 %v5646
    %v5648 = vpop.xlane.xlu0 %5647
    %v5649 = vsel %vm337, %v5639, 0.0
    %5650 = vadd.xlane.f32.xlu0 %v5649
    %v5651 = vpop.xlane.xlu0 %5650
    %v5652 = vsel %vm337, %v5640, 0.0
    %5653 = vadd.xlane.f32.xlu0 %v5652
    %v5654 = vpop.xlane.xlu0 %5653
    %v5655 = vsel %vm337, %v5641, 0.0
    %5656 = vadd.xlane.f32.xlu0 %v5655
    %v5657 = vpop.xlane.xlu0 %5656
    %v5658 = vsel %vm337, %v5642, 0.0
    %5659 = vadd.xlane.f32.xlu0 %v5658
    %v5660 = vpop.xlane.xlu0 %5659
    %v5661 = vsel %vm337, %v5643, 0.0
    %5662 = vadd.xlane.f32.xlu0 %v5661
    %v5663 = vpop.xlane.xlu0 %5662
    %v5664 = vsel %vm337, %v5644, 0.0
    %5665 = vadd.xlane.f32.xlu0 %v5664
    %v5666 = vpop.xlane.xlu0 %5665
    %v5667 = vsel %vm337, %v5645, 0.0
    %5668 = vadd.xlane.f32.xlu0 %v5667
    %v5669 = vpop.xlane.xlu0 %5668
    %v5670 = vadd.f32 %v5648, 1e-09
    %v5671 = vadd.f32 %v5651, 1e-09
    %v5672 = vadd.f32 %v5654, 1e-09
    %v5673 = vadd.f32 %v5657, 1e-09
    %v5674 = vadd.f32 %v5660, 1e-09
    %v5675 = vadd.f32 %v5663, 1e-09
    %v5676 = vadd.f32 %v5666, 1e-09
    %v5677 = vadd.f32 %v5669, 1e-09
    %v5678 = vrcp.pop %v5670
    %v5679 = vrcp.pop %v5671
    %v5680 = vrcp.pop %v5672
    %v5681 = vrcp.pop %v5673
    %v5682 = vrcp.pop %v5674
    %v5683 = vrcp.pop %v5675
    %v5684 = vrcp.pop %v5676
    %v5685 = vrcp.pop %v5677
    %v5686 = vmul.f32 %v5638, %v5678
    %v5687 = vmul.f32 %v5639, %v5679
    %v5688 = vmul.f32 %v5640, %v5680
    %v5689 = vmul.f32 %v5641, %v5681
    %v5690 = vmul.f32 %v5642, %v5682
    %v5691 = vmul.f32 %v5643, %v5683
    %v5692 = vmul.f32 %v5644, %v5684
    %v5693 = vmul.f32 %v5645, %v5685
    %v5695 = vsel %vm337, %v5686, 0
    %v5698 = vsel %vm337, %v5687, 0
    %v5701 = vsel %vm337, %v5688, 0
    %v5704 = vsel %vm337, %v5689, 0
    %v5707 = vsel %vm337, %v5690, 0
    %v5710 = vsel %vm337, %v5691, 0
    %v5713 = vsel %vm337, %v5692, 0
    %v5716 = vsel %vm337, %v5693, 0
    %5718 = vmatprep.subr.mxu0 0.0
    %5719 = vmatpush1.msra.mxu0 0.0
    %5720 = vmatprep.subr.mxu0 0.0
    %5721 = vmatpush1.msra.mxu0 0.0
    %5722 = vmatprep.subr.mxu0 0.0
    %5723 = vmatpush1.msra.mxu0 0.0
    %5724 = vmatprep.subr.mxu0 0.0
    %5725 = vmatpush1.msra.mxu0 0.0
    %5726 = vmatprep.subr.mxu0 0.0
    %5727 = vmatpush1.msra.mxu0 0.0
    %5728 = vmatprep.subr.mxu0 0.0
    %5729 = vmatpush1.msra.mxu0 0.0
    %5730 = vmatprep.subr.mxu0 0.0
    %5731 = vmatpush1.msra.mxu0 0.0
    %5732 = vmatprep.subr.mxu0 0.0
    %5733 = vmatpush1.msra.mxu0 0.0
    %5734 = vmatprep.subr.mxu0 0.0
    %5735 = vmatpush1.msra.mxu0 %v5367
    %5736 = vmatprep.subr.mxu0 0.0
    %5737 = vmatpush1.msra.mxu0 %v5362
    %5738 = vmatprep.subr.mxu0 0.0
    %5739 = vmatpush1.msra.mxu0 %v5357
    %5740 = vmatprep.subr.mxu0 0.0
    %5741 = vmatpush1.msra.mxu0 %v5352
    %5742 = vmatprep.subr.mxu0 0.0
    %5743 = vmatpush1.msra.mxu0 %v5347
    %5744 = vmatprep.subr.mxu0 0.0
    %5745 = vmatpush1.msra.mxu0 %v5342
    %5746 = vmatprep.subr.mxu0 0.0
    %5747 = vmatpush1.msra.mxu0 %v5337
    %5748 = vmatprep.subr.mxu0 0.0
    %5749 = vmatpush1.msra.mxu0 %v5332
    %5750 = vmatprep.subr.mxu0 0.0
    %5751 = vmatpush2.msra.mxu0 0.0
    %5752 = vmatprep.subr.mxu0 0.0
    %5753 = vmatpush2.msra.mxu0 0.0
    %5754 = vmatprep.subr.mxu0 0.0
    %5755 = vmatpush2.msra.mxu0 0.0
    %5756 = vmatprep.subr.mxu0 0.0
    %5757 = vmatpush2.msra.mxu0 0.0
    %5758 = vmatprep.subr.mxu0 0.0
    %5759 = vmatpush2.msra.mxu0 0.0
    %5760 = vmatprep.subr.mxu0 0.0
    %5761 = vmatpush2.msra.mxu0 0.0
    %5762 = vmatprep.subr.mxu0 0.0
    %5763 = vmatpush2.msra.mxu0 0.0
    %5764 = vmatprep.subr.mxu0 0.0
    %5765 = vmatpush2.msra.mxu0 0.0
    %5766 = vmatprep.subr.mxu0 0.0
    %5767 = vmatpush2.msra.mxu0 0.0
    %5768 = vmatprep.subr.mxu0 0.0
    %5769 = vmatpush2.msra.mxu0 0.0
    %5770 = vmatprep.subr.mxu0 0.0
    %5771 = vmatpush2.msra.mxu0 0.0
    %5772 = vmatprep.subr.mxu0 0.0
    %5773 = vmatpush2.msra.mxu0 0.0
    %5774 = vmatprep.subr.mxu0 0.0
    %5775 = vmatpush2.msra.mxu0 0.0
    %5776 = vmatprep.subr.mxu0 0.0
    %5777 = vmatpush2.msra.mxu0 0.0
    %5778 = vmatprep.subr.mxu0 0.0
    %5779 = vmatpush2.msra.mxu0 0.0
    %5780 = vmatprep.subr.mxu0 0.0
    %5781 = vmatpush2.msra.mxu0 0.0
    %5782 = vmatprep.mubr.f32.mxu0 0.0
    %5783 = vmatmul.mubr.f32.gmra.mxu0 %v5695
    %v5784 = vpop.f32.mrf.mxu0
    %v5785 = vadd.f32 0.0, %v5784
    %v5786 = vpop.f32.mrf.mxu0
    %5787 = vmatprep.mubr.f32.mxu0 0.0
    %5788 = vmatmul.mubr.f32.gmra.mxu0 %v5698
    %v5789 = vpop.f32.mrf.mxu0
    %v5790 = vadd.f32 0.0, %v5789
    %v5791 = vpop.f32.mrf.mxu0
    %5792 = vmatprep.mubr.f32.mxu0 0.0
    %5793 = vmatmul.mubr.f32.gmra.mxu0 %v5701
    %v5794 = vpop.f32.mrf.mxu0
    %v5795 = vadd.f32 0.0, %v5794
    %v5796 = vpop.f32.mrf.mxu0
    %5797 = vmatprep.mubr.f32.mxu0 0.0
    %5798 = vmatmul.mubr.f32.gmra.mxu0 %v5704
    %v5799 = vpop.f32.mrf.mxu0
    %v5800 = vadd.f32 0.0, %v5799
    %v5801 = vpop.f32.mrf.mxu0
    %5802 = vmatprep.mubr.f32.mxu0 0.0
    %5803 = vmatmul.mubr.f32.gmra.mxu0 %v5707
    %v5804 = vpop.f32.mrf.mxu0
    %v5805 = vadd.f32 0.0, %v5804
    %v5806 = vpop.f32.mrf.mxu0
    %5807 = vmatprep.mubr.f32.mxu0 0.0
    %5808 = vmatmul.mubr.f32.gmra.mxu0 %v5710
    %v5809 = vpop.f32.mrf.mxu0
    %v5810 = vadd.f32 0.0, %v5809
    %v5811 = vpop.f32.mrf.mxu0
    %5812 = vmatprep.mubr.f32.mxu0 0.0
    %5813 = vmatmul.mubr.f32.gmra.mxu0 %v5713
    %v5814 = vpop.f32.mrf.mxu0
    %v5815 = vadd.f32 0.0, %v5814
    %v5816 = vpop.f32.mrf.mxu0
    %5817 = vmatprep.mubr.f32.mxu0 0.0
    %5818 = vmatmul.mubr.f32.gmra.mxu0 %v5716
    %v5819 = vpop.f32.mrf.mxu0
    %v5820 = vadd.f32 0.0, %v5819
    %v5821 = vpop.f32.mrf.mxu0
    %5822 = vdwg.mxu0
    %v5823 = vsub.f32 %v4974, %v5785
    %v5824 = vsub.f32 %v4975, %v5790
    %v5825 = vsub.f32 %v4976, %v5795
    %v5826 = vsub.f32 %v4977, %v5800
    %v5827 = vsub.f32 %v4978, %v5805
    %v5828 = vsub.f32 %v4979, %v5810
    %v5829 = vsub.f32 %v4980, %v5815
    %v5830 = vsub.f32 %v4981, %v5820
    %5839 = vrot.lane.b32.xlu0 %v5372, 64
    %v5840 = vpop.permute.xlu0 %5839
    %5841 = vrot.lane.b32.xlu0 %v5377, 64
    %v5842 = vpop.permute.xlu0 %5841
    %5843 = vrot.lane.b32.xlu0 %v5382, 64
    %v5844 = vpop.permute.xlu0 %5843
    %5845 = vrot.lane.b32.xlu0 %v5387, 64
    %v5846 = vpop.permute.xlu0 %5845
    %5847 = vrot.lane.b32.xlu0 %v5392, 64
    %v5848 = vpop.permute.xlu0 %5847
    %5849 = vrot.lane.b32.xlu0 %v5397, 64
    %v5850 = vpop.permute.xlu0 %5849
    %5851 = vrot.lane.b32.xlu0 %v5402, 64
    %v5852 = vpop.permute.xlu0 %5851
    %5853 = vrot.lane.b32.xlu0 %v5407, 64
    %v5854 = vpop.permute.xlu0 %5853
    %v5855 = vsel %vm337, %v5840, 0
    %v5857 = vsel %vm337, %v5842, 0
    %v5859 = vsel %vm337, %v5844, 0
    %v5861 = vsel %vm337, %v5846, 0
    %v5863 = vsel %vm337, %v5848, 0
    %v5865 = vsel %vm337, %v5850, 0
    %v5867 = vsel %vm337, %v5852, 0
    %v5869 = vsel %vm337, %v5854, 0
    %5871 = vmatprep.subr.mxu0 0.0
    %5872 = vmatpush1.xpose.msra.mxu0 0.0
    %5873 = vmatprep.subr.mxu0 0.0
    %5874 = vmatpush1.xpose.msra.mxu0 0.0
    %5875 = vmatprep.subr.mxu0 0.0
    %5876 = vmatpush1.xpose.msra.mxu0 0.0
    %5877 = vmatprep.subr.mxu0 0.0
    %5878 = vmatpush1.xpose.msra.mxu0 0.0
    %5879 = vmatprep.subr.mxu0 0.0
    %5880 = vmatpush1.xpose.msra.mxu0 0.0
    %5881 = vmatprep.subr.mxu0 0.0
    %5882 = vmatpush1.xpose.msra.mxu0 0.0
    %5883 = vmatprep.subr.mxu0 0.0
    %5884 = vmatpush1.xpose.msra.mxu0 0.0
    %5885 = vmatprep.subr.mxu0 0.0
    %5886 = vmatpush1.xpose.msra.mxu0 0.0
    %5887 = vmatprep.subr.mxu0 0.0
    %5888 = vmatpush1.xpose.msra.mxu0 %v5869
    %5889 = vmatprep.subr.mxu0 0.0
    %5890 = vmatpush1.xpose.msra.mxu0 %v5867
    %5891 = vmatprep.subr.mxu0 0.0
    %5892 = vmatpush1.xpose.msra.mxu0 %v5865
    %5893 = vmatprep.subr.mxu0 0.0
    %5894 = vmatpush1.xpose.msra.mxu0 %v5863
    %5895 = vmatprep.subr.mxu0 0.0
    %5896 = vmatpush1.xpose.msra.mxu0 %v5861
    %5897 = vmatprep.subr.mxu0 0.0
    %5898 = vmatpush1.xpose.msra.mxu0 %v5859
    %5899 = vmatprep.subr.mxu0 0.0
    %5900 = vmatpush1.xpose.msra.mxu0 %v5857
    %5901 = vmatprep.subr.mxu0 0.0
    %5902 = vmatpush1.xpose.msra.mxu0 %v5855
    %5903 = vmatprep.subr.mxu0 0.0
    %5904 = vmatpush2.xpose.msra.mxu0 0.0
    %5905 = vmatprep.subr.mxu0 0.0
    %5906 = vmatpush2.xpose.msra.mxu0 0.0
    %5907 = vmatprep.subr.mxu0 0.0
    %5908 = vmatpush2.xpose.msra.mxu0 0.0
    %5909 = vmatprep.subr.mxu0 0.0
    %5910 = vmatpush2.xpose.msra.mxu0 0.0
    %5911 = vmatprep.subr.mxu0 0.0
    %5912 = vmatpush2.xpose.msra.mxu0 0.0
    %5913 = vmatprep.subr.mxu0 0.0
    %5914 = vmatpush2.xpose.msra.mxu0 0.0
    %5915 = vmatprep.subr.mxu0 0.0
    %5916 = vmatpush2.xpose.msra.mxu0 0.0
    %5917 = vmatprep.subr.mxu0 0.0
    %5918 = vmatpush2.xpose.msra.mxu0 0.0
    %5919 = vmatprep.subr.mxu0 0.0
    %5920 = vmatpush2.xpose.msra.mxu0 0.0
    %5921 = vmatprep.subr.mxu0 0.0
    %5922 = vmatpush2.xpose.msra.mxu0 0.0
    %5923 = vmatprep.subr.mxu0 0.0
    %5924 = vmatpush2.xpose.msra.mxu0 0.0
    %5925 = vmatprep.subr.mxu0 0.0
    %5926 = vmatpush2.xpose.msra.mxu0 0.0
    %5927 = vmatprep.subr.mxu0 0.0
    %5928 = vmatpush2.xpose.msra.mxu0 0.0
    %5929 = vmatprep.subr.mxu0 0.0
    %5930 = vmatpush2.xpose.msra.mxu0 0.0
    %5931 = vmatprep.subr.mxu0 0.0
    %5932 = vmatpush2.xpose.msra.mxu0 0.0
    %5933 = vmatprep.subr.mxu0 0.0
    %5934 = vmatpush2.xpose.msra.mxu0 0.0
    %5935 = vmatprep.mubr.f32.mxu0 0.0
    %5936 = vmatmul.mubr.f32.gmra.mxu0 %v5855
    %v5937 = vpop.f32.mrf.mxu0
    %v5938 = vadd.f32 0.0, %v5937
    %v5939 = vpop.f32.mrf.mxu0
    %5940 = vmatprep.mubr.f32.mxu0 0.0
    %5941 = vmatmul.mubr.f32.gmra.mxu0 %v5857
    %v5942 = vpop.f32.mrf.mxu0
    %v5943 = vadd.f32 0.0, %v5942
    %v5944 = vpop.f32.mrf.mxu0
    %5945 = vmatprep.mubr.f32.mxu0 0.0
    %5946 = vmatmul.mubr.f32.gmra.mxu0 %v5859
    %v5947 = vpop.f32.mrf.mxu0
    %v5948 = vadd.f32 0.0, %v5947
    %v5949 = vpop.f32.mrf.mxu0
    %5950 = vmatprep.mubr.f32.mxu0 0.0
    %5951 = vmatmul.mubr.f32.gmra.mxu0 %v5861
    %v5952 = vpop.f32.mrf.mxu0
    %v5953 = vadd.f32 0.0, %v5952
    %v5954 = vpop.f32.mrf.mxu0
    %5955 = vmatprep.mubr.f32.mxu0 0.0
    %5956 = vmatmul.mubr.f32.gmra.mxu0 %v5863
    %v5957 = vpop.f32.mrf.mxu0
    %v5958 = vadd.f32 0.0, %v5957
    %v5959 = vpop.f32.mrf.mxu0
    %5960 = vmatprep.mubr.f32.mxu0 0.0
    %5961 = vmatmul.mubr.f32.gmra.mxu0 %v5865
    %v5962 = vpop.f32.mrf.mxu0
    %v5963 = vadd.f32 0.0, %v5962
    %v5964 = vpop.f32.mrf.mxu0
    %5965 = vmatprep.mubr.f32.mxu0 0.0
    %5966 = vmatmul.mubr.f32.gmra.mxu0 %v5867
    %v5967 = vpop.f32.mrf.mxu0
    %v5968 = vadd.f32 0.0, %v5967
    %v5969 = vpop.f32.mrf.mxu0
    %5970 = vmatprep.mubr.f32.mxu0 0.0
    %5971 = vmatmul.mubr.f32.gmra.mxu0 %v5869
    %v5972 = vpop.f32.mrf.mxu0
    %v5973 = vadd.f32 0.0, %v5972
    %v5974 = vpop.f32.mrf.mxu0
    %5975 = vdwg.mxu0
    %v5976 = vsel %vm337, %v5938, -inf
    %5977 = vmax.xlane.f32.xlu0 %v5976
    %v5978 = vpop.xlane.xlu0 %5977
    %v5979 = vsel %vm337, %v5943, -inf
    %5980 = vmax.xlane.f32.xlu0 %v5979
    %v5981 = vpop.xlane.xlu0 %5980
    %v5982 = vsel %vm337, %v5948, -inf
    %5983 = vmax.xlane.f32.xlu0 %v5982
    %v5984 = vpop.xlane.xlu0 %5983
    %v5985 = vsel %vm337, %v5953, -inf
    %5986 = vmax.xlane.f32.xlu0 %v5985
    %v5987 = vpop.xlane.xlu0 %5986
    %v5988 = vsel %vm337, %v5958, -inf
    %5989 = vmax.xlane.f32.xlu0 %v5988
    %v5990 = vpop.xlane.xlu0 %5989
    %v5991 = vsel %vm337, %v5963, -inf
    %5992 = vmax.xlane.f32.xlu0 %v5991
    %v5993 = vpop.xlane.xlu0 %5992
    %v5994 = vsel %vm337, %v5968, -inf
    %5995 = vmax.xlane.f32.xlu0 %v5994
    %v5996 = vpop.xlane.xlu0 %5995
    %v5997 = vsel %vm337, %v5973, -inf
    %5998 = vmax.xlane.f32.xlu0 %v5997
    %v5999 = vpop.xlane.xlu0 %5998
    %v6000 = vmax.f32 %v5978, %v5990
    %v6001 = vmax.f32 %v5981, %v5993
    %v6002 = vmax.f32 %v5984, %v5996
    %v6003 = vmax.f32 %v5987, %v5999
    %v6004 = vmax.f32 %v6000, %v6001
    %v6005 = vmax.f32 %v6002, %v6003
    %v6006 = vmax.f32 %v6004, %v6005
    %v6007 = vrot.slane %v6006, 4
    %v6008 = vmax.f32 %v6006, %v6007
    %v6009 = vrot.slane %v6008, 2
    %v6010 = vmax.f32 %v6008, %v6009
    %v6011 = vrot.slane %v6010, 1
    %v6012 = vmax.f32 %v6010, %v6011
    %v6013 = vsub.f32 %v5938, %v6012
    %v6014 = vsub.f32 %v5943, %v6012
    %v6015 = vsub.f32 %v5948, %v6012
    %v6016 = vsub.f32 %v5953, %v6012
    %v6017 = vsub.f32 %v5958, %v6012
    %v6018 = vsub.f32 %v5963, %v6012
    %v6019 = vsub.f32 %v5968, %v6012
    %v6020 = vsub.f32 %v5973, %v6012
    %v6021 = vmul.f32 %v6013, 1.442695
    %v6022 = vpow.pop %v6021
    %v6023 = vmul.f32 %v6014, 1.442695
    %v6024 = vpow.pop %v6023
    %v6025 = vmul.f32 %v6015, 1.442695
    %v6026 = vpow.pop %v6025
    %v6027 = vmul.f32 %v6016, 1.442695
    %v6028 = vpow.pop %v6027
    %v6029 = vmul.f32 %v6017, 1.442695
    %v6030 = vpow.pop %v6029
    %v6031 = vmul.f32 %v6018, 1.442695
    %v6032 = vpow.pop %v6031
    %v6033 = vmul.f32 %v6019, 1.442695
    %v6034 = vpow.pop %v6033
    %v6035 = vmul.f32 %v6020, 1.442695
    %v6036 = vpow.pop %v6035
    %v6037 = vsel %vm337, %v6022, 0.0
    %v6038 = vsel %vm337, %v6024, 0.0
    %v6039 = vadd.f32 %v6037, %v6038
    %v6040 = vsel %vm337, %v6026, 0.0
    %v6041 = vadd.f32 %v6039, %v6040
    %v6042 = vsel %vm337, %v6028, 0.0
    %v6043 = vadd.f32 %v6041, %v6042
    %v6044 = vsel %vm337, %v6030, 0.0
    %v6045 = vadd.f32 %v6043, %v6044
    %v6046 = vsel %vm337, %v6032, 0.0
    %v6047 = vadd.f32 %v6045, %v6046
    %v6048 = vsel %vm337, %v6034, 0.0
    %v6049 = vadd.f32 %v6047, %v6048
    %v6050 = vsel %vm337, %v6036, 0.0
    %v6051 = vadd.f32 %v6049, %v6050
    %v6052 = vrot.slane %v6051, 4
    %v6053 = vadd.f32 %v6051, %v6052
    %v6054 = vrot.slane %v6053, 2
    %v6055 = vadd.f32 %v6053, %v6054
    %v6056 = vrot.slane %v6055, 1
    %v6057 = vadd.f32 %v6055, %v6056
    %v6058 = vrcp.pop %v6057
    %v6059 = vmul.f32 %v6022, %v6058
    %v6060 = vmul.f32 %v6024, %v6058
    %v6061 = vmul.f32 %v6026, %v6058
    %v6062 = vmul.f32 %v6028, %v6058
    %v6063 = vmul.f32 %v6030, %v6058
    %v6064 = vmul.f32 %v6032, %v6058
    %v6065 = vmul.f32 %v6034, %v6058
    %v6066 = vmul.f32 %v6036, %v6058
    %v6067 = vsel %vm337, %v6059, 0.0
    %6068 = vadd.xlane.f32.xlu0 %v6067
    %v6069 = vpop.xlane.xlu0 %6068
    %v6070 = vsel %vm337, %v6060, 0.0
    %6071 = vadd.xlane.f32.xlu0 %v6070
    %v6072 = vpop.xlane.xlu0 %6071
    %v6073 = vsel %vm337, %v6061, 0.0
    %6074 = vadd.xlane.f32.xlu0 %v6073
    %v6075 = vpop.xlane.xlu0 %6074
    %v6076 = vsel %vm337, %v6062, 0.0
    %6077 = vadd.xlane.f32.xlu0 %v6076
    %v6078 = vpop.xlane.xlu0 %6077
    %v6079 = vsel %vm337, %v6063, 0.0
    %6080 = vadd.xlane.f32.xlu0 %v6079
    %v6081 = vpop.xlane.xlu0 %6080
    %v6082 = vsel %vm337, %v6064, 0.0
    %6083 = vadd.xlane.f32.xlu0 %v6082
    %v6084 = vpop.xlane.xlu0 %6083
    %v6085 = vsel %vm337, %v6065, 0.0
    %6086 = vadd.xlane.f32.xlu0 %v6085
    %v6087 = vpop.xlane.xlu0 %6086
    %v6088 = vsel %vm337, %v6066, 0.0
    %6089 = vadd.xlane.f32.xlu0 %v6088
    %v6090 = vpop.xlane.xlu0 %6089
    %v6091 = vadd.f32 %v6069, 1e-09
    %v6092 = vadd.f32 %v6072, 1e-09
    %v6093 = vadd.f32 %v6075, 1e-09
    %v6094 = vadd.f32 %v6078, 1e-09
    %v6095 = vadd.f32 %v6081, 1e-09
    %v6096 = vadd.f32 %v6084, 1e-09
    %v6097 = vadd.f32 %v6087, 1e-09
    %v6098 = vadd.f32 %v6090, 1e-09
    %v6099 = vrcp.pop %v6091
    %v6100 = vrcp.pop %v6092
    %v6101 = vrcp.pop %v6093
    %v6102 = vrcp.pop %v6094
    %v6103 = vrcp.pop %v6095
    %v6104 = vrcp.pop %v6096
    %v6105 = vrcp.pop %v6097
    %v6106 = vrcp.pop %v6098
    %v6107 = vmul.f32 %v6059, %v6099
    %v6108 = vmul.f32 %v6060, %v6100
    %v6109 = vmul.f32 %v6061, %v6101
    %v6110 = vmul.f32 %v6062, %v6102
    %v6111 = vmul.f32 %v6063, %v6103
    %v6112 = vmul.f32 %v6064, %v6104
    %v6113 = vmul.f32 %v6065, %v6105
    %v6114 = vmul.f32 %v6066, %v6106
    %v6116 = vsel %vm337, %v6107, 0
    %v6119 = vsel %vm337, %v6108, 0
    %v6122 = vsel %vm337, %v6109, 0
    %v6125 = vsel %vm337, %v6110, 0
    %v6128 = vsel %vm337, %v6111, 0
    %v6131 = vsel %vm337, %v6112, 0
    %v6134 = vsel %vm337, %v6113, 0
    %v6137 = vsel %vm337, %v6114, 0
    %6139 = vmatprep.subr.mxu0 0.0
    %6140 = vmatpush1.msra.mxu0 0.0
    %6141 = vmatprep.subr.mxu0 0.0
    %6142 = vmatpush1.msra.mxu0 0.0
    %6143 = vmatprep.subr.mxu0 0.0
    %6144 = vmatpush1.msra.mxu0 0.0
    %6145 = vmatprep.subr.mxu0 0.0
    %6146 = vmatpush1.msra.mxu0 0.0
    %6147 = vmatprep.subr.mxu0 0.0
    %6148 = vmatpush1.msra.mxu0 0.0
    %6149 = vmatprep.subr.mxu0 0.0
    %6150 = vmatpush1.msra.mxu0 0.0
    %6151 = vmatprep.subr.mxu0 0.0
    %6152 = vmatpush1.msra.mxu0 0.0
    %6153 = vmatprep.subr.mxu0 0.0
    %6154 = vmatpush1.msra.mxu0 0.0
    %6155 = vmatprep.subr.mxu0 0.0
    %6156 = vmatpush1.msra.mxu0 %v5407
    %6157 = vmatprep.subr.mxu0 0.0
    %6158 = vmatpush1.msra.mxu0 %v5402
    %6159 = vmatprep.subr.mxu0 0.0
    %6160 = vmatpush1.msra.mxu0 %v5397
    %6161 = vmatprep.subr.mxu0 0.0
    %6162 = vmatpush1.msra.mxu0 %v5392
    %6163 = vmatprep.subr.mxu0 0.0
    %6164 = vmatpush1.msra.mxu0 %v5387
    %6165 = vmatprep.subr.mxu0 0.0
    %6166 = vmatpush1.msra.mxu0 %v5382
    %6167 = vmatprep.subr.mxu0 0.0
    %6168 = vmatpush1.msra.mxu0 %v5377
    %6169 = vmatprep.subr.mxu0 0.0
    %6170 = vmatpush1.msra.mxu0 %v5372
    %6171 = vmatprep.subr.mxu0 0.0
    %6172 = vmatpush2.msra.mxu0 0.0
    %6173 = vmatprep.subr.mxu0 0.0
    %6174 = vmatpush2.msra.mxu0 0.0
    %6175 = vmatprep.subr.mxu0 0.0
    %6176 = vmatpush2.msra.mxu0 0.0
    %6177 = vmatprep.subr.mxu0 0.0
    %6178 = vmatpush2.msra.mxu0 0.0
    %6179 = vmatprep.subr.mxu0 0.0
    %6180 = vmatpush2.msra.mxu0 0.0
    %6181 = vmatprep.subr.mxu0 0.0
    %6182 = vmatpush2.msra.mxu0 0.0
    %6183 = vmatprep.subr.mxu0 0.0
    %6184 = vmatpush2.msra.mxu0 0.0
    %6185 = vmatprep.subr.mxu0 0.0
    %6186 = vmatpush2.msra.mxu0 0.0
    %6187 = vmatprep.subr.mxu0 0.0
    %6188 = vmatpush2.msra.mxu0 0.0
    %6189 = vmatprep.subr.mxu0 0.0
    %6190 = vmatpush2.msra.mxu0 0.0
    %6191 = vmatprep.subr.mxu0 0.0
    %6192 = vmatpush2.msra.mxu0 0.0
    %6193 = vmatprep.subr.mxu0 0.0
    %6194 = vmatpush2.msra.mxu0 0.0
    %6195 = vmatprep.subr.mxu0 0.0
    %6196 = vmatpush2.msra.mxu0 0.0
    %6197 = vmatprep.subr.mxu0 0.0
    %6198 = vmatpush2.msra.mxu0 0.0
    %6199 = vmatprep.subr.mxu0 0.0
    %6200 = vmatpush2.msra.mxu0 0.0
    %6201 = vmatprep.subr.mxu0 0.0
    %6202 = vmatpush2.msra.mxu0 0.0
    %6203 = vmatprep.mubr.f32.mxu0 0.0
    %6204 = vmatmul.mubr.f32.gmra.mxu0 %v6116
    %v6205 = vpop.f32.mrf.mxu0
    %v6206 = vadd.f32 0.0, %v6205
    %v6207 = vpop.f32.mrf.mxu0
    %6208 = vmatprep.mubr.f32.mxu0 0.0
    %6209 = vmatmul.mubr.f32.gmra.mxu0 %v6119
    %v6210 = vpop.f32.mrf.mxu0
    %v6211 = vadd.f32 0.0, %v6210
    %v6212 = vpop.f32.mrf.mxu0
    %6213 = vmatprep.mubr.f32.mxu0 0.0
    %6214 = vmatmul.mubr.f32.gmra.mxu0 %v6122
    %v6215 = vpop.f32.mrf.mxu0
    %v6216 = vadd.f32 0.0, %v6215
    %v6217 = vpop.f32.mrf.mxu0
    %6218 = vmatprep.mubr.f32.mxu0 0.0
    %6219 = vmatmul.mubr.f32.gmra.mxu0 %v6125
    %v6220 = vpop.f32.mrf.mxu0
    %v6221 = vadd.f32 0.0, %v6220
    %v6222 = vpop.f32.mrf.mxu0
    %6223 = vmatprep.mubr.f32.mxu0 0.0
    %6224 = vmatmul.mubr.f32.gmra.mxu0 %v6128
    %v6225 = vpop.f32.mrf.mxu0
    %v6226 = vadd.f32 0.0, %v6225
    %v6227 = vpop.f32.mrf.mxu0
    %6228 = vmatprep.mubr.f32.mxu0 0.0
    %6229 = vmatmul.mubr.f32.gmra.mxu0 %v6131
    %v6230 = vpop.f32.mrf.mxu0
    %v6231 = vadd.f32 0.0, %v6230
    %v6232 = vpop.f32.mrf.mxu0
    %6233 = vmatprep.mubr.f32.mxu0 0.0
    %6234 = vmatmul.mubr.f32.gmra.mxu0 %v6134
    %v6235 = vpop.f32.mrf.mxu0
    %v6236 = vadd.f32 0.0, %v6235
    %v6237 = vpop.f32.mrf.mxu0
    %6238 = vmatprep.mubr.f32.mxu0 0.0
    %6239 = vmatmul.mubr.f32.gmra.mxu0 %v6137
    %v6240 = vpop.f32.mrf.mxu0
    %v6241 = vadd.f32 0.0, %v6240
    %v6242 = vpop.f32.mrf.mxu0
    %6243 = vdwg.mxu0
    %v6244 = vsub.f32 %v4982, %v6206
    %v6245 = vsub.f32 %v4983, %v6211
    %v6246 = vsub.f32 %v4984, %v6216
    %v6247 = vsub.f32 %v4985, %v6221
    %v6248 = vsub.f32 %v4986, %v6226
    %v6249 = vsub.f32 %v4987, %v6231
    %v6250 = vsub.f32 %v4988, %v6236
    %v6251 = vsub.f32 %v4989, %v6241
    %s6252 = scalar_lea.vmem [#allocation5], 192
    %v6253 = vld [vmem:[%s6252] sm:$0xff]
    %v6254 = vld [vmem:[%s6252 + $0x8] sm:$0xff]
    %v6255 = vld [vmem:[%s6252 + $0x10] sm:$0xff]
    %v6256 = vld [vmem:[%s6252 + $0x18] sm:$0xff]
    %v6257 = vld [vmem:[%s6252 + $0x20] sm:$0xff]
    %v6258 = vld [vmem:[%s6252 + $0x28] sm:$0xff]
    %v6259 = vld [vmem:[%s6252 + $0x30] sm:$0xff]
    %v6260 = vld [vmem:[%s6252 + $0x38] sm:$0xff]
    %s6261 = scalar_lea.vmem %s8, 3
    %v6262 = vld [vmem:[%s6261] sm:$0x1]
    %v6264 = vlaneseq
    %v6265 = vshrl.u32 %v6264, 7
    %v6266 = vsub.s32 0, %v6265
    %v6267 = vrot.slane %v6262, %v6266
    %v6270 = vsel %vm337, %v5823, 0
    %v6273 = vsel %vm337, %v5824, 0
    %v6276 = vsel %vm337, %v5825, 0
    %v6279 = vsel %vm337, %v5826, 0
    %v6282 = vsel %vm337, %v5827, 0
    %v6285 = vsel %vm337, %v5828, 0
    %v6288 = vsel %vm337, %v5829, 0
    %v6291 = vsel %vm337, %v5830, 0
    %v6294 = vsel %vm337, %v6244, 0
    %v6297 = vsel %vm337, %v6245, 0
    %v6300 = vsel %vm337, %v6246, 0
    %v6303 = vsel %vm337, %v6247, 0
    %v6306 = vsel %vm337, %v6248, 0
    %v6309 = vsel %vm337, %v6249, 0
    %v6312 = vsel %vm337, %v6250, 0
    %v6315 = vsel %vm337, %v6251, 0
    %6317 = vmatprep.subr.mxu0 0.0
    %6318 = vmatpush1.msra.mxu0 0.0
    %6319 = vmatprep.subr.mxu0 0.0
    %6320 = vmatpush1.msra.mxu0 0.0
    %6321 = vmatprep.subr.mxu0 0.0
    %6322 = vmatpush1.msra.mxu0 0.0
    %6323 = vmatprep.subr.mxu0 0.0
    %6324 = vmatpush1.msra.mxu0 0.0
    %6325 = vmatprep.subr.mxu0 0.0
    %6326 = vmatpush1.msra.mxu0 0.0
    %6327 = vmatprep.subr.mxu0 0.0
    %6328 = vmatpush1.msra.mxu0 0.0
    %6329 = vmatprep.subr.mxu0 0.0
    %6330 = vmatpush1.msra.mxu0 0.0
    %6331 = vmatprep.subr.mxu0 0.0
    %6332 = vmatpush1.msra.mxu0 0.0
    %6333 = vmatprep.subr.mxu0 0.0
    %6334 = vmatpush1.msra.mxu0 %v6260
    %6335 = vmatprep.subr.mxu0 0.0
    %6336 = vmatpush1.msra.mxu0 %v6259
    %6337 = vmatprep.subr.mxu0 0.0
    %6338 = vmatpush1.msra.mxu0 %v6258
    %6339 = vmatprep.subr.mxu0 0.0
    %6340 = vmatpush1.msra.mxu0 %v6257
    %6341 = vmatprep.subr.mxu0 0.0
    %6342 = vmatpush1.msra.mxu0 %v6256
    %6343 = vmatprep.subr.mxu0 0.0
    %6344 = vmatpush1.msra.mxu0 %v6255
    %6345 = vmatprep.subr.mxu0 0.0
    %6346 = vmatpush1.msra.mxu0 %v6254
    %6347 = vmatprep.subr.mxu0 0.0
    %6348 = vmatpush1.msra.mxu0 %v6253
    %6349 = vmatprep.subr.mxu0 0.0
    %6350 = vmatpush2.msra.mxu0 0.0
    %6351 = vmatprep.subr.mxu0 0.0
    %6352 = vmatpush2.msra.mxu0 0.0
    %6353 = vmatprep.subr.mxu0 0.0
    %6354 = vmatpush2.msra.mxu0 0.0
    %6355 = vmatprep.subr.mxu0 0.0
    %6356 = vmatpush2.msra.mxu0 0.0
    %6357 = vmatprep.subr.mxu0 0.0
    %6358 = vmatpush2.msra.mxu0 0.0
    %6359 = vmatprep.subr.mxu0 0.0
    %6360 = vmatpush2.msra.mxu0 0.0
    %6361 = vmatprep.subr.mxu0 0.0
    %6362 = vmatpush2.msra.mxu0 0.0
    %6363 = vmatprep.subr.mxu0 0.0
    %6364 = vmatpush2.msra.mxu0 0.0
    %6365 = vmatprep.subr.mxu0 0.0
    %6366 = vmatpush2.msra.mxu0 0.0
    %6367 = vmatprep.subr.mxu0 0.0
    %6368 = vmatpush2.msra.mxu0 0.0
    %6369 = vmatprep.subr.mxu0 0.0
    %6370 = vmatpush2.msra.mxu0 0.0
    %6371 = vmatprep.subr.mxu0 0.0
    %6372 = vmatpush2.msra.mxu0 0.0
    %6373 = vmatprep.subr.mxu0 0.0
    %6374 = vmatpush2.msra.mxu0 0.0
    %6375 = vmatprep.subr.mxu0 0.0
    %6376 = vmatpush2.msra.mxu0 0.0
    %6377 = vmatprep.subr.mxu0 0.0
    %6378 = vmatpush2.msra.mxu0 0.0
    %6379 = vmatprep.subr.mxu0 0.0
    %6380 = vmatpush2.msra.mxu0 0.0
    %6381 = vmatprep.mubr.f32.mxu0 0.0
    %6382 = vmatmul.mubr.f32.gmra.mxu0 %v6270
    %v6383 = vpop.f32.mrf.mxu0
    %v6384 = vadd.f32 %v6267, %v6383
    %v6385 = vpop.f32.mrf.mxu0
    %6386 = vmatprep.mubr.f32.mxu0 0.0
    %6387 = vmatmul.mubr.f32.gmra.mxu0 %v6273
    %v6388 = vpop.f32.mrf.mxu0
    %v6389 = vadd.f32 %v6267, %v6388
    %v6390 = vpop.f32.mrf.mxu0
    %6391 = vmatprep.mubr.f32.mxu0 0.0
    %6392 = vmatmul.mubr.f32.gmra.mxu0 %v6276
    %v6393 = vpop.f32.mrf.mxu0
    %v6394 = vadd.f32 %v6267, %v6393
    %v6395 = vpop.f32.mrf.mxu0
    %6396 = vmatprep.mubr.f32.mxu0 0.0
    %6397 = vmatmul.mubr.f32.gmra.mxu0 %v6279
    %v6398 = vpop.f32.mrf.mxu0
    %v6399 = vadd.f32 %v6267, %v6398
    %v6400 = vpop.f32.mrf.mxu0
    %6401 = vmatprep.mubr.f32.mxu0 0.0
    %6402 = vmatmul.mubr.f32.gmra.mxu0 %v6282
    %v6403 = vpop.f32.mrf.mxu0
    %v6404 = vadd.f32 %v6267, %v6403
    %v6405 = vpop.f32.mrf.mxu0
    %6406 = vmatprep.mubr.f32.mxu0 0.0
    %6407 = vmatmul.mubr.f32.gmra.mxu0 %v6285
    %v6408 = vpop.f32.mrf.mxu0
    %v6409 = vadd.f32 %v6267, %v6408
    %v6410 = vpop.f32.mrf.mxu0
    %6411 = vmatprep.mubr.f32.mxu0 0.0
    %6412 = vmatmul.mubr.f32.gmra.mxu0 %v6288
    %v6413 = vpop.f32.mrf.mxu0
    %v6414 = vadd.f32 %v6267, %v6413
    %v6415 = vpop.f32.mrf.mxu0
    %6416 = vmatprep.mubr.f32.mxu0 0.0
    %6417 = vmatmul.mubr.f32.gmra.mxu0 %v6291
    %v6418 = vpop.f32.mrf.mxu0
    %v6419 = vadd.f32 %v6267, %v6418
    %v6420 = vpop.f32.mrf.mxu0
    %6421 = vmatprep.mubr.f32.mxu0 0.0
    %6422 = vmatmul.mubr.f32.gmra.mxu0 %v6294
    %v6423 = vpop.f32.mrf.mxu0
    %v6424 = vadd.f32 %v6267, %v6423
    %v6425 = vpop.f32.mrf.mxu0
    %6426 = vmatprep.mubr.f32.mxu0 0.0
    %6427 = vmatmul.mubr.f32.gmra.mxu0 %v6297
    %v6428 = vpop.f32.mrf.mxu0
    %v6429 = vadd.f32 %v6267, %v6428
    %v6430 = vpop.f32.mrf.mxu0
    %6431 = vmatprep.mubr.f32.mxu0 0.0
    %6432 = vmatmul.mubr.f32.gmra.mxu0 %v6300
    %v6433 = vpop.f32.mrf.mxu0
    %v6434 = vadd.f32 %v6267, %v6433
    %v6435 = vpop.f32.mrf.mxu0
    %6436 = vmatprep.mubr.f32.mxu0 0.0
    %6437 = vmatmul.mubr.f32.gmra.mxu0 %v6303
    %v6438 = vpop.f32.mrf.mxu0
    %v6439 = vadd.f32 %v6267, %v6438
    %v6440 = vpop.f32.mrf.mxu0
    %6441 = vmatprep.mubr.f32.mxu0 0.0
    %6442 = vmatmul.mubr.f32.gmra.mxu0 %v6306
    %v6443 = vpop.f32.mrf.mxu0
    %v6444 = vadd.f32 %v6267, %v6443
    %v6445 = vpop.f32.mrf.mxu0
    %6446 = vmatprep.mubr.f32.mxu0 0.0
    %6447 = vmatmul.mubr.f32.gmra.mxu0 %v6309
    %v6448 = vpop.f32.mrf.mxu0
    %v6449 = vadd.f32 %v6267, %v6448
    %v6450 = vpop.f32.mrf.mxu0
    %6451 = vmatprep.mubr.f32.mxu0 0.0
    %6452 = vmatmul.mubr.f32.gmra.mxu0 %v6312
    %v6453 = vpop.f32.mrf.mxu0
    %v6454 = vadd.f32 %v6267, %v6453
    %v6455 = vpop.f32.mrf.mxu0
    %6456 = vmatprep.mubr.f32.mxu0 0.0
    %6457 = vmatmul.mubr.f32.gmra.mxu0 %v6315
    %v6458 = vpop.f32.mrf.mxu0
    %v6459 = vadd.f32 %v6267, %v6458
    %v6460 = vpop.f32.mrf.mxu0
    %6461 = vdwg.mxu0
    %v6462 = vmax.f32 %v6384, 0.0
    %v6463 = vmax.f32 %v6389, 0.0
    %v6464 = vmax.f32 %v6394, 0.0
    %v6465 = vmax.f32 %v6399, 0.0
    %v6466 = vmax.f32 %v6404, 0.0
    %v6467 = vmax.f32 %v6409, 0.0
    %v6468 = vmax.f32 %v6414, 0.0
    %v6469 = vmax.f32 %v6419, 0.0
    %v6470 = vmax.f32 %v6424, 0.0
    %v6471 = vmax.f32 %v6429, 0.0
    %v6472 = vmax.f32 %v6434, 0.0
    %v6473 = vmax.f32 %v6439, 0.0
    %v6474 = vmax.f32 %v6444, 0.0
    %v6475 = vmax.f32 %v6449, 0.0
    %v6476 = vmax.f32 %v6454, 0.0
    %v6477 = vmax.f32 %v6459, 0.0
    %v6478 = vadd.f32 %v4974, %v6462
    %v6479 = vadd.f32 %v4975, %v6463
    %v6480 = vadd.f32 %v4976, %v6464
    %v6481 = vadd.f32 %v4977, %v6465
    %v6482 = vadd.f32 %v4978, %v6466
    %v6483 = vadd.f32 %v4979, %v6467
    %v6484 = vadd.f32 %v4980, %v6468
    %v6485 = vadd.f32 %v4981, %v6469
    %v6486 = vadd.f32 %v4982, %v6470
    %v6487 = vadd.f32 %v4983, %v6471
    %v6488 = vadd.f32 %v4984, %v6472
    %v6489 = vadd.f32 %v4985, %v6473
    %v6490 = vadd.f32 %v4986, %v6474
    %v6491 = vadd.f32 %v4987, %v6475
    %v6492 = vadd.f32 %v4988, %v6476
    %v6493 = vadd.f32 %v4989, %v6477
    %s6494 = scalar_lea.vmem [#allocation7], 512
    %v6495 = vld [vmem:[%s6494] sm:$0xff]
    %v6496 = vld [vmem:[%s6494 + $0x8] sm:$0xff]
    %v6497 = vld [vmem:[%s6494 + $0x10] sm:$0xff]
    %v6498 = vld [vmem:[%s6494 + $0x18] sm:$0xff]
    %v6499 = vld [vmem:[%s6494 + $0x20] sm:$0xff]
    %v6500 = vld [vmem:[%s6494 + $0x28] sm:$0xff]
    %v6501 = vld [vmem:[%s6494 + $0x30] sm:$0xff]
    %v6502 = vld [vmem:[%s6494 + $0x38] sm:$0xff]
    %v6503 = vld [vmem:[%s6494 + $0x40] sm:$0xff]
    %v6504 = vld [vmem:[%s6494 + $0x48] sm:$0xff]
    %v6505 = vld [vmem:[%s6494 + $0x50] sm:$0xff]
    %v6506 = vld [vmem:[%s6494 + $0x58] sm:$0xff]
    %v6507 = vld [vmem:[%s6494 + $0x60] sm:$0xff]
    %v6508 = vld [vmem:[%s6494 + $0x68] sm:$0xff]
    %v6509 = vld [vmem:[%s6494 + $0x70] sm:$0xff]
    %v6510 = vld [vmem:[%s6494 + $0x78] sm:$0xff]
    %v6512 = vsel %vm337, %v6478, 0
    %v6515 = vsel %vm337, %v6479, 0
    %v6518 = vsel %vm337, %v6480, 0
    %v6521 = vsel %vm337, %v6481, 0
    %v6524 = vsel %vm337, %v6482, 0
    %v6527 = vsel %vm337, %v6483, 0
    %v6530 = vsel %vm337, %v6484, 0
    %v6533 = vsel %vm337, %v6485, 0
    %v6536 = vsel %vm337, %v6486, 0
    %v6539 = vsel %vm337, %v6487, 0
    %v6542 = vsel %vm337, %v6488, 0
    %v6545 = vsel %vm337, %v6489, 0
    %v6548 = vsel %vm337, %v6490, 0
    %v6551 = vsel %vm337, %v6491, 0
    %v6554 = vsel %vm337, %v6492, 0
    %v6557 = vsel %vm337, %v6493, 0
    %6559 = vmatprep.subr.mxu0 0.0
    %6560 = vmatpush1.msra.mxu0 0.0
    %6561 = vmatprep.subr.mxu0 0.0
    %6562 = vmatpush1.msra.mxu0 0.0
    %6563 = vmatprep.subr.mxu0 0.0
    %6564 = vmatpush1.msra.mxu0 0.0
    %6565 = vmatprep.subr.mxu0 0.0
    %6566 = vmatpush1.msra.mxu0 0.0
    %6567 = vmatprep.subr.mxu0 0.0
    %6568 = vmatpush1.msra.mxu0 0.0
    %6569 = vmatprep.subr.mxu0 0.0
    %6570 = vmatpush1.msra.mxu0 0.0
    %6571 = vmatprep.subr.mxu0 0.0
    %6572 = vmatpush1.msra.mxu0 0.0
    %6573 = vmatprep.subr.mxu0 0.0
    %6574 = vmatpush1.msra.mxu0 0.0
    %6575 = vmatprep.subr.mxu0 %v6510
    %6576 = vmatpush1.msra.mxu0 %v6509
    %6577 = vmatprep.subr.mxu0 %v6508
    %6578 = vmatpush1.msra.mxu0 %v6507
    %6579 = vmatprep.subr.mxu0 %v6506
    %6580 = vmatpush1.msra.mxu0 %v6505
    %6581 = vmatprep.subr.mxu0 %v6504
    %6582 = vmatpush1.msra.mxu0 %v6503
    %6583 = vmatprep.subr.mxu0 %v6502
    %6584 = vmatpush1.msra.mxu0 %v6501
    %6585 = vmatprep.subr.mxu0 %v6500
    %6586 = vmatpush1.msra.mxu0 %v6499
    %6587 = vmatprep.subr.mxu0 %v6498
    %6588 = vmatpush1.msra.mxu0 %v6497
    %6589 = vmatprep.subr.mxu0 %v6496
    %6590 = vmatpush1.msra.mxu0 %v6495
    %6591 = vmatprep.subr.mxu0 0.0
    %6592 = vmatpush2.msra.mxu0 0.0
    %6593 = vmatprep.subr.mxu0 0.0
    %6594 = vmatpush2.msra.mxu0 0.0
    %6595 = vmatprep.subr.mxu0 0.0
    %6596 = vmatpush2.msra.mxu0 0.0
    %6597 = vmatprep.subr.mxu0 0.0
    %6598 = vmatpush2.msra.mxu0 0.0
    %6599 = vmatprep.subr.mxu0 0.0
    %6600 = vmatpush2.msra.mxu0 0.0
    %6601 = vmatprep.subr.mxu0 0.0
    %6602 = vmatpush2.msra.mxu0 0.0
    %6603 = vmatprep.subr.mxu0 0.0
    %6604 = vmatpush2.msra.mxu0 0.0
    %6605 = vmatprep.subr.mxu0 0.0
    %6606 = vmatpush2.msra.mxu0 0.0
    %6607 = vmatprep.subr.mxu0 0.0
    %6608 = vmatpush2.msra.mxu0 0.0
    %6609 = vmatprep.subr.mxu0 0.0
    %6610 = vmatpush2.msra.mxu0 0.0
    %6611 = vmatprep.subr.mxu0 0.0
    %6612 = vmatpush2.msra.mxu0 0.0
    %6613 = vmatprep.subr.mxu0 0.0
    %6614 = vmatpush2.msra.mxu0 0.0
    %6615 = vmatprep.subr.mxu0 0.0
    %6616 = vmatpush2.msra.mxu0 0.0
    %6617 = vmatprep.subr.mxu0 0.0
    %6618 = vmatpush2.msra.mxu0 0.0
    %6619 = vmatprep.subr.mxu0 0.0
    %6620 = vmatpush2.msra.mxu0 0.0
    %6621 = vmatprep.subr.mxu0 0.0
    %6622 = vmatpush2.msra.mxu0 0.0
    %6623 = vmatprep.mubr.f32.mxu0 0.0
    %6624 = vmatmul.mubr.f32.gmra.mxu0 %v6512
    %v6625 = vpop.f32.mrf.mxu0
    %v6626 = vadd.f32 0.0, %v6625
    %v6627 = vpop.f32.mrf.mxu0
    %v6628 = vadd.f32 0.0, %v6627
    %6629 = vmatprep.mubr.f32.mxu0 0.0
    %6630 = vmatmul.mubr.f32.gmra.mxu0 %v6515
    %v6631 = vpop.f32.mrf.mxu0
    %v6632 = vadd.f32 0.0, %v6631
    %v6633 = vpop.f32.mrf.mxu0
    %v6634 = vadd.f32 0.0, %v6633
    %6635 = vmatprep.mubr.f32.mxu0 0.0
    %6636 = vmatmul.mubr.f32.gmra.mxu0 %v6518
    %v6637 = vpop.f32.mrf.mxu0
    %v6638 = vadd.f32 0.0, %v6637
    %v6639 = vpop.f32.mrf.mxu0
    %v6640 = vadd.f32 0.0, %v6639
    %6641 = vmatprep.mubr.f32.mxu0 0.0
    %6642 = vmatmul.mubr.f32.gmra.mxu0 %v6521
    %v6643 = vpop.f32.mrf.mxu0
    %v6644 = vadd.f32 0.0, %v6643
    %v6645 = vpop.f32.mrf.mxu0
    %v6646 = vadd.f32 0.0, %v6645
    %6647 = vmatprep.mubr.f32.mxu0 0.0
    %6648 = vmatmul.mubr.f32.gmra.mxu0 %v6524
    %v6649 = vpop.f32.mrf.mxu0
    %v6650 = vadd.f32 0.0, %v6649
    %v6651 = vpop.f32.mrf.mxu0
    %v6652 = vadd.f32 0.0, %v6651
    %6653 = vmatprep.mubr.f32.mxu0 0.0
    %6654 = vmatmul.mubr.f32.gmra.mxu0 %v6527
    %v6655 = vpop.f32.mrf.mxu0
    %v6656 = vadd.f32 0.0, %v6655
    %v6657 = vpop.f32.mrf.mxu0
    %v6658 = vadd.f32 0.0, %v6657
    %6659 = vmatprep.mubr.f32.mxu0 0.0
    %6660 = vmatmul.mubr.f32.gmra.mxu0 %v6530
    %v6661 = vpop.f32.mrf.mxu0
    %v6662 = vadd.f32 0.0, %v6661
    %v6663 = vpop.f32.mrf.mxu0
    %v6664 = vadd.f32 0.0, %v6663
    %6665 = vmatprep.mubr.f32.mxu0 0.0
    %6666 = vmatmul.mubr.f32.gmra.mxu0 %v6533
    %v6667 = vpop.f32.mrf.mxu0
    %v6668 = vadd.f32 0.0, %v6667
    %v6669 = vpop.f32.mrf.mxu0
    %v6670 = vadd.f32 0.0, %v6669
    %6671 = vmatprep.mubr.f32.mxu0 0.0
    %6672 = vmatmul.mubr.f32.gmra.mxu0 %v6536
    %v6673 = vpop.f32.mrf.mxu0
    %v6674 = vadd.f32 0.0, %v6673
    %v6675 = vpop.f32.mrf.mxu0
    %v6676 = vadd.f32 0.0, %v6675
    %6677 = vmatprep.mubr.f32.mxu0 0.0
    %6678 = vmatmul.mubr.f32.gmra.mxu0 %v6539
    %v6679 = vpop.f32.mrf.mxu0
    %v6680 = vadd.f32 0.0, %v6679
    %v6681 = vpop.f32.mrf.mxu0
    %v6682 = vadd.f32 0.0, %v6681
    %6683 = vmatprep.mubr.f32.mxu0 0.0
    %6684 = vmatmul.mubr.f32.gmra.mxu0 %v6542
    %v6685 = vpop.f32.mrf.mxu0
    %v6686 = vadd.f32 0.0, %v6685
    %v6687 = vpop.f32.mrf.mxu0
    %v6688 = vadd.f32 0.0, %v6687
    %6689 = vmatprep.mubr.f32.mxu0 0.0
    %6690 = vmatmul.mubr.f32.gmra.mxu0 %v6545
    %v6691 = vpop.f32.mrf.mxu0
    %v6692 = vadd.f32 0.0, %v6691
    %v6693 = vpop.f32.mrf.mxu0
    %v6694 = vadd.f32 0.0, %v6693
    %6695 = vmatprep.mubr.f32.mxu0 0.0
    %6696 = vmatmul.mubr.f32.gmra.mxu0 %v6548
    %v6697 = vpop.f32.mrf.mxu0
    %v6698 = vadd.f32 0.0, %v6697
    %v6699 = vpop.f32.mrf.mxu0
    %v6700 = vadd.f32 0.0, %v6699
    %6701 = vmatprep.mubr.f32.mxu0 0.0
    %6702 = vmatmul.mubr.f32.gmra.mxu0 %v6551
    %v6703 = vpop.f32.mrf.mxu0
    %v6704 = vadd.f32 0.0, %v6703
    %v6705 = vpop.f32.mrf.mxu0
    %v6706 = vadd.f32 0.0, %v6705
    %6707 = vmatprep.mubr.f32.mxu0 0.0
    %6708 = vmatmul.mubr.f32.gmra.mxu0 %v6554
    %v6709 = vpop.f32.mrf.mxu0
    %v6710 = vadd.f32 0.0, %v6709
    %v6711 = vpop.f32.mrf.mxu0
    %v6712 = vadd.f32 0.0, %v6711
    %6713 = vmatprep.mubr.f32.mxu0 0.0
    %6714 = vmatmul.mubr.f32.gmra.mxu0 %v6557
    %v6715 = vpop.f32.mrf.mxu0
    %v6716 = vadd.f32 0.0, %v6715
    %v6717 = vpop.f32.mrf.mxu0
    %v6718 = vadd.f32 0.0, %v6717
    %6719 = vdwg.mxu0
    %v6720 = vadd.f32 %v5216, %v6626
    %v6721 = vadd.f32 %v5217, %v6628
    %v6722 = vadd.f32 %v5218, %v6632
    %v6723 = vadd.f32 %v5219, %v6634
    %v6724 = vadd.f32 %v5220, %v6638
    %v6725 = vadd.f32 %v5221, %v6640
    %v6726 = vadd.f32 %v5222, %v6644
    %v6727 = vadd.f32 %v5223, %v6646
    %v6728 = vadd.f32 %v5224, %v6650
    %v6729 = vadd.f32 %v5225, %v6652
    %v6730 = vadd.f32 %v5226, %v6656
    %v6731 = vadd.f32 %v5227, %v6658
    %v6732 = vadd.f32 %v5228, %v6662
    %v6733 = vadd.f32 %v5229, %v6664
    %v6734 = vadd.f32 %v5230, %v6668
    %v6735 = vadd.f32 %v5231, %v6670
    %v6736 = vadd.f32 %v5232, %v6674
    %v6737 = vadd.f32 %v5233, %v6676
    %v6738 = vadd.f32 %v5234, %v6680
    %v6739 = vadd.f32 %v5235, %v6682
    %v6740 = vadd.f32 %v5236, %v6686
    %v6741 = vadd.f32 %v5237, %v6688
    %v6742 = vadd.f32 %v5238, %v6692
    %v6743 = vadd.f32 %v5239, %v6694
    %v6744 = vadd.f32 %v5240, %v6698
    %v6745 = vadd.f32 %v5241, %v6700
    %v6746 = vadd.f32 %v5242, %v6704
    %v6747 = vadd.f32 %v5243, %v6706
    %v6748 = vadd.f32 %v5244, %v6710
    %v6749 = vadd.f32 %v5245, %v6712
    %v6750 = vadd.f32 %v5246, %v6716
    %v6751 = vadd.f32 %v5247, %v6718
    %v6752 = vld [vmem:[%s10] sm:$0x3]
    %v6754 = vlaneseq
    %v6755 = vshrl.u32 %v6754, 7
    %v6756 = vsub.s32 0, %v6755
    %v6757 = vrot.slane %v6752, %v6756
    %v6758 = vlaneseq
    %v6759 = vshrl.u32 %v6758, 7
    %v6760 = vsub.s32 1, %v6759
    %v6761 = vrot.slane %v6752, %v6760
    %v6764 = vadd.f32 %v6720, %v6757
    %v6765 = vadd.f32 %v6721, %v6761
    %v6766 = vadd.f32 %v6722, %v6757
    %v6767 = vadd.f32 %v6723, %v6761
    %v6768 = vadd.f32 %v6724, %v6757
    %v6769 = vadd.f32 %v6725, %v6761
    %v6770 = vadd.f32 %v6726, %v6757
    %v6771 = vadd.f32 %v6727, %v6761
    %v6772 = vadd.f32 %v6728, %v6757
    %v6773 = vadd.f32 %v6729, %v6761
    %v6774 = vadd.f32 %v6730, %v6757
    %v6775 = vadd.f32 %v6731, %v6761
    %v6776 = vadd.f32 %v6732, %v6757
    %v6777 = vadd.f32 %v6733, %v6761
    %v6778 = vadd.f32 %v6734, %v6757
    %v6779 = vadd.f32 %v6735, %v6761
    %v6780 = vadd.f32 %v6736, %v6757
    %v6781 = vadd.f32 %v6737, %v6761
    %v6782 = vadd.f32 %v6738, %v6757
    %v6783 = vadd.f32 %v6739, %v6761
    %v6784 = vadd.f32 %v6740, %v6757
    %v6785 = vadd.f32 %v6741, %v6761
    %v6786 = vadd.f32 %v6742, %v6757
    %v6787 = vadd.f32 %v6743, %v6761
    %v6788 = vadd.f32 %v6744, %v6757
    %v6789 = vadd.f32 %v6745, %v6761
    %v6790 = vadd.f32 %v6746, %v6757
    %v6791 = vadd.f32 %v6747, %v6761
    %v6792 = vadd.f32 %v6748, %v6757
    %v6793 = vadd.f32 %v6749, %v6761
    %v6794 = vadd.f32 %v6750, %v6757
    %v6795 = vadd.f32 %v6751, %v6761
    %vm6796 = vcmp.ge.f32.partialorder %v6764, 0.0
    %vm6797 = vcmp.ge.f32.partialorder %v6765, 0.0
    %vm6798 = vcmp.ge.f32.partialorder %v6766, 0.0
    %vm6799 = vcmp.ge.f32.partialorder %v6767, 0.0
    %vm6800 = vcmp.ge.f32.partialorder %v6768, 0.0
    %vm6801 = vcmp.ge.f32.partialorder %v6769, 0.0
    %vm6802 = vcmp.ge.f32.partialorder %v6770, 0.0
    %vm6803 = vcmp.ge.f32.partialorder %v6771, 0.0
    %vm6804 = vcmp.ge.f32.partialorder %v6772, 0.0
    %vm6805 = vcmp.ge.f32.partialorder %v6773, 0.0
    %vm6806 = vcmp.ge.f32.partialorder %v6774, 0.0
    %vm6807 = vcmp.ge.f32.partialorder %v6775, 0.0
    %vm6808 = vcmp.ge.f32.partialorder %v6776, 0.0
    %vm6809 = vcmp.ge.f32.partialorder %v6777, 0.0
    %vm6810 = vcmp.ge.f32.partialorder %v6778, 0.0
    %vm6811 = vcmp.ge.f32.partialorder %v6779, 0.0
    %vm6812 = vcmp.ge.f32.partialorder %v6780, 0.0
    %vm6813 = vcmp.ge.f32.partialorder %v6781, 0.0
    %vm6814 = vcmp.ge.f32.partialorder %v6782, 0.0
    %vm6815 = vcmp.ge.f32.partialorder %v6783, 0.0
    %vm6816 = vcmp.ge.f32.partialorder %v6784, 0.0
    %vm6817 = vcmp.ge.f32.partialorder %v6785, 0.0
    %vm6818 = vcmp.ge.f32.partialorder %v6786, 0.0
    %vm6819 = vcmp.ge.f32.partialorder %v6787, 0.0
    %vm6820 = vcmp.ge.f32.partialorder %v6788, 0.0
    %vm6821 = vcmp.ge.f32.partialorder %v6789, 0.0
    %vm6822 = vcmp.ge.f32.partialorder %v6790, 0.0
    %vm6823 = vcmp.ge.f32.partialorder %v6791, 0.0
    %vm6824 = vcmp.ge.f32.partialorder %v6792, 0.0
    %vm6825 = vcmp.ge.f32.partialorder %v6793, 0.0
    %vm6826 = vcmp.ge.f32.partialorder %v6794, 0.0
    %vm6827 = vcmp.ge.f32.partialorder %v6795, 0.0
    %v6828 = vmul.f32 %v6764, 0.2
    %v6829 = vmul.f32 %v6765, 0.2
    %v6830 = vmul.f32 %v6766, 0.2
    %v6831 = vmul.f32 %v6767, 0.2
    %v6832 = vmul.f32 %v6768, 0.2
    %v6833 = vmul.f32 %v6769, 0.2
    %v6834 = vmul.f32 %v6770, 0.2
    %v6835 = vmul.f32 %v6771, 0.2
    %v6836 = vmul.f32 %v6772, 0.2
    %v6837 = vmul.f32 %v6773, 0.2
    %v6838 = vmul.f32 %v6774, 0.2
    %v6839 = vmul.f32 %v6775, 0.2
    %v6840 = vmul.f32 %v6776, 0.2
    %v6841 = vmul.f32 %v6777, 0.2
    %v6842 = vmul.f32 %v6778, 0.2
    %v6843 = vmul.f32 %v6779, 0.2
    %v6844 = vmul.f32 %v6780, 0.2
    %v6845 = vmul.f32 %v6781, 0.2
    %v6846 = vmul.f32 %v6782, 0.2
    %v6847 = vmul.f32 %v6783, 0.2
    %v6848 = vmul.f32 %v6784, 0.2
    %v6849 = vmul.f32 %v6785, 0.2
    %v6850 = vmul.f32 %v6786, 0.2
    %v6851 = vmul.f32 %v6787, 0.2
    %v6852 = vmul.f32 %v6788, 0.2
    %v6853 = vmul.f32 %v6789, 0.2
    %v6854 = vmul.f32 %v6790, 0.2
    %v6855 = vmul.f32 %v6791, 0.2
    %v6856 = vmul.f32 %v6792, 0.2
    %v6857 = vmul.f32 %v6793, 0.2
    %v6858 = vmul.f32 %v6794, 0.2
    %v6859 = vmul.f32 %v6795, 0.2
    %v6860 = vsel %vm6796, %v6764, %v6828
    %v6861 = vsel %vm6797, %v6765, %v6829
    %v6862 = vsel %vm6798, %v6766, %v6830
    %v6863 = vsel %vm6799, %v6767, %v6831
    %v6864 = vsel %vm6800, %v6768, %v6832
    %v6865 = vsel %vm6801, %v6769, %v6833
    %v6866 = vsel %vm6802, %v6770, %v6834
    %v6867 = vsel %vm6803, %v6771, %v6835
    %v6868 = vsel %vm6804, %v6772, %v6836
    %v6869 = vsel %vm6805, %v6773, %v6837
    %v6870 = vsel %vm6806, %v6774, %v6838
    %v6871 = vsel %vm6807, %v6775, %v6839
    %v6872 = vsel %vm6808, %v6776, %v6840
    %v6873 = vsel %vm6809, %v6777, %v6841
    %v6874 = vsel %vm6810, %v6778, %v6842
    %v6875 = vsel %vm6811, %v6779, %v6843
    %v6876 = vsel %vm6812, %v6780, %v6844
    %v6877 = vsel %vm6813, %v6781, %v6845
    %v6878 = vsel %vm6814, %v6782, %v6846
    %v6879 = vsel %vm6815, %v6783, %v6847
    %v6880 = vsel %vm6816, %v6784, %v6848
    %v6881 = vsel %vm6817, %v6785, %v6849
    %v6882 = vsel %vm6818, %v6786, %v6850
    %v6883 = vsel %vm6819, %v6787, %v6851
    %v6884 = vsel %vm6820, %v6788, %v6852
    %v6885 = vsel %vm6821, %v6789, %v6853
    %v6886 = vsel %vm6822, %v6790, %v6854
    %v6887 = vsel %vm6823, %v6791, %v6855
    %v6888 = vsel %vm6824, %v6792, %v6856
    %v6889 = vsel %vm6825, %v6793, %v6857
    %v6890 = vsel %vm6826, %v6794, %v6858
    %v6891 = vsel %vm6827, %v6795, %v6859
    %6892 = vxpose.xlu0.b32.start [1/16] %v6860, 128
    %6893 = vxpose.xlu0.b32.cont [2/16] %v6862, 128
    %6894 = vxpose.xlu0.b32.cont [3/16] %v6864, 128
    %6895 = vxpose.xlu0.b32.cont [4/16] %v6866, 128
    %6896 = vxpose.xlu0.b32.cont [5/16] %v6868, 128
    %6897 = vxpose.xlu0.b32.cont [6/16] %v6870, 128
    %6898 = vxpose.xlu0.b32.cont [7/16] %v6872, 128
    %6899 = vxpose.xlu0.b32.cont [8/16] %v6874, 128
    %6900 = vxpose.xlu0.b32.cont [9/16] 0.0, 128
    %6901 = vxpose.xlu0.b32.cont [10/16] 0.0, 128
    %6902 = vxpose.xlu0.b32.cont [11/16] 0.0, 128
    %6903 = vxpose.xlu0.b32.cont [12/16] 0.0, 128
    %6904 = vxpose.xlu0.b32.cont [13/16] 0.0, 128
    %6905 = vxpose.xlu0.b32.cont [14/16] 0.0, 128
    %6906 = vxpose.xlu0.b32.cont [15/16] 0.0, 128
    %6907 = vxpose.xlu0.b32.end [16/16] 0.0, 128
    %v6908 = vpop.trf.xlu0
    %v6909 = vpop.trf.xlu0
    %v6910 = vpop.trf.xlu0
    %v6911 = vpop.trf.xlu0
    %v6912 = vpop.trf.xlu0
    %v6913 = vpop.trf.xlu0
    %v6914 = vpop.trf.xlu0
    %v6915 = vpop.trf.xlu0
    %v6916 = vpop.trf.xlu0
    %v6917 = vpop.trf.xlu0
    %v6918 = vpop.trf.xlu0
    %v6919 = vpop.trf.xlu0
    %v6920 = vpop.trf.xlu0
    %v6921 = vpop.trf.xlu0
    %v6922 = vpop.trf.xlu0
    %v6923 = vpop.trf.xlu0
    %6924 = vxpose.xlu0.b32.start [1/16] %v6861, 128
    %6925 = vxpose.xlu0.b32.cont [2/16] %v6863, 128
    %6926 = vxpose.xlu0.b32.cont [3/16] %v6865, 128
    %6927 = vxpose.xlu0.b32.cont [4/16] %v6867, 128
    %6928 = vxpose.xlu0.b32.cont [5/16] %v6869, 128
    %6929 = vxpose.xlu0.b32.cont [6/16] %v6871, 128
    %6930 = vxpose.xlu0.b32.cont [7/16] %v6873, 128
    %6931 = vxpose.xlu0.b32.cont [8/16] %v6875, 128
    %6932 = vxpose.xlu0.b32.cont [9/16] 0.0, 128
    %6933 = vxpose.xlu0.b32.cont [10/16] 0.0, 128
    %6934 = vxpose.xlu0.b32.cont [11/16] 0.0, 128
    %6935 = vxpose.xlu0.b32.cont [12/16] 0.0, 128
    %6936 = vxpose.xlu0.b32.cont [13/16] 0.0, 128
    %6937 = vxpose.xlu0.b32.cont [14/16] 0.0, 128
    %6938 = vxpose.xlu0.b32.cont [15/16] 0.0, 128
    %6939 = vxpose.xlu0.b32.end [16/16] 0.0, 128
    %v6940 = vpop.trf.xlu0
    %v6941 = vpop.trf.xlu0
    %v6942 = vpop.trf.xlu0
    %v6943 = vpop.trf.xlu0
    %v6944 = vpop.trf.xlu0
    %v6945 = vpop.trf.xlu0
    %v6946 = vpop.trf.xlu0
    %v6947 = vpop.trf.xlu0
    %v6948 = vpop.trf.xlu0
    %v6949 = vpop.trf.xlu0
    %v6950 = vpop.trf.xlu0
    %v6951 = vpop.trf.xlu0
    %v6952 = vpop.trf.xlu0
    %v6953 = vpop.trf.xlu0
    %v6954 = vpop.trf.xlu0
    %v6955 = vpop.trf.xlu0
    %6956 = vst.msk [vmem:[%s11] sm:$0xff] %vm337, %v6908
    %6957 = vst.msk [vmem:[%s11 + $0x8] sm:$0xff] %vm337, %v6909
    %6958 = vst.msk [vmem:[%s11 + $0x10] sm:$0xff] %vm337, %v6910
    %6959 = vst.msk [vmem:[%s11 + $0x18] sm:$0xff] %vm337, %v6911
    %6960 = vst.msk [vmem:[%s11 + $0x20] sm:$0xff] %vm337, %v6912
    %6961 = vst.msk [vmem:[%s11 + $0x28] sm:$0xff] %vm337, %v6913
    %6962 = vst.msk [vmem:[%s11 + $0x30] sm:$0xff] %vm337, %v6914
    %6963 = vst.msk [vmem:[%s11 + $0x38] sm:$0xff] %vm337, %v6915
    %6964 = vst.msk [vmem:[%s11 + $0x40] sm:$0xff] %vm337, %v6916
    %6965 = vst.msk [vmem:[%s11 + $0x48] sm:$0xff] %vm337, %v6917
    %6966 = vst.msk [vmem:[%s11 + $0x50] sm:$0xff] %vm337, %v6918
    %6967 = vst.msk [vmem:[%s11 + $0x58] sm:$0xff] %vm337, %v6919
    %6968 = vst.msk [vmem:[%s11 + $0x60] sm:$0xff] %vm337, %v6920
    %6969 = vst.msk [vmem:[%s11 + $0x68] sm:$0xff] %vm337, %v6921
    %6970 = vst.msk [vmem:[%s11 + $0x70] sm:$0xff] %vm337, %v6922
    %6971 = vst.msk [vmem:[%s11 + $0x78] sm:$0xff] %vm337, %v6923
    %6972 = vst.msk [vmem:[%s11 + $0x80] sm:$0xff] %vm337, %v6940
    %6973 = vst.msk [vmem:[%s11 + $0x88] sm:$0xff] %vm337, %v6941
    %6974 = vst.msk [vmem:[%s11 + $0x90] sm:$0xff] %vm337, %v6942
    %6975 = vst.msk [vmem:[%s11 + $0x98] sm:$0xff] %vm337, %v6943
    %6976 = vst.msk [vmem:[%s11 + $0xa0] sm:$0xff] %vm337, %v6944
    %6977 = vst.msk [vmem:[%s11 + $0xa8] sm:$0xff] %vm337, %v6945
    %6978 = vst.msk [vmem:[%s11 + $0xb0] sm:$0xff] %vm337, %v6946
    %6979 = vst.msk [vmem:[%s11 + $0xb8] sm:$0xff] %vm337, %v6947
    %6980 = vst.msk [vmem:[%s11 + $0xc0] sm:$0xff] %vm337, %v6948
    %6981 = vst.msk [vmem:[%s11 + $0xc8] sm:$0xff] %vm337, %v6949
    %6982 = vst.msk [vmem:[%s11 + $0xd0] sm:$0xff] %vm337, %v6950
    %6983 = vst.msk [vmem:[%s11 + $0xd8] sm:$0xff] %vm337, %v6951
    %6984 = vst.msk [vmem:[%s11 + $0xe0] sm:$0xff] %vm337, %v6952
    %6985 = vst.msk [vmem:[%s11 + $0xe8] sm:$0xff] %vm337, %v6953
    %6986 = vst.msk [vmem:[%s11 + $0xf0] sm:$0xff] %vm337, %v6954
    %6987 = vst.msk [vmem:[%s11 + $0xf8] sm:$0xff] %vm337, %v6955
    %v6988 = vmax.f32 %v6860, %v6864
    %v6989 = vmax.f32 %v6862, %v6866
    %v6990 = vmax.f32 %v6988, %v6868
    %v6991 = vmax.f32 %v6989, %v6870
    %v6992 = vmax.f32 %v6990, %v6872
    %v6993 = vmax.f32 %v6991, %v6874
    %v6994 = vmax.f32 %v6992, %v6993
    %v6995 = vrot.slane %v6994, 4
    %v6996 = vmax.f32 %v6994, %v6995
    %v6997 = vrot.slane %v6996, 2
    %v6998 = vmax.f32 %v6996, %v6997
    %v6999 = vrot.slane %v6998, 1
    %v7000 = vmax.f32 %v6998, %v6999
    %v7001 = vmax.f32 %v6861, %v6865
    %v7002 = vmax.f32 %v6863, %v6867
    %v7003 = vmax.f32 %v7001, %v6869
    %v7004 = vmax.f32 %v7002, %v6871
    %v7005 = vmax.f32 %v7003, %v6873
    %v7006 = vmax.f32 %v7004, %v6875
    %v7007 = vmax.f32 %v7005, %v7006
    %v7008 = vrot.slane %v7007, 4
    %v7009 = vmax.f32 %v7007, %v7008
    %v7010 = vrot.slane %v7009, 2
    %v7011 = vmax.f32 %v7009, %v7010
    %v7012 = vrot.slane %v7011, 1
    %v7013 = vmax.f32 %v7011, %v7012
    %v7016 = vcombine.low %v7000, %v7013
    %v7018 = vunpack.c.l.s4 1966171168
    %v7019 = vunpack.c.0.s8 %v7018
    %v7020 = vlaneseq
    %v7021 = vshrl.u32 %v7020, 7
    %v7022 = vsub.s32 %v7019, %v7021
    %v7023 = vrot.slane %v7016, %v7022
    %v7025 = vunpack.c.l.s4 1966171168
    %v7026 = vunpack.c.0.s8 %v7025
    %v7027 = vlaneseq
    %v7028 = vshrl.u32 %v7027, 7
    %v7029 = vsub.s32 %v7026, %v7028
    %v7030 = vrot.slane %v7023, %v7029
    %v7032 = vlaneseq
    %vm7033 = vcmp.ge.s32.totalorder %v7032, 0
    %vm7034 = vcmp.lt.s32.totalorder %v7032, 256
    %vm7035 = vmand %vm7033, %vm7034
    %7036 = vst.msk [vmem:[#allocation8] sm:$0x3] %vm7035, %v7030
    %v7037 = vadd.f32 %v6860, %v6862
    %v7038 = vadd.f32 %v7037, %v6864
    %v7039 = vadd.f32 %v7038, %v6866
    %v7040 = vadd.f32 %v7039, %v6868
    %v7041 = vadd.f32 %v7040, %v6870
    %v7042 = vadd.f32 %v7041, %v6872
    %v7043 = vadd.f32 %v7042, %v6874
    %v7044 = vrot.slane %v7043, 4
    %v7045 = vadd.f32 %v7043, %v7044
    %v7046 = vrot.slane %v7045, 2
    %v7047 = vadd.f32 %v7045, %v7046
    %v7048 = vrot.slane %v7047, 1
    %v7049 = vadd.f32 %v7047, %v7048
    %v7050 = vadd.f32 %v6861, %v6863
    %v7051 = vadd.f32 %v7050, %v6865
    %v7052 = vadd.f32 %v7051, %v6867
    %v7053 = vadd.f32 %v7052, %v6869
    %v7054 = vadd.f32 %v7053, %v6871
    %v7055 = vadd.f32 %v7054, %v6873
    %v7056 = vadd.f32 %v7055, %v6875
    %v7057 = vrot.slane %v7056, 4
    %v7058 = vadd.f32 %v7056, %v7057
    %v7059 = vrot.slane %v7058, 2
    %v7060 = vadd.f32 %v7058, %v7059
    %v7061 = vrot.slane %v7060, 1
    %v7062 = vadd.f32 %v7060, %v7061
    %v7063 = vrcp.pop 64.0
    %v7064 = vmul.f32 %v7049, %v7063
    %v7065 = vmul.f32 %v7062, %v7063
    %v7068 = vcombine.low %v7064, %v7065
    %v7070 = vunpack.c.l.s4 1966171168
    %v7071 = vunpack.c.0.s8 %v7070
    %v7072 = vlaneseq
    %v7073 = vshrl.u32 %v7072, 7
    %v7074 = vsub.s32 %v7071, %v7073
    %v7075 = vrot.slane %v7068, %v7074
    %v7077 = vunpack.c.l.s4 1966171168
    %v7078 = vunpack.c.0.s8 %v7077
    %v7079 = vlaneseq
    %v7080 = vshrl.u32 %v7079, 7
    %v7081 = vsub.s32 %v7078, %v7080
    %v7082 = vrot.slane %v7075, %v7081
    %7084 = vst.msk [vmem:[#allocation9] sm:$0x3] %vm7035, %v7082
    %7085 = vxpose.xlu0.b32.start [1/16] %v6876, 128
    %7086 = vxpose.xlu0.b32.cont [2/16] %v6878, 128
    %7087 = vxpose.xlu0.b32.cont [3/16] %v6880, 128
    %7088 = vxpose.xlu0.b32.cont [4/16] %v6882, 128
    %7089 = vxpose.xlu0.b32.cont [5/16] %v6884, 128
    %7090 = vxpose.xlu0.b32.cont [6/16] %v6886, 128
    %7091 = vxpose.xlu0.b32.cont [7/16] %v6888, 128
    %7092 = vxpose.xlu0.b32.cont [8/16] %v6890, 128
    %7093 = vxpose.xlu0.b32.cont [9/16] 0.0, 128
    %7094 = vxpose.xlu0.b32.cont [10/16] 0.0, 128
    %7095 = vxpose.xlu0.b32.cont [11/16] 0.0, 128
    %7096 = vxpose.xlu0.b32.cont [12/16] 0.0, 128
    %7097 = vxpose.xlu0.b32.cont [13/16] 0.0, 128
    %7098 = vxpose.xlu0.b32.cont [14/16] 0.0, 128
    %7099 = vxpose.xlu0.b32.cont [15/16] 0.0, 128
    %7100 = vxpose.xlu0.b32.end [16/16] 0.0, 128
    %v7101 = vpop.trf.xlu0
    %v7102 = vpop.trf.xlu0
    %v7103 = vpop.trf.xlu0
    %v7104 = vpop.trf.xlu0
    %v7105 = vpop.trf.xlu0
    %v7106 = vpop.trf.xlu0
    %v7107 = vpop.trf.xlu0
    %v7108 = vpop.trf.xlu0
    %v7109 = vpop.trf.xlu0
    %v7110 = vpop.trf.xlu0
    %v7111 = vpop.trf.xlu0
    %v7112 = vpop.trf.xlu0
    %v7113 = vpop.trf.xlu0
    %v7114 = vpop.trf.xlu0
    %v7115 = vpop.trf.xlu0
    %v7116 = vpop.trf.xlu0
    %7117 = vxpose.xlu0.b32.start [1/16] %v6877, 128
    %7118 = vxpose.xlu0.b32.cont [2/16] %v6879, 128
    %7119 = vxpose.xlu0.b32.cont [3/16] %v6881, 128
    %7120 = vxpose.xlu0.b32.cont [4/16] %v6883, 128
    %7121 = vxpose.xlu0.b32.cont [5/16] %v6885, 128
    %7122 = vxpose.xlu0.b32.cont [6/16] %v6887, 128
    %7123 = vxpose.xlu0.b32.cont [7/16] %v6889, 128
    %7124 = vxpose.xlu0.b32.cont [8/16] %v6891, 128
    %7125 = vxpose.xlu0.b32.cont [9/16] 0.0, 128
    %7126 = vxpose.xlu0.b32.cont [10/16] 0.0, 128
    %7127 = vxpose.xlu0.b32.cont [11/16] 0.0, 128
    %7128 = vxpose.xlu0.b32.cont [12/16] 0.0, 128
    %7129 = vxpose.xlu0.b32.cont [13/16] 0.0, 128
    %7130 = vxpose.xlu0.b32.cont [14/16] 0.0, 128
    %7131 = vxpose.xlu0.b32.cont [15/16] 0.0, 128
    %7132 = vxpose.xlu0.b32.end [16/16] 0.0, 128
    %v7133 = vpop.trf.xlu0
    %v7134 = vpop.trf.xlu0
    %v7135 = vpop.trf.xlu0
    %v7136 = vpop.trf.xlu0
    %v7137 = vpop.trf.xlu0
    %v7138 = vpop.trf.xlu0
    %v7139 = vpop.trf.xlu0
    %v7140 = vpop.trf.xlu0
    %v7141 = vpop.trf.xlu0
    %v7142 = vpop.trf.xlu0
    %v7143 = vpop.trf.xlu0
    %v7144 = vpop.trf.xlu0
    %v7145 = vpop.trf.xlu0
    %v7146 = vpop.trf.xlu0
    %v7147 = vpop.trf.xlu0
    %v7148 = vpop.trf.xlu0
    %s7149 = scalar_lea.vmem %s11, 256
    %7150 = vst.msk [vmem:[%s7149] sm:$0xff] %vm337, %v7101
    %7151 = vst.msk [vmem:[%s7149 + $0x8] sm:$0xff] %vm337, %v7102
    %7152 = vst.msk [vmem:[%s7149 + $0x10] sm:$0xff] %vm337, %v7103
    %7153 = vst.msk [vmem:[%s7149 + $0x18] sm:$0xff] %vm337, %v7104
    %7154 = vst.msk [vmem:[%s7149 + $0x20] sm:$0xff] %vm337, %v7105
    %7155 = vst.msk [vmem:[%s7149 + $0x28] sm:$0xff] %vm337, %v7106
    %7156 = vst.msk [vmem:[%s7149 + $0x30] sm:$0xff] %vm337, %v7107
    %7157 = vst.msk [vmem:[%s7149 + $0x38] sm:$0xff] %vm337, %v7108
    %7158 = vst.msk [vmem:[%s7149 + $0x40] sm:$0xff] %vm337, %v7109
    %7159 = vst.msk [vmem:[%s7149 + $0x48] sm:$0xff] %vm337, %v7110
    %7160 = vst.msk [vmem:[%s7149 + $0x50] sm:$0xff] %vm337, %v7111
    %7161 = vst.msk [vmem:[%s7149 + $0x58] sm:$0xff] %vm337, %v7112
    %7162 = vst.msk [vmem:[%s7149 + $0x60] sm:$0xff] %vm337, %v7113
    %7163 = vst.msk [vmem:[%s7149 + $0x68] sm:$0xff] %vm337, %v7114
    %7164 = vst.msk [vmem:[%s7149 + $0x70] sm:$0xff] %vm337, %v7115
    %7165 = vst.msk [vmem:[%s7149 + $0x78] sm:$0xff] %vm337, %v7116
    %7166 = vst.msk [vmem:[%s7149 + $0x80] sm:$0xff] %vm337, %v7133
    %7167 = vst.msk [vmem:[%s7149 + $0x88] sm:$0xff] %vm337, %v7134
    %7168 = vst.msk [vmem:[%s7149 + $0x90] sm:$0xff] %vm337, %v7135
    %7169 = vst.msk [vmem:[%s7149 + $0x98] sm:$0xff] %vm337, %v7136
    %7170 = vst.msk [vmem:[%s7149 + $0xa0] sm:$0xff] %vm337, %v7137
    %7171 = vst.msk [vmem:[%s7149 + $0xa8] sm:$0xff] %vm337, %v7138
    %7172 = vst.msk [vmem:[%s7149 + $0xb0] sm:$0xff] %vm337, %v7139
    %7173 = vst.msk [vmem:[%s7149 + $0xb8] sm:$0xff] %vm337, %v7140
    %7174 = vst.msk [vmem:[%s7149 + $0xc0] sm:$0xff] %vm337, %v7141
    %7175 = vst.msk [vmem:[%s7149 + $0xc8] sm:$0xff] %vm337, %v7142
    %7176 = vst.msk [vmem:[%s7149 + $0xd0] sm:$0xff] %vm337, %v7143
    %7177 = vst.msk [vmem:[%s7149 + $0xd8] sm:$0xff] %vm337, %v7144
    %7178 = vst.msk [vmem:[%s7149 + $0xe0] sm:$0xff] %vm337, %v7145
    %7179 = vst.msk [vmem:[%s7149 + $0xe8] sm:$0xff] %vm337, %v7146
    %7180 = vst.msk [vmem:[%s7149 + $0xf0] sm:$0xff] %vm337, %v7147
    %7181 = vst.msk [vmem:[%s7149 + $0xf8] sm:$0xff] %vm337, %v7148
    %v7182 = vmax.f32 %v6876, %v6880
    %v7183 = vmax.f32 %v6878, %v6882
    %v7184 = vmax.f32 %v7182, %v6884
    %v7185 = vmax.f32 %v7183, %v6886
    %v7186 = vmax.f32 %v7184, %v6888
    %v7187 = vmax.f32 %v7185, %v6890
    %v7188 = vmax.f32 %v7186, %v7187
    %v7189 = vrot.slane %v7188, 4
    %v7190 = vmax.f32 %v7188, %v7189
    %v7191 = vrot.slane %v7190, 2
    %v7192 = vmax.f32 %v7190, %v7191
    %v7193 = vrot.slane %v7192, 1
    %v7194 = vmax.f32 %v7192, %v7193
    %v7195 = vmax.f32 %v6877, %v6881
    %v7196 = vmax.f32 %v6879, %v6883
    %v7197 = vmax.f32 %v7195, %v6885
    %v7198 = vmax.f32 %v7196, %v6887
    %v7199 = vmax.f32 %v7197, %v6889
    %v7200 = vmax.f32 %v7198, %v6891
    %v7201 = vmax.f32 %v7199, %v7200
    %v7202 = vrot.slane %v7201, 4
    %v7203 = vmax.f32 %v7201, %v7202
    %v7204 = vrot.slane %v7203, 2
    %v7205 = vmax.f32 %v7203, %v7204
    %v7206 = vrot.slane %v7205, 1
    %v7207 = vmax.f32 %v7205, %v7206
    %v7210 = vcombine.low %v7194, %v7207
    %v7212 = vunpack.c.l.s4 1966171168
    %v7213 = vunpack.c.0.s8 %v7212
    %v7214 = vlaneseq
    %v7215 = vshrl.u32 %v7214, 7
    %v7216 = vsub.s32 %v7213, %v7215
    %v7217 = vrot.slane %v7210, %v7216
    %v7219 = vunpack.c.l.s4 1966171168
    %v7220 = vunpack.c.0.s8 %v7219
    %v7221 = vlaneseq
    %v7222 = vshrl.u32 %v7221, 7
    %v7223 = vsub.s32 %v7220, %v7222
    %v7224 = vrot.slane %v7217, %v7223
    %s7226 = scalar_lea.vmem [#allocation8], 2
    %7227 = vst.msk [vmem:[%s7226] sm:$0x3] %vm7035, %v7224
    %v7228 = vadd.f32 %v6876, %v6878
    %v7229 = vadd.f32 %v7228, %v6880
    %v7230 = vadd.f32 %v7229, %v6882
    %v7231 = vadd.f32 %v7230, %v6884
    %v7232 = vadd.f32 %v7231, %v6886
    %v7233 = vadd.f32 %v7232, %v6888
    %v7234 = vadd.f32 %v7233, %v6890
    %v7235 = vrot.slane %v7234, 4
    %v7236 = vadd.f32 %v7234, %v7235
    %v7237 = vrot.slane %v7236, 2
    %v7238 = vadd.f32 %v7236, %v7237
    %v7239 = vrot.slane %v7238, 1
    %v7240 = vadd.f32 %v7238, %v7239
    %v7241 = vadd.f32 %v6877, %v6879
    %v7242 = vadd.f32 %v7241, %v6881
    %v7243 = vadd.f32 %v7242, %v6883
    %v7244 = vadd.f32 %v7243, %v6885
    %v7245 = vadd.f32 %v7244, %v6887
    %v7246 = vadd.f32 %v7245, %v6889
    %v7247 = vadd.f32 %v7246, %v6891
    %v7248 = vrot.slane %v7247, 4
    %v7249 = vadd.f32 %v7247, %v7248
    %v7250 = vrot.slane %v7249, 2
    %v7251 = vadd.f32 %v7249, %v7250
    %v7252 = vrot.slane %v7251, 1
    %v7253 = vadd.f32 %v7251, %v7252
    %v7254 = vmul.f32 %v7240, %v7063
    %v7255 = vmul.f32 %v7253, %v7063
    %v7258 = vcombine.low %v7254, %v7255
    %v7260 = vunpack.c.l.s4 1966171168
    %v7261 = vunpack.c.0.s8 %v7260
    %v7262 = vlaneseq
    %v7263 = vshrl.u32 %v7262, 7
    %v7264 = vsub.s32 %v7261, %v7263
    %v7265 = vrot.slane %v7258, %v7264
    %v7267 = vunpack.c.l.s4 1966171168
    %v7268 = vunpack.c.0.s8 %v7267
    %v7269 = vlaneseq
    %v7270 = vshrl.u32 %v7269, 7
    %v7271 = vsub.s32 %v7268, %v7270
    %v7272 = vrot.slane %v7265, %v7271
    %s7274 = scalar_lea.vmem [#allocation9], 2
    %7275 = vst.msk [vmem:[%s7274] sm:$0x3] %vm7035, %v7272
    // Predicated region
    $region58: #{tpu_custom_call.1} parent=1 // pred_check
      _
    $region59: #{tpu_custom_call.1} parent=1 // pred_check_branch
      %7277 = sbr.rel (0) target = $region61
    $region60: #{tpu_custom_call.1} parent=1 // pred_region
      _
    $region61: #{tpu_custom_call.1} parent=1 // pred_fallthru
      _
    // Predicated region
    $region62: #{tpu_custom_call.1} parent=1 // pred_check
      _
    $region63: #{tpu_custom_call.1} parent=1 // pred_check_branch
      %7279 = sbr.rel (0) target = $region65
    $region64: #{tpu_custom_call.1} parent=1 // pred_region
      %s7281 = ssub.s32 64, 64
      %7282 = vsyncadd [#allocation4], %s7281
      %s7283 = sshll.u32 [#allocation8], 4
      %s7284 = int_to_ptr.vmem [resolvable:$true] %s7283
      %7289 = dma.vmem_to_hbm [thread:$0]  %s7284, 64, %s12, [#allocation4], 32, 32, 2
    $region65: #{tpu_custom_call.1} parent=1 // pred_fallthru
      _
    // Predicated region
    $region66: #{tpu_custom_call.1} parent=1 // pred_check
      _
    $region67: #{tpu_custom_call.1} parent=1 // pred_check_branch
      %7291 = sbr.rel (0) target = $region69
    $region68: #{tpu_custom_call.1} parent=1 // pred_region
      %s7293 = ssub.s32 64, 64
      %7294 = vsyncadd [#allocation10], %s7293
      %s7295 = sshll.u32 [#allocation9], 4
      %s7296 = int_to_ptr.vmem [resolvable:$true] %s7295
      %7301 = dma.vmem_to_hbm [thread:$0]  %s7296, 64, %s13, [#allocation10], 32, 32, 2
    $region69: #{tpu_custom_call.1} parent=1 // pred_fallthru
      _
    // Predicated region
    $region70: #{tpu_custom_call.1} parent=1 // pred_check
      _
    $region71: #{tpu_custom_call.1} parent=1 // pred_check_branch
      %7303 = sbr.rel (0) target = $region73
    $region72: #{tpu_custom_call.1} parent=1 // pred_region
      _
    $region73: #{tpu_custom_call.1} parent=1 // pred_fallthru
      _
    // Predicated region
    $region74: #{tpu_custom_call.1} parent=1 // pred_check
      _
    $region75: #{tpu_custom_call.1} parent=1 // pred_check_branch
      %7305 = sbr.rel (0) target = $region77
    $region76: #{tpu_custom_call.1} parent=1 // pred_region
      %7306 = dma.done [#allocation4], 64
    $region77: #{tpu_custom_call.1} parent=1 // pred_fallthru
      _
    // Predicated region
    $region78: #{tpu_custom_call.1} parent=1 // pred_check
      _
    $region79: #{tpu_custom_call.1} parent=1 // pred_check_branch
      %7308 = sbr.rel (0) target = $region81
    $region80: #{tpu_custom_call.1} parent=1 // pred_region
      %7309 = dma.done [#allocation10], 64
    $region81: #{tpu_custom_call.1} parent=1 // pred_fallthru
      _
    %7310 = vsyncpa [#allocation3], 1
    %7311 = vsyncpa [#allocation6], 1
    %7312 = vsyncpa [#allocation4], 1
    %7313 = vsyncpa [#allocation10], 1

</llo_original>
